<compile_context>
chip_gen: v7x
topology: tpu7x:2x2x1
jax: 0.10.0
libtpu: 0.0.40
codegen_flags: <defaults>
</compile_context>

<pallas_src>
import functools

import jax
import jax.numpy as jnp
from jax.experimental import pallas as pl
from jax.experimental.pallas import tpu as pltpu

_EPS = 1e-5
_LANE = 128


# ----------------------------------------------------------------------------
# Pallas kernels
# ----------------------------------------------------------------------------
def _stem_kernel(x_ref, w_ref, o_ref, *, H, W):
    """3x3 conv (stride 1, pad 1) + folded BN; im2col done in-kernel.

    x_ref: (1, H+2, W+2, 128) f32   (channels zero-padded to 128)
    w_ref: (9, 128, 128) bf16       (per-tap (Cin->Cout) matrices, BN scale folded)
    o_ref: (H*W, 128) bf16
    """
    acc = None
    for kh in range(3):
        for kw in range(3):
            patch = x_ref[0, kh:kh + H, kw:kw + W, :]
            patch = patch.astype(jnp.bfloat16).reshape(H * W, _LANE)
            d = jnp.dot(patch, w_ref[kh * 3 + kw],
                        preferred_element_type=jnp.float32)
            acc = d if acc is None else acc + d
    o_ref[...] = acc.astype(o_ref.dtype)


def _normal_cell_kernel(s0_ref, s1_ref, w0_ref, w1_ref, o_ref, *, n_nodes):
    """Normal cell: t0 = BN(conv0(relu(s0))), t1 = BN(conv1(relu(s1))),
    every node (skip_connect + sum of first two inputs) = t0 + t1,
    output = concat of n_nodes identical node blocks (each 128-lane padded)."""
    acc = jnp.dot(jnp.maximum(s0_ref[...], 0), w0_ref[...],
                  preferred_element_type=jnp.float32)
    acc = acc + jnp.dot(jnp.maximum(s1_ref[...], 0), w1_ref[...],
                        preferred_element_type=jnp.float32)
    node = acc.astype(o_ref.dtype)                       # (tm, 128)
    o_ref[...] = jnp.concatenate([node] * n_nodes, axis=-1)


def _reduce_cell_kernel(p0e_ref, p0o_ref, s1e_ref, s1o_ref,
                        wp0_ref, wp1_ref,
                        wn0e_ref, wn0o_ref, wn1e_ref, wn1o_ref, o_ref):
    """Reduction cell, fully fused.

    Rows are the cell-output spatial positions.  The even/odd spatial taps needed by
    the FactorizedReduce node ops were pre-separated by the wrapper, so stage 1 is
    evaluated only where it is needed (half the preproc work) and stage 2 only uses
    contiguous operands.  All node weights are packed along N (n_nodes * 128 lanes);
    the sum of the two FR branches per node is folded into the accumulation.
    """
    def pre(x_ref, w_ref):
        return jnp.dot(jnp.maximum(x_ref[...], 0), w_ref[...],
                       preferred_element_type=jnp.float32)

    t0e = pre(p0e_ref, wp0_ref)       # (tp, 128) f32
    t0o = pre(p0o_ref, wp0_ref)
    t1e = pre(s1e_ref, wp1_ref)
    t1o = pre(s1o_ref, wp1_ref)

    def node_dot(t, w_ref):
        return jnp.dot(jnp.maximum(t, 0.0).astype(jnp.bfloat16), w_ref[...],
                       preferred_element_type=jnp.float32)

    acc = node_dot(t0e, wn0e_ref)
    acc = acc + node_dot(t0o, wn0o_ref)
    acc = acc + node_dot(t1e, wn1e_ref)
    acc = acc + node_dot(t1o, wn1o_ref)
    o_ref[...] = acc.astype(o_ref.dtype)


def _heads_kernel(x_ref, w_ref, b_ref, o_ref, *, relu_flags):
    """(optional ReLU) -> global-avg-pool -> Linear, for one or more heads that share
    the same feature map.  x_ref: (B, S, Cp) bf16, w_ref: (n_heads, Cp, 128) bf16,
    b_ref: (n_heads, 1, 128) f32, o_ref: (n_heads, B, 128) f32."""
    x = x_ref[...].astype(jnp.float32)
    inv_s = 1.0 / x.shape[1]
    pooled_raw = None
    pooled_relu = None
    if not all(relu_flags):
        pooled_raw = jnp.sum(x, axis=1) * inv_s                      # (B, Cp)
    if any(relu_flags):
        pooled_relu = jnp.sum(jnp.maximum(x, 0.0), axis=1) * inv_s   # (B, Cp)
    for h, flag in enumerate(relu_flags):
        p = pooled_relu if flag else pooled_raw
        y = jnp.dot(p.astype(jnp.bfloat16), w_ref[h],
                    preferred_element_type=jnp.float32) + b_ref[h]
        o_ref[h] = y


# ----------------------------------------------------------------------------
# Wrappers (pallas_call setup); activations travel as NHWC bf16, 128-lane blocks.
# ----------------------------------------------------------------------------
def stem_forward(sp, x_nchw):
    N, Cin, H, W = x_nchw.shape
    x = jnp.transpose(x_nchw, (0, 2, 3, 1))                           # NCHW -> NHWC
    xp = jnp.pad(x, ((0, 0), (1, 1), (1, 1), (0, _LANE - Cin)))       # spatial+lane pad
    kernel = functools.partial(_stem_kernel, H=H, W=W)
    out = pl.pallas_call(
        kernel,
        out_shape=jax.ShapeDtypeStruct((N * H * W, _LANE), jnp.bfloat16),
        grid_spec=pltpu.PrefetchScalarGridSpec(
            num_scalar_prefetch=0,
            grid=(N,),
            in_specs=[
                pl.BlockSpec((1, H + 2, W + 2, _LANE), lambda n: (n, 0, 0, 0)),
                pl.BlockSpec((9, _LANE, _LANE), lambda n: (0, 0, 0)),
            ],
            out_specs=pl.BlockSpec((H * W, _LANE), lambda n: (n, 0))),
        compiler_params=pltpu.CompilerParams(dimension_semantics=("parallel",)),
    )(xp, sp['w'])
    return out.reshape(N, H, W, _LANE)


def normal_cell_forward(cp, s0, s1, n_nodes):
    N, H, W, _ = s1.shape
    M = N * H * W
    s0_2d = s0.reshape(M, s0.shape[-1])
    s1_2d = s1.reshape(M, s1.shape[-1])
    K0, K1 = s0_2d.shape[1], s1_2d.shape[1]
    Np = n_nodes * _LANE
    m_blocks = 2 if M % 16 == 0 else 1
    tm = M // m_blocks
    kernel = functools.partial(_normal_cell_kernel, n_nodes=n_nodes)
    out = pl.pallas_call(
        kernel,
        out_shape=jax.ShapeDtypeStruct((M, Np), jnp.bfloat16),
        grid_spec=pltpu.PrefetchScalarGridSpec(
            num_scalar_prefetch=0,
            grid=(m_blocks,),
            in_specs=[
                pl.BlockSpec((tm, K0), lambda i: (i, 0)),
                pl.BlockSpec((tm, K1), lambda i: (i, 0)),
                pl.BlockSpec((K0, _LANE), lambda i: (0, 0)),
                pl.BlockSpec((K1, _LANE), lambda i: (0, 0)),
            ],
            out_specs=pl.BlockSpec((tm, Np), lambda i: (i, 0))),
        compiler_params=pltpu.CompilerParams(dimension_semantics=("parallel",)),
    )(s0_2d, s1_2d, cp['w0'], cp['w1'])
    return out.reshape(N, H, W, Np)


def reduce_cell_forward(cp, ac, s0, s1, n_nodes):
    # t0/t1 live at s1's resolution; the cell output is at half of that.  Only the
    # even-even / odd-odd spatial taps of t0/t1 are consumed by the FR node ops, so
    # the wrapper pre-selects those source positions (strided slices, 128-lane dense).
    N, Ht, Wt, C1 = s1.shape
    OH, OW = Ht // 2, Wt // 2
    Mo = N * OH * OW
    s1e = s1[:, 0::2, 0::2, :].reshape(Mo, C1)
    s1o = s1[:, 1::2, 1::2, :].reshape(Mo, C1)
    if ac['reduction_p']:
        # preproc0 = FactorizedReduce(s0): its conv1/conv2 sources, restricted to the
        # even-even / odd-odd t-positions, are the stride-4 taps of s0.
        C0 = s0.shape[-1]
        p0e = jnp.concatenate([s0[:, 0::4, 0::4, :], s0[:, 1::4, 1::4, :]],
                              axis=-1).reshape(Mo, 2 * C0)
        p0o = jnp.concatenate([s0[:, 2::4, 2::4, :], s0[:, 3::4, 3::4, :]],
                              axis=-1).reshape(Mo, 2 * C0)
    else:
        C0 = s0.shape[-1]
        p0e = s0[:, 0::2, 0::2, :].reshape(Mo, C0)
        p0o = s0[:, 1::2, 1::2, :].reshape(Mo, C0)

    Kp0, Kp1 = p0e.shape[1], s1e.shape[1]
    Np = n_nodes * _LANE
    blocks = 2 if Mo % 16 == 0 else 1
    tp = Mo // blocks
    out = pl.pallas_call(
        _reduce_cell_kernel,
        out_shape=jax.ShapeDtypeStruct((Mo, Np), jnp.bfloat16),
        grid_spec=pltpu.PrefetchScalarGridSpec(
            num_scalar_prefetch=0,
            grid=(blocks,),
            in_specs=[
                pl.BlockSpec((tp, Kp0), lambda i: (i, 0)),
                pl.BlockSpec((tp, Kp0), lambda i: (i, 0)),
                pl.BlockSpec((tp, Kp1), lambda i: (i, 0)),
                pl.BlockSpec((tp, Kp1), lambda i: (i, 0)),
                pl.BlockSpec((Kp0, _LANE), lambda i: (0, 0)),
                pl.BlockSpec((Kp1, _LANE), lambda i: (0, 0)),
                pl.BlockSpec((_LANE, Np), lambda i: (0, 0)),
                pl.BlockSpec((_LANE, Np), lambda i: (0, 0)),
                pl.BlockSpec((_LANE, Np), lambda i: (0, 0)),
                pl.BlockSpec((_LANE, Np), lambda i: (0, 0)),
            ],
            out_specs=pl.BlockSpec((tp, Np), lambda i: (i, 0))),
        compiler_params=pltpu.CompilerParams(dimension_semantics=("parallel",)),
    )(p0e, p0o, s1e, s1o, cp['wp0'], cp['wp1'],
      cp['wn0e'], cp['wn0o'], cp['wn1e'], cp['wn1o'])
    return out.reshape(N, OH, OW, Np)


def heads_forward(hp, x_nhwc, relu_flags):
    N, H, W, Cp = x_nhwc.shape
    S = H * W
    x = x_nhwc.reshape(N, S, Cp)
    n_heads = len(relu_flags)
    kernel = functools.partial(_heads_kernel, relu_flags=relu_flags)
    out = pl.pallas_call(
        kernel,
        out_shape=jax.ShapeDtypeStruct((n_heads, N, _LANE), jnp.float32),
        grid_spec=pltpu.PrefetchScalarGridSpec(
            num_scalar_prefetch=0,
            grid=(1,),
            in_specs=[
                pl.BlockSpec((N, S, Cp), lambda i: (0, 0, 0)),
                pl.BlockSpec((n_heads, Cp, _LANE), lambda i: (0, 0, 0)),
                pl.BlockSpec((n_heads, 1, _LANE), lambda i: (0, 0, 0)),
            ],
            out_specs=pl.BlockSpec((n_heads, N, _LANE), lambda i: (0, 0, 0))),
        compiler_params=pltpu.CompilerParams(dimension_semantics=("arbitrary",)),
    )(x, hp['w'], hp['b'])
    return out                                           # (n_heads, N, 128) f32


def model_forward(arch, params, x):
    s0 = s1 = stem_forward(params['stem'], x)
    outputs = []
    logits = None
    for i, (ac, cp) in enumerate(zip(arch['cells'], params['cells'])):
        if ac['reduction']:
            new_s1 = reduce_cell_forward(cp, ac, s0, s1, arch['n_nodes'])
        else:
            new_s1 = normal_cell_forward(cp, s0, s1, arch['n_nodes'])
        s0, s1 = s1, new_s1
        if i in arch['head_idx']:
            flags = arch['head_relu'][i]
            ho = heads_forward(params['heads'][i], s1, flags)
            for h, flag in enumerate(flags):
                o = ho[h, :, :arch['n_classes']]
                if flag:                      # aux head
                    outputs.append(o)
                else:                         # final classifier
                    logits = o
    outputs.append(logits)
    e = jax.nn.softmax(params['ensemble'], axis=0)
    em_output = jnp.concatenate([e[j] * o for j, o in enumerate(outputs)], axis=0)
    return logits, em_output


# ----------------------------------------------------------------------------
# Parameter initialization: BN folded, K rows / N cols scattered to 128-lane blocks.
# ----------------------------------------------------------------------------
def _place(w, row_layout, col_layout):
    """Scatter a logical f32 weight (sum(row_layout), sum(col_layout)) into a padded
    bf16 matrix (128*len(row_layout), 128*len(col_layout)); block j holds its logical
    channels at lane offset j*128."""
    kp = _LANE * len(row_layout)
    np_ = _LANE * len(col_layout)
    out = jnp.zeros((kp, np_), jnp.float32)
    r = 0
    for bi, rc in enumerate(row_layout):
        c0 = 0
        for bj, cc in enumerate(col_layout):
            out = out.at[bi * _LANE:bi * _LANE + rc,
                         bj * _LANE:bj * _LANE + cc].set(w[r:r + rc, c0:c0 + cc])
            c0 += cc
        r += rc
    return out.astype(jnp.bfloat16)


def init_model(key, *, n_layers=3, in_channels=3, channels=8, n_nodes=2, n_classes=2):
    # eval-mode BN (running mean 0, var 1, affine=False / gamma=1) folds to a scale.
    bn_scale = (1.0 + _EPS) ** -0.5
    keys = iter(jax.random.split(key, 256))

    def rand(shape):
        return jax.random.normal(next(keys), shape, jnp.float32) * 0.1

    # ---- stem: Conv3x3 + BN ----
    stem_multiplier = 1                                   # dataset != 'cifar'
    c_stem = stem_multiplier * channels
    w = rand((c_stem, in_channels, 3, 3))
    stem_w = jnp.zeros((9, _LANE, _LANE), jnp.float32)
    for kh in range(3):
        for kw in range(3):
            stem_w = stem_w.at[kh * 3 + kw, :in_channels, :c_stem].set(
                w[:, :, kh, kw].T * bn_scale)
    stem = {'w': stem_w.astype(jnp.bfloat16)}

    aux_idx = (n_layers // 3, 2 * n_layers // 3)
    layout_pp = [c_stem]                                  # channel layout of s0
    layout_p = [c_stem]                                   # channel layout of s1
    c_cur = channels
    cells_params, cells_arch = [], []
    heads_params, head_relu = {}, {}
    reduction_p = reduction = False
    for i in range(n_layers):
        reduction_p, reduction = reduction, False
        if i in [n_layers // 3, 2 * n_layers // 3]:
            c_cur *= 2
            reduction = True
        cpp, cp_ = sum(layout_pp), sum(layout_p)

        if not reduction:
            if reduction_p:
                raise NotImplementedError(
                    "normal cell following a reduction cell not needed for this config")
            cell_p = {'w0': _place(rand((c_cur, cpp)).T * bn_scale, layout_pp, [c_cur]),
                      'w1': _place(rand((c_cur, cp_)).T * bn_scale, layout_p, [c_cur])}
        else:
            if reduction_p:                               # preproc0 = FactorizedReduce
                fr_half = c_cur // 2
                wfa = rand((fr_half, cpp)).T * bn_scale   # conv1 (even source)
                wfb = rand((fr_half, cpp)).T * bn_scale   # conv2 (odd source)
                wlog = jnp.zeros((2 * cpp, c_cur), jnp.float32)
                wlog = wlog.at[:cpp, :fr_half].set(wfa)
                wlog = wlog.at[cpp:, fr_half:].set(wfb)
                wp0 = _place(wlog, layout_pp + layout_pp, [c_cur])
            else:                                         # preproc0 = StdConv
                wp0 = _place(rand((c_cur, cpp)).T * bn_scale, layout_pp, [c_cur])
            wp1 = _place(rand((c_cur, cp_)).T * bn_scale, layout_p, [c_cur])

            # node weights: per t-source matrix with all nodes packed along N;
            # node_j = FR_a(t0) + FR_b(t1), the branch sum is folded into accumulation.
            half = c_cur // 2
            nsrc = {k: jnp.zeros((c_cur, n_nodes * c_cur), jnp.float32)
                    for k in ('0e', '0o', '1e', '1o')}
            for j in range(n_nodes):
                base = j * c_cur
                fa1 = rand((half, c_cur)).T * bn_scale
                fa2 = rand((half, c_cur)).T * bn_scale
                fb1 = rand((half, c_cur)).T * bn_scale
                fb2 = rand((half, c_cur)).T * bn_scale
                nsrc['0e'] = nsrc['0e'].at[:, base:base + half].set(fa1)
                nsrc['0o'] = nsrc['0o'].at[:, base + half:base + c_cur].set(fa2)
                nsrc['1e'] = nsrc['1e'].at[:, base:base + half].set(fb1)
                nsrc['1o'] = nsrc['1o'].at[:, base + half:base + c_cur].set(fb2)
            node_cols = [c_cur] * n_nodes
            cell_p = {'wp0': wp0, 'wp1': wp1,
                      'wn0e': _place(nsrc['0e'], [c_cur], node_cols),
                      'wn0o': _place(nsrc['0o'], [c_cur], node_cols),
                      'wn1e': _place(nsrc['1e'], [c_cur], node_cols),
                      'wn1o': _place(nsrc['1o'], [c_cur], node_cols)}

        cells_params.append(cell_p)
        cells_arch.append({'reduction': reduction, 'reduction_p': reduction_p})

        out_layout = [c_cur] * n_nodes
        descs = []
        if i in aux_idx:
            descs.append(True)                            # aux head (ReLU->GAP->Linear)
        if i == n_layers - 1:
            descs.append(False)                           # final classifier (GAP->Linear)
        if descs:
            c_out = sum(out_layout)
            ws, bs = [], []
            for _ in descs:
                wlin = rand((n_classes, c_out)).T
                blin = rand((n_classes,))
                ws.append(_place(wlin, out_layout, [n_classes]))
                bs.append(jnp.zeros((1, _LANE), jnp.float32).at[0, :n_classes].set(blin))
            heads_params[i] = {'w': jnp.stack(ws, axis=0),
                               'b': jnp.stack(bs, axis=0)}
            head_relu[i] = tuple(descs)

        layout_pp, layout_p = layout_p, out_layout

    n_ens = len(set(aux_idx)) + 1
    params = {
        'stem': stem,
        'cells': cells_params,
        'heads': heads_params,
        'ensemble': jax.random.uniform(next(keys), (n_ens,), jnp.float32) / n_ens,
    }
    arch = {
        'cells': cells_arch,
        'n_nodes': n_nodes,
        'n_classes': n_classes,
        'head_idx': tuple(sorted(head_relu.keys())),
        'head_relu': head_relu,
    }
    return params, arch


# ----------------------------------------------------------------------------
if __name__ == "__main__":
    key = jax.random.PRNGKey(0)
    pkey, xkey = jax.random.split(key)

    # Model(dataset='mld', n_layers=3, in_channels=3, channels=8, n_nodes=2, retrain=False)
    params, arch = init_model(pkey, n_layers=3, in_channels=3, channels=8,
                              n_nodes=2, n_classes=2)

    x = jax.random.normal(xkey, (2, 3, 16, 16), jnp.float32)   # NCHW
    fwd = jax.jit(functools.partial(model_forward, arch))
    logits, em_output = fwd(params, x)
    jax.block_until_ready((logits, em_output))

    assert logits.shape == (2, 2), logits.shape
    assert em_output.shape == (6, 2), em_output.shape      # 3 weighted heads over dim 0
    assert bool(jnp.all(jnp.isfinite(logits))) and bool(jnp.all(jnp.isfinite(em_output)))
    print("KERNEL_OK")
</pallas_src>

<mosaic_0001>
module attributes {stable_mosaic.version = 11 : i64} {
  func.func @_stem_kernel(%arg0: i32, %arg1: memref<1x18x18x128xf32, #tpu.memory_space<vmem>>, %arg2: memref<9x128x128xbf16, #tpu.memory_space<vmem>>, %arg3: memref<256x128xbf16, #tpu.memory_space<vmem>>) attributes {dimension_semantics = [#tpu.dimension_semantics<parallel>], iteration_bounds = array<i64: 2>, scalar_prefetch = 0 : i64, scratch_operands = 0 : i64, tpu.core_type = #tpu.core_type<tc>, window_params = [{transform_indices = @transform_0, window_bounds = array<i64: 1, 18, 18, 128>}, {pipeline_mode = #tpu.pipeline_mode<synchronous>, transform_indices = @transform_1, window_bounds = array<i64: 9, 128, 128>}, {transform_indices = @transform_2, window_bounds = array<i64: 256, 128>}]} {
    %c0 = arith.constant 0 : index
    %c0_0 = arith.constant 0 : index
    %c0_1 = arith.constant 0 : index
    %c0_2 = arith.constant 0 : index
    %0 = vector.load %arg1[%c0, %c0_0, %c0_1, %c0_2] : memref<1x18x18x128xf32, #tpu.memory_space<vmem>>, vector<1x16x16x128xf32>
    %1 = vector.shape_cast %0 : vector<1x16x16x128xf32> to vector<16x16x128xf32>
    %2 = arith.truncf %1 : vector<16x16x128xf32> to vector<16x16x128xbf16>
    %3 = vector.shape_cast %2 : vector<16x16x128xbf16> to vector<256x128xbf16>
    %c0_3 = arith.constant 0 : index
    %c0_4 = arith.constant 0 : index
    %c0_5 = arith.constant 0 : index
    %4 = vector.load %arg2[%c0_3, %c0_4, %c0_5] : memref<9x128x128xbf16, #tpu.memory_space<vmem>>, vector<1x128x128xbf16>
    %5 = vector.shape_cast %4 : vector<1x128x128xbf16> to vector<128x128xbf16>
    %cst = arith.constant dense<0.000000e+00> : vector<256x128xf32>
    %6 = tpu.matmul %3, %5, %cst {dimension_numbers = #tpu.dot_dimension_numbers<[1], [0], [0], [1], [0, 0, 1, 1], [], []>} : vector<256x128xbf16>, vector<128x128xbf16>, vector<256x128xf32> -> vector<256x128xf32>
    %c0_6 = arith.constant 0 : index
    %c0_7 = arith.constant 0 : index
    %c1 = arith.constant 1 : index
    %c0_8 = arith.constant 0 : index
    %7 = vector.load %arg1[%c0_6, %c0_7, %c1, %c0_8] : memref<1x18x18x128xf32, #tpu.memory_space<vmem>>, vector<1x16x16x128xf32>
    %8 = vector.shape_cast %7 : vector<1x16x16x128xf32> to vector<16x16x128xf32>
    %9 = arith.truncf %8 : vector<16x16x128xf32> to vector<16x16x128xbf16>
    %10 = vector.shape_cast %9 : vector<16x16x128xbf16> to vector<256x128xbf16>
    %c1_9 = arith.constant 1 : index
    %c0_10 = arith.constant 0 : index
    %c0_11 = arith.constant 0 : index
    %11 = vector.load %arg2[%c1_9, %c0_10, %c0_11] : memref<9x128x128xbf16, #tpu.memory_space<vmem>>, vector<1x128x128xbf16>
    %12 = vector.shape_cast %11 : vector<1x128x128xbf16> to vector<128x128xbf16>
    %cst_12 = arith.constant dense<0.000000e+00> : vector<256x128xf32>
    %13 = tpu.matmul %10, %12, %cst_12 {dimension_numbers = #tpu.dot_dimension_numbers<[1], [0], [0], [1], [0, 0, 1, 1], [], []>} : vector<256x128xbf16>, vector<128x128xbf16>, vector<256x128xf32> -> vector<256x128xf32>
    %14 = arith.addf %6, %13 : vector<256x128xf32>
    %c0_13 = arith.constant 0 : index
    %c0_14 = arith.constant 0 : index
    %c2 = arith.constant 2 : index
    %c0_15 = arith.constant 0 : index
    %15 = vector.load %arg1[%c0_13, %c0_14, %c2, %c0_15] : memref<1x18x18x128xf32, #tpu.memory_space<vmem>>, vector<1x16x16x128xf32>
    %16 = vector.shape_cast %15 : vector<1x16x16x128xf32> to vector<16x16x128xf32>
    %17 = arith.truncf %16 : vector<16x16x128xf32> to vector<16x16x128xbf16>
    %18 = vector.shape_cast %17 : vector<16x16x128xbf16> to vector<256x128xbf16>
    %c2_16 = arith.constant 2 : index
    %c0_17 = arith.constant 0 : index
    %c0_18 = arith.constant 0 : index
    %19 = vector.load %arg2[%c2_16, %c0_17, %c0_18] : memref<9x128x128xbf16, #tpu.memory_space<vmem>>, vector<1x128x128xbf16>
    %20 = vector.shape_cast %19 : vector<1x128x128xbf16> to vector<128x128xbf16>
    %cst_19 = arith.constant dense<0.000000e+00> : vector<256x128xf32>
    %21 = tpu.matmul %18, %20, %cst_19 {dimension_numbers = #tpu.dot_dimension_numbers<[1], [0], [0], [1], [0, 0, 1, 1], [], []>} : vector<256x128xbf16>, vector<128x128xbf16>, vector<256x128xf32> -> vector<256x128xf32>
    %22 = arith.addf %14, %21 : vector<256x128xf32>
    %c0_20 = arith.constant 0 : index
    %c1_21 = arith.constant 1 : index
    %c0_22 = arith.constant 0 : index
    %c0_23 = arith.constant 0 : index
    %23 = vector.load %arg1[%c0_20, %c1_21, %c0_22, %c0_23] : memref<1x18x18x128xf32, #tpu.memory_space<vmem>>, vector<1x16x16x128xf32>
    %24 = vector.shape_cast %23 : vector<1x16x16x128xf32> to vector<16x16x128xf32>
    %25 = arith.truncf %24 : vector<16x16x128xf32> to vector<16x16x128xbf16>
    %26 = vector.shape_cast %25 : vector<16x16x128xbf16> to vector<256x128xbf16>
    %c3 = arith.constant 3 : index
    %c0_24 = arith.constant 0 : index
    %c0_25 = arith.constant 0 : index
    %27 = vector.load %arg2[%c3, %c0_24, %c0_25] : memref<9x128x128xbf16, #tpu.memory_space<vmem>>, vector<1x128x128xbf16>
    %28 = vector.shape_cast %27 : vector<1x128x128xbf16> to vector<128x128xbf16>
    %cst_26 = arith.constant dense<0.000000e+00> : vector<256x128xf32>
    %29 = tpu.matmul %26, %28, %cst_26 {dimension_numbers = #tpu.dot_dimension_numbers<[1], [0], [0], [1], [0, 0, 1, 1], [], []>} : vector<256x128xbf16>, vector<128x128xbf16>, vector<256x128xf32> -> vector<256x128xf32>
    %30 = arith.addf %22, %29 : vector<256x128xf32>
    %c0_27 = arith.constant 0 : index
    %c1_28 = arith.constant 1 : index
    %c1_29 = arith.constant 1 : index
    %c0_30 = arith.constant 0 : index
    %31 = vector.load %arg1[%c0_27, %c1_28, %c1_29, %c0_30] : memref<1x18x18x128xf32, #tpu.memory_space<vmem>>, vector<1x16x16x128xf32>
    %32 = vector.shape_cast %31 : vector<1x16x16x128xf32> to vector<16x16x128xf32>
    %33 = arith.truncf %32 : vector<16x16x128xf32> to vector<16x16x128xbf16>
    %34 = vector.shape_cast %33 : vector<16x16x128xbf16> to vector<256x128xbf16>
    %c4 = arith.constant 4 : index
    %c0_31 = arith.constant 0 : index
    %c0_32 = arith.constant 0 : index
    %35 = vector.load %arg2[%c4, %c0_31, %c0_32] : memref<9x128x128xbf16, #tpu.memory_space<vmem>>, vector<1x128x128xbf16>
    %36 = vector.shape_cast %35 : vector<1x128x128xbf16> to vector<128x128xbf16>
    %cst_33 = arith.constant dense<0.000000e+00> : vector<256x128xf32>
    %37 = tpu.matmul %34, %36, %cst_33 {dimension_numbers = #tpu.dot_dimension_numbers<[1], [0], [0], [1], [0, 0, 1, 1], [], []>} : vector<256x128xbf16>, vector<128x128xbf16>, vector<256x128xf32> -> vector<256x128xf32>
    %38 = arith.addf %30, %37 : vector<256x128xf32>
    %c0_34 = arith.constant 0 : index
    %c1_35 = arith.constant 1 : index
    %c2_36 = arith.constant 2 : index
    %c0_37 = arith.constant 0 : index
    %39 = vector.load %arg1[%c0_34, %c1_35, %c2_36, %c0_37] : memref<1x18x18x128xf32, #tpu.memory_space<vmem>>, vector<1x16x16x128xf32>
    %40 = vector.shape_cast %39 : vector<1x16x16x128xf32> to vector<16x16x128xf32>
    %41 = arith.truncf %40 : vector<16x16x128xf32> to vector<16x16x128xbf16>
    %42 = vector.shape_cast %41 : vector<16x16x128xbf16> to vector<256x128xbf16>
    %c5 = arith.constant 5 : index
    %c0_38 = arith.constant 0 : index
    %c0_39 = arith.constant 0 : index
    %43 = vector.load %arg2[%c5, %c0_38, %c0_39] : memref<9x128x128xbf16, #tpu.memory_space<vmem>>, vector<1x128x128xbf16>
    %44 = vector.shape_cast %43 : vector<1x128x128xbf16> to vector<128x128xbf16>
    %cst_40 = arith.constant dense<0.000000e+00> : vector<256x128xf32>
    %45 = tpu.matmul %42, %44, %cst_40 {dimension_numbers = #tpu.dot_dimension_numbers<[1], [0], [0], [1], [0, 0, 1, 1], [], []>} : vector<256x128xbf16>, vector<128x128xbf16>, vector<256x128xf32> -> vector<256x128xf32>
    %46 = arith.addf %38, %45 : vector<256x128xf32>
    %c0_41 = arith.constant 0 : index
    %c2_42 = arith.constant 2 : index
    %c0_43 = arith.constant 0 : index
    %c0_44 = arith.constant 0 : index
    %47 = vector.load %arg1[%c0_41, %c2_42, %c0_43, %c0_44] : memref<1x18x18x128xf32, #tpu.memory_space<vmem>>, vector<1x16x16x128xf32>
    %48 = vector.shape_cast %47 : vector<1x16x16x128xf32> to vector<16x16x128xf32>
    %49 = arith.truncf %48 : vector<16x16x128xf32> to vector<16x16x128xbf16>
    %50 = vector.shape_cast %49 : vector<16x16x128xbf16> to vector<256x128xbf16>
    %c6 = arith.constant 6 : index
    %c0_45 = arith.constant 0 : index
    %c0_46 = arith.constant 0 : index
    %51 = vector.load %arg2[%c6, %c0_45, %c0_46] : memref<9x128x128xbf16, #tpu.memory_space<vmem>>, vector<1x128x128xbf16>
    %52 = vector.shape_cast %51 : vector<1x128x128xbf16> to vector<128x128xbf16>
    %cst_47 = arith.constant dense<0.000000e+00> : vector<256x128xf32>
    %53 = tpu.matmul %50, %52, %cst_47 {dimension_numbers = #tpu.dot_dimension_numbers<[1], [0], [0], [1], [0, 0, 1, 1], [], []>} : vector<256x128xbf16>, vector<128x128xbf16>, vector<256x128xf32> -> vector<256x128xf32>
    %54 = arith.addf %46, %53 : vector<256x128xf32>
    %c0_48 = arith.constant 0 : index
    %c2_49 = arith.constant 2 : index
    %c1_50 = arith.constant 1 : index
    %c0_51 = arith.constant 0 : index
    %55 = vector.load %arg1[%c0_48, %c2_49, %c1_50, %c0_51] : memref<1x18x18x128xf32, #tpu.memory_space<vmem>>, vector<1x16x16x128xf32>
    %56 = vector.shape_cast %55 : vector<1x16x16x128xf32> to vector<16x16x128xf32>
    %57 = arith.truncf %56 : vector<16x16x128xf32> to vector<16x16x128xbf16>
    %58 = vector.shape_cast %57 : vector<16x16x128xbf16> to vector<256x128xbf16>
    %c7 = arith.constant 7 : index
    %c0_52 = arith.constant 0 : index
    %c0_53 = arith.constant 0 : index
    %59 = vector.load %arg2[%c7, %c0_52, %c0_53] : memref<9x128x128xbf16, #tpu.memory_space<vmem>>, vector<1x128x128xbf16>
    %60 = vector.shape_cast %59 : vector<1x128x128xbf16> to vector<128x128xbf16>
    %cst_54 = arith.constant dense<0.000000e+00> : vector<256x128xf32>
    %61 = tpu.matmul %58, %60, %cst_54 {dimension_numbers = #tpu.dot_dimension_numbers<[1], [0], [0], [1], [0, 0, 1, 1], [], []>} : vector<256x128xbf16>, vector<128x128xbf16>, vector<256x128xf32> -> vector<256x128xf32>
    %62 = arith.addf %54, %61 : vector<256x128xf32>
    %c0_55 = arith.constant 0 : index
    %c2_56 = arith.constant 2 : index
    %c2_57 = arith.constant 2 : index
    %c0_58 = arith.constant 0 : index
    %63 = vector.load %arg1[%c0_55, %c2_56, %c2_57, %c0_58] : memref<1x18x18x128xf32, #tpu.memory_space<vmem>>, vector<1x16x16x128xf32>
    %64 = vector.shape_cast %63 : vector<1x16x16x128xf32> to vector<16x16x128xf32>
    %65 = arith.truncf %64 : vector<16x16x128xf32> to vector<16x16x128xbf16>
    %66 = vector.shape_cast %65 : vector<16x16x128xbf16> to vector<256x128xbf16>
    %c8 = arith.constant 8 : index
    %c0_59 = arith.constant 0 : index
    %c0_60 = arith.constant 0 : index
    %67 = vector.load %arg2[%c8, %c0_59, %c0_60] : memref<9x128x128xbf16, #tpu.memory_space<vmem>>, vector<1x128x128xbf16>
    %68 = vector.shape_cast %67 : vector<1x128x128xbf16> to vector<128x128xbf16>
    %cst_61 = arith.constant dense<0.000000e+00> : vector<256x128xf32>
    %69 = tpu.matmul %66, %68, %cst_61 {dimension_numbers = #tpu.dot_dimension_numbers<[1], [0], [0], [1], [0, 0, 1, 1], [], []>} : vector<256x128xbf16>, vector<128x128xbf16>, vector<256x128xf32> -> vector<256x128xf32>
    %70 = arith.addf %62, %69 : vector<256x128xf32>
    %71 = arith.truncf %70 : vector<256x128xf32> to vector<256x128xbf16>
    %c0_62 = arith.constant 0 : index
    %c0_63 = arith.constant 0 : index
    %72 = vector.load %arg3[%c0_62, %c0_63] : memref<256x128xbf16, #tpu.memory_space<vmem>>, vector<256x128xbf16>
    tpu.vector_store %arg3[%c0_62, %c0_63], %71 {strides = array<i32>} : memref<256x128xbf16, #tpu.memory_space<vmem>>, vector<256x128xbf16>,
    return
  }
  func.func @transform_0(%arg0: i32) -> (i32, i32, i32, i32) {
    %c0_i32 = arith.constant 0 : i32
    %c0_i32_0 = arith.constant 0 : i32
    %c0_i32_1 = arith.constant 0 : i32
    %c0_i32_2 = arith.constant 0 : i32
    return %arg0, %c0_i32, %c0_i32_0, %c0_i32_1 : i32, i32, i32, i32
  }
  func.func @transform_1(%arg0: i32) -> (i32, i32, i32) {
    %c0_i32 = arith.constant 0 : i32
    %c0_i32_0 = arith.constant 0 : i32
    %c0_i32_1 = arith.constant 0 : i32
    %c0_i32_2 = arith.constant 0 : i32
    return %c0_i32, %c0_i32_0, %c0_i32_1 : i32, i32, i32
  }
  func.func @transform_2(%arg0: i32) -> (i32, i32) {
    %c0_i32 = arith.constant 0 : i32
    %c0_i32_0 = arith.constant 0 : i32
    return %arg0, %c0_i32 : i32, i32
  }
}

module attributes {stable_mosaic.version = 11 : i64} {
  func.func @_normal_cell_kernel(%arg0: i32, %arg1: memref<256x128xbf16, #tpu.memory_space<vmem>>, %arg2: memref<256x128xbf16, #tpu.memory_space<vmem>>, %arg3: memref<128x128xbf16, #tpu.memory_space<vmem>>, %arg4: memref<128x128xbf16, #tpu.memory_space<vmem>>, %arg5: memref<256x256xbf16, #tpu.memory_space<vmem>>) attributes {dimension_semantics = [#tpu.dimension_semantics<parallel>], iteration_bounds = array<i64: 2>, scalar_prefetch = 0 : i64, scratch_operands = 0 : i64, tpu.core_type = #tpu.core_type<tc>, window_params = [{transform_indices = @transform_0, window_bounds = array<i64: 256, 128>}, {transform_indices = @transform_1, window_bounds = array<i64: 256, 128>}, {pipeline_mode = #tpu.pipeline_mode<synchronous>, transform_indices = @transform_2, window_bounds = array<i64: 128, 128>}, {pipeline_mode = #tpu.pipeline_mode<synchronous>, transform_indices = @transform_3, window_bounds = array<i64: 128, 128>}, {transform_indices = @transform_4, window_bounds = array<i64: 256, 256>}]} {
    %c0 = arith.constant 0 : index
    %c0_0 = arith.constant 0 : index
    %0 = vector.load %arg1[%c0, %c0_0] : memref<256x128xbf16, #tpu.memory_space<vmem>>, vector<256x128xbf16>
    %cst = arith.constant 0.000000e+00 : bf16
    %1 = vector.broadcast %cst : bf16 to vector<256x128xbf16>
    %2 = arith.maximumf %0, %1 : vector<256x128xbf16>
    %c0_1 = arith.constant 0 : index
    %c0_2 = arith.constant 0 : index
    %3 = vector.load %arg3[%c0_1, %c0_2] : memref<128x128xbf16, #tpu.memory_space<vmem>>, vector<128x128xbf16>
    %cst_3 = arith.constant dense<0.000000e+00> : vector<256x128xf32>
    %4 = tpu.matmul %2, %3, %cst_3 {dimension_numbers = #tpu.dot_dimension_numbers<[1], [0], [0], [1], [0, 0, 1, 1], [], []>} : vector<256x128xbf16>, vector<128x128xbf16>, vector<256x128xf32> -> vector<256x128xf32>
    %c0_4 = arith.constant 0 : index
    %c0_5 = arith.constant 0 : index
    %5 = vector.load %arg2[%c0_4, %c0_5] : memref<256x128xbf16, #tpu.memory_space<vmem>>, vector<256x128xbf16>
    %cst_6 = arith.constant 0.000000e+00 : bf16
    %6 = vector.broadcast %cst_6 : bf16 to vector<256x128xbf16>
    %7 = arith.maximumf %5, %6 : vector<256x128xbf16>
    %c0_7 = arith.constant 0 : index
    %c0_8 = arith.constant 0 : index
    %8 = vector.load %arg4[%c0_7, %c0_8] : memref<128x128xbf16, #tpu.memory_space<vmem>>, vector<128x128xbf16>
    %cst_9 = arith.constant dense<0.000000e+00> : vector<256x128xf32>
    %9 = tpu.matmul %7, %8, %cst_9 {dimension_numbers = #tpu.dot_dimension_numbers<[1], [0], [0], [1], [0, 0, 1, 1], [], []>} : vector<256x128xbf16>, vector<128x128xbf16>, vector<256x128xf32> -> vector<256x128xf32>
    %10 = arith.addf %4, %9 : vector<256x128xf32>
    %11 = arith.truncf %10 : vector<256x128xf32> to vector<256x128xbf16>
    %12 = tpu.concatenate %11, %11 in 1 : vector<256x128xbf16>, vector<256x128xbf16> -> vector<256x256xbf16>
    %c0_10 = arith.constant 0 : index
    %c0_11 = arith.constant 0 : index
    %13 = vector.load %arg5[%c0_10, %c0_11] : memref<256x256xbf16, #tpu.memory_space<vmem>>, vector<256x256xbf16>
    tpu.vector_store %arg5[%c0_10, %c0_11], %12 {strides = array<i32>} : memref<256x256xbf16, #tpu.memory_space<vmem>>, vector<256x256xbf16>,
    return
  }
  func.func @transform_0(%arg0: i32) -> (i32, i32) {
    %c0_i32 = arith.constant 0 : i32
    %c0_i32_0 = arith.constant 0 : i32
    return %arg0, %c0_i32 : i32, i32
  }
  func.func @transform_1(%arg0: i32) -> (i32, i32) {
    %c0_i32 = arith.constant 0 : i32
    %c0_i32_0 = arith.constant 0 : i32
    return %arg0, %c0_i32 : i32, i32
  }
  func.func @transform_2(%arg0: i32) -> (i32, i32) {
    %c0_i32 = arith.constant 0 : i32
    %c0_i32_0 = arith.constant 0 : i32
    %c0_i32_1 = arith.constant 0 : i32
    return %c0_i32, %c0_i32_0 : i32, i32
  }
  func.func @transform_3(%arg0: i32) -> (i32, i32) {
    %c0_i32 = arith.constant 0 : i32
    %c0_i32_0 = arith.constant 0 : i32
    %c0_i32_1 = arith.constant 0 : i32
    return %c0_i32, %c0_i32_0 : i32, i32
  }
  func.func @transform_4(%arg0: i32) -> (i32, i32) {
    %c0_i32 = arith.constant 0 : i32
    %c0_i32_0 = arith.constant 0 : i32
    return %arg0, %c0_i32 : i32, i32
  }
}

module attributes {stable_mosaic.version = 11 : i64} {
  func.func @_reduce_cell_kernel(%arg0: i32, %arg1: memref<64x128xbf16, #tpu.memory_space<vmem>>, %arg2: memref<64x128xbf16, #tpu.memory_space<vmem>>, %arg3: memref<64x256xbf16, #tpu.memory_space<vmem>>, %arg4: memref<64x256xbf16, #tpu.memory_space<vmem>>, %arg5: memref<128x128xbf16, #tpu.memory_space<vmem>>, %arg6: memref<256x128xbf16, #tpu.memory_space<vmem>>, %arg7: memref<128x256xbf16, #tpu.memory_space<vmem>>, %arg8: memref<128x256xbf16, #tpu.memory_space<vmem>>, %arg9: memref<128x256xbf16, #tpu.memory_space<vmem>>, %arg10: memref<128x256xbf16, #tpu.memory_space<vmem>>, %arg11: memref<64x256xbf16, #tpu.memory_space<vmem>>) attributes {dimension_semantics = [#tpu.dimension_semantics<parallel>], iteration_bounds = array<i64: 2>, scalar_prefetch = 0 : i64, scratch_operands = 0 : i64, tpu.core_type = #tpu.core_type<tc>, window_params = [{transform_indices = @transform_0, window_bounds = array<i64: 64, 128>}, {transform_indices = @transform_1, window_bounds = array<i64: 64, 128>}, {transform_indices = @transform_2, window_bounds = array<i64: 64, 256>}, {transform_indices = @transform_3, window_bounds = array<i64: 64, 256>}, {pipeline_mode = #tpu.pipeline_mode<synchronous>, transform_indices = @transform_4, window_bounds = array<i64: 128, 128>}, {pipeline_mode = #tpu.pipeline_mode<synchronous>, transform_indices = @transform_5, window_bounds = array<i64: 256, 128>}, {pipeline_mode = #tpu.pipeline_mode<synchronous>, transform_indices = @transform_6, window_bounds = array<i64: 128, 256>}, {pipeline_mode = #tpu.pipeline_mode<synchronous>, transform_indices = @transform_7, window_bounds = array<i64: 128, 256>}, {pipeline_mode = #tpu.pipeline_mode<synchronous>, transform_indices = @transform_8, window_bounds = array<i64: 128, 256>}, {pipeline_mode = #tpu.pipeline_mode<synchronous>, transform_indices = @transform_9, window_bounds = array<i64: 128, 256>}, {transform_indices = @transform_10, window_bounds = array<i64: 64, 256>}]} {
    %c0 = arith.constant 0 : index
    %c0_0 = arith.constant 0 : index
    %0 = vector.load %arg1[%c0, %c0_0] : memref<64x128xbf16, #tpu.memory_space<vmem>>, vector<64x128xbf16>
    %cst = arith.constant 0.000000e+00 : bf16
    %1 = vector.broadcast %cst : bf16 to vector<64x128xbf16>
    %2 = arith.maximumf %0, %1 : vector<64x128xbf16>
    %c0_1 = arith.constant 0 : index
    %c0_2 = arith.constant 0 : index
    %3 = vector.load %arg5[%c0_1, %c0_2] : memref<128x128xbf16, #tpu.memory_space<vmem>>, vector<128x128xbf16>
    %cst_3 = arith.constant dense<0.000000e+00> : vector<64x128xf32>
    %4 = tpu.matmul %2, %3, %cst_3 {dimension_numbers = #tpu.dot_dimension_numbers<[1], [0], [0], [1], [0, 0, 1, 1], [], []>} : vector<64x128xbf16>, vector<128x128xbf16>, vector<64x128xf32> -> vector<64x128xf32>
    %c0_4 = arith.constant 0 : index
    %c0_5 = arith.constant 0 : index
    %5 = vector.load %arg2[%c0_4, %c0_5] : memref<64x128xbf16, #tpu.memory_space<vmem>>, vector<64x128xbf16>
    %cst_6 = arith.constant 0.000000e+00 : bf16
    %6 = vector.broadcast %cst_6 : bf16 to vector<64x128xbf16>
    %7 = arith.maximumf %5, %6 : vector<64x128xbf16>
    %c0_7 = arith.constant 0 : index
    %c0_8 = arith.constant 0 : index
    %8 = vector.load %arg5[%c0_7, %c0_8] : memref<128x128xbf16, #tpu.memory_space<vmem>>, vector<128x128xbf16>
    %cst_9 = arith.constant dense<0.000000e+00> : vector<64x128xf32>
    %9 = tpu.matmul %7, %8, %cst_9 {dimension_numbers = #tpu.dot_dimension_numbers<[1], [0], [0], [1], [0, 0, 1, 1], [], []>} : vector<64x128xbf16>, vector<128x128xbf16>, vector<64x128xf32> -> vector<64x128xf32>
    %c0_10 = arith.constant 0 : index
    %c0_11 = arith.constant 0 : index
    %10 = vector.load %arg3[%c0_10, %c0_11] : memref<64x256xbf16, #tpu.memory_space<vmem>>, vector<64x256xbf16>
    %cst_12 = arith.constant 0.000000e+00 : bf16
    %11 = vector.broadcast %cst_12 : bf16 to vector<64x256xbf16>
    %12 = arith.maximumf %10, %11 : vector<64x256xbf16>
    %c0_13 = arith.constant 0 : index
    %c0_14 = arith.constant 0 : index
    %13 = vector.load %arg6[%c0_13, %c0_14] : memref<256x128xbf16, #tpu.memory_space<vmem>>, vector<256x128xbf16>
    %cst_15 = arith.constant dense<0.000000e+00> : vector<64x128xf32>
    %14 = tpu.matmul %12, %13, %cst_15 {dimension_numbers = #tpu.dot_dimension_numbers<[1], [0], [0], [1], [0, 0, 1, 1], [], []>} : vector<64x256xbf16>, vector<256x128xbf16>, vector<64x128xf32> -> vector<64x128xf32>
    %c0_16 = arith.constant 0 : index
    %c0_17 = arith.constant 0 : index
    %15 = vector.load %arg4[%c0_16, %c0_17] : memref<64x256xbf16, #tpu.memory_space<vmem>>, vector<64x256xbf16>
    %cst_18 = arith.constant 0.000000e+00 : bf16
    %16 = vector.broadcast %cst_18 : bf16 to vector<64x256xbf16>
    %17 = arith.maximumf %15, %16 : vector<64x256xbf16>
    %c0_19 = arith.constant 0 : index
    %c0_20 = arith.constant 0 : index
    %18 = vector.load %arg6[%c0_19, %c0_20] : memref<256x128xbf16, #tpu.memory_space<vmem>>, vector<256x128xbf16>
    %cst_21 = arith.constant dense<0.000000e+00> : vector<64x128xf32>
    %19 = tpu.matmul %17, %18, %cst_21 {dimension_numbers = #tpu.dot_dimension_numbers<[1], [0], [0], [1], [0, 0, 1, 1], [], []>} : vector<64x256xbf16>, vector<256x128xbf16>, vector<64x128xf32> -> vector<64x128xf32>
    %cst_22 = arith.constant 0.000000e+00 : f32
    %20 = vector.broadcast %cst_22 : f32 to vector<64x128xf32>
    %21 = arith.maximumf %4, %20 : vector<64x128xf32>
    %22 = arith.truncf %21 : vector<64x128xf32> to vector<64x128xbf16>
    %c0_23 = arith.constant 0 : index
    %c0_24 = arith.constant 0 : index
    %23 = vector.load %arg7[%c0_23, %c0_24] : memref<128x256xbf16, #tpu.memory_space<vmem>>, vector<128x256xbf16>
    %cst_25 = arith.constant dense<0.000000e+00> : vector<64x256xf32>
    %24 = tpu.matmul %22, %23, %cst_25 {dimension_numbers = #tpu.dot_dimension_numbers<[1], [0], [0], [1], [0, 0, 1, 1], [], []>} : vector<64x128xbf16>, vector<128x256xbf16>, vector<64x256xf32> -> vector<64x256xf32>
    %cst_26 = arith.constant 0.000000e+00 : f32
    %25 = vector.broadcast %cst_26 : f32 to vector<64x128xf32>
    %26 = arith.maximumf %9, %25 : vector<64x128xf32>
    %27 = arith.truncf %26 : vector<64x128xf32> to vector<64x128xbf16>
    %c0_27 = arith.constant 0 : index
    %c0_28 = arith.constant 0 : index
    %28 = vector.load %arg8[%c0_27, %c0_28] : memref<128x256xbf16, #tpu.memory_space<vmem>>, vector<128x256xbf16>
    %cst_29 = arith.constant dense<0.000000e+00> : vector<64x256xf32>
    %29 = tpu.matmul %27, %28, %cst_29 {dimension_numbers = #tpu.dot_dimension_numbers<[1], [0], [0], [1], [0, 0, 1, 1], [], []>} : vector<64x128xbf16>, vector<128x256xbf16>, vector<64x256xf32> -> vector<64x256xf32>
    %30 = arith.addf %24, %29 : vector<64x256xf32>
    %cst_30 = arith.constant 0.000000e+00 : f32
    %31 = vector.broadcast %cst_30 : f32 to vector<64x128xf32>
    %32 = arith.maximumf %14, %31 : vector<64x128xf32>
    %33 = arith.truncf %32 : vector<64x128xf32> to vector<64x128xbf16>
    %c0_31 = arith.constant 0 : index
    %c0_32 = arith.constant 0 : index
    %34 = vector.load %arg9[%c0_31, %c0_32] : memref<128x256xbf16, #tpu.memory_space<vmem>>, vector<128x256xbf16>
    %cst_33 = arith.constant dense<0.000000e+00> : vector<64x256xf32>
    %35 = tpu.matmul %33, %34, %cst_33 {dimension_numbers = #tpu.dot_dimension_numbers<[1], [0], [0], [1], [0, 0, 1, 1], [], []>} : vector<64x128xbf16>, vector<128x256xbf16>, vector<64x256xf32> -> vector<64x256xf32>
    %36 = arith.addf %30, %35 : vector<64x256xf32>
    %cst_34 = arith.constant 0.000000e+00 : f32
    %37 = vector.broadcast %cst_34 : f32 to vector<64x128xf32>
    %38 = arith.maximumf %19, %37 : vector<64x128xf32>
    %39 = arith.truncf %38 : vector<64x128xf32> to vector<64x128xbf16>
    %c0_35 = arith.constant 0 : index
    %c0_36 = arith.constant 0 : index
    %40 = vector.load %arg10[%c0_35, %c0_36] : memref<128x256xbf16, #tpu.memory_space<vmem>>, vector<128x256xbf16>
    %cst_37 = arith.constant dense<0.000000e+00> : vector<64x256xf32>
    %41 = tpu.matmul %39, %40, %cst_37 {dimension_numbers = #tpu.dot_dimension_numbers<[1], [0], [0], [1], [0, 0, 1, 1], [], []>} : vector<64x128xbf16>, vector<128x256xbf16>, vector<64x256xf32> -> vector<64x256xf32>
    %42 = arith.addf %36, %41 : vector<64x256xf32>
    %43 = arith.truncf %42 : vector<64x256xf32> to vector<64x256xbf16>
    %c0_38 = arith.constant 0 : index
    %c0_39 = arith.constant 0 : index
    %44 = vector.load %arg11[%c0_38, %c0_39] : memref<64x256xbf16, #tpu.memory_space<vmem>>, vector<64x256xbf16>
    tpu.vector_store %arg11[%c0_38, %c0_39], %43 {strides = array<i32>} : memref<64x256xbf16, #tpu.memory_space<vmem>>, vector<64x256xbf16>,
    return
  }
  func.func @transform_0(%arg0: i32) -> (i32, i32) {
    %c0_i32 = arith.constant 0 : i32
    %c0_i32_0 = arith.constant 0 : i32
    return %arg0, %c0_i32 : i32, i32
  }
  func.func @transform_1(%arg0: i32) -> (i32, i32) {
    %c0_i32 = arith.constant 0 : i32
    %c0_i32_0 = arith.constant 0 : i32
    return %arg0, %c0_i32 : i32, i32
  }
  func.func @transform_2(%arg0: i32) -> (i32, i32) {
    %c0_i32 = arith.constant 0 : i32
    %c0_i32_0 = arith.constant 0 : i32
    return %arg0, %c0_i32 : i32, i32
  }
  func.func @transform_3(%arg0: i32) -> (i32, i32) {
    %c0_i32 = arith.constant 0 : i32
    %c0_i32_0 = arith.constant 0 : i32
    return %arg0, %c0_i32 : i32, i32
  }
  func.func @transform_4(%arg0: i32) -> (i32, i32) {
    %c0_i32 = arith.constant 0 : i32
    %c0_i32_0 = arith.constant 0 : i32
    %c0_i32_1 = arith.constant 0 : i32
    return %c0_i32, %c0_i32_0 : i32, i32
  }
  func.func @transform_5(%arg0: i32) -> (i32, i32) {
    %c0_i32 = arith.constant 0 : i32
    %c0_i32_0 = arith.constant 0 : i32
    %c0_i32_1 = arith.constant 0 : i32
    return %c0_i32, %c0_i32_0 : i32, i32
  }
  func.func @transform_6(%arg0: i32) -> (i32, i32) {
    %c0_i32 = arith.constant 0 : i32
    %c0_i32_0 = arith.constant 0 : i32
    %c0_i32_1 = arith.constant 0 : i32
    return %c0_i32, %c0_i32_0 : i32, i32
  }
  func.func @transform_7(%arg0: i32) -> (i32, i32) {
    %c0_i32 = arith.constant 0 : i32
    %c0_i32_0 = arith.constant 0 : i32
    %c0_i32_1 = arith.constant 0 : i32
    return %c0_i32, %c0_i32_0 : i32, i32
  }
  func.func @transform_8(%arg0: i32) -> (i32, i32) {
    %c0_i32 = arith.constant 0 : i32
    %c0_i32_0 = arith.constant 0 : i32
    %c0_i32_1 = arith.constant 0 : i32
    return %c0_i32, %c0_i32_0 : i32, i32
  }
  func.func @transform_9(%arg0: i32) -> (i32, i32) {
    %c0_i32 = arith.constant 0 : i32
    %c0_i32_0 = arith.constant 0 : i32
    %c0_i32_1 = arith.constant 0 : i32
    return %c0_i32, %c0_i32_0 : i32, i32
  }
  func.func @transform_10(%arg0: i32) -> (i32, i32) {
    %c0_i32 = arith.constant 0 : i32
    %c0_i32_0 = arith.constant 0 : i32
    return %arg0, %c0_i32 : i32, i32
  }
}

module attributes {stable_mosaic.version = 11 : i64} {
  func.func @_heads_kernel(%arg0: i32, %arg1: memref<2x16x256xbf16, #tpu.memory_space<vmem>>, %arg2: memref<2x256x128xbf16, #tpu.memory_space<vmem>>, %arg3: memref<2x1x128xf32, #tpu.memory_space<vmem>>, %arg4: memref<2x2x128xf32, #tpu.memory_space<vmem>>) attributes {dimension_semantics = [#tpu.dimension_semantics<arbitrary>], iteration_bounds = array<i64: 1>, scalar_prefetch = 0 : i64, scratch_operands = 0 : i64, tpu.core_type = #tpu.core_type<tc>, window_params = [{pipeline_mode = #tpu.pipeline_mode<synchronous>, transform_indices = @transform_0, window_bounds = array<i64: 2, 16, 256>}, {pipeline_mode = #tpu.pipeline_mode<synchronous>, transform_indices = @transform_1, window_bounds = array<i64: 2, 256, 128>}, {pipeline_mode = #tpu.pipeline_mode<synchronous>, transform_indices = @transform_2, window_bounds = array<i64: 2, 1, 128>}, {pipeline_mode = #tpu.pipeline_mode<synchronous>, transform_indices = @transform_3, window_bounds = array<i64: 2, 2, 128>}]} {
    %c0 = arith.constant 0 : index
    %c0_0 = arith.constant 0 : index
    %c0_1 = arith.constant 0 : index
    %0 = vector.load %arg1[%c0, %c0_0, %c0_1] : memref<2x16x256xbf16, #tpu.memory_space<vmem>>, vector<2x16x256xbf16>
    %1 = arith.extf %0 : vector<2x16x256xbf16> to vector<2x16x256xf32>
    %cst = arith.constant dense<0.000000e+00> : vector<2x256xf32>
    %2 = vector.multi_reduction <add>, %1, %cst [1] : vector<2x16x256xf32> to vector<2x256xf32>
    %cst_2 = arith.constant 6.250000e-02 : f32
    %3 = vector.broadcast %cst_2 : f32 to vector<2x256xf32>
    %4 = arith.mulf %2, %3 : vector<2x256xf32>
    %cst_3 = arith.constant 0.000000e+00 : f32
    %5 = vector.broadcast %cst_3 : f32 to vector<2x16x256xf32>
    %6 = arith.maximumf %1, %5 : vector<2x16x256xf32>
    %cst_4 = arith.constant dense<0.000000e+00> : vector<2x256xf32>
    %7 = vector.multi_reduction <add>, %6, %cst_4 [1] : vector<2x16x256xf32> to vector<2x256xf32>
    %cst_5 = arith.constant 6.250000e-02 : f32
    %8 = vector.broadcast %cst_5 : f32 to vector<2x256xf32>
    %9 = arith.mulf %7, %8 : vector<2x256xf32>
    %10 = arith.truncf %9 : vector<2x256xf32> to vector<2x256xbf16>
    %c0_6 = arith.constant 0 : index
    %c0_7 = arith.constant 0 : index
    %c0_8 = arith.constant 0 : index
    %11 = vector.load %arg2[%c0_6, %c0_7, %c0_8] : memref<2x256x128xbf16, #tpu.memory_space<vmem>>, vector<1x256x128xbf16>
    %12 = vector.shape_cast %11 : vector<1x256x128xbf16> to vector<256x128xbf16>
    %cst_9 = arith.constant dense<0.000000e+00> : vector<2x128xf32>
    %13 = tpu.matmul %10, %12, %cst_9 {dimension_numbers = #tpu.dot_dimension_numbers<[1], [0], [0], [1], [0, 0, 1, 1], [], []>} : vector<2x256xbf16>, vector<256x128xbf16>, vector<2x128xf32> -> vector<2x128xf32>
    %c0_10 = arith.constant 0 : index
    %c0_11 = arith.constant 0 : index
    %c0_12 = arith.constant 0 : index
    %14 = vector.load %arg3[%c0_10, %c0_11, %c0_12] : memref<2x1x128xf32, #tpu.memory_space<vmem>>, vector<1x1x128xf32>
    %15 = vector.shape_cast %14 : vector<1x1x128xf32> to vector<1x128xf32>
    %16 = vector.broadcast %15 : vector<1x128xf32> to vector<2x128xf32>
    %17 = arith.addf %13, %16 : vector<2x128xf32>
    %c0_13 = arith.constant 0 : index
    %c0_14 = arith.constant 0 : index
    %c0_15 = arith.constant 0 : index
    %18 = vector.load %arg4[%c0_13, %c0_14, %c0_15] : memref<2x2x128xf32, #tpu.memory_space<vmem>>, vector<1x2x128xf32>
    %19 = vector.shape_cast %18 : vector<1x2x128xf32> to vector<2x128xf32>
    %20 = vector.shape_cast %17 : vector<2x128xf32> to vector<1x2x128xf32>
    tpu.vector_store %arg4[%c0_13, %c0_14, %c0_15], %20 {strides = array<i32>} : memref<2x2x128xf32, #tpu.memory_space<vmem>>, vector<1x2x128xf32>,
    %21 = arith.truncf %4 : vector<2x256xf32> to vector<2x256xbf16>
    %c1 = arith.constant 1 : index
    %c0_16 = arith.constant 0 : index
    %c0_17 = arith.constant 0 : index
    %22 = vector.load %arg2[%c1, %c0_16, %c0_17] : memref<2x256x128xbf16, #tpu.memory_space<vmem>>, vector<1x256x128xbf16>
    %23 = vector.shape_cast %22 : vector<1x256x128xbf16> to vector<256x128xbf16>
    %cst_18 = arith.constant dense<0.000000e+00> : vector<2x128xf32>
    %24 = tpu.matmul %21, %23, %cst_18 {dimension_numbers = #tpu.dot_dimension_numbers<[1], [0], [0], [1], [0, 0, 1, 1], [], []>} : vector<2x256xbf16>, vector<256x128xbf16>, vector<2x128xf32> -> vector<2x128xf32>
    %c1_19 = arith.constant 1 : index
    %c0_20 = arith.constant 0 : index
    %c0_21 = arith.constant 0 : index
    %25 = vector.load %arg3[%c1_19, %c0_20, %c0_21] : memref<2x1x128xf32, #tpu.memory_space<vmem>>, vector<1x1x128xf32>
    %26 = vector.shape_cast %25 : vector<1x1x128xf32> to vector<1x128xf32>
    %27 = vector.broadcast %26 : vector<1x128xf32> to vector<2x128xf32>
    %28 = arith.addf %24, %27 : vector<2x128xf32>
    %c1_22 = arith.constant 1 : index
    %c0_23 = arith.constant 0 : index
    %c0_24 = arith.constant 0 : index
    %29 = vector.load %arg4[%c1_22, %c0_23, %c0_24] : memref<2x2x128xf32, #tpu.memory_space<vmem>>, vector<1x2x128xf32>
    %30 = vector.shape_cast %29 : vector<1x2x128xf32> to vector<2x128xf32>
    %31 = vector.shape_cast %28 : vector<2x128xf32> to vector<1x2x128xf32>
    tpu.vector_store %arg4[%c1_22, %c0_23, %c0_24], %31 {strides = array<i32>} : memref<2x2x128xf32, #tpu.memory_space<vmem>>, vector<1x2x128xf32>,
    return
  }
  func.func @transform_0(%arg0: i32) -> (i32, i32, i32) {
    %c0_i32 = arith.constant 0 : i32
    %c0_i32_0 = arith.constant 0 : i32
    %c0_i32_1 = arith.constant 0 : i32
    %c0_i32_2 = arith.constant 0 : i32
    return %c0_i32, %c0_i32_0, %c0_i32_1 : i32, i32, i32
  }
  func.func @transform_1(%arg0: i32) -> (i32, i32, i32) {
    %c0_i32 = arith.constant 0 : i32
    %c0_i32_0 = arith.constant 0 : i32
    %c0_i32_1 = arith.constant 0 : i32
    %c0_i32_2 = arith.constant 0 : i32
    return %c0_i32, %c0_i32_0, %c0_i32_1 : i32, i32, i32
  }
  func.func @transform_2(%arg0: i32) -> (i32, i32, i32) {
    %c0_i32 = arith.constant 0 : i32
    %c0_i32_0 = arith.constant 0 : i32
    %c0_i32_1 = arith.constant 0 : i32
    %c0_i32_2 = arith.constant 0 : i32
    return %c0_i32, %c0_i32_0, %c0_i32_1 : i32, i32, i32
  }
  func.func @transform_3(%arg0: i32) -> (i32, i32, i32) {
    %c0_i32 = arith.constant 0 : i32
    %c0_i32_0 = arith.constant 0 : i32
    %c0_i32_1 = arith.constant 0 : i32
    %c0_i32_2 = arith.constant 0 : i32
    return %c0_i32, %c0_i32_0, %c0_i32_1 : i32, i32, i32
  }
}

module attributes {stable_mosaic.version = 11 : i64} {
  func.func @_reduce_cell_kernel(%arg0: i32, %arg1: memref<16x512xbf16, #tpu.memory_space<vmem>>, %arg2: memref<16x512xbf16, #tpu.memory_space<vmem>>, %arg3: memref<16x256xbf16, #tpu.memory_space<vmem>>, %arg4: memref<16x256xbf16, #tpu.memory_space<vmem>>, %arg5: memref<512x128xbf16, #tpu.memory_space<vmem>>, %arg6: memref<256x128xbf16, #tpu.memory_space<vmem>>, %arg7: memref<128x256xbf16, #tpu.memory_space<vmem>>, %arg8: memref<128x256xbf16, #tpu.memory_space<vmem>>, %arg9: memref<128x256xbf16, #tpu.memory_space<vmem>>, %arg10: memref<128x256xbf16, #tpu.memory_space<vmem>>, %arg11: memref<16x256xbf16, #tpu.memory_space<vmem>>) attributes {dimension_semantics = [#tpu.dimension_semantics<parallel>], iteration_bounds = array<i64: 2>, scalar_prefetch = 0 : i64, scratch_operands = 0 : i64, tpu.core_type = #tpu.core_type<tc>, window_params = [{transform_indices = @transform_0, window_bounds = array<i64: 16, 512>}, {transform_indices = @transform_1, window_bounds = array<i64: 16, 512>}, {transform_indices = @transform_2, window_bounds = array<i64: 16, 256>}, {transform_indices = @transform_3, window_bounds = array<i64: 16, 256>}, {pipeline_mode = #tpu.pipeline_mode<synchronous>, transform_indices = @transform_4, window_bounds = array<i64: 512, 128>}, {pipeline_mode = #tpu.pipeline_mode<synchronous>, transform_indices = @transform_5, window_bounds = array<i64: 256, 128>}, {pipeline_mode = #tpu.pipeline_mode<synchronous>, transform_indices = @transform_6, window_bounds = array<i64: 128, 256>}, {pipeline_mode = #tpu.pipeline_mode<synchronous>, transform_indices = @transform_7, window_bounds = array<i64: 128, 256>}, {pipeline_mode = #tpu.pipeline_mode<synchronous>, transform_indices = @transform_8, window_bounds = array<i64: 128, 256>}, {pipeline_mode = #tpu.pipeline_mode<synchronous>, transform_indices = @transform_9, window_bounds = array<i64: 128, 256>}, {transform_indices = @transform_10, window_bounds = array<i64: 16, 256>}]} {
    %c0 = arith.constant 0 : index
    %c0_0 = arith.constant 0 : index
    %0 = vector.load %arg1[%c0, %c0_0] : memref<16x512xbf16, #tpu.memory_space<vmem>>, vector<16x512xbf16>
    %cst = arith.constant 0.000000e+00 : bf16
    %1 = vector.broadcast %cst : bf16 to vector<16x512xbf16>
    %2 = arith.maximumf %0, %1 : vector<16x512xbf16>
    %c0_1 = arith.constant 0 : index
    %c0_2 = arith.constant 0 : index
    %3 = vector.load %arg5[%c0_1, %c0_2] : memref<512x128xbf16, #tpu.memory_space<vmem>>, vector<512x128xbf16>
    %cst_3 = arith.constant dense<0.000000e+00> : vector<16x128xf32>
    %4 = tpu.matmul %2, %3, %cst_3 {dimension_numbers = #tpu.dot_dimension_numbers<[1], [0], [0], [1], [0, 0, 1, 1], [], []>} : vector<16x512xbf16>, vector<512x128xbf16>, vector<16x128xf32> -> vector<16x128xf32>
    %c0_4 = arith.constant 0 : index
    %c0_5 = arith.constant 0 : index
    %5 = vector.load %arg2[%c0_4, %c0_5] : memref<16x512xbf16, #tpu.memory_space<vmem>>, vector<16x512xbf16>
    %cst_6 = arith.constant 0.000000e+00 : bf16
    %6 = vector.broadcast %cst_6 : bf16 to vector<16x512xbf16>
    %7 = arith.maximumf %5, %6 : vector<16x512xbf16>
    %c0_7 = arith.constant 0 : index
    %c0_8 = arith.constant 0 : index
    %8 = vector.load %arg5[%c0_7, %c0_8] : memref<512x128xbf16, #tpu.memory_space<vmem>>, vector<512x128xbf16>
    %cst_9 = arith.constant dense<0.000000e+00> : vector<16x128xf32>
    %9 = tpu.matmul %7, %8, %cst_9 {dimension_numbers = #tpu.dot_dimension_numbers<[1], [0], [0], [1], [0, 0, 1, 1], [], []>} : vector<16x512xbf16>, vector<512x128xbf16>, vector<16x128xf32> -> vector<16x128xf32>
    %c0_10 = arith.constant 0 : index
    %c0_11 = arith.constant 0 : index
    %10 = vector.load %arg3[%c0_10, %c0_11] : memref<16x256xbf16, #tpu.memory_space<vmem>>, vector<16x256xbf16>
    %cst_12 = arith.constant 0.000000e+00 : bf16
    %11 = vector.broadcast %cst_12 : bf16 to vector<16x256xbf16>
    %12 = arith.maximumf %10, %11 : vector<16x256xbf16>
    %c0_13 = arith.constant 0 : index
    %c0_14 = arith.constant 0 : index
    %13 = vector.load %arg6[%c0_13, %c0_14] : memref<256x128xbf16, #tpu.memory_space<vmem>>, vector<256x128xbf16>
    %cst_15 = arith.constant dense<0.000000e+00> : vector<16x128xf32>
    %14 = tpu.matmul %12, %13, %cst_15 {dimension_numbers = #tpu.dot_dimension_numbers<[1], [0], [0], [1], [0, 0, 1, 1], [], []>} : vector<16x256xbf16>, vector<256x128xbf16>, vector<16x128xf32> -> vector<16x128xf32>
    %c0_16 = arith.constant 0 : index
    %c0_17 = arith.constant 0 : index
    %15 = vector.load %arg4[%c0_16, %c0_17] : memref<16x256xbf16, #tpu.memory_space<vmem>>, vector<16x256xbf16>
    %cst_18 = arith.constant 0.000000e+00 : bf16
    %16 = vector.broadcast %cst_18 : bf16 to vector<16x256xbf16>
    %17 = arith.maximumf %15, %16 : vector<16x256xbf16>
    %c0_19 = arith.constant 0 : index
    %c0_20 = arith.constant 0 : index
    %18 = vector.load %arg6[%c0_19, %c0_20] : memref<256x128xbf16, #tpu.memory_space<vmem>>, vector<256x128xbf16>
    %cst_21 = arith.constant dense<0.000000e+00> : vector<16x128xf32>
    %19 = tpu.matmul %17, %18, %cst_21 {dimension_numbers = #tpu.dot_dimension_numbers<[1], [0], [0], [1], [0, 0, 1, 1], [], []>} : vector<16x256xbf16>, vector<256x128xbf16>, vector<16x128xf32> -> vector<16x128xf32>
    %cst_22 = arith.constant 0.000000e+00 : f32
    %20 = vector.broadcast %cst_22 : f32 to vector<16x128xf32>
    %21 = arith.maximumf %4, %20 : vector<16x128xf32>
    %22 = arith.truncf %21 : vector<16x128xf32> to vector<16x128xbf16>
    %c0_23 = arith.constant 0 : index
    %c0_24 = arith.constant 0 : index
    %23 = vector.load %arg7[%c0_23, %c0_24] : memref<128x256xbf16, #tpu.memory_space<vmem>>, vector<128x256xbf16>
    %cst_25 = arith.constant dense<0.000000e+00> : vector<16x256xf32>
    %24 = tpu.matmul %22, %23, %cst_25 {dimension_numbers = #tpu.dot_dimension_numbers<[1], [0], [0], [1], [0, 0, 1, 1], [], []>} : vector<16x128xbf16>, vector<128x256xbf16>, vector<16x256xf32> -> vector<16x256xf32>
    %cst_26 = arith.constant 0.000000e+00 : f32
    %25 = vector.broadcast %cst_26 : f32 to vector<16x128xf32>
    %26 = arith.maximumf %9, %25 : vector<16x128xf32>
    %27 = arith.truncf %26 : vector<16x128xf32> to vector<16x128xbf16>
    %c0_27 = arith.constant 0 : index
    %c0_28 = arith.constant 0 : index
    %28 = vector.load %arg8[%c0_27, %c0_28] : memref<128x256xbf16, #tpu.memory_space<vmem>>, vector<128x256xbf16>
    %cst_29 = arith.constant dense<0.000000e+00> : vector<16x256xf32>
    %29 = tpu.matmul %27, %28, %cst_29 {dimension_numbers = #tpu.dot_dimension_numbers<[1], [0], [0], [1], [0, 0, 1, 1], [], []>} : vector<16x128xbf16>, vector<128x256xbf16>, vector<16x256xf32> -> vector<16x256xf32>
    %30 = arith.addf %24, %29 : vector<16x256xf32>
    %cst_30 = arith.constant 0.000000e+00 : f32
    %31 = vector.broadcast %cst_30 : f32 to vector<16x128xf32>
    %32 = arith.maximumf %14, %31 : vector<16x128xf32>
    %33 = arith.truncf %32 : vector<16x128xf32> to vector<16x128xbf16>
    %c0_31 = arith.constant 0 : index
    %c0_32 = arith.constant 0 : index
    %34 = vector.load %arg9[%c0_31, %c0_32] : memref<128x256xbf16, #tpu.memory_space<vmem>>, vector<128x256xbf16>
    %cst_33 = arith.constant dense<0.000000e+00> : vector<16x256xf32>
    %35 = tpu.matmul %33, %34, %cst_33 {dimension_numbers = #tpu.dot_dimension_numbers<[1], [0], [0], [1], [0, 0, 1, 1], [], []>} : vector<16x128xbf16>, vector<128x256xbf16>, vector<16x256xf32> -> vector<16x256xf32>
    %36 = arith.addf %30, %35 : vector<16x256xf32>
    %cst_34 = arith.constant 0.000000e+00 : f32
    %37 = vector.broadcast %cst_34 : f32 to vector<16x128xf32>
    %38 = arith.maximumf %19, %37 : vector<16x128xf32>
    %39 = arith.truncf %38 : vector<16x128xf32> to vector<16x128xbf16>
    %c0_35 = arith.constant 0 : index
    %c0_36 = arith.constant 0 : index
    %40 = vector.load %arg10[%c0_35, %c0_36] : memref<128x256xbf16, #tpu.memory_space<vmem>>, vector<128x256xbf16>
    %cst_37 = arith.constant dense<0.000000e+00> : vector<16x256xf32>
    %41 = tpu.matmul %39, %40, %cst_37 {dimension_numbers = #tpu.dot_dimension_numbers<[1], [0], [0], [1], [0, 0, 1, 1], [], []>} : vector<16x128xbf16>, vector<128x256xbf16>, vector<16x256xf32> -> vector<16x256xf32>
    %42 = arith.addf %36, %41 : vector<16x256xf32>
    %43 = arith.truncf %42 : vector<16x256xf32> to vector<16x256xbf16>
    %c0_38 = arith.constant 0 : index
    %c0_39 = arith.constant 0 : index
    %44 = vector.load %arg11[%c0_38, %c0_39] : memref<16x256xbf16, #tpu.memory_space<vmem>>, vector<16x256xbf16>
    tpu.vector_store %arg11[%c0_38, %c0_39], %43 {strides = array<i32>} : memref<16x256xbf16, #tpu.memory_space<vmem>>, vector<16x256xbf16>,
    return
  }
  func.func @transform_0(%arg0: i32) -> (i32, i32) {
    %c0_i32 = arith.constant 0 : i32
    %c0_i32_0 = arith.constant 0 : i32
    return %arg0, %c0_i32 : i32, i32
  }
  func.func @transform_1(%arg0: i32) -> (i32, i32) {
    %c0_i32 = arith.constant 0 : i32
    %c0_i32_0 = arith.constant 0 : i32
    return %arg0, %c0_i32 : i32, i32
  }
  func.func @transform_2(%arg0: i32) -> (i32, i32) {
    %c0_i32 = arith.constant 0 : i32
    %c0_i32_0 = arith.constant 0 : i32
    return %arg0, %c0_i32 : i32, i32
  }
  func.func @transform_3(%arg0: i32) -> (i32, i32) {
    %c0_i32 = arith.constant 0 : i32
    %c0_i32_0 = arith.constant 0 : i32
    return %arg0, %c0_i32 : i32, i32
  }
  func.func @transform_4(%arg0: i32) -> (i32, i32) {
    %c0_i32 = arith.constant 0 : i32
    %c0_i32_0 = arith.constant 0 : i32
    %c0_i32_1 = arith.constant 0 : i32
    return %c0_i32, %c0_i32_0 : i32, i32
  }
  func.func @transform_5(%arg0: i32) -> (i32, i32) {
    %c0_i32 = arith.constant 0 : i32
    %c0_i32_0 = arith.constant 0 : i32
    %c0_i32_1 = arith.constant 0 : i32
    return %c0_i32, %c0_i32_0 : i32, i32
  }
  func.func @transform_6(%arg0: i32) -> (i32, i32) {
    %c0_i32 = arith.constant 0 : i32
    %c0_i32_0 = arith.constant 0 : i32
    %c0_i32_1 = arith.constant 0 : i32
    return %c0_i32, %c0_i32_0 : i32, i32
  }
  func.func @transform_7(%arg0: i32) -> (i32, i32) {
    %c0_i32 = arith.constant 0 : i32
    %c0_i32_0 = arith.constant 0 : i32
    %c0_i32_1 = arith.constant 0 : i32
    return %c0_i32, %c0_i32_0 : i32, i32
  }
  func.func @transform_8(%arg0: i32) -> (i32, i32) {
    %c0_i32 = arith.constant 0 : i32
    %c0_i32_0 = arith.constant 0 : i32
    %c0_i32_1 = arith.constant 0 : i32
    return %c0_i32, %c0_i32_0 : i32, i32
  }
  func.func @transform_9(%arg0: i32) -> (i32, i32) {
    %c0_i32 = arith.constant 0 : i32
    %c0_i32_0 = arith.constant 0 : i32
    %c0_i32_1 = arith.constant 0 : i32
    return %c0_i32, %c0_i32_0 : i32, i32
  }
  func.func @transform_10(%arg0: i32) -> (i32, i32) {
    %c0_i32 = arith.constant 0 : i32
    %c0_i32_0 = arith.constant 0 : i32
    return %arg0, %c0_i32 : i32, i32
  }
}

module attributes {stable_mosaic.version = 11 : i64} {
  func.func @_heads_kernel(%arg0: i32, %arg1: memref<2x64x256xbf16, #tpu.memory_space<vmem>>, %arg2: memref<1x256x128xbf16, #tpu.memory_space<vmem>>, %arg3: memref<1x1x128xf32, #tpu.memory_space<vmem>>, %arg4: memref<1x2x128xf32, #tpu.memory_space<vmem>>) attributes {dimension_semantics = [#tpu.dimension_semantics<arbitrary>], iteration_bounds = array<i64: 1>, scalar_prefetch = 0 : i64, scratch_operands = 0 : i64, tpu.core_type = #tpu.core_type<tc>, window_params = [{pipeline_mode = #tpu.pipeline_mode<synchronous>, transform_indices = @transform_0, window_bounds = array<i64: 2, 64, 256>}, {pipeline_mode = #tpu.pipeline_mode<synchronous>, transform_indices = @transform_1, window_bounds = array<i64: 1, 256, 128>}, {pipeline_mode = #tpu.pipeline_mode<synchronous>, transform_indices = @transform_2, window_bounds = array<i64: 1, 1, 128>}, {pipeline_mode = #tpu.pipeline_mode<synchronous>, transform_indices = @transform_3, window_bounds = array<i64: 1, 2, 128>}]} {
    %c0 = arith.constant 0 : index
    %c0_0 = arith.constant 0 : index
    %c0_1 = arith.constant 0 : index
    %0 = vector.load %arg1[%c0, %c0_0, %c0_1] : memref<2x64x256xbf16, #tpu.memory_space<vmem>>, vector<2x64x256xbf16>
    %1 = arith.extf %0 : vector<2x64x256xbf16> to vector<2x64x256xf32>
    %cst = arith.constant 0.000000e+00 : f32
    %2 = vector.broadcast %cst : f32 to vector<2x64x256xf32>
    %3 = arith.maximumf %1, %2 : vector<2x64x256xf32>
    %cst_2 = arith.constant dense<0.000000e+00> : vector<2x256xf32>
    %4 = vector.multi_reduction <add>, %3, %cst_2 [1] : vector<2x64x256xf32> to vector<2x256xf32>
    %cst_3 = arith.constant 1.562500e-02 : f32
    %5 = vector.broadcast %cst_3 : f32 to vector<2x256xf32>
    %6 = arith.mulf %4, %5 : vector<2x256xf32>
    %7 = arith.truncf %6 : vector<2x256xf32> to vector<2x256xbf16>
    %c0_4 = arith.constant 0 : index
    %c0_5 = arith.constant 0 : index
    %c0_6 = arith.constant 0 : index
    %8 = vector.load %arg2[%c0_4, %c0_5, %c0_6] : memref<1x256x128xbf16, #tpu.memory_space<vmem>>, vector<1x256x128xbf16>
    %9 = vector.shape_cast %8 : vector<1x256x128xbf16> to vector<256x128xbf16>
    %cst_7 = arith.constant dense<0.000000e+00> : vector<2x128xf32>
    %10 = tpu.matmul %7, %9, %cst_7 {dimension_numbers = #tpu.dot_dimension_numbers<[1], [0], [0], [1], [0, 0, 1, 1], [], []>} : vector<2x256xbf16>, vector<256x128xbf16>, vector<2x128xf32> -> vector<2x128xf32>
    %c0_8 = arith.constant 0 : index
    %c0_9 = arith.constant 0 : index
    %c0_10 = arith.constant 0 : index
    %11 = vector.load %arg3[%c0_8, %c0_9, %c0_10] : memref<1x1x128xf32, #tpu.memory_space<vmem>>, vector<1x1x128xf32>
    %12 = vector.shape_cast %11 : vector<1x1x128xf32> to vector<1x128xf32>
    %13 = vector.broadcast %12 : vector<1x128xf32> to vector<2x128xf32>
    %14 = arith.addf %10, %13 : vector<2x128xf32>
    %c0_11 = arith.constant 0 : index
    %c0_12 = arith.constant 0 : index
    %c0_13 = arith.constant 0 : index
    %15 = vector.load %arg4[%c0_11, %c0_12, %c0_13] : memref<1x2x128xf32, #tpu.memory_space<vmem>>, vector<1x2x128xf32>
    %16 = vector.shape_cast %15 : vector<1x2x128xf32> to vector<2x128xf32>
    %17 = vector.shape_cast %14 : vector<2x128xf32> to vector<1x2x128xf32>
    tpu.vector_store %arg4[%c0_11, %c0_12, %c0_13], %17 {strides = array<i32>} : memref<1x2x128xf32, #tpu.memory_space<vmem>>, vector<1x2x128xf32>,
    return
  }
  func.func @transform_0(%arg0: i32) -> (i32, i32, i32) {
    %c0_i32 = arith.constant 0 : i32
    %c0_i32_0 = arith.constant 0 : i32
    %c0_i32_1 = arith.constant 0 : i32
    %c0_i32_2 = arith.constant 0 : i32
    return %c0_i32, %c0_i32_0, %c0_i32_1 : i32, i32, i32
  }
  func.func @transform_1(%arg0: i32) -> (i32, i32, i32) {
    %c0_i32 = arith.constant 0 : i32
    %c0_i32_0 = arith.constant 0 : i32
    %c0_i32_1 = arith.constant 0 : i32
    %c0_i32_2 = arith.constant 0 : i32
    return %c0_i32, %c0_i32_0, %c0_i32_1 : i32, i32, i32
  }
  func.func @transform_2(%arg0: i32) -> (i32, i32, i32) {
    %c0_i32 = arith.constant 0 : i32
    %c0_i32_0 = arith.constant 0 : i32
    %c0_i32_1 = arith.constant 0 : i32
    %c0_i32_2 = arith.constant 0 : i32
    return %c0_i32, %c0_i32_0, %c0_i32_1 : i32, i32, i32
  }
  func.func @transform_3(%arg0: i32) -> (i32, i32, i32) {
    %c0_i32 = arith.constant 0 : i32
    %c0_i32_0 = arith.constant 0 : i32
    %c0_i32_1 = arith.constant 0 : i32
    %c0_i32_2 = arith.constant 0 : i32
    return %c0_i32, %c0_i32_0, %c0_i32_1 : i32, i32, i32
  }
}

</mosaic_0001>

<llo_original>
// kernel: model_forward.7
$region0: #{model_forward.7}
  #allocation0 [shape = 'u32[]', space=smem, size = 0x4, offset = 0x4, fixed_abs, tag = 'smem constant byte address 0x4 - core index']
  #allocation1 [shape = 'u32[144,128]{1,0:T(1,128)}', space=vmem, size = 0x12000, scoped, tag = 'internal scratch']
  %s0 = inlined_call_operand.vmem [shape: bf16[512,128], index: 0, kind: input, shape index: {}, may-alias: {0,1}]
  %s1 = inlined_call_operand.vmem [shape: bf16[512,128], index: 1, kind: input, shape index: {}, may-alias: {0,1}]
  %s2 = inlined_call_operand.vmem [shape: bf16[128,128], index: 2, kind: input, shape index: {}]
  %s3 = inlined_call_operand.vmem [shape: bf16[128,128], index: 3, kind: input, shape index: {}]
  %s4 = inlined_call_operand.vmem [shape: bf16[512,256], index: 4, kind: output, shape index: {}]
  %s5 = sld [smem:[#allocation0]]
  $region49: #{model_forward.7} parent=0
    _
  %s7 = ssub.s32 1, %s5
  %s8 = scalar_select 0, %s7, %s5
  loop: start=0, step=1, limit=4
  $region2: #{model_forward.7} parent=0 // loop_pre_header
    _
  $region3: #{model_forward.7} parent=0 // loop_header
    %s10 = sphi 0, %s14
    %p11 = scmp.ge.s32.totalorder %s10, 4
    %s20 = sphi 0, %s22
    %s23 = sphi 0, %s20
    %s24 = sphi 0, %s23
    %s40 = sphi 0, %s24
    %s46 = sphi 0, %s48
    %s49 = sphi 0, %s46
    %s50 = sphi 0, %s49
    %s66 = sphi 0, %s50
    %s70 = sphi 0, %s70
    %s72 = sphi 0, %s70
    %s73 = sphi 0, %s72
    %s87 = sphi 0, %s73
    %s91 = sphi 0, %s91
    %s93 = sphi 0, %s91
    %s94 = sphi 0, %s93
    %s108 = sphi 0, %s94
    %s114 = sphi 0, %s116
    %s117 = sphi 0, %s114
    %s118 = sphi 0, %s117
    %s134 = sphi 0, %s118
  $region4: #{model_forward.7} parent=0 // loop_header_branch
    %13 = sbr.rel (%p11) target = $region8
  $region5: #{model_forward.7} parent=0 // loop_body
    %s15 = ssub.s32 %s10, 1
    %s16 = ssub.s32 %s10, 2
    %s17 = sadd.s32 %s10, 1
    %s18 = ssub.s32 %s10, %s17
    %p19 = scmp.eq.s32.totalorder %s18, 0
    %s21 = sadd.s32 %s20, 1
    %s22 = scalar_select %p19, %s20, %s21
    %p25 = pneg %p19
    %p26 = scmp.eq.s32.totalorder %s10, 1
    %p27 = por %p25, %p26
    %p28 = scmp.ne.s32.totalorder %s20, %s23
    %p29 = scmp.eq.s32.totalorder %s10, 0
    %p30 = por %p28, %p29
    %p31 = scmp.ne.s32.totalorder %s20, %s23
    %p32 = scmp.eq.s32.totalorder %s15, 1
    %p33 = por %p31, %p32
    %p34 = scmp.ne.s32.totalorder %s23, %s24
    %p35 = scmp.eq.s32.totalorder %s15, 0
    %p36 = por %p34, %p35
    %p37 = scmp.ne.s32.totalorder %s23, %s24
    %p38 = scmp.eq.s32.totalorder %s16, 1
    %p39 = por %p37, %p38
    %p41 = scmp.ne.s32.totalorder %s24, %s40
    %p42 = scmp.eq.s32.totalorder %s16, 0
    %p43 = por %p41, %p42
    %s44 = ssub.s32 %s10, %s17
    %p45 = scmp.eq.s32.totalorder %s44, 0
    %s47 = sadd.s32 %s46, 1
    %s48 = scalar_select %p45, %s46, %s47
    %p51 = pneg %p45
    %p52 = scmp.eq.s32.totalorder %s10, 1
    %p53 = por %p51, %p52
    %p54 = scmp.ne.s32.totalorder %s46, %s49
    %p55 = scmp.eq.s32.totalorder %s10, 0
    %p56 = por %p54, %p55
    %p57 = scmp.ne.s32.totalorder %s46, %s49
    %p58 = scmp.eq.s32.totalorder %s15, 1
    %p59 = por %p57, %p58
    %p60 = scmp.ne.s32.totalorder %s49, %s50
    %p61 = scmp.eq.s32.totalorder %s15, 0
    %p62 = por %p60, %p61
    %p63 = scmp.ne.s32.totalorder %s49, %s50
    %p64 = scmp.eq.s32.totalorder %s16, 1
    %p65 = por %p63, %p64
    %p67 = scmp.ne.s32.totalorder %s50, %s66
    %p68 = scmp.eq.s32.totalorder %s16, 0
    %p69 = por %p67, %p68
    %s71 = sadd.s32 %s70, 1
    %p74 = scmp.eq.s32.totalorder %s10, 1
    %p75 = scmp.ne.s32.totalorder %s70, %s72
    %p76 = scmp.eq.s32.totalorder %s10, 0
    %p77 = por %p75, %p76
    %p78 = scmp.ne.s32.totalorder %s70, %s72
    %p79 = scmp.eq.s32.totalorder %s15, 1
    %p80 = por %p78, %p79
    %p81 = scmp.ne.s32.totalorder %s72, %s73
    %p82 = scmp.eq.s32.totalorder %s15, 0
    %p83 = por %p81, %p82
    %p84 = scmp.ne.s32.totalorder %s72, %s73
    %p85 = scmp.eq.s32.totalorder %s16, 1
    %p86 = por %p84, %p85
    %p88 = scmp.ne.s32.totalorder %s73, %s87
    %p89 = scmp.eq.s32.totalorder %s16, 0
    %p90 = por %p88, %p89
    %s92 = sadd.s32 %s91, 1
    %p95 = scmp.eq.s32.totalorder %s10, 1
    %p96 = scmp.ne.s32.totalorder %s91, %s93
    %p97 = scmp.eq.s32.totalorder %s10, 0
    %p98 = por %p96, %p97
    %p99 = scmp.ne.s32.totalorder %s91, %s93
    %p100 = scmp.eq.s32.totalorder %s15, 1
    %p101 = por %p99, %p100
    %p102 = scmp.ne.s32.totalorder %s93, %s94
    %p103 = scmp.eq.s32.totalorder %s15, 0
    %p104 = por %p102, %p103
    %p105 = scmp.ne.s32.totalorder %s93, %s94
    %p106 = scmp.eq.s32.totalorder %s16, 1
    %p107 = por %p105, %p106
    %p109 = scmp.ne.s32.totalorder %s94, %s108
    %p110 = scmp.eq.s32.totalorder %s16, 0
    %p111 = por %p109, %p110
    %s112 = ssub.s32 %s10, %s17
    %p113 = scmp.eq.s32.totalorder %s112, 0
    %s115 = sadd.s32 %s114, 1
    %s116 = scalar_select %p113, %s114, %s115
    %p119 = pneg %p113
    %p120 = scmp.eq.s32.totalorder %s10, 1
    %p121 = por %p119, %p120
    %p122 = scmp.ne.s32.totalorder %s114, %s117
    %p123 = scmp.eq.s32.totalorder %s10, 0
    %p124 = por %p122, %p123
    %p125 = scmp.ne.s32.totalorder %s114, %s117
    %p126 = scmp.eq.s32.totalorder %s15, 1
    %p127 = por %p125, %p126
    %p128 = scmp.ne.s32.totalorder %s117, %s118
    %p129 = scmp.eq.s32.totalorder %s15, 0
    %p130 = por %p128, %p129
    %p131 = scmp.ne.s32.totalorder %s117, %s118
    %p132 = scmp.eq.s32.totalorder %s16, 1
    %p133 = por %p131, %p132
    %p135 = scmp.ne.s32.totalorder %s118, %s134
    %p136 = scmp.eq.s32.totalorder %s16, 0
    %p137 = por %p135, %p136
    %p138 = scmp.le.s32.totalorder 1, %s10
    %p139 = scmp.lt.s32.totalorder %s10, 3
    %p140 = pnand %p138, %p139
    %p141 = pneg %p140
    // Predicated region
    $region9: #{model_forward.7} parent=5 // pred_check
      _
    $region10: #{model_forward.7} parent=5 // pred_check_branch
      %143 = sbr.rel (%p140) target = $region12
    $region11: #{model_forward.7} parent=5 // pred_region
      %s144 = ssub.s32 %s10, 1
      // Predicated region
      $region13: #{model_forward.7} parent=11 // pred_check
        %p145 = pneg %p83
      $region14: #{model_forward.7} parent=11 // pred_check_branch
        %147 = sbr.rel (%p145) target = $region16
      $region15: #{model_forward.7} parent=11 // pred_region
        _
      $region16: #{model_forward.7} parent=11 // pred_fallthru
        _
      // Predicated region
      $region17: #{model_forward.7} parent=11 // pred_check
        %p148 = pneg %p104
      $region18: #{model_forward.7} parent=11 // pred_check_branch
        %150 = sbr.rel (%p148) target = $region20
      $region19: #{model_forward.7} parent=11 // pred_region
        _
      $region20: #{model_forward.7} parent=11 // pred_fallthru
        _
    $region12: #{model_forward.7} parent=5 // pred_fallthru
      _
    %p151 = scmp.lt.s32.totalorder %s10, 2
    // Predicated region
    $region21: #{model_forward.7} parent=5 // pred_check
      %p152 = pneg %p151
    $region22: #{model_forward.7} parent=5 // pred_check_branch
      %154 = sbr.rel (%p152) target = $region24
    $region23: #{model_forward.7} parent=5 // pred_region
      // Predicated region
      $region25: #{model_forward.7} parent=23 // pred_check
        %p155 = pneg %p30
      $region26: #{model_forward.7} parent=23 // pred_check_branch
        %157 = sbr.rel (%p155) target = $region28
      $region27: #{model_forward.7} parent=23 // pred_region
        %s158 = smul.u32 32, %s10
        %p159 = scmp.lt.s32.totalorder %s158, 63
        %s160 = scalar_select %p159, %s158, 63
        %s161 = smul.addr %s160, 4
        %s162 = scalar_lea.vmem %s0, %s161
        %s163 = smul.u32 32, %s10
      $region28: #{model_forward.7} parent=23 // pred_fallthru
        _
      // Predicated region
      $region29: #{model_forward.7} parent=23 // pred_check
        %p164 = pneg %p56
      $region30: #{model_forward.7} parent=23 // pred_check_branch
        %166 = sbr.rel (%p164) target = $region32
      $region31: #{model_forward.7} parent=23 // pred_region
        %s167 = smul.u32 32, %s10
        %p168 = scmp.lt.s32.totalorder %s167, 63
        %s169 = scalar_select %p168, %s167, 63
        %s170 = smul.addr %s169, 4
        %s171 = scalar_lea.vmem %s1, %s170
        %s172 = smul.u32 32, %s10
      $region32: #{model_forward.7} parent=23 // pred_fallthru
        _
    $region24: #{model_forward.7} parent=5 // pred_fallthru
      _
    %p173 = scmp.le.s32.totalorder 1, %s10
    %p174 = scmp.lt.s32.totalorder %s10, 3
    %p175 = pnand %p173, %p174
    %p176 = pneg %p175
    // Predicated region
    $region33: #{model_forward.7} parent=5 // pred_check
      _
    $region34: #{model_forward.7} parent=5 // pred_check_branch
      %178 = sbr.rel (%p175) target = $region36
    $region35: #{model_forward.7} parent=5 // pred_region
      %s179 = ssub.s32 %s10, 1
      %s180 = smul.u32 32, %s15
      %p181 = scmp.lt.s32.totalorder %s180, 63
      %s182 = scalar_select %p181, %s180, 63
      %s183 = smul.addr %s182, 4
      %s184 = scalar_lea.vmem %s0, %s183
      %p185 = pneg %p36
      %p186 = pneg %p33
      %s187 = smul.u32 32, %s15
      %p188 = scmp.lt.s32.totalorder %s187, 63
      %s189 = scalar_select %p188, %s187, 63
      %s190 = smul.addr %s189, 4
      %s191 = scalar_lea.vmem %s1, %s190
      %p192 = pneg %p62
      %p193 = pneg %p59
      %p194 = pneg %p83
      %p195 = pneg %p80
      %p196 = pneg %p104
      %p197 = pneg %p101
      %p198 = pneg %p130
      %p199 = pneg %p127
      %s200 = smul.u32 32, %s15
      %p201 = scmp.lt.s32.totalorder %s200, 63
      %s202 = scalar_select %p201, %s200, 63
      %s203 = smul.addr %s202, 2
      %s204 = smul.addr %s203, 4
      %s205 = scalar_lea.vmem %s4, %s204
      %s206 = smul.u32 32, %s15
      %p207 = scmp.lt.s32.totalorder %s206, 63
      %s208 = scalar_select %p207, %s206, 63
      %s209 = smul.addr %s208, 4
      %s210 = scalar_lea.vmem %s0, %s209
      %s211 = smul.u32 32, %s15
      %s212 = smul.u32 32, %s15
      %p213 = scmp.lt.s32.totalorder %s212, 63
      %s214 = scalar_select %p213, %s212, 63
      %s215 = smul.addr %s214, 4
      %s216 = scalar_lea.vmem %s1, %s215
      %s217 = smul.u32 32, %s15
      %s218 = smul.u32 32, %s15
      %p219 = scmp.lt.s32.totalorder %s218, 63
      %s220 = scalar_select %p219, %s218, 63
      %s221 = smul.addr %s220, 2
      %s222 = smul.addr %s221, 4
      %s223 = scalar_lea.vmem %s4, %s222
      %s224 = smul.u32 32, %s15
      %v226 = vld [vmem:[%s210] sm:$0xf]
      %v227 = vld [vmem:[%s210 + $0x4] sm:$0xf]
      %v228 = vld [vmem:[%s210 + $0x8] sm:$0xf]
      %v229 = vld [vmem:[%s210 + $0xc] sm:$0xf]
      %v230 = vld [vmem:[%s210 + $0x10] sm:$0xf]
      %v231 = vld [vmem:[%s210 + $0x14] sm:$0xf]
      %v232 = vld [vmem:[%s210 + $0x18] sm:$0xf]
      %v233 = vld [vmem:[%s210 + $0x1c] sm:$0xf]
      %v234 = vld [vmem:[%s210 + $0x20] sm:$0xf]
      %v235 = vld [vmem:[%s210 + $0x24] sm:$0xf]
      %v236 = vld [vmem:[%s210 + $0x28] sm:$0xf]
      %v237 = vld [vmem:[%s210 + $0x2c] sm:$0xf]
      %v238 = vld [vmem:[%s210 + $0x30] sm:$0xf]
      %v239 = vld [vmem:[%s210 + $0x34] sm:$0xf]
      %v240 = vld [vmem:[%s210 + $0x38] sm:$0xf]
      %v241 = vld [vmem:[%s210 + $0x3c] sm:$0xf]
      %v242 = vld [vmem:[%s210 + $0x40] sm:$0xf]
      %v243 = vld [vmem:[%s210 + $0x44] sm:$0xf]
      %v244 = vld [vmem:[%s210 + $0x48] sm:$0xf]
      %v245 = vld [vmem:[%s210 + $0x4c] sm:$0xf]
      %v246 = vld [vmem:[%s210 + $0x50] sm:$0xf]
      %v247 = vld [vmem:[%s210 + $0x54] sm:$0xf]
      %v248 = vld [vmem:[%s210 + $0x58] sm:$0xf]
      %v249 = vld [vmem:[%s210 + $0x5c] sm:$0xf]
      %v250 = vld [vmem:[%s210 + $0x60] sm:$0xf]
      %v251 = vld [vmem:[%s210 + $0x64] sm:$0xf]
      %v252 = vld [vmem:[%s210 + $0x68] sm:$0xf]
      %v253 = vld [vmem:[%s210 + $0x6c] sm:$0xf]
      %v254 = vld [vmem:[%s210 + $0x70] sm:$0xf]
      %v255 = vld [vmem:[%s210 + $0x74] sm:$0xf]
      %v256 = vld [vmem:[%s210 + $0x78] sm:$0xf]
      %v257 = vld [vmem:[%s210 + $0x7c] sm:$0xf]
      %v258 = vmax.bf16 %v226, 0
      %v259 = vmax.bf16 %v227, 0
      %v260 = vmax.bf16 %v228, 0
      %v261 = vmax.bf16 %v229, 0
      %v262 = vmax.bf16 %v230, 0
      %v263 = vmax.bf16 %v231, 0
      %v264 = vmax.bf16 %v232, 0
      %v265 = vmax.bf16 %v233, 0
      %v266 = vmax.bf16 %v234, 0
      %v267 = vmax.bf16 %v235, 0
      %v268 = vmax.bf16 %v236, 0
      %v269 = vmax.bf16 %v237, 0
      %v270 = vmax.bf16 %v238, 0
      %v271 = vmax.bf16 %v239, 0
      %v272 = vmax.bf16 %v240, 0
      %v273 = vmax.bf16 %v241, 0
      %v274 = vmax.bf16 %v242, 0
      %v275 = vmax.bf16 %v243, 0
      %v276 = vmax.bf16 %v244, 0
      %v277 = vmax.bf16 %v245, 0
      %v278 = vmax.bf16 %v246, 0
      %v279 = vmax.bf16 %v247, 0
      %v280 = vmax.bf16 %v248, 0
      %v281 = vmax.bf16 %v249, 0
      %v282 = vmax.bf16 %v250, 0
      %v283 = vmax.bf16 %v251, 0
      %v284 = vmax.bf16 %v252, 0
      %v285 = vmax.bf16 %v253, 0
      %v286 = vmax.bf16 %v254, 0
      %v287 = vmax.bf16 %v255, 0
      %v288 = vmax.bf16 %v256, 0
      %v289 = vmax.bf16 %v257, 0
      %v290 = vld [vmem:[%s2] sm:$0xf]
      %v291 = vld [vmem:[%s2 + $0x4] sm:$0xf]
      %v292 = vld [vmem:[%s2 + $0x8] sm:$0xf]
      %v293 = vld [vmem:[%s2 + $0xc] sm:$0xf]
      %v294 = vld [vmem:[%s2 + $0x10] sm:$0xf]
      %v295 = vld [vmem:[%s2 + $0x14] sm:$0xf]
      %v296 = vld [vmem:[%s2 + $0x18] sm:$0xf]
      %v297 = vld [vmem:[%s2 + $0x1c] sm:$0xf]
      %v298 = vld [vmem:[%s2 + $0x20] sm:$0xf]
      %v299 = vld [vmem:[%s2 + $0x24] sm:$0xf]
      %v300 = vld [vmem:[%s2 + $0x28] sm:$0xf]
      %v301 = vld [vmem:[%s2 + $0x2c] sm:$0xf]
      %v302 = vld [vmem:[%s2 + $0x30] sm:$0xf]
      %v303 = vld [vmem:[%s2 + $0x34] sm:$0xf]
      %v304 = vld [vmem:[%s2 + $0x38] sm:$0xf]
      %v305 = vld [vmem:[%s2 + $0x3c] sm:$0xf]
      %v306 = vld [vmem:[%s216] sm:$0xf]
      %v307 = vld [vmem:[%s216 + $0x4] sm:$0xf]
      %v308 = vld [vmem:[%s216 + $0x8] sm:$0xf]
      %v309 = vld [vmem:[%s216 + $0xc] sm:$0xf]
      %v310 = vld [vmem:[%s216 + $0x10] sm:$0xf]
      %v311 = vld [vmem:[%s216 + $0x14] sm:$0xf]
      %v312 = vld [vmem:[%s216 + $0x18] sm:$0xf]
      %v313 = vld [vmem:[%s216 + $0x1c] sm:$0xf]
      %v314 = vld [vmem:[%s216 + $0x20] sm:$0xf]
      %v315 = vld [vmem:[%s216 + $0x24] sm:$0xf]
      %v316 = vld [vmem:[%s216 + $0x28] sm:$0xf]
      %v317 = vld [vmem:[%s216 + $0x2c] sm:$0xf]
      %v318 = vld [vmem:[%s216 + $0x30] sm:$0xf]
      %v319 = vld [vmem:[%s216 + $0x34] sm:$0xf]
      %v320 = vld [vmem:[%s216 + $0x38] sm:$0xf]
      %v321 = vld [vmem:[%s216 + $0x3c] sm:$0xf]
      %v322 = vld [vmem:[%s216 + $0x40] sm:$0xf]
      %v323 = vld [vmem:[%s216 + $0x44] sm:$0xf]
      %v324 = vld [vmem:[%s216 + $0x48] sm:$0xf]
      %v325 = vld [vmem:[%s216 + $0x4c] sm:$0xf]
      %v326 = vld [vmem:[%s216 + $0x50] sm:$0xf]
      %v327 = vld [vmem:[%s216 + $0x54] sm:$0xf]
      %v328 = vld [vmem:[%s216 + $0x58] sm:$0xf]
      %v329 = vld [vmem:[%s216 + $0x5c] sm:$0xf]
      %v330 = vld [vmem:[%s216 + $0x60] sm:$0xf]
      %v331 = vld [vmem:[%s216 + $0x64] sm:$0xf]
      %v332 = vld [vmem:[%s216 + $0x68] sm:$0xf]
      %v333 = vld [vmem:[%s216 + $0x6c] sm:$0xf]
      %v334 = vld [vmem:[%s216 + $0x70] sm:$0xf]
      %v335 = vld [vmem:[%s216 + $0x74] sm:$0xf]
      %v336 = vld [vmem:[%s216 + $0x78] sm:$0xf]
      %v337 = vld [vmem:[%s216 + $0x7c] sm:$0xf]
      %v338 = vmax.bf16 %v306, 0
      %v339 = vmax.bf16 %v307, 0
      %v340 = vmax.bf16 %v308, 0
      %v341 = vmax.bf16 %v309, 0
      %v342 = vmax.bf16 %v310, 0
      %v343 = vmax.bf16 %v311, 0
      %v344 = vmax.bf16 %v312, 0
      %v345 = vmax.bf16 %v313, 0
      %v346 = vmax.bf16 %v314, 0
      %v347 = vmax.bf16 %v315, 0
      %v348 = vmax.bf16 %v316, 0
      %v349 = vmax.bf16 %v317, 0
      %v350 = vmax.bf16 %v318, 0
      %v351 = vmax.bf16 %v319, 0
      %v352 = vmax.bf16 %v320, 0
      %v353 = vmax.bf16 %v321, 0
      %v354 = vmax.bf16 %v322, 0
      %v355 = vmax.bf16 %v323, 0
      %v356 = vmax.bf16 %v324, 0
      %v357 = vmax.bf16 %v325, 0
      %v358 = vmax.bf16 %v326, 0
      %v359 = vmax.bf16 %v327, 0
      %v360 = vmax.bf16 %v328, 0
      %v361 = vmax.bf16 %v329, 0
      %v362 = vmax.bf16 %v330, 0
      %v363 = vmax.bf16 %v331, 0
      %v364 = vmax.bf16 %v332, 0
      %v365 = vmax.bf16 %v333, 0
      %v366 = vmax.bf16 %v334, 0
      %v367 = vmax.bf16 %v335, 0
      %v368 = vmax.bf16 %v336, 0
      %v369 = vmax.bf16 %v337, 0
      %v370 = vld [vmem:[%s3] sm:$0xf]
      %v371 = vld [vmem:[%s3 + $0x4] sm:$0xf]
      %v372 = vld [vmem:[%s3 + $0x8] sm:$0xf]
      %v373 = vld [vmem:[%s3 + $0xc] sm:$0xf]
      %v374 = vld [vmem:[%s3 + $0x10] sm:$0xf]
      %v375 = vld [vmem:[%s3 + $0x14] sm:$0xf]
      %v376 = vld [vmem:[%s3 + $0x18] sm:$0xf]
      %v377 = vld [vmem:[%s3 + $0x1c] sm:$0xf]
      %v378 = vld [vmem:[%s3 + $0x20] sm:$0xf]
      %v379 = vld [vmem:[%s3 + $0x24] sm:$0xf]
      %v380 = vld [vmem:[%s3 + $0x28] sm:$0xf]
      %v381 = vld [vmem:[%s3 + $0x2c] sm:$0xf]
      %v382 = vld [vmem:[%s3 + $0x30] sm:$0xf]
      %v383 = vld [vmem:[%s3 + $0x34] sm:$0xf]
      %v384 = vld [vmem:[%s3 + $0x38] sm:$0xf]
      %v385 = vld [vmem:[%s3 + $0x3c] sm:$0xf]
      %v418 = vunpack.c.l.b16 %v338
      %v419 = vunpack.c.l.b16 %v339
      %v420 = vunpack.c.l.b16 %v340
      %v421 = vunpack.c.l.b16 %v341
      %v422 = vunpack.c.l.b16 %v342
      %v423 = vunpack.c.l.b16 %v343
      %v424 = vunpack.c.l.b16 %v344
      %v425 = vunpack.c.l.b16 %v345
      %v426 = vunpack.c.l.b16 %v346
      %v427 = vunpack.c.l.b16 %v347
      %v428 = vunpack.c.l.b16 %v348
      %v429 = vunpack.c.l.b16 %v349
      %v430 = vunpack.c.l.b16 %v350
      %v431 = vunpack.c.l.b16 %v351
      %v432 = vunpack.c.l.b16 %v352
      %v433 = vunpack.c.l.b16 %v353
      %v434 = vunpack.c.l.b16 %v354
      %v435 = vunpack.c.l.b16 %v355
      %v436 = vunpack.c.l.b16 %v356
      %v437 = vunpack.c.l.b16 %v357
      %v438 = vunpack.c.l.b16 %v358
      %v439 = vunpack.c.l.b16 %v359
      %v440 = vunpack.c.l.b16 %v360
      %v441 = vunpack.c.l.b16 %v361
      %v442 = vunpack.c.l.b16 %v362
      %v443 = vunpack.c.l.b16 %v363
      %v444 = vunpack.c.l.b16 %v364
      %v445 = vunpack.c.l.b16 %v365
      %v446 = vunpack.c.l.b16 %v366
      %v447 = vunpack.c.l.b16 %v367
      %v448 = vunpack.c.l.b16 %v368
      %v449 = vunpack.c.l.b16 %v369
      %v450 = vpack.c.b16 %v419, %v418
      %v451 = vpack.c.b16 %v421, %v420
      %v452 = vpack.c.b16 %v423, %v422
      %v453 = vpack.c.b16 %v425, %v424
      %v454 = vpack.c.b16 %v427, %v426
      %v455 = vpack.c.b16 %v429, %v428
      %v456 = vpack.c.b16 %v431, %v430
      %v457 = vpack.c.b16 %v433, %v432
      %v458 = vpack.c.b16 %v435, %v434
      %v459 = vpack.c.b16 %v437, %v436
      %v460 = vpack.c.b16 %v439, %v438
      %v461 = vpack.c.b16 %v441, %v440
      %v462 = vpack.c.b16 %v443, %v442
      %v463 = vpack.c.b16 %v445, %v444
      %v464 = vpack.c.b16 %v447, %v446
      %v465 = vpack.c.b16 %v449, %v448
      %v498 = vunpack.c.l.b16 %v370
      %v499 = vunpack.c.l.b16 %v371
      %v500 = vunpack.c.l.b16 %v372
      %v501 = vunpack.c.l.b16 %v373
      %v502 = vunpack.c.l.b16 %v374
      %v503 = vunpack.c.l.b16 %v375
      %v504 = vunpack.c.l.b16 %v376
      %v505 = vunpack.c.l.b16 %v377
      %v506 = vunpack.c.l.b16 %v378
      %v507 = vunpack.c.l.b16 %v379
      %v508 = vunpack.c.l.b16 %v380
      %v509 = vunpack.c.l.b16 %v381
      %v510 = vunpack.c.l.b16 %v382
      %v511 = vunpack.c.l.b16 %v383
      %v512 = vunpack.c.l.b16 %v384
      %v513 = vunpack.c.l.b16 %v385
      %v514 = vpack.c.b16 %v499, %v498
      %v515 = vpack.c.b16 %v501, %v500
      %v516 = vpack.c.b16 %v503, %v502
      %v517 = vpack.c.b16 %v505, %v504
      %v518 = vpack.c.b16 %v507, %v506
      %v519 = vpack.c.b16 %v509, %v508
      %v520 = vpack.c.b16 %v511, %v510
      %v521 = vpack.c.b16 %v513, %v512
      %530 = vmatprep.subr.bf16.mxu0 0
      %531 = vmatpush1.bf16.msra.mxu0 %v514
      %532 = vmatprep.subr.bf16.mxu0 0
      %533 = vmatpush1.bf16.msra.mxu0 %v515
      %534 = vmatprep.subr.bf16.mxu0 0
      %535 = vmatpush1.bf16.msra.mxu0 %v516
      %536 = vmatprep.subr.bf16.mxu0 0
      %537 = vmatpush1.bf16.msra.mxu0 %v517
      %538 = vmatprep.subr.bf16.mxu0 0
      %539 = vmatpush1.bf16.msra.mxu0 %v518
      %540 = vmatprep.subr.bf16.mxu0 0
      %541 = vmatpush1.bf16.msra.mxu0 %v519
      %542 = vmatprep.subr.bf16.mxu0 0
      %543 = vmatpush1.bf16.msra.mxu0 %v520
      %544 = vmatprep.subr.bf16.mxu0 0
      %545 = vmatpush1.bf16.msra.mxu0 %v521
      %546 = vmatprep.subr.bf16.mxu0 0
      %547 = vmatpush1.bf16.msra.mxu0 0
      %548 = vmatprep.subr.bf16.mxu0 0
      %549 = vmatpush1.bf16.msra.mxu0 0
      %550 = vmatprep.subr.bf16.mxu0 0
      %551 = vmatpush1.bf16.msra.mxu0 0
      %552 = vmatprep.subr.bf16.mxu0 0
      %553 = vmatpush1.bf16.msra.mxu0 0
      %554 = vmatprep.subr.bf16.mxu0 0
      %555 = vmatpush1.bf16.msra.mxu0 0
      %556 = vmatprep.subr.bf16.mxu0 0
      %557 = vmatpush1.bf16.msra.mxu0 0
      %558 = vmatprep.subr.bf16.mxu0 0
      %559 = vmatpush1.bf16.msra.mxu0 0
      %560 = vmatprep.subr.bf16.mxu0 0
      %561 = vmatpush1.bf16.msra.mxu0 0
      %562 = vmatprep.mubr.bf16.mxu0 0
      %563 = vmatmul.mubr.bf16.gmra.mrb[0].mxu0 %v450
      %v564 = vpop.f32.mrb[0].mxu0
      %v565 = vadd.f32 0.0, %v564
      %v566 = vpop.f32.mrb[0].mxu0
      %v567 = vpop.f32.mrb[0].mxu0
      %v568 = vadd.f32 0.0, %v567
      %v569 = vpop.f32.mrb[0].mxu0
      %570 = vmatprep.mubr.bf16.mxu0 0
      %571 = vmatmul.mubr.bf16.gmra.mrb[0].mxu0 %v451
      %v572 = vpop.f32.mrb[0].mxu0
      %v573 = vadd.f32 0.0, %v572
      %v574 = vpop.f32.mrb[0].mxu0
      %v575 = vpop.f32.mrb[0].mxu0
      %v576 = vadd.f32 0.0, %v575
      %v577 = vpop.f32.mrb[0].mxu0
      %578 = vmatprep.mubr.bf16.mxu0 0
      %579 = vmatmul.mubr.bf16.gmra.mrb[0].mxu0 %v452
      %v580 = vpop.f32.mrb[0].mxu0
      %v581 = vadd.f32 0.0, %v580
      %v582 = vpop.f32.mrb[0].mxu0
      %v583 = vpop.f32.mrb[0].mxu0
      %v584 = vadd.f32 0.0, %v583
      %v585 = vpop.f32.mrb[0].mxu0
      %586 = vmatprep.mubr.bf16.mxu0 0
      %587 = vmatmul.mubr.bf16.gmra.mrb[0].mxu0 %v453
      %v588 = vpop.f32.mrb[0].mxu0
      %v589 = vadd.f32 0.0, %v588
      %v590 = vpop.f32.mrb[0].mxu0
      %v591 = vpop.f32.mrb[0].mxu0
      %v592 = vadd.f32 0.0, %v591
      %v593 = vpop.f32.mrb[0].mxu0
      %594 = vmatprep.mubr.bf16.mxu0 0
      %595 = vmatmul.mubr.bf16.gmra.mrb[0].mxu0 %v454
      %v596 = vpop.f32.mrb[0].mxu0
      %v597 = vadd.f32 0.0, %v596
      %v598 = vpop.f32.mrb[0].mxu0
      %v599 = vpop.f32.mrb[0].mxu0
      %v600 = vadd.f32 0.0, %v599
      %v601 = vpop.f32.mrb[0].mxu0
      %602 = vmatprep.mubr.bf16.mxu0 0
      %603 = vmatmul.mubr.bf16.gmra.mrb[0].mxu0 %v455
      %v604 = vpop.f32.mrb[0].mxu0
      %v605 = vadd.f32 0.0, %v604
      %v606 = vpop.f32.mrb[0].mxu0
      %v607 = vpop.f32.mrb[0].mxu0
      %v608 = vadd.f32 0.0, %v607
      %v609 = vpop.f32.mrb[0].mxu0
      %610 = vmatprep.mubr.bf16.mxu0 0
      %611 = vmatmul.mubr.bf16.gmra.mrb[0].mxu0 %v456
      %v612 = vpop.f32.mrb[0].mxu0
      %v613 = vadd.f32 0.0, %v612
      %v614 = vpop.f32.mrb[0].mxu0
      %v615 = vpop.f32.mrb[0].mxu0
      %v616 = vadd.f32 0.0, %v615
      %v617 = vpop.f32.mrb[0].mxu0
      %618 = vmatprep.mubr.bf16.mxu0 0
      %619 = vmatmul.mubr.bf16.gmra.mrb[0].mxu0 %v457
      %v620 = vpop.f32.mrb[0].mxu0
      %v621 = vadd.f32 0.0, %v620
      %v622 = vpop.f32.mrb[0].mxu0
      %v623 = vpop.f32.mrb[0].mxu0
      %v624 = vadd.f32 0.0, %v623
      %v625 = vpop.f32.mrb[0].mxu0
      %626 = vmatprep.mubr.bf16.mxu0 0
      %627 = vmatmul.mubr.bf16.gmra.mrb[0].mxu0 %v458
      %v628 = vpop.f32.mrb[0].mxu0
      %v629 = vadd.f32 0.0, %v628
      %v630 = vpop.f32.mrb[0].mxu0
      %v631 = vpop.f32.mrb[0].mxu0
      %v632 = vadd.f32 0.0, %v631
      %v633 = vpop.f32.mrb[0].mxu0
      %634 = vmatprep.mubr.bf16.mxu0 0
      %635 = vmatmul.mubr.bf16.gmra.mrb[0].mxu0 %v459
      %v636 = vpop.f32.mrb[0].mxu0
      %v637 = vadd.f32 0.0, %v636
      %v638 = vpop.f32.mrb[0].mxu0
      %v639 = vpop.f32.mrb[0].mxu0
      %v640 = vadd.f32 0.0, %v639
      %v641 = vpop.f32.mrb[0].mxu0
      %642 = vmatprep.mubr.bf16.mxu0 0
      %643 = vmatmul.mubr.bf16.gmra.mrb[0].mxu0 %v460
      %v644 = vpop.f32.mrb[0].mxu0
      %v645 = vadd.f32 0.0, %v644
      %v646 = vpop.f32.mrb[0].mxu0
      %v647 = vpop.f32.mrb[0].mxu0
      %v648 = vadd.f32 0.0, %v647
      %v649 = vpop.f32.mrb[0].mxu0
      %650 = vmatprep.mubr.bf16.mxu0 0
      %651 = vmatmul.mubr.bf16.gmra.mrb[0].mxu0 %v461
      %v652 = vpop.f32.mrb[0].mxu0
      %v653 = vadd.f32 0.0, %v652
      %v654 = vpop.f32.mrb[0].mxu0
      %v655 = vpop.f32.mrb[0].mxu0
      %v656 = vadd.f32 0.0, %v655
      %v657 = vpop.f32.mrb[0].mxu0
      %658 = vmatprep.mubr.bf16.mxu0 0
      %659 = vmatmul.mubr.bf16.gmra.mrb[0].mxu0 %v462
      %v660 = vpop.f32.mrb[0].mxu0
      %v661 = vadd.f32 0.0, %v660
      %v662 = vpop.f32.mrb[0].mxu0
      %v663 = vpop.f32.mrb[0].mxu0
      %v664 = vadd.f32 0.0, %v663
      %v665 = vpop.f32.mrb[0].mxu0
      %666 = vmatprep.mubr.bf16.mxu0 0
      %667 = vmatmul.mubr.bf16.gmra.mrb[0].mxu0 %v463
      %v668 = vpop.f32.mrb[0].mxu0
      %v669 = vadd.f32 0.0, %v668
      %v670 = vpop.f32.mrb[0].mxu0
      %v671 = vpop.f32.mrb[0].mxu0
      %v672 = vadd.f32 0.0, %v671
      %v673 = vpop.f32.mrb[0].mxu0
      %674 = vmatprep.mubr.bf16.mxu0 0
      %675 = vmatmul.mubr.bf16.gmra.mrb[0].mxu0 %v464
      %v676 = vpop.f32.mrb[0].mxu0
      %v677 = vadd.f32 0.0, %v676
      %v678 = vpop.f32.mrb[0].mxu0
      %v679 = vpop.f32.mrb[0].mxu0
      %v680 = vadd.f32 0.0, %v679
      %v681 = vpop.f32.mrb[0].mxu0
      %682 = vmatprep.mubr.bf16.mxu0 0
      %683 = vmatmul.mubr.bf16.gmra.mrb[0].mxu0 %v465
      %v684 = vpop.f32.mrb[0].mxu0
      %v685 = vadd.f32 0.0, %v684
      %v686 = vpop.f32.mrb[0].mxu0
      %v687 = vpop.f32.mrb[0].mxu0
      %v688 = vadd.f32 0.0, %v687
      %v689 = vpop.f32.mrb[0].mxu0
      %690 = vdwg.mxu0
      %v723 = vunpack.c.l.b16 %v258
      %v724 = vunpack.c.l.b16 %v259
      %v725 = vunpack.c.l.b16 %v260
      %v726 = vunpack.c.l.b16 %v261
      %v727 = vunpack.c.l.b16 %v262
      %v728 = vunpack.c.l.b16 %v263
      %v729 = vunpack.c.l.b16 %v264
      %v730 = vunpack.c.l.b16 %v265
      %v731 = vunpack.c.l.b16 %v266
      %v732 = vunpack.c.l.b16 %v267
      %v733 = vunpack.c.l.b16 %v268
      %v734 = vunpack.c.l.b16 %v269
      %v735 = vunpack.c.l.b16 %v270
      %v736 = vunpack.c.l.b16 %v271
      %v737 = vunpack.c.l.b16 %v272
      %v738 = vunpack.c.l.b16 %v273
      %v739 = vunpack.c.l.b16 %v274
      %v740 = vunpack.c.l.b16 %v275
      %v741 = vunpack.c.l.b16 %v276
      %v742 = vunpack.c.l.b16 %v277
      %v743 = vunpack.c.l.b16 %v278
      %v744 = vunpack.c.l.b16 %v279
      %v745 = vunpack.c.l.b16 %v280
      %v746 = vunpack.c.l.b16 %v281
      %v747 = vunpack.c.l.b16 %v282
      %v748 = vunpack.c.l.b16 %v283
      %v749 = vunpack.c.l.b16 %v284
      %v750 = vunpack.c.l.b16 %v285
      %v751 = vunpack.c.l.b16 %v286
      %v752 = vunpack.c.l.b16 %v287
      %v753 = vunpack.c.l.b16 %v288
      %v754 = vunpack.c.l.b16 %v289
      %v755 = vpack.c.b16 %v724, %v723
      %v756 = vpack.c.b16 %v726, %v725
      %v757 = vpack.c.b16 %v728, %v727
      %v758 = vpack.c.b16 %v730, %v729
      %v759 = vpack.c.b16 %v732, %v731
      %v760 = vpack.c.b16 %v734, %v733
      %v761 = vpack.c.b16 %v736, %v735
      %v762 = vpack.c.b16 %v738, %v737
      %v763 = vpack.c.b16 %v740, %v739
      %v764 = vpack.c.b16 %v742, %v741
      %v765 = vpack.c.b16 %v744, %v743
      %v766 = vpack.c.b16 %v746, %v745
      %v767 = vpack.c.b16 %v748, %v747
      %v768 = vpack.c.b16 %v750, %v749
      %v769 = vpack.c.b16 %v752, %v751
      %v770 = vpack.c.b16 %v754, %v753
      %v803 = vunpack.c.l.b16 %v290
      %v804 = vunpack.c.l.b16 %v291
      %v805 = vunpack.c.l.b16 %v292
      %v806 = vunpack.c.l.b16 %v293
      %v807 = vunpack.c.l.b16 %v294
      %v808 = vunpack.c.l.b16 %v295
      %v809 = vunpack.c.l.b16 %v296
      %v810 = vunpack.c.l.b16 %v297
      %v811 = vunpack.c.l.b16 %v298
      %v812 = vunpack.c.l.b16 %v299
      %v813 = vunpack.c.l.b16 %v300
      %v814 = vunpack.c.l.b16 %v301
      %v815 = vunpack.c.l.b16 %v302
      %v816 = vunpack.c.l.b16 %v303
      %v817 = vunpack.c.l.b16 %v304
      %v818 = vunpack.c.l.b16 %v305
      %v819 = vpack.c.b16 %v804, %v803
      %v820 = vpack.c.b16 %v806, %v805
      %v821 = vpack.c.b16 %v808, %v807
      %v822 = vpack.c.b16 %v810, %v809
      %v823 = vpack.c.b16 %v812, %v811
      %v824 = vpack.c.b16 %v814, %v813
      %v825 = vpack.c.b16 %v816, %v815
      %v826 = vpack.c.b16 %v818, %v817
      %835 = vmatprep.subr.bf16.mxu0 0
      %836 = vmatpush1.bf16.msra.mxu0 %v819
      %837 = vmatprep.subr.bf16.mxu0 0
      %838 = vmatpush1.bf16.msra.mxu0 %v820
      %839 = vmatprep.subr.bf16.mxu0 0
      %840 = vmatpush1.bf16.msra.mxu0 %v821
      %841 = vmatprep.subr.bf16.mxu0 0
      %842 = vmatpush1.bf16.msra.mxu0 %v822
      %843 = vmatprep.subr.bf16.mxu0 0
      %844 = vmatpush1.bf16.msra.mxu0 %v823
      %845 = vmatprep.subr.bf16.mxu0 0
      %846 = vmatpush1.bf16.msra.mxu0 %v824
      %847 = vmatprep.subr.bf16.mxu0 0
      %848 = vmatpush1.bf16.msra.mxu0 %v825
      %849 = vmatprep.subr.bf16.mxu0 0
      %850 = vmatpush1.bf16.msra.mxu0 %v826
      %851 = vmatprep.subr.bf16.mxu0 0
      %852 = vmatpush1.bf16.msra.mxu0 0
      %853 = vmatprep.subr.bf16.mxu0 0
      %854 = vmatpush1.bf16.msra.mxu0 0
      %855 = vmatprep.subr.bf16.mxu0 0
      %856 = vmatpush1.bf16.msra.mxu0 0
      %857 = vmatprep.subr.bf16.mxu0 0
      %858 = vmatpush1.bf16.msra.mxu0 0
      %859 = vmatprep.subr.bf16.mxu0 0
      %860 = vmatpush1.bf16.msra.mxu0 0
      %861 = vmatprep.subr.bf16.mxu0 0
      %862 = vmatpush1.bf16.msra.mxu0 0
      %863 = vmatprep.subr.bf16.mxu0 0
      %864 = vmatpush1.bf16.msra.mxu0 0
      %865 = vmatprep.subr.bf16.mxu0 0
      %866 = vmatpush1.bf16.msra.mxu0 0
      %867 = vmatprep.mubr.bf16.mxu0 0
      %868 = vmatmul.mubr.bf16.gmra.mrb[0].mxu0 %v755
      %v869 = vpop.f32.mrb[0].mxu0
      %v870 = vadd.f32 %v565, %v869
      %v871 = vpop.f32.mrb[0].mxu0
      %v872 = vpop.f32.mrb[0].mxu0
      %v873 = vadd.f32 %v568, %v872
      %v874 = vpop.f32.mrb[0].mxu0
      %875 = vmatprep.mubr.bf16.mxu0 0
      %876 = vmatmul.mubr.bf16.gmra.mrb[0].mxu0 %v756
      %v877 = vpop.f32.mrb[0].mxu0
      %v878 = vadd.f32 %v573, %v877
      %v879 = vpop.f32.mrb[0].mxu0
      %v880 = vpop.f32.mrb[0].mxu0
      %v881 = vadd.f32 %v576, %v880
      %v882 = vpop.f32.mrb[0].mxu0
      %883 = vmatprep.mubr.bf16.mxu0 0
      %884 = vmatmul.mubr.bf16.gmra.mrb[0].mxu0 %v757
      %v885 = vpop.f32.mrb[0].mxu0
      %v886 = vadd.f32 %v581, %v885
      %v887 = vpop.f32.mrb[0].mxu0
      %v888 = vpop.f32.mrb[0].mxu0
      %v889 = vadd.f32 %v584, %v888
      %v890 = vpop.f32.mrb[0].mxu0
      %891 = vmatprep.mubr.bf16.mxu0 0
      %892 = vmatmul.mubr.bf16.gmra.mrb[0].mxu0 %v758
      %v893 = vpop.f32.mrb[0].mxu0
      %v894 = vadd.f32 %v589, %v893
      %v895 = vpop.f32.mrb[0].mxu0
      %v896 = vpop.f32.mrb[0].mxu0
      %v897 = vadd.f32 %v592, %v896
      %v898 = vpop.f32.mrb[0].mxu0
      %899 = vmatprep.mubr.bf16.mxu0 0
      %900 = vmatmul.mubr.bf16.gmra.mrb[0].mxu0 %v759
      %v901 = vpop.f32.mrb[0].mxu0
      %v902 = vadd.f32 %v597, %v901
      %v903 = vpop.f32.mrb[0].mxu0
      %v904 = vpop.f32.mrb[0].mxu0
      %v905 = vadd.f32 %v600, %v904
      %v906 = vpop.f32.mrb[0].mxu0
      %907 = vmatprep.mubr.bf16.mxu0 0
      %908 = vmatmul.mubr.bf16.gmra.mrb[0].mxu0 %v760
      %v909 = vpop.f32.mrb[0].mxu0
      %v910 = vadd.f32 %v605, %v909
      %v911 = vpop.f32.mrb[0].mxu0
      %v912 = vpop.f32.mrb[0].mxu0
      %v913 = vadd.f32 %v608, %v912
      %v914 = vpop.f32.mrb[0].mxu0
      %915 = vmatprep.mubr.bf16.mxu0 0
      %916 = vmatmul.mubr.bf16.gmra.mrb[0].mxu0 %v761
      %v917 = vpop.f32.mrb[0].mxu0
      %v918 = vadd.f32 %v613, %v917
      %v919 = vpop.f32.mrb[0].mxu0
      %v920 = vpop.f32.mrb[0].mxu0
      %v921 = vadd.f32 %v616, %v920
      %v922 = vpop.f32.mrb[0].mxu0
      %923 = vmatprep.mubr.bf16.mxu0 0
      %924 = vmatmul.mubr.bf16.gmra.mrb[0].mxu0 %v762
      %v925 = vpop.f32.mrb[0].mxu0
      %v926 = vadd.f32 %v621, %v925
      %v927 = vpop.f32.mrb[0].mxu0
      %v928 = vpop.f32.mrb[0].mxu0
      %v929 = vadd.f32 %v624, %v928
      %v930 = vpop.f32.mrb[0].mxu0
      %931 = vmatprep.mubr.bf16.mxu0 0
      %932 = vmatmul.mubr.bf16.gmra.mrb[0].mxu0 %v763
      %v933 = vpop.f32.mrb[0].mxu0
      %v934 = vadd.f32 %v629, %v933
      %v935 = vpop.f32.mrb[0].mxu0
      %v936 = vpop.f32.mrb[0].mxu0
      %v937 = vadd.f32 %v632, %v936
      %v938 = vpop.f32.mrb[0].mxu0
      %939 = vmatprep.mubr.bf16.mxu0 0
      %940 = vmatmul.mubr.bf16.gmra.mrb[0].mxu0 %v764
      %v941 = vpop.f32.mrb[0].mxu0
      %v942 = vadd.f32 %v637, %v941
      %v943 = vpop.f32.mrb[0].mxu0
      %v944 = vpop.f32.mrb[0].mxu0
      %v945 = vadd.f32 %v640, %v944
      %v946 = vpop.f32.mrb[0].mxu0
      %947 = vmatprep.mubr.bf16.mxu0 0
      %948 = vmatmul.mubr.bf16.gmra.mrb[0].mxu0 %v765
      %v949 = vpop.f32.mrb[0].mxu0
      %v950 = vadd.f32 %v645, %v949
      %v951 = vpop.f32.mrb[0].mxu0
      %v952 = vpop.f32.mrb[0].mxu0
      %v953 = vadd.f32 %v648, %v952
      %v954 = vpop.f32.mrb[0].mxu0
      %955 = vmatprep.mubr.bf16.mxu0 0
      %956 = vmatmul.mubr.bf16.gmra.mrb[0].mxu0 %v766
      %v957 = vpop.f32.mrb[0].mxu0
      %v958 = vadd.f32 %v653, %v957
      %v959 = vpop.f32.mrb[0].mxu0
      %v960 = vpop.f32.mrb[0].mxu0
      %v961 = vadd.f32 %v656, %v960
      %v962 = vpop.f32.mrb[0].mxu0
      %963 = vmatprep.mubr.bf16.mxu0 0
      %964 = vmatmul.mubr.bf16.gmra.mrb[0].mxu0 %v767
      %v965 = vpop.f32.mrb[0].mxu0
      %v966 = vadd.f32 %v661, %v965
      %v967 = vpop.f32.mrb[0].mxu0
      %v968 = vpop.f32.mrb[0].mxu0
      %v969 = vadd.f32 %v664, %v968
      %v970 = vpop.f32.mrb[0].mxu0
      %971 = vmatprep.mubr.bf16.mxu0 0
      %972 = vmatmul.mubr.bf16.gmra.mrb[0].mxu0 %v768
      %v973 = vpop.f32.mrb[0].mxu0
      %v974 = vadd.f32 %v669, %v973
      %v975 = vpop.f32.mrb[0].mxu0
      %v976 = vpop.f32.mrb[0].mxu0
      %v977 = vadd.f32 %v672, %v976
      %v978 = vpop.f32.mrb[0].mxu0
      %979 = vmatprep.mubr.bf16.mxu0 0
      %980 = vmatmul.mubr.bf16.gmra.mrb[0].mxu0 %v769
      %v981 = vpop.f32.mrb[0].mxu0
      %v982 = vadd.f32 %v677, %v981
      %v983 = vpop.f32.mrb[0].mxu0
      %v984 = vpop.f32.mrb[0].mxu0
      %v985 = vadd.f32 %v680, %v984
      %v986 = vpop.f32.mrb[0].mxu0
      %987 = vmatprep.mubr.bf16.mxu0 0
      %988 = vmatmul.mubr.bf16.gmra.mrb[0].mxu0 %v770
      %v989 = vpop.f32.mrb[0].mxu0
      %v990 = vadd.f32 %v685, %v989
      %v991 = vpop.f32.mrb[0].mxu0
      %v992 = vpop.f32.mrb[0].mxu0
      %v993 = vadd.f32 %v688, %v992
      %v994 = vpop.f32.mrb[0].mxu0
      %995 = vdwg.mxu0
      %v996 = vpack.c.bf16 %v873, %v870
      %v997 = vpack.c.bf16 %v881, %v878
      %v998 = vpack.c.bf16 %v889, %v886
      %v999 = vpack.c.bf16 %v897, %v894
      %v1000 = vpack.c.bf16 %v905, %v902
      %v1001 = vpack.c.bf16 %v913, %v910
      %v1002 = vpack.c.bf16 %v921, %v918
      %v1003 = vpack.c.bf16 %v929, %v926
      %v1004 = vpack.c.bf16 %v937, %v934
      %v1005 = vpack.c.bf16 %v945, %v942
      %v1006 = vpack.c.bf16 %v953, %v950
      %v1007 = vpack.c.bf16 %v961, %v958
      %v1008 = vpack.c.bf16 %v969, %v966
      %v1009 = vpack.c.bf16 %v977, %v974
      %v1010 = vpack.c.bf16 %v985, %v982
      %v1011 = vpack.c.bf16 %v993, %v990
      %v1028 = vunpack.c.l.b16 %v996
      %v1029 = vunpack.c.h.b16 %v996
      %v1030 = vunpack.c.l.b16 %v997
      %v1031 = vunpack.c.h.b16 %v997
      %v1032 = vunpack.c.l.b16 %v998
      %v1033 = vunpack.c.h.b16 %v998
      %v1034 = vunpack.c.l.b16 %v999
      %v1035 = vunpack.c.h.b16 %v999
      %v1036 = vunpack.c.l.b16 %v1000
      %v1037 = vunpack.c.h.b16 %v1000
      %v1038 = vunpack.c.l.b16 %v1001
      %v1039 = vunpack.c.h.b16 %v1001
      %v1040 = vunpack.c.l.b16 %v1002
      %v1041 = vunpack.c.h.b16 %v1002
      %v1042 = vunpack.c.l.b16 %v1003
      %v1043 = vunpack.c.h.b16 %v1003
      %v1044 = vunpack.c.l.b16 %v1004
      %v1045 = vunpack.c.h.b16 %v1004
      %v1046 = vunpack.c.l.b16 %v1005
      %v1047 = vunpack.c.h.b16 %v1005
      %v1048 = vunpack.c.l.b16 %v1006
      %v1049 = vunpack.c.h.b16 %v1006
      %v1050 = vunpack.c.l.b16 %v1007
      %v1051 = vunpack.c.h.b16 %v1007
      %v1052 = vunpack.c.l.b16 %v1008
      %v1053 = vunpack.c.h.b16 %v1008
      %v1054 = vunpack.c.l.b16 %v1009
      %v1055 = vunpack.c.h.b16 %v1009
      %v1056 = vunpack.c.l.b16 %v1010
      %v1057 = vunpack.c.h.b16 %v1010
      %v1058 = vunpack.c.l.b16 %v1011
      %v1059 = vunpack.c.h.b16 %v1011
      %v1060 = vpack.c.b16 %v1028, %v1028
      %v1061 = vpack.c.b16 %v1029, %v1029
      %v1062 = vpack.c.b16 %v1030, %v1030
      %v1063 = vpack.c.b16 %v1031, %v1031
      %v1064 = vpack.c.b16 %v1032, %v1032
      %v1065 = vpack.c.b16 %v1033, %v1033
      %v1066 = vpack.c.b16 %v1034, %v1034
      %v1067 = vpack.c.b16 %v1035, %v1035
      %v1068 = vpack.c.b16 %v1036, %v1036
      %v1069 = vpack.c.b16 %v1037, %v1037
      %v1070 = vpack.c.b16 %v1038, %v1038
      %v1071 = vpack.c.b16 %v1039, %v1039
      %v1072 = vpack.c.b16 %v1040, %v1040
      %v1073 = vpack.c.b16 %v1041, %v1041
      %v1074 = vpack.c.b16 %v1042, %v1042
      %v1075 = vpack.c.b16 %v1043, %v1043
      %v1076 = vpack.c.b16 %v1044, %v1044
      %v1077 = vpack.c.b16 %v1045, %v1045
      %v1078 = vpack.c.b16 %v1046, %v1046
      %v1079 = vpack.c.b16 %v1047, %v1047
      %v1080 = vpack.c.b16 %v1048, %v1048
      %v1081 = vpack.c.b16 %v1049, %v1049
      %v1082 = vpack.c.b16 %v1050, %v1050
      %v1083 = vpack.c.b16 %v1051, %v1051
      %v1084 = vpack.c.b16 %v1052, %v1052
      %v1085 = vpack.c.b16 %v1053, %v1053
      %v1086 = vpack.c.b16 %v1054, %v1054
      %v1087 = vpack.c.b16 %v1055, %v1055
      %v1088 = vpack.c.b16 %v1056, %v1056
      %v1089 = vpack.c.b16 %v1057, %v1057
      %v1090 = vpack.c.b16 %v1058, %v1058
      %v1091 = vpack.c.b16 %v1059, %v1059
      %1124 = vst [vmem:[%s223] sm:$0xff] %v1060
      %1125 = vst [vmem:[%s223 + $0x8] sm:$0xff] %v1061
      %1126 = vst [vmem:[%s223 + $0x10] sm:$0xff] %v1062
      %1127 = vst [vmem:[%s223 + $0x18] sm:$0xff] %v1063
      %1128 = vst [vmem:[%s223 + $0x20] sm:$0xff] %v1064
      %1129 = vst [vmem:[%s223 + $0x28] sm:$0xff] %v1065
      %1130 = vst [vmem:[%s223 + $0x30] sm:$0xff] %v1066
      %1131 = vst [vmem:[%s223 + $0x38] sm:$0xff] %v1067
      %1132 = vst [vmem:[%s223 + $0x40] sm:$0xff] %v1068
      %1133 = vst [vmem:[%s223 + $0x48] sm:$0xff] %v1069
      %1134 = vst [vmem:[%s223 + $0x50] sm:$0xff] %v1070
      %1135 = vst [vmem:[%s223 + $0x58] sm:$0xff] %v1071
      %1136 = vst [vmem:[%s223 + $0x60] sm:$0xff] %v1072
      %1137 = vst [vmem:[%s223 + $0x68] sm:$0xff] %v1073
      %1138 = vst [vmem:[%s223 + $0x70] sm:$0xff] %v1074
      %1139 = vst [vmem:[%s223 + $0x78] sm:$0xff] %v1075
      %1140 = vst [vmem:[%s223 + $0x80] sm:$0xff] %v1076
      %1141 = vst [vmem:[%s223 + $0x88] sm:$0xff] %v1077
      %1142 = vst [vmem:[%s223 + $0x90] sm:$0xff] %v1078
      %1143 = vst [vmem:[%s223 + $0x98] sm:$0xff] %v1079
      %1144 = vst [vmem:[%s223 + $0xa0] sm:$0xff] %v1080
      %1145 = vst [vmem:[%s223 + $0xa8] sm:$0xff] %v1081
      %1146 = vst [vmem:[%s223 + $0xb0] sm:$0xff] %v1082
      %1147 = vst [vmem:[%s223 + $0xb8] sm:$0xff] %v1083
      %1148 = vst [vmem:[%s223 + $0xc0] sm:$0xff] %v1084
      %1149 = vst [vmem:[%s223 + $0xc8] sm:$0xff] %v1085
      %1150 = vst [vmem:[%s223 + $0xd0] sm:$0xff] %v1086
      %1151 = vst [vmem:[%s223 + $0xd8] sm:$0xff] %v1087
      %1152 = vst [vmem:[%s223 + $0xe0] sm:$0xff] %v1088
      %1153 = vst [vmem:[%s223 + $0xe8] sm:$0xff] %v1089
      %1154 = vst [vmem:[%s223 + $0xf0] sm:$0xff] %v1090
      %1155 = vst [vmem:[%s223 + $0xf8] sm:$0xff] %v1091
      %s1156 = smul.u32 32, %s15
      %p1157 = scmp.lt.s32.totalorder %s1156, 63
      %s1158 = scalar_select %p1157, %s1156, 63
      %s1159 = smul.addr %s1158, 2
      %s1160 = smul.addr %s1159, 4
      %s1161 = scalar_lea.vmem %s4, %s1160
      // Predicated region
      $region37: #{model_forward.7} parent=35 // pred_check
        %p1162 = pneg %p127
      $region38: #{model_forward.7} parent=35 // pred_check_branch
        %1164 = sbr.rel (%p1162) target = $region40
      $region39: #{model_forward.7} parent=35 // pred_region
        %s1165 = smul.u32 32, %s15
      $region40: #{model_forward.7} parent=35 // pred_fallthru
        _
    $region36: #{model_forward.7} parent=5 // pred_fallthru
      _
    %p1166 = scmp.le.s32.totalorder 2, %s10
    // Predicated region
    $region41: #{model_forward.7} parent=5 // pred_check
      %p1167 = pneg %p1166
    $region42: #{model_forward.7} parent=5 // pred_check_branch
      %1169 = sbr.rel (%p1167) target = $region44
    $region43: #{model_forward.7} parent=5 // pred_region
      %s1170 = ssub.s32 %s10, 2
      // Predicated region
      $region45: #{model_forward.7} parent=43 // pred_check
        %p1171 = pneg %p133
      $region46: #{model_forward.7} parent=43 // pred_check_branch
        %1173 = sbr.rel (%p1171) target = $region48
      $region47: #{model_forward.7} parent=43 // pred_region
        %s1174 = smul.u32 32, %s16
        %p1175 = scmp.lt.s32.totalorder %s1174, 63
        %s1176 = scalar_select %p1175, %s1174, 63
        %s1177 = smul.addr %s1176, 2
        %s1178 = smul.addr %s1177, 4
        %s1179 = scalar_lea.vmem %s4, %s1178
      $region48: #{model_forward.7} parent=43 // pred_fallthru
        _
    $region44: #{model_forward.7} parent=5 // pred_fallthru
      _
  $region6: #{model_forward.7} parent=0 // loop_footer
    %s14 = sadd.s32 1, %s10
  $region7: #{model_forward.7} parent=0 // loop_footer_branch
    %9 = sbr.rel target = $region3
  $region8: #{model_forward.7} parent=0 // loop_exit
    _

// kernel: model_forward.6
$region0: #{model_forward.6}
  #allocation0 [shape = 'u32[]', space=smem, size = 0x4, offset = 0x4, fixed_abs, tag = 'smem constant byte address 0x4 - core index']
  #allocation1 [shape = 'u32[144,128]{1,0:T(1,128)}', space=vmem, size = 0x12000, scoped, tag = 'internal scratch']
  %s0 = inlined_call_operand.vmem [shape: f32[2,18,18,128], index: 0, kind: input, shape index: {}]
  %s1 = inlined_call_operand.vmem [shape: bf16[9,128,128], index: 1, kind: input, shape index: {}]
  %s2 = inlined_call_operand.vmem [shape: bf16[512,128], index: 2, kind: output, shape index: {}]
  %s3 = sld [smem:[#allocation0]]
  $region41: #{model_forward.6} parent=0
    _
  %s5 = ssub.s32 1, %s3
  %s6 = scalar_select 0, %s5, %s3
  loop: start=0, step=1, limit=4
  $region2: #{model_forward.6} parent=0 // loop_pre_header
    _
  $region3: #{model_forward.6} parent=0 // loop_header
    %s8 = sphi 0, %s12
    %p9 = scmp.ge.s32.totalorder %s8, 4
    %s18 = sphi 0, %s20
    %s21 = sphi 0, %s18
    %s22 = sphi 0, %s21
    %s38 = sphi 0, %s22
    %s42 = sphi 0, %s42
    %s44 = sphi 0, %s42
    %s45 = sphi 0, %s44
    %s59 = sphi 0, %s45
    %s65 = sphi 0, %s67
    %s68 = sphi 0, %s65
    %s69 = sphi 0, %s68
    %s85 = sphi 0, %s69
  $region4: #{model_forward.6} parent=0 // loop_header_branch
    %11 = sbr.rel (%p9) target = $region8
  $region5: #{model_forward.6} parent=0 // loop_body
    %s13 = ssub.s32 %s8, 1
    %s14 = ssub.s32 %s8, 2
    %s15 = sadd.s32 %s8, 1
    %s16 = ssub.s32 %s8, %s15
    %p17 = scmp.eq.s32.totalorder %s16, 0
    %s19 = sadd.s32 %s18, 1
    %s20 = scalar_select %p17, %s18, %s19
    %p23 = pneg %p17
    %p24 = scmp.eq.s32.totalorder %s8, 1
    %p25 = por %p23, %p24
    %p26 = scmp.ne.s32.totalorder %s18, %s21
    %p27 = scmp.eq.s32.totalorder %s8, 0
    %p28 = por %p26, %p27
    %p29 = scmp.ne.s32.totalorder %s18, %s21
    %p30 = scmp.eq.s32.totalorder %s13, 1
    %p31 = por %p29, %p30
    %p32 = scmp.ne.s32.totalorder %s21, %s22
    %p33 = scmp.eq.s32.totalorder %s13, 0
    %p34 = por %p32, %p33
    %p35 = scmp.ne.s32.totalorder %s21, %s22
    %p36 = scmp.eq.s32.totalorder %s14, 1
    %p37 = por %p35, %p36
    %p39 = scmp.ne.s32.totalorder %s22, %s38
    %p40 = scmp.eq.s32.totalorder %s14, 0
    %p41 = por %p39, %p40
    %s43 = sadd.s32 %s42, 1
    %p46 = scmp.eq.s32.totalorder %s8, 1
    %p47 = scmp.ne.s32.totalorder %s42, %s44
    %p48 = scmp.eq.s32.totalorder %s8, 0
    %p49 = por %p47, %p48
    %p50 = scmp.ne.s32.totalorder %s42, %s44
    %p51 = scmp.eq.s32.totalorder %s13, 1
    %p52 = por %p50, %p51
    %p53 = scmp.ne.s32.totalorder %s44, %s45
    %p54 = scmp.eq.s32.totalorder %s13, 0
    %p55 = por %p53, %p54
    %p56 = scmp.ne.s32.totalorder %s44, %s45
    %p57 = scmp.eq.s32.totalorder %s14, 1
    %p58 = por %p56, %p57
    %p60 = scmp.ne.s32.totalorder %s45, %s59
    %p61 = scmp.eq.s32.totalorder %s14, 0
    %p62 = por %p60, %p61
    %s63 = ssub.s32 %s8, %s15
    %p64 = scmp.eq.s32.totalorder %s63, 0
    %s66 = sadd.s32 %s65, 1
    %s67 = scalar_select %p64, %s65, %s66
    %p70 = pneg %p64
    %p71 = scmp.eq.s32.totalorder %s8, 1
    %p72 = por %p70, %p71
    %p73 = scmp.ne.s32.totalorder %s65, %s68
    %p74 = scmp.eq.s32.totalorder %s8, 0
    %p75 = por %p73, %p74
    %p76 = scmp.ne.s32.totalorder %s65, %s68
    %p77 = scmp.eq.s32.totalorder %s13, 1
    %p78 = por %p76, %p77
    %p79 = scmp.ne.s32.totalorder %s68, %s69
    %p80 = scmp.eq.s32.totalorder %s13, 0
    %p81 = por %p79, %p80
    %p82 = scmp.ne.s32.totalorder %s68, %s69
    %p83 = scmp.eq.s32.totalorder %s14, 1
    %p84 = por %p82, %p83
    %p86 = scmp.ne.s32.totalorder %s69, %s85
    %p87 = scmp.eq.s32.totalorder %s14, 0
    %p88 = por %p86, %p87
    %p89 = scmp.le.s32.totalorder 1, %s8
    %p90 = scmp.lt.s32.totalorder %s8, 3
    %p91 = pnand %p89, %p90
    %p92 = pneg %p91
    // Predicated region
    $region9: #{model_forward.6} parent=5 // pred_check
      _
    $region10: #{model_forward.6} parent=5 // pred_check_branch
      %94 = sbr.rel (%p91) target = $region12
    $region11: #{model_forward.6} parent=5 // pred_region
      %s95 = ssub.s32 %s8, 1
      // Predicated region
      $region13: #{model_forward.6} parent=11 // pred_check
        %p96 = pneg %p55
      $region14: #{model_forward.6} parent=11 // pred_check_branch
        %98 = sbr.rel (%p96) target = $region16
      $region15: #{model_forward.6} parent=11 // pred_region
        _
      $region16: #{model_forward.6} parent=11 // pred_fallthru
        _
    $region12: #{model_forward.6} parent=5 // pred_fallthru
      _
    %p99 = scmp.lt.s32.totalorder %s8, 2
    // Predicated region
    $region17: #{model_forward.6} parent=5 // pred_check
      %p100 = pneg %p99
    $region18: #{model_forward.6} parent=5 // pred_check_branch
      %102 = sbr.rel (%p100) target = $region20
    $region19: #{model_forward.6} parent=5 // pred_region
      // Predicated region
      $region21: #{model_forward.6} parent=19 // pred_check
        %p103 = pneg %p28
      $region22: #{model_forward.6} parent=19 // pred_check_branch
        %105 = sbr.rel (%p103) target = $region24
      $region23: #{model_forward.6} parent=19 // pred_region
        %p106 = scmp.lt.s32.totalorder %s8, 1
        %s107 = scalar_select %p106, %s8, 1
        %s108 = smul.addr %s107, 54
        %s109 = smul.addr %s108, 8
        %s110 = scalar_lea.vmem %s0, %s109
      $region24: #{model_forward.6} parent=19 // pred_fallthru
        _
    $region20: #{model_forward.6} parent=5 // pred_fallthru
      _
    %p111 = scmp.le.s32.totalorder 1, %s8
    %p112 = scmp.lt.s32.totalorder %s8, 3
    %p113 = pnand %p111, %p112
    %p114 = pneg %p113
    // Predicated region
    $region25: #{model_forward.6} parent=5 // pred_check
      _
    $region26: #{model_forward.6} parent=5 // pred_check_branch
      %116 = sbr.rel (%p113) target = $region28
    $region27: #{model_forward.6} parent=5 // pred_region
      %s117 = ssub.s32 %s8, 1
      %p118 = scmp.lt.s32.totalorder %s13, 1
      %s119 = scalar_select %p118, %s13, 1
      %s120 = smul.addr %s119, 54
      %s121 = smul.addr %s120, 8
      %s122 = scalar_lea.vmem %s0, %s121
      %p123 = pneg %p34
      %p124 = pneg %p31
      %p125 = pneg %p55
      %p126 = pneg %p52
      %p127 = pneg %p81
      %p128 = pneg %p78
      %s129 = smul.u32 32, %s13
      %p130 = scmp.lt.s32.totalorder %s129, 63
      %s131 = scalar_select %p130, %s129, 63
      %s132 = smul.addr %s131, 4
      %s133 = scalar_lea.vmem %s2, %s132
      %p134 = scmp.lt.s32.totalorder %s13, 1
      %s135 = scalar_select %p134, %s13, 1
      %s136 = smul.addr %s135, 54
      %s137 = smul.addr %s136, 8
      %s138 = scalar_lea.vmem %s0, %s137
      %s139 = smul.u32 32, %s13
      %p140 = scmp.lt.s32.totalorder %s139, 63
      %s141 = scalar_select %p140, %s139, 63
      %s142 = smul.addr %s141, 4
      %s143 = scalar_lea.vmem %s2, %s142
      %s144 = smul.u32 32, %s13
      %v146 = vld [vmem:[%s138] sm:$0xff]
      %v147 = vld [vmem:[%s138 + $0x8] sm:$0xff]
      %v148 = vld [vmem:[%s138 + $0x18] sm:$0xff]
      %v149 = vld [vmem:[%s138 + $0x20] sm:$0xff]
      %v150 = vld [vmem:[%s138 + $0x30] sm:$0xff]
      %v151 = vld [vmem:[%s138 + $0x38] sm:$0xff]
      %v152 = vld [vmem:[%s138 + $0x48] sm:$0xff]
      %v153 = vld [vmem:[%s138 + $0x50] sm:$0xff]
      %v154 = vld [vmem:[%s138 + $0x60] sm:$0xff]
      %v155 = vld [vmem:[%s138 + $0x68] sm:$0xff]
      %v156 = vld [vmem:[%s138 + $0x78] sm:$0xff]
      %v157 = vld [vmem:[%s138 + $0x80] sm:$0xff]
      %v158 = vld [vmem:[%s138 + $0x90] sm:$0xff]
      %v159 = vld [vmem:[%s138 + $0x98] sm:$0xff]
      %v160 = vld [vmem:[%s138 + $0xa8] sm:$0xff]
      %v161 = vld [vmem:[%s138 + $0xb0] sm:$0xff]
      %v162 = vld [vmem:[%s138 + $0xc0] sm:$0xff]
      %v163 = vld [vmem:[%s138 + $0xc8] sm:$0xff]
      %v164 = vld [vmem:[%s138 + $0xd8] sm:$0xff]
      %v165 = vld [vmem:[%s138 + $0xe0] sm:$0xff]
      %v166 = vld [vmem:[%s138 + $0xf0] sm:$0xff]
      %v167 = vld [vmem:[%s138 + $0xf8] sm:$0xff]
      %v168 = vld [vmem:[%s138 + $0x108] sm:$0xff]
      %v169 = vld [vmem:[%s138 + $0x110] sm:$0xff]
      %v170 = vld [vmem:[%s138 + $0x120] sm:$0xff]
      %v171 = vld [vmem:[%s138 + $0x128] sm:$0xff]
      %v172 = vld [vmem:[%s138 + $0x138] sm:$0xff]
      %v173 = vld [vmem:[%s138 + $0x140] sm:$0xff]
      %v174 = vld [vmem:[%s138 + $0x150] sm:$0xff]
      %v175 = vld [vmem:[%s138 + $0x158] sm:$0xff]
      %v176 = vld [vmem:[%s138 + $0x168] sm:$0xff]
      %v177 = vld [vmem:[%s138 + $0x170] sm:$0xff]
      %v178 = vpack.c.bf16 %v147, %v146
      %v179 = vpack.c.bf16 %v149, %v148
      %v180 = vpack.c.bf16 %v151, %v150
      %v181 = vpack.c.bf16 %v153, %v152
      %v182 = vpack.c.bf16 %v155, %v154
      %v183 = vpack.c.bf16 %v157, %v156
      %v184 = vpack.c.bf16 %v159, %v158
      %v185 = vpack.c.bf16 %v161, %v160
      %v186 = vpack.c.bf16 %v163, %v162
      %v187 = vpack.c.bf16 %v165, %v164
      %v188 = vpack.c.bf16 %v167, %v166
      %v189 = vpack.c.bf16 %v169, %v168
      %v190 = vpack.c.bf16 %v171, %v170
      %v191 = vpack.c.bf16 %v173, %v172
      %v192 = vpack.c.bf16 %v175, %v174
      %v193 = vpack.c.bf16 %v177, %v176
      %v194 = vld [vmem:[%s1] sm:$0xf]
      %v195 = vld [vmem:[%s1 + $0x4] sm:$0xf]
      %v196 = vld [vmem:[%s1 + $0x8] sm:$0xf]
      %v197 = vld [vmem:[%s1 + $0xc] sm:$0xf]
      %v198 = vld [vmem:[%s1 + $0x10] sm:$0xf]
      %v199 = vld [vmem:[%s1 + $0x14] sm:$0xf]
      %v200 = vld [vmem:[%s1 + $0x18] sm:$0xf]
      %v201 = vld [vmem:[%s1 + $0x1c] sm:$0xf]
      %v202 = vld [vmem:[%s1 + $0x20] sm:$0xf]
      %v203 = vld [vmem:[%s1 + $0x24] sm:$0xf]
      %v204 = vld [vmem:[%s1 + $0x28] sm:$0xf]
      %v205 = vld [vmem:[%s1 + $0x2c] sm:$0xf]
      %v206 = vld [vmem:[%s1 + $0x30] sm:$0xf]
      %v207 = vld [vmem:[%s1 + $0x34] sm:$0xf]
      %v208 = vld [vmem:[%s1 + $0x38] sm:$0xf]
      %v209 = vld [vmem:[%s1 + $0x3c] sm:$0xf]
      %v210 = vld [vmem:[%s138 + $0x1] sm:$0xff]
      %v211 = vld [vmem:[%s138 + $0x9] sm:$0xff]
      %v212 = vld [vmem:[%s138 + $0x19] sm:$0xff]
      %v213 = vld [vmem:[%s138 + $0x21] sm:$0xff]
      %v214 = vld [vmem:[%s138 + $0x31] sm:$0xff]
      %v215 = vld [vmem:[%s138 + $0x39] sm:$0xff]
      %v216 = vld [vmem:[%s138 + $0x49] sm:$0xff]
      %v217 = vld [vmem:[%s138 + $0x51] sm:$0xff]
      %v218 = vld [vmem:[%s138 + $0x61] sm:$0xff]
      %v219 = vld [vmem:[%s138 + $0x69] sm:$0xff]
      %v220 = vld [vmem:[%s138 + $0x79] sm:$0xff]
      %v221 = vld [vmem:[%s138 + $0x81] sm:$0xff]
      %v222 = vld [vmem:[%s138 + $0x91] sm:$0xff]
      %v223 = vld [vmem:[%s138 + $0x99] sm:$0xff]
      %v224 = vld [vmem:[%s138 + $0xa9] sm:$0xff]
      %v225 = vld [vmem:[%s138 + $0xb1] sm:$0xff]
      %v226 = vld [vmem:[%s138 + $0xc1] sm:$0xff]
      %v227 = vld [vmem:[%s138 + $0xc9] sm:$0xff]
      %v228 = vld [vmem:[%s138 + $0xd9] sm:$0xff]
      %v229 = vld [vmem:[%s138 + $0xe1] sm:$0xff]
      %v230 = vld [vmem:[%s138 + $0xf1] sm:$0xff]
      %v231 = vld [vmem:[%s138 + $0xf9] sm:$0xff]
      %v232 = vld [vmem:[%s138 + $0x109] sm:$0xff]
      %v233 = vld [vmem:[%s138 + $0x111] sm:$0xff]
      %v234 = vld [vmem:[%s138 + $0x121] sm:$0xff]
      %v235 = vld [vmem:[%s138 + $0x129] sm:$0xff]
      %v236 = vld [vmem:[%s138 + $0x139] sm:$0xff]
      %v237 = vld [vmem:[%s138 + $0x141] sm:$0xff]
      %v238 = vld [vmem:[%s138 + $0x151] sm:$0xff]
      %v239 = vld [vmem:[%s138 + $0x159] sm:$0xff]
      %v240 = vld [vmem:[%s138 + $0x169] sm:$0xff]
      %v241 = vld [vmem:[%s138 + $0x171] sm:$0xff]
      %v242 = vpack.c.bf16 %v211, %v210
      %v243 = vpack.c.bf16 %v213, %v212
      %v244 = vpack.c.bf16 %v215, %v214
      %v245 = vpack.c.bf16 %v217, %v216
      %v246 = vpack.c.bf16 %v219, %v218
      %v247 = vpack.c.bf16 %v221, %v220
      %v248 = vpack.c.bf16 %v223, %v222
      %v249 = vpack.c.bf16 %v225, %v224
      %v250 = vpack.c.bf16 %v227, %v226
      %v251 = vpack.c.bf16 %v229, %v228
      %v252 = vpack.c.bf16 %v231, %v230
      %v253 = vpack.c.bf16 %v233, %v232
      %v254 = vpack.c.bf16 %v235, %v234
      %v255 = vpack.c.bf16 %v237, %v236
      %v256 = vpack.c.bf16 %v239, %v238
      %v257 = vpack.c.bf16 %v241, %v240
      %s258 = scalar_lea.vmem %s1, 64
      %v259 = vld [vmem:[%s258] sm:$0xf]
      %v260 = vld [vmem:[%s258 + $0x4] sm:$0xf]
      %v261 = vld [vmem:[%s258 + $0x8] sm:$0xf]
      %v262 = vld [vmem:[%s258 + $0xc] sm:$0xf]
      %v263 = vld [vmem:[%s258 + $0x10] sm:$0xf]
      %v264 = vld [vmem:[%s258 + $0x14] sm:$0xf]
      %v265 = vld [vmem:[%s258 + $0x18] sm:$0xf]
      %v266 = vld [vmem:[%s258 + $0x1c] sm:$0xf]
      %v267 = vld [vmem:[%s258 + $0x20] sm:$0xf]
      %v268 = vld [vmem:[%s258 + $0x24] sm:$0xf]
      %v269 = vld [vmem:[%s258 + $0x28] sm:$0xf]
      %v270 = vld [vmem:[%s258 + $0x2c] sm:$0xf]
      %v271 = vld [vmem:[%s258 + $0x30] sm:$0xf]
      %v272 = vld [vmem:[%s258 + $0x34] sm:$0xf]
      %v273 = vld [vmem:[%s258 + $0x38] sm:$0xf]
      %v274 = vld [vmem:[%s258 + $0x3c] sm:$0xf]
      %v291 = vunpack.c.l.b16 %v259
      %v292 = vunpack.c.l.b16 %v260
      %v293 = vunpack.c.l.b16 %v261
      %v294 = vunpack.c.l.b16 %v262
      %v295 = vunpack.c.l.b16 %v263
      %v296 = vunpack.c.l.b16 %v264
      %v297 = vunpack.c.l.b16 %v265
      %v298 = vunpack.c.l.b16 %v266
      %v299 = vunpack.c.l.b16 %v267
      %v300 = vunpack.c.l.b16 %v268
      %v301 = vunpack.c.l.b16 %v269
      %v302 = vunpack.c.l.b16 %v270
      %v303 = vunpack.c.l.b16 %v271
      %v304 = vunpack.c.l.b16 %v272
      %v305 = vunpack.c.l.b16 %v273
      %v306 = vunpack.c.l.b16 %v274
      %v307 = vpack.c.b16 %v292, %v291
      %v308 = vpack.c.b16 %v294, %v293
      %v309 = vpack.c.b16 %v296, %v295
      %v310 = vpack.c.b16 %v298, %v297
      %v311 = vpack.c.b16 %v300, %v299
      %v312 = vpack.c.b16 %v302, %v301
      %v313 = vpack.c.b16 %v304, %v303
      %v314 = vpack.c.b16 %v306, %v305
      %323 = vmatprep.subr.bf16.mxu0 0
      %324 = vmatpush1.bf16.msra.mxu0 %v307
      %325 = vmatprep.subr.bf16.mxu0 0
      %326 = vmatpush1.bf16.msra.mxu0 %v308
      %327 = vmatprep.subr.bf16.mxu0 0
      %328 = vmatpush1.bf16.msra.mxu0 %v309
      %329 = vmatprep.subr.bf16.mxu0 0
      %330 = vmatpush1.bf16.msra.mxu0 %v310
      %331 = vmatprep.subr.bf16.mxu0 0
      %332 = vmatpush1.bf16.msra.mxu0 %v311
      %333 = vmatprep.subr.bf16.mxu0 0
      %334 = vmatpush1.bf16.msra.mxu0 %v312
      %335 = vmatprep.subr.bf16.mxu0 0
      %336 = vmatpush1.bf16.msra.mxu0 %v313
      %337 = vmatprep.subr.bf16.mxu0 0
      %338 = vmatpush1.bf16.msra.mxu0 %v314
      %339 = vmatprep.subr.bf16.mxu0 0
      %340 = vmatpush1.bf16.msra.mxu0 0
      %341 = vmatprep.subr.bf16.mxu0 0
      %342 = vmatpush1.bf16.msra.mxu0 0
      %343 = vmatprep.subr.bf16.mxu0 0
      %344 = vmatpush1.bf16.msra.mxu0 0
      %345 = vmatprep.subr.bf16.mxu0 0
      %346 = vmatpush1.bf16.msra.mxu0 0
      %347 = vmatprep.subr.bf16.mxu0 0
      %348 = vmatpush1.bf16.msra.mxu0 0
      %349 = vmatprep.subr.bf16.mxu0 0
      %350 = vmatpush1.bf16.msra.mxu0 0
      %351 = vmatprep.subr.bf16.mxu0 0
      %352 = vmatpush1.bf16.msra.mxu0 0
      %353 = vmatprep.subr.bf16.mxu0 0
      %354 = vmatpush1.bf16.msra.mxu0 0
      %355 = vmatprep.mubr.bf16.mxu0 0
      %356 = vmatmul.mubr.bf16.gmra.mrb[0].mxu0 %v242
      %v357 = vpop.f32.mrb[0].mxu0
      %v358 = vadd.f32 0.0, %v357
      %v359 = vpop.f32.mrb[0].mxu0
      %v360 = vpop.f32.mrb[0].mxu0
      %v361 = vadd.f32 0.0, %v360
      %v362 = vpop.f32.mrb[0].mxu0
      %363 = vmatprep.mubr.bf16.mxu0 0
      %364 = vmatmul.mubr.bf16.gmra.mrb[0].mxu0 %v243
      %v365 = vpop.f32.mrb[0].mxu0
      %v366 = vadd.f32 0.0, %v365
      %v367 = vpop.f32.mrb[0].mxu0
      %v368 = vpop.f32.mrb[0].mxu0
      %v369 = vadd.f32 0.0, %v368
      %v370 = vpop.f32.mrb[0].mxu0
      %371 = vmatprep.mubr.bf16.mxu0 0
      %372 = vmatmul.mubr.bf16.gmra.mrb[0].mxu0 %v244
      %v373 = vpop.f32.mrb[0].mxu0
      %v374 = vadd.f32 0.0, %v373
      %v375 = vpop.f32.mrb[0].mxu0
      %v376 = vpop.f32.mrb[0].mxu0
      %v377 = vadd.f32 0.0, %v376
      %v378 = vpop.f32.mrb[0].mxu0
      %379 = vmatprep.mubr.bf16.mxu0 0
      %380 = vmatmul.mubr.bf16.gmra.mrb[0].mxu0 %v245
      %v381 = vpop.f32.mrb[0].mxu0
      %v382 = vadd.f32 0.0, %v381
      %v383 = vpop.f32.mrb[0].mxu0
      %v384 = vpop.f32.mrb[0].mxu0
      %v385 = vadd.f32 0.0, %v384
      %v386 = vpop.f32.mrb[0].mxu0
      %387 = vmatprep.mubr.bf16.mxu0 0
      %388 = vmatmul.mubr.bf16.gmra.mrb[0].mxu0 %v246
      %v389 = vpop.f32.mrb[0].mxu0
      %v390 = vadd.f32 0.0, %v389
      %v391 = vpop.f32.mrb[0].mxu0
      %v392 = vpop.f32.mrb[0].mxu0
      %v393 = vadd.f32 0.0, %v392
      %v394 = vpop.f32.mrb[0].mxu0
      %395 = vmatprep.mubr.bf16.mxu0 0
      %396 = vmatmul.mubr.bf16.gmra.mrb[0].mxu0 %v247
      %v397 = vpop.f32.mrb[0].mxu0
      %v398 = vadd.f32 0.0, %v397
      %v399 = vpop.f32.mrb[0].mxu0
      %v400 = vpop.f32.mrb[0].mxu0
      %v401 = vadd.f32 0.0, %v400
      %v402 = vpop.f32.mrb[0].mxu0
      %403 = vmatprep.mubr.bf16.mxu0 0
      %404 = vmatmul.mubr.bf16.gmra.mrb[0].mxu0 %v248
      %v405 = vpop.f32.mrb[0].mxu0
      %v406 = vadd.f32 0.0, %v405
      %v407 = vpop.f32.mrb[0].mxu0
      %v408 = vpop.f32.mrb[0].mxu0
      %v409 = vadd.f32 0.0, %v408
      %v410 = vpop.f32.mrb[0].mxu0
      %411 = vmatprep.mubr.bf16.mxu0 0
      %412 = vmatmul.mubr.bf16.gmra.mrb[0].mxu0 %v249
      %v413 = vpop.f32.mrb[0].mxu0
      %v414 = vadd.f32 0.0, %v413
      %v415 = vpop.f32.mrb[0].mxu0
      %v416 = vpop.f32.mrb[0].mxu0
      %v417 = vadd.f32 0.0, %v416
      %v418 = vpop.f32.mrb[0].mxu0
      %419 = vmatprep.mubr.bf16.mxu0 0
      %420 = vmatmul.mubr.bf16.gmra.mrb[0].mxu0 %v250
      %v421 = vpop.f32.mrb[0].mxu0
      %v422 = vadd.f32 0.0, %v421
      %v423 = vpop.f32.mrb[0].mxu0
      %v424 = vpop.f32.mrb[0].mxu0
      %v425 = vadd.f32 0.0, %v424
      %v426 = vpop.f32.mrb[0].mxu0
      %427 = vmatprep.mubr.bf16.mxu0 0
      %428 = vmatmul.mubr.bf16.gmra.mrb[0].mxu0 %v251
      %v429 = vpop.f32.mrb[0].mxu0
      %v430 = vadd.f32 0.0, %v429
      %v431 = vpop.f32.mrb[0].mxu0
      %v432 = vpop.f32.mrb[0].mxu0
      %v433 = vadd.f32 0.0, %v432
      %v434 = vpop.f32.mrb[0].mxu0
      %435 = vmatprep.mubr.bf16.mxu0 0
      %436 = vmatmul.mubr.bf16.gmra.mrb[0].mxu0 %v252
      %v437 = vpop.f32.mrb[0].mxu0
      %v438 = vadd.f32 0.0, %v437
      %v439 = vpop.f32.mrb[0].mxu0
      %v440 = vpop.f32.mrb[0].mxu0
      %v441 = vadd.f32 0.0, %v440
      %v442 = vpop.f32.mrb[0].mxu0
      %443 = vmatprep.mubr.bf16.mxu0 0
      %444 = vmatmul.mubr.bf16.gmra.mrb[0].mxu0 %v253
      %v445 = vpop.f32.mrb[0].mxu0
      %v446 = vadd.f32 0.0, %v445
      %v447 = vpop.f32.mrb[0].mxu0
      %v448 = vpop.f32.mrb[0].mxu0
      %v449 = vadd.f32 0.0, %v448
      %v450 = vpop.f32.mrb[0].mxu0
      %451 = vmatprep.mubr.bf16.mxu0 0
      %452 = vmatmul.mubr.bf16.gmra.mrb[0].mxu0 %v254
      %v453 = vpop.f32.mrb[0].mxu0
      %v454 = vadd.f32 0.0, %v453
      %v455 = vpop.f32.mrb[0].mxu0
      %v456 = vpop.f32.mrb[0].mxu0
      %v457 = vadd.f32 0.0, %v456
      %v458 = vpop.f32.mrb[0].mxu0
      %459 = vmatprep.mubr.bf16.mxu0 0
      %460 = vmatmul.mubr.bf16.gmra.mrb[0].mxu0 %v255
      %v461 = vpop.f32.mrb[0].mxu0
      %v462 = vadd.f32 0.0, %v461
      %v463 = vpop.f32.mrb[0].mxu0
      %v464 = vpop.f32.mrb[0].mxu0
      %v465 = vadd.f32 0.0, %v464
      %v466 = vpop.f32.mrb[0].mxu0
      %467 = vmatprep.mubr.bf16.mxu0 0
      %468 = vmatmul.mubr.bf16.gmra.mrb[0].mxu0 %v256
      %v469 = vpop.f32.mrb[0].mxu0
      %v470 = vadd.f32 0.0, %v469
      %v471 = vpop.f32.mrb[0].mxu0
      %v472 = vpop.f32.mrb[0].mxu0
      %v473 = vadd.f32 0.0, %v472
      %v474 = vpop.f32.mrb[0].mxu0
      %475 = vmatprep.mubr.bf16.mxu0 0
      %476 = vmatmul.mubr.bf16.gmra.mrb[0].mxu0 %v257
      %v477 = vpop.f32.mrb[0].mxu0
      %v478 = vadd.f32 0.0, %v477
      %v479 = vpop.f32.mrb[0].mxu0
      %v480 = vpop.f32.mrb[0].mxu0
      %v481 = vadd.f32 0.0, %v480
      %v482 = vpop.f32.mrb[0].mxu0
      %483 = vdwg.mxu0
      %v500 = vunpack.c.l.b16 %v194
      %v501 = vunpack.c.l.b16 %v195
      %v502 = vunpack.c.l.b16 %v196
      %v503 = vunpack.c.l.b16 %v197
      %v504 = vunpack.c.l.b16 %v198
      %v505 = vunpack.c.l.b16 %v199
      %v506 = vunpack.c.l.b16 %v200
      %v507 = vunpack.c.l.b16 %v201
      %v508 = vunpack.c.l.b16 %v202
      %v509 = vunpack.c.l.b16 %v203
      %v510 = vunpack.c.l.b16 %v204
      %v511 = vunpack.c.l.b16 %v205
      %v512 = vunpack.c.l.b16 %v206
      %v513 = vunpack.c.l.b16 %v207
      %v514 = vunpack.c.l.b16 %v208
      %v515 = vunpack.c.l.b16 %v209
      %v516 = vpack.c.b16 %v501, %v500
      %v517 = vpack.c.b16 %v503, %v502
      %v518 = vpack.c.b16 %v505, %v504
      %v519 = vpack.c.b16 %v507, %v506
      %v520 = vpack.c.b16 %v509, %v508
      %v521 = vpack.c.b16 %v511, %v510
      %v522 = vpack.c.b16 %v513, %v512
      %v523 = vpack.c.b16 %v515, %v514
      %532 = vmatprep.subr.bf16.mxu0 0
      %533 = vmatpush1.bf16.msra.mxu0 %v516
      %534 = vmatprep.subr.bf16.mxu0 0
      %535 = vmatpush1.bf16.msra.mxu0 %v517
      %536 = vmatprep.subr.bf16.mxu0 0
      %537 = vmatpush1.bf16.msra.mxu0 %v518
      %538 = vmatprep.subr.bf16.mxu0 0
      %539 = vmatpush1.bf16.msra.mxu0 %v519
      %540 = vmatprep.subr.bf16.mxu0 0
      %541 = vmatpush1.bf16.msra.mxu0 %v520
      %542 = vmatprep.subr.bf16.mxu0 0
      %543 = vmatpush1.bf16.msra.mxu0 %v521
      %544 = vmatprep.subr.bf16.mxu0 0
      %545 = vmatpush1.bf16.msra.mxu0 %v522
      %546 = vmatprep.subr.bf16.mxu0 0
      %547 = vmatpush1.bf16.msra.mxu0 %v523
      %548 = vmatprep.subr.bf16.mxu0 0
      %549 = vmatpush1.bf16.msra.mxu0 0
      %550 = vmatprep.subr.bf16.mxu0 0
      %551 = vmatpush1.bf16.msra.mxu0 0
      %552 = vmatprep.subr.bf16.mxu0 0
      %553 = vmatpush1.bf16.msra.mxu0 0
      %554 = vmatprep.subr.bf16.mxu0 0
      %555 = vmatpush1.bf16.msra.mxu0 0
      %556 = vmatprep.subr.bf16.mxu0 0
      %557 = vmatpush1.bf16.msra.mxu0 0
      %558 = vmatprep.subr.bf16.mxu0 0
      %559 = vmatpush1.bf16.msra.mxu0 0
      %560 = vmatprep.subr.bf16.mxu0 0
      %561 = vmatpush1.bf16.msra.mxu0 0
      %562 = vmatprep.subr.bf16.mxu0 0
      %563 = vmatpush1.bf16.msra.mxu0 0
      %564 = vmatprep.mubr.bf16.mxu0 0
      %565 = vmatmul.mubr.bf16.gmra.mrb[0].mxu0 %v178
      %v566 = vpop.f32.mrb[0].mxu0
      %v567 = vadd.f32 %v358, %v566
      %v568 = vpop.f32.mrb[0].mxu0
      %v569 = vpop.f32.mrb[0].mxu0
      %v570 = vadd.f32 %v361, %v569
      %v571 = vpop.f32.mrb[0].mxu0
      %572 = vmatprep.mubr.bf16.mxu0 0
      %573 = vmatmul.mubr.bf16.gmra.mrb[0].mxu0 %v179
      %v574 = vpop.f32.mrb[0].mxu0
      %v575 = vadd.f32 %v366, %v574
      %v576 = vpop.f32.mrb[0].mxu0
      %v577 = vpop.f32.mrb[0].mxu0
      %v578 = vadd.f32 %v369, %v577
      %v579 = vpop.f32.mrb[0].mxu0
      %580 = vmatprep.mubr.bf16.mxu0 0
      %581 = vmatmul.mubr.bf16.gmra.mrb[0].mxu0 %v180
      %v582 = vpop.f32.mrb[0].mxu0
      %v583 = vadd.f32 %v374, %v582
      %v584 = vpop.f32.mrb[0].mxu0
      %v585 = vpop.f32.mrb[0].mxu0
      %v586 = vadd.f32 %v377, %v585
      %v587 = vpop.f32.mrb[0].mxu0
      %588 = vmatprep.mubr.bf16.mxu0 0
      %589 = vmatmul.mubr.bf16.gmra.mrb[0].mxu0 %v181
      %v590 = vpop.f32.mrb[0].mxu0
      %v591 = vadd.f32 %v382, %v590
      %v592 = vpop.f32.mrb[0].mxu0
      %v593 = vpop.f32.mrb[0].mxu0
      %v594 = vadd.f32 %v385, %v593
      %v595 = vpop.f32.mrb[0].mxu0
      %596 = vmatprep.mubr.bf16.mxu0 0
      %597 = vmatmul.mubr.bf16.gmra.mrb[0].mxu0 %v182
      %v598 = vpop.f32.mrb[0].mxu0
      %v599 = vadd.f32 %v390, %v598
      %v600 = vpop.f32.mrb[0].mxu0
      %v601 = vpop.f32.mrb[0].mxu0
      %v602 = vadd.f32 %v393, %v601
      %v603 = vpop.f32.mrb[0].mxu0
      %604 = vmatprep.mubr.bf16.mxu0 0
      %605 = vmatmul.mubr.bf16.gmra.mrb[0].mxu0 %v183
      %v606 = vpop.f32.mrb[0].mxu0
      %v607 = vadd.f32 %v398, %v606
      %v608 = vpop.f32.mrb[0].mxu0
      %v609 = vpop.f32.mrb[0].mxu0
      %v610 = vadd.f32 %v401, %v609
      %v611 = vpop.f32.mrb[0].mxu0
      %612 = vmatprep.mubr.bf16.mxu0 0
      %613 = vmatmul.mubr.bf16.gmra.mrb[0].mxu0 %v184
      %v614 = vpop.f32.mrb[0].mxu0
      %v615 = vadd.f32 %v406, %v614
      %v616 = vpop.f32.mrb[0].mxu0
      %v617 = vpop.f32.mrb[0].mxu0
      %v618 = vadd.f32 %v409, %v617
      %v619 = vpop.f32.mrb[0].mxu0
      %620 = vmatprep.mubr.bf16.mxu0 0
      %621 = vmatmul.mubr.bf16.gmra.mrb[0].mxu0 %v185
      %v622 = vpop.f32.mrb[0].mxu0
      %v623 = vadd.f32 %v414, %v622
      %v624 = vpop.f32.mrb[0].mxu0
      %v625 = vpop.f32.mrb[0].mxu0
      %v626 = vadd.f32 %v417, %v625
      %v627 = vpop.f32.mrb[0].mxu0
      %628 = vmatprep.mubr.bf16.mxu0 0
      %629 = vmatmul.mubr.bf16.gmra.mrb[0].mxu0 %v186
      %v630 = vpop.f32.mrb[0].mxu0
      %v631 = vadd.f32 %v422, %v630
      %v632 = vpop.f32.mrb[0].mxu0
      %v633 = vpop.f32.mrb[0].mxu0
      %v634 = vadd.f32 %v425, %v633
      %v635 = vpop.f32.mrb[0].mxu0
      %636 = vmatprep.mubr.bf16.mxu0 0
      %637 = vmatmul.mubr.bf16.gmra.mrb[0].mxu0 %v187
      %v638 = vpop.f32.mrb[0].mxu0
      %v639 = vadd.f32 %v430, %v638
      %v640 = vpop.f32.mrb[0].mxu0
      %v641 = vpop.f32.mrb[0].mxu0
      %v642 = vadd.f32 %v433, %v641
      %v643 = vpop.f32.mrb[0].mxu0
      %644 = vmatprep.mubr.bf16.mxu0 0
      %645 = vmatmul.mubr.bf16.gmra.mrb[0].mxu0 %v188
      %v646 = vpop.f32.mrb[0].mxu0
      %v647 = vadd.f32 %v438, %v646
      %v648 = vpop.f32.mrb[0].mxu0
      %v649 = vpop.f32.mrb[0].mxu0
      %v650 = vadd.f32 %v441, %v649
      %v651 = vpop.f32.mrb[0].mxu0
      %652 = vmatprep.mubr.bf16.mxu0 0
      %653 = vmatmul.mubr.bf16.gmra.mrb[0].mxu0 %v189
      %v654 = vpop.f32.mrb[0].mxu0
      %v655 = vadd.f32 %v446, %v654
      %v656 = vpop.f32.mrb[0].mxu0
      %v657 = vpop.f32.mrb[0].mxu0
      %v658 = vadd.f32 %v449, %v657
      %v659 = vpop.f32.mrb[0].mxu0
      %660 = vmatprep.mubr.bf16.mxu0 0
      %661 = vmatmul.mubr.bf16.gmra.mrb[0].mxu0 %v190
      %v662 = vpop.f32.mrb[0].mxu0
      %v663 = vadd.f32 %v454, %v662
      %v664 = vpop.f32.mrb[0].mxu0
      %v665 = vpop.f32.mrb[0].mxu0
      %v666 = vadd.f32 %v457, %v665
      %v667 = vpop.f32.mrb[0].mxu0
      %668 = vmatprep.mubr.bf16.mxu0 0
      %669 = vmatmul.mubr.bf16.gmra.mrb[0].mxu0 %v191
      %v670 = vpop.f32.mrb[0].mxu0
      %v671 = vadd.f32 %v462, %v670
      %v672 = vpop.f32.mrb[0].mxu0
      %v673 = vpop.f32.mrb[0].mxu0
      %v674 = vadd.f32 %v465, %v673
      %v675 = vpop.f32.mrb[0].mxu0
      %676 = vmatprep.mubr.bf16.mxu0 0
      %677 = vmatmul.mubr.bf16.gmra.mrb[0].mxu0 %v192
      %v678 = vpop.f32.mrb[0].mxu0
      %v679 = vadd.f32 %v470, %v678
      %v680 = vpop.f32.mrb[0].mxu0
      %v681 = vpop.f32.mrb[0].mxu0
      %v682 = vadd.f32 %v473, %v681
      %v683 = vpop.f32.mrb[0].mxu0
      %684 = vmatprep.mubr.bf16.mxu0 0
      %685 = vmatmul.mubr.bf16.gmra.mrb[0].mxu0 %v193
      %v686 = vpop.f32.mrb[0].mxu0
      %v687 = vadd.f32 %v478, %v686
      %v688 = vpop.f32.mrb[0].mxu0
      %v689 = vpop.f32.mrb[0].mxu0
      %v690 = vadd.f32 %v481, %v689
      %v691 = vpop.f32.mrb[0].mxu0
      %692 = vdwg.mxu0
      %v693 = vld [vmem:[%s138 + $0x2] sm:$0xff]
      %v694 = vld [vmem:[%s138 + $0xa] sm:$0xff]
      %v695 = vld [vmem:[%s138 + $0x1a] sm:$0xff]
      %v696 = vld [vmem:[%s138 + $0x22] sm:$0xff]
      %v697 = vld [vmem:[%s138 + $0x32] sm:$0xff]
      %v698 = vld [vmem:[%s138 + $0x3a] sm:$0xff]
      %v699 = vld [vmem:[%s138 + $0x4a] sm:$0xff]
      %v700 = vld [vmem:[%s138 + $0x52] sm:$0xff]
      %v701 = vld [vmem:[%s138 + $0x62] sm:$0xff]
      %v702 = vld [vmem:[%s138 + $0x6a] sm:$0xff]
      %v703 = vld [vmem:[%s138 + $0x7a] sm:$0xff]
      %v704 = vld [vmem:[%s138 + $0x82] sm:$0xff]
      %v705 = vld [vmem:[%s138 + $0x92] sm:$0xff]
      %v706 = vld [vmem:[%s138 + $0x9a] sm:$0xff]
      %v707 = vld [vmem:[%s138 + $0xaa] sm:$0xff]
      %v708 = vld [vmem:[%s138 + $0xb2] sm:$0xff]
      %v709 = vld [vmem:[%s138 + $0xc2] sm:$0xff]
      %v710 = vld [vmem:[%s138 + $0xca] sm:$0xff]
      %v711 = vld [vmem:[%s138 + $0xda] sm:$0xff]
      %v712 = vld [vmem:[%s138 + $0xe2] sm:$0xff]
      %v713 = vld [vmem:[%s138 + $0xf2] sm:$0xff]
      %v714 = vld [vmem:[%s138 + $0xfa] sm:$0xff]
      %v715 = vld [vmem:[%s138 + $0x10a] sm:$0xff]
      %v716 = vld [vmem:[%s138 + $0x112] sm:$0xff]
      %v717 = vld [vmem:[%s138 + $0x122] sm:$0xff]
      %v718 = vld [vmem:[%s138 + $0x12a] sm:$0xff]
      %v719 = vld [vmem:[%s138 + $0x13a] sm:$0xff]
      %v720 = vld [vmem:[%s138 + $0x142] sm:$0xff]
      %v721 = vld [vmem:[%s138 + $0x152] sm:$0xff]
      %v722 = vld [vmem:[%s138 + $0x15a] sm:$0xff]
      %v723 = vld [vmem:[%s138 + $0x16a] sm:$0xff]
      %v724 = vld [vmem:[%s138 + $0x172] sm:$0xff]
      %v725 = vpack.c.bf16 %v694, %v693
      %v726 = vpack.c.bf16 %v696, %v695
      %v727 = vpack.c.bf16 %v698, %v697
      %v728 = vpack.c.bf16 %v700, %v699
      %v729 = vpack.c.bf16 %v702, %v701
      %v730 = vpack.c.bf16 %v704, %v703
      %v731 = vpack.c.bf16 %v706, %v705
      %v732 = vpack.c.bf16 %v708, %v707
      %v733 = vpack.c.bf16 %v710, %v709
      %v734 = vpack.c.bf16 %v712, %v711
      %v735 = vpack.c.bf16 %v714, %v713
      %v736 = vpack.c.bf16 %v716, %v715
      %v737 = vpack.c.bf16 %v718, %v717
      %v738 = vpack.c.bf16 %v720, %v719
      %v739 = vpack.c.bf16 %v722, %v721
      %v740 = vpack.c.bf16 %v724, %v723
      %s741 = scalar_lea.vmem %s1, 128
      %v742 = vld [vmem:[%s741] sm:$0xf]
      %v743 = vld [vmem:[%s741 + $0x4] sm:$0xf]
      %v744 = vld [vmem:[%s741 + $0x8] sm:$0xf]
      %v745 = vld [vmem:[%s741 + $0xc] sm:$0xf]
      %v746 = vld [vmem:[%s741 + $0x10] sm:$0xf]
      %v747 = vld [vmem:[%s741 + $0x14] sm:$0xf]
      %v748 = vld [vmem:[%s741 + $0x18] sm:$0xf]
      %v749 = vld [vmem:[%s741 + $0x1c] sm:$0xf]
      %v750 = vld [vmem:[%s741 + $0x20] sm:$0xf]
      %v751 = vld [vmem:[%s741 + $0x24] sm:$0xf]
      %v752 = vld [vmem:[%s741 + $0x28] sm:$0xf]
      %v753 = vld [vmem:[%s741 + $0x2c] sm:$0xf]
      %v754 = vld [vmem:[%s741 + $0x30] sm:$0xf]
      %v755 = vld [vmem:[%s741 + $0x34] sm:$0xf]
      %v756 = vld [vmem:[%s741 + $0x38] sm:$0xf]
      %v757 = vld [vmem:[%s741 + $0x3c] sm:$0xf]
      %v774 = vunpack.c.l.b16 %v742
      %v775 = vunpack.c.l.b16 %v743
      %v776 = vunpack.c.l.b16 %v744
      %v777 = vunpack.c.l.b16 %v745
      %v778 = vunpack.c.l.b16 %v746
      %v779 = vunpack.c.l.b16 %v747
      %v780 = vunpack.c.l.b16 %v748
      %v781 = vunpack.c.l.b16 %v749
      %v782 = vunpack.c.l.b16 %v750
      %v783 = vunpack.c.l.b16 %v751
      %v784 = vunpack.c.l.b16 %v752
      %v785 = vunpack.c.l.b16 %v753
      %v786 = vunpack.c.l.b16 %v754
      %v787 = vunpack.c.l.b16 %v755
      %v788 = vunpack.c.l.b16 %v756
      %v789 = vunpack.c.l.b16 %v757
      %v790 = vpack.c.b16 %v775, %v774
      %v791 = vpack.c.b16 %v777, %v776
      %v792 = vpack.c.b16 %v779, %v778
      %v793 = vpack.c.b16 %v781, %v780
      %v794 = vpack.c.b16 %v783, %v782
      %v795 = vpack.c.b16 %v785, %v784
      %v796 = vpack.c.b16 %v787, %v786
      %v797 = vpack.c.b16 %v789, %v788
      %806 = vmatprep.subr.bf16.mxu0 0
      %807 = vmatpush1.bf16.msra.mxu0 %v790
      %808 = vmatprep.subr.bf16.mxu0 0
      %809 = vmatpush1.bf16.msra.mxu0 %v791
      %810 = vmatprep.subr.bf16.mxu0 0
      %811 = vmatpush1.bf16.msra.mxu0 %v792
      %812 = vmatprep.subr.bf16.mxu0 0
      %813 = vmatpush1.bf16.msra.mxu0 %v793
      %814 = vmatprep.subr.bf16.mxu0 0
      %815 = vmatpush1.bf16.msra.mxu0 %v794
      %816 = vmatprep.subr.bf16.mxu0 0
      %817 = vmatpush1.bf16.msra.mxu0 %v795
      %818 = vmatprep.subr.bf16.mxu0 0
      %819 = vmatpush1.bf16.msra.mxu0 %v796
      %820 = vmatprep.subr.bf16.mxu0 0
      %821 = vmatpush1.bf16.msra.mxu0 %v797
      %822 = vmatprep.subr.bf16.mxu0 0
      %823 = vmatpush1.bf16.msra.mxu0 0
      %824 = vmatprep.subr.bf16.mxu0 0
      %825 = vmatpush1.bf16.msra.mxu0 0
      %826 = vmatprep.subr.bf16.mxu0 0
      %827 = vmatpush1.bf16.msra.mxu0 0
      %828 = vmatprep.subr.bf16.mxu0 0
      %829 = vmatpush1.bf16.msra.mxu0 0
      %830 = vmatprep.subr.bf16.mxu0 0
      %831 = vmatpush1.bf16.msra.mxu0 0
      %832 = vmatprep.subr.bf16.mxu0 0
      %833 = vmatpush1.bf16.msra.mxu0 0
      %834 = vmatprep.subr.bf16.mxu0 0
      %835 = vmatpush1.bf16.msra.mxu0 0
      %836 = vmatprep.subr.bf16.mxu0 0
      %837 = vmatpush1.bf16.msra.mxu0 0
      %838 = vmatprep.mubr.bf16.mxu0 0
      %839 = vmatmul.mubr.bf16.gmra.mrb[0].mxu0 %v725
      %v840 = vpop.f32.mrb[0].mxu0
      %v841 = vadd.f32 0.0, %v840
      %v842 = vpop.f32.mrb[0].mxu0
      %v843 = vpop.f32.mrb[0].mxu0
      %v844 = vadd.f32 0.0, %v843
      %v845 = vpop.f32.mrb[0].mxu0
      %846 = vmatprep.mubr.bf16.mxu0 0
      %847 = vmatmul.mubr.bf16.gmra.mrb[0].mxu0 %v726
      %v848 = vpop.f32.mrb[0].mxu0
      %v849 = vadd.f32 0.0, %v848
      %v850 = vpop.f32.mrb[0].mxu0
      %v851 = vpop.f32.mrb[0].mxu0
      %v852 = vadd.f32 0.0, %v851
      %v853 = vpop.f32.mrb[0].mxu0
      %854 = vmatprep.mubr.bf16.mxu0 0
      %855 = vmatmul.mubr.bf16.gmra.mrb[0].mxu0 %v727
      %v856 = vpop.f32.mrb[0].mxu0
      %v857 = vadd.f32 0.0, %v856
      %v858 = vpop.f32.mrb[0].mxu0
      %v859 = vpop.f32.mrb[0].mxu0
      %v860 = vadd.f32 0.0, %v859
      %v861 = vpop.f32.mrb[0].mxu0
      %862 = vmatprep.mubr.bf16.mxu0 0
      %863 = vmatmul.mubr.bf16.gmra.mrb[0].mxu0 %v728
      %v864 = vpop.f32.mrb[0].mxu0
      %v865 = vadd.f32 0.0, %v864
      %v866 = vpop.f32.mrb[0].mxu0
      %v867 = vpop.f32.mrb[0].mxu0
      %v868 = vadd.f32 0.0, %v867
      %v869 = vpop.f32.mrb[0].mxu0
      %870 = vmatprep.mubr.bf16.mxu0 0
      %871 = vmatmul.mubr.bf16.gmra.mrb[0].mxu0 %v729
      %v872 = vpop.f32.mrb[0].mxu0
      %v873 = vadd.f32 0.0, %v872
      %v874 = vpop.f32.mrb[0].mxu0
      %v875 = vpop.f32.mrb[0].mxu0
      %v876 = vadd.f32 0.0, %v875
      %v877 = vpop.f32.mrb[0].mxu0
      %878 = vmatprep.mubr.bf16.mxu0 0
      %879 = vmatmul.mubr.bf16.gmra.mrb[0].mxu0 %v730
      %v880 = vpop.f32.mrb[0].mxu0
      %v881 = vadd.f32 0.0, %v880
      %v882 = vpop.f32.mrb[0].mxu0
      %v883 = vpop.f32.mrb[0].mxu0
      %v884 = vadd.f32 0.0, %v883
      %v885 = vpop.f32.mrb[0].mxu0
      %886 = vmatprep.mubr.bf16.mxu0 0
      %887 = vmatmul.mubr.bf16.gmra.mrb[0].mxu0 %v731
      %v888 = vpop.f32.mrb[0].mxu0
      %v889 = vadd.f32 0.0, %v888
      %v890 = vpop.f32.mrb[0].mxu0
      %v891 = vpop.f32.mrb[0].mxu0
      %v892 = vadd.f32 0.0, %v891
      %v893 = vpop.f32.mrb[0].mxu0
      %894 = vmatprep.mubr.bf16.mxu0 0
      %895 = vmatmul.mubr.bf16.gmra.mrb[0].mxu0 %v732
      %v896 = vpop.f32.mrb[0].mxu0
      %v897 = vadd.f32 0.0, %v896
      %v898 = vpop.f32.mrb[0].mxu0
      %v899 = vpop.f32.mrb[0].mxu0
      %v900 = vadd.f32 0.0, %v899
      %v901 = vpop.f32.mrb[0].mxu0
      %902 = vmatprep.mubr.bf16.mxu0 0
      %903 = vmatmul.mubr.bf16.gmra.mrb[0].mxu0 %v733
      %v904 = vpop.f32.mrb[0].mxu0
      %v905 = vadd.f32 0.0, %v904
      %v906 = vpop.f32.mrb[0].mxu0
      %v907 = vpop.f32.mrb[0].mxu0
      %v908 = vadd.f32 0.0, %v907
      %v909 = vpop.f32.mrb[0].mxu0
      %910 = vmatprep.mubr.bf16.mxu0 0
      %911 = vmatmul.mubr.bf16.gmra.mrb[0].mxu0 %v734
      %v912 = vpop.f32.mrb[0].mxu0
      %v913 = vadd.f32 0.0, %v912
      %v914 = vpop.f32.mrb[0].mxu0
      %v915 = vpop.f32.mrb[0].mxu0
      %v916 = vadd.f32 0.0, %v915
      %v917 = vpop.f32.mrb[0].mxu0
      %918 = vmatprep.mubr.bf16.mxu0 0
      %919 = vmatmul.mubr.bf16.gmra.mrb[0].mxu0 %v735
      %v920 = vpop.f32.mrb[0].mxu0
      %v921 = vadd.f32 0.0, %v920
      %v922 = vpop.f32.mrb[0].mxu0
      %v923 = vpop.f32.mrb[0].mxu0
      %v924 = vadd.f32 0.0, %v923
      %v925 = vpop.f32.mrb[0].mxu0
      %926 = vmatprep.mubr.bf16.mxu0 0
      %927 = vmatmul.mubr.bf16.gmra.mrb[0].mxu0 %v736
      %v928 = vpop.f32.mrb[0].mxu0
      %v929 = vadd.f32 0.0, %v928
      %v930 = vpop.f32.mrb[0].mxu0
      %v931 = vpop.f32.mrb[0].mxu0
      %v932 = vadd.f32 0.0, %v931
      %v933 = vpop.f32.mrb[0].mxu0
      %934 = vmatprep.mubr.bf16.mxu0 0
      %935 = vmatmul.mubr.bf16.gmra.mrb[0].mxu0 %v737
      %v936 = vpop.f32.mrb[0].mxu0
      %v937 = vadd.f32 0.0, %v936
      %v938 = vpop.f32.mrb[0].mxu0
      %v939 = vpop.f32.mrb[0].mxu0
      %v940 = vadd.f32 0.0, %v939
      %v941 = vpop.f32.mrb[0].mxu0
      %942 = vmatprep.mubr.bf16.mxu0 0
      %943 = vmatmul.mubr.bf16.gmra.mrb[0].mxu0 %v738
      %v944 = vpop.f32.mrb[0].mxu0
      %v945 = vadd.f32 0.0, %v944
      %v946 = vpop.f32.mrb[0].mxu0
      %v947 = vpop.f32.mrb[0].mxu0
      %v948 = vadd.f32 0.0, %v947
      %v949 = vpop.f32.mrb[0].mxu0
      %950 = vmatprep.mubr.bf16.mxu0 0
      %951 = vmatmul.mubr.bf16.gmra.mrb[0].mxu0 %v739
      %v952 = vpop.f32.mrb[0].mxu0
      %v953 = vadd.f32 0.0, %v952
      %v954 = vpop.f32.mrb[0].mxu0
      %v955 = vpop.f32.mrb[0].mxu0
      %v956 = vadd.f32 0.0, %v955
      %v957 = vpop.f32.mrb[0].mxu0
      %958 = vmatprep.mubr.bf16.mxu0 0
      %959 = vmatmul.mubr.bf16.gmra.mrb[0].mxu0 %v740
      %v960 = vpop.f32.mrb[0].mxu0
      %v961 = vadd.f32 0.0, %v960
      %v962 = vpop.f32.mrb[0].mxu0
      %v963 = vpop.f32.mrb[0].mxu0
      %v964 = vadd.f32 0.0, %v963
      %v965 = vpop.f32.mrb[0].mxu0
      %966 = vdwg.mxu0
      %v967 = vadd.f32 %v567, %v841
      %v968 = vadd.f32 %v570, %v844
      %v969 = vadd.f32 %v575, %v849
      %v970 = vadd.f32 %v578, %v852
      %v971 = vadd.f32 %v583, %v857
      %v972 = vadd.f32 %v586, %v860
      %v973 = vadd.f32 %v591, %v865
      %v974 = vadd.f32 %v594, %v868
      %v975 = vadd.f32 %v599, %v873
      %v976 = vadd.f32 %v602, %v876
      %v977 = vadd.f32 %v607, %v881
      %v978 = vadd.f32 %v610, %v884
      %v979 = vadd.f32 %v615, %v889
      %v980 = vadd.f32 %v618, %v892
      %v981 = vadd.f32 %v623, %v897
      %v982 = vadd.f32 %v626, %v900
      %v983 = vadd.f32 %v631, %v905
      %v984 = vadd.f32 %v634, %v908
      %v985 = vadd.f32 %v639, %v913
      %v986 = vadd.f32 %v642, %v916
      %v987 = vadd.f32 %v647, %v921
      %v988 = vadd.f32 %v650, %v924
      %v989 = vadd.f32 %v655, %v929
      %v990 = vadd.f32 %v658, %v932
      %v991 = vadd.f32 %v663, %v937
      %v992 = vadd.f32 %v666, %v940
      %v993 = vadd.f32 %v671, %v945
      %v994 = vadd.f32 %v674, %v948
      %v995 = vadd.f32 %v679, %v953
      %v996 = vadd.f32 %v682, %v956
      %v997 = vadd.f32 %v687, %v961
      %v998 = vadd.f32 %v690, %v964
      %s999 = scalar_lea.vmem %s138, 24
      %v1000 = vld [vmem:[%s999] sm:$0xff]
      %v1001 = vld [vmem:[%s999 + $0x8] sm:$0xff]
      %v1002 = vld [vmem:[%s999 + $0x18] sm:$0xff]
      %v1003 = vld [vmem:[%s999 + $0x20] sm:$0xff]
      %v1004 = vld [vmem:[%s999 + $0x30] sm:$0xff]
      %v1005 = vld [vmem:[%s999 + $0x38] sm:$0xff]
      %v1006 = vld [vmem:[%s999 + $0x48] sm:$0xff]
      %v1007 = vld [vmem:[%s999 + $0x50] sm:$0xff]
      %v1008 = vld [vmem:[%s999 + $0x60] sm:$0xff]
      %v1009 = vld [vmem:[%s999 + $0x68] sm:$0xff]
      %v1010 = vld [vmem:[%s999 + $0x78] sm:$0xff]
      %v1011 = vld [vmem:[%s999 + $0x80] sm:$0xff]
      %v1012 = vld [vmem:[%s999 + $0x90] sm:$0xff]
      %v1013 = vld [vmem:[%s999 + $0x98] sm:$0xff]
      %v1014 = vld [vmem:[%s999 + $0xa8] sm:$0xff]
      %v1015 = vld [vmem:[%s999 + $0xb0] sm:$0xff]
      %v1016 = vld [vmem:[%s999 + $0xc0] sm:$0xff]
      %v1017 = vld [vmem:[%s999 + $0xc8] sm:$0xff]
      %v1018 = vld [vmem:[%s999 + $0xd8] sm:$0xff]
      %v1019 = vld [vmem:[%s999 + $0xe0] sm:$0xff]
      %v1020 = vld [vmem:[%s999 + $0xf0] sm:$0xff]
      %v1021 = vld [vmem:[%s999 + $0xf8] sm:$0xff]
      %v1022 = vld [vmem:[%s999 + $0x108] sm:$0xff]
      %v1023 = vld [vmem:[%s999 + $0x110] sm:$0xff]
      %v1024 = vld [vmem:[%s999 + $0x120] sm:$0xff]
      %v1025 = vld [vmem:[%s999 + $0x128] sm:$0xff]
      %v1026 = vld [vmem:[%s999 + $0x138] sm:$0xff]
      %v1027 = vld [vmem:[%s999 + $0x140] sm:$0xff]
      %v1028 = vld [vmem:[%s999 + $0x150] sm:$0xff]
      %v1029 = vld [vmem:[%s999 + $0x158] sm:$0xff]
      %v1030 = vld [vmem:[%s999 + $0x168] sm:$0xff]
      %v1031 = vld [vmem:[%s999 + $0x170] sm:$0xff]
      %v1032 = vpack.c.bf16 %v1001, %v1000
      %v1033 = vpack.c.bf16 %v1003, %v1002
      %v1034 = vpack.c.bf16 %v1005, %v1004
      %v1035 = vpack.c.bf16 %v1007, %v1006
      %v1036 = vpack.c.bf16 %v1009, %v1008
      %v1037 = vpack.c.bf16 %v1011, %v1010
      %v1038 = vpack.c.bf16 %v1013, %v1012
      %v1039 = vpack.c.bf16 %v1015, %v1014
      %v1040 = vpack.c.bf16 %v1017, %v1016
      %v1041 = vpack.c.bf16 %v1019, %v1018
      %v1042 = vpack.c.bf16 %v1021, %v1020
      %v1043 = vpack.c.bf16 %v1023, %v1022
      %v1044 = vpack.c.bf16 %v1025, %v1024
      %v1045 = vpack.c.bf16 %v1027, %v1026
      %v1046 = vpack.c.bf16 %v1029, %v1028
      %v1047 = vpack.c.bf16 %v1031, %v1030
      %s1048 = scalar_lea.vmem %s1, 192
      %v1049 = vld [vmem:[%s1048] sm:$0xf]
      %v1050 = vld [vmem:[%s1048 + $0x4] sm:$0xf]
      %v1051 = vld [vmem:[%s1048 + $0x8] sm:$0xf]
      %v1052 = vld [vmem:[%s1048 + $0xc] sm:$0xf]
      %v1053 = vld [vmem:[%s1048 + $0x10] sm:$0xf]
      %v1054 = vld [vmem:[%s1048 + $0x14] sm:$0xf]
      %v1055 = vld [vmem:[%s1048 + $0x18] sm:$0xf]
      %v1056 = vld [vmem:[%s1048 + $0x1c] sm:$0xf]
      %v1057 = vld [vmem:[%s1048 + $0x20] sm:$0xf]
      %v1058 = vld [vmem:[%s1048 + $0x24] sm:$0xf]
      %v1059 = vld [vmem:[%s1048 + $0x28] sm:$0xf]
      %v1060 = vld [vmem:[%s1048 + $0x2c] sm:$0xf]
      %v1061 = vld [vmem:[%s1048 + $0x30] sm:$0xf]
      %v1062 = vld [vmem:[%s1048 + $0x34] sm:$0xf]
      %v1063 = vld [vmem:[%s1048 + $0x38] sm:$0xf]
      %v1064 = vld [vmem:[%s1048 + $0x3c] sm:$0xf]
      %v1081 = vunpack.c.l.b16 %v1049
      %v1082 = vunpack.c.l.b16 %v1050
      %v1083 = vunpack.c.l.b16 %v1051
      %v1084 = vunpack.c.l.b16 %v1052
      %v1085 = vunpack.c.l.b16 %v1053
      %v1086 = vunpack.c.l.b16 %v1054
      %v1087 = vunpack.c.l.b16 %v1055
      %v1088 = vunpack.c.l.b16 %v1056
      %v1089 = vunpack.c.l.b16 %v1057
      %v1090 = vunpack.c.l.b16 %v1058
      %v1091 = vunpack.c.l.b16 %v1059
      %v1092 = vunpack.c.l.b16 %v1060
      %v1093 = vunpack.c.l.b16 %v1061
      %v1094 = vunpack.c.l.b16 %v1062
      %v1095 = vunpack.c.l.b16 %v1063
      %v1096 = vunpack.c.l.b16 %v1064
      %v1097 = vpack.c.b16 %v1082, %v1081
      %v1098 = vpack.c.b16 %v1084, %v1083
      %v1099 = vpack.c.b16 %v1086, %v1085
      %v1100 = vpack.c.b16 %v1088, %v1087
      %v1101 = vpack.c.b16 %v1090, %v1089
      %v1102 = vpack.c.b16 %v1092, %v1091
      %v1103 = vpack.c.b16 %v1094, %v1093
      %v1104 = vpack.c.b16 %v1096, %v1095
      %1113 = vmatprep.subr.bf16.mxu0 0
      %1114 = vmatpush1.bf16.msra.mxu0 %v1097
      %1115 = vmatprep.subr.bf16.mxu0 0
      %1116 = vmatpush1.bf16.msra.mxu0 %v1098
      %1117 = vmatprep.subr.bf16.mxu0 0
      %1118 = vmatpush1.bf16.msra.mxu0 %v1099
      %1119 = vmatprep.subr.bf16.mxu0 0
      %1120 = vmatpush1.bf16.msra.mxu0 %v1100
      %1121 = vmatprep.subr.bf16.mxu0 0
      %1122 = vmatpush1.bf16.msra.mxu0 %v1101
      %1123 = vmatprep.subr.bf16.mxu0 0
      %1124 = vmatpush1.bf16.msra.mxu0 %v1102
      %1125 = vmatprep.subr.bf16.mxu0 0
      %1126 = vmatpush1.bf16.msra.mxu0 %v1103
      %1127 = vmatprep.subr.bf16.mxu0 0
      %1128 = vmatpush1.bf16.msra.mxu0 %v1104
      %1129 = vmatprep.subr.bf16.mxu0 0
      %1130 = vmatpush1.bf16.msra.mxu0 0
      %1131 = vmatprep.subr.bf16.mxu0 0
      %1132 = vmatpush1.bf16.msra.mxu0 0
      %1133 = vmatprep.subr.bf16.mxu0 0
      %1134 = vmatpush1.bf16.msra.mxu0 0
      %1135 = vmatprep.subr.bf16.mxu0 0
      %1136 = vmatpush1.bf16.msra.mxu0 0
      %1137 = vmatprep.subr.bf16.mxu0 0
      %1138 = vmatpush1.bf16.msra.mxu0 0
      %1139 = vmatprep.subr.bf16.mxu0 0
      %1140 = vmatpush1.bf16.msra.mxu0 0
      %1141 = vmatprep.subr.bf16.mxu0 0
      %1142 = vmatpush1.bf16.msra.mxu0 0
      %1143 = vmatprep.subr.bf16.mxu0 0
      %1144 = vmatpush1.bf16.msra.mxu0 0
      %1145 = vmatprep.mubr.bf16.mxu0 0
      %1146 = vmatmul.mubr.bf16.gmra.mrb[0].mxu0 %v1032
      %v1147 = vpop.f32.mrb[0].mxu0
      %v1148 = vadd.f32 0.0, %v1147
      %v1149 = vpop.f32.mrb[0].mxu0
      %v1150 = vpop.f32.mrb[0].mxu0
      %v1151 = vadd.f32 0.0, %v1150
      %v1152 = vpop.f32.mrb[0].mxu0
      %1153 = vmatprep.mubr.bf16.mxu0 0
      %1154 = vmatmul.mubr.bf16.gmra.mrb[0].mxu0 %v1033
      %v1155 = vpop.f32.mrb[0].mxu0
      %v1156 = vadd.f32 0.0, %v1155
      %v1157 = vpop.f32.mrb[0].mxu0
      %v1158 = vpop.f32.mrb[0].mxu0
      %v1159 = vadd.f32 0.0, %v1158
      %v1160 = vpop.f32.mrb[0].mxu0
      %1161 = vmatprep.mubr.bf16.mxu0 0
      %1162 = vmatmul.mubr.bf16.gmra.mrb[0].mxu0 %v1034
      %v1163 = vpop.f32.mrb[0].mxu0
      %v1164 = vadd.f32 0.0, %v1163
      %v1165 = vpop.f32.mrb[0].mxu0
      %v1166 = vpop.f32.mrb[0].mxu0
      %v1167 = vadd.f32 0.0, %v1166
      %v1168 = vpop.f32.mrb[0].mxu0
      %1169 = vmatprep.mubr.bf16.mxu0 0
      %1170 = vmatmul.mubr.bf16.gmra.mrb[0].mxu0 %v1035
      %v1171 = vpop.f32.mrb[0].mxu0
      %v1172 = vadd.f32 0.0, %v1171
      %v1173 = vpop.f32.mrb[0].mxu0
      %v1174 = vpop.f32.mrb[0].mxu0
      %v1175 = vadd.f32 0.0, %v1174
      %v1176 = vpop.f32.mrb[0].mxu0
      %1177 = vmatprep.mubr.bf16.mxu0 0
      %1178 = vmatmul.mubr.bf16.gmra.mrb[0].mxu0 %v1036
      %v1179 = vpop.f32.mrb[0].mxu0
      %v1180 = vadd.f32 0.0, %v1179
      %v1181 = vpop.f32.mrb[0].mxu0
      %v1182 = vpop.f32.mrb[0].mxu0
      %v1183 = vadd.f32 0.0, %v1182
      %v1184 = vpop.f32.mrb[0].mxu0
      %1185 = vmatprep.mubr.bf16.mxu0 0
      %1186 = vmatmul.mubr.bf16.gmra.mrb[0].mxu0 %v1037
      %v1187 = vpop.f32.mrb[0].mxu0
      %v1188 = vadd.f32 0.0, %v1187
      %v1189 = vpop.f32.mrb[0].mxu0
      %v1190 = vpop.f32.mrb[0].mxu0
      %v1191 = vadd.f32 0.0, %v1190
      %v1192 = vpop.f32.mrb[0].mxu0
      %1193 = vmatprep.mubr.bf16.mxu0 0
      %1194 = vmatmul.mubr.bf16.gmra.mrb[0].mxu0 %v1038
      %v1195 = vpop.f32.mrb[0].mxu0
      %v1196 = vadd.f32 0.0, %v1195
      %v1197 = vpop.f32.mrb[0].mxu0
      %v1198 = vpop.f32.mrb[0].mxu0
      %v1199 = vadd.f32 0.0, %v1198
      %v1200 = vpop.f32.mrb[0].mxu0
      %1201 = vmatprep.mubr.bf16.mxu0 0
      %1202 = vmatmul.mubr.bf16.gmra.mrb[0].mxu0 %v1039
      %v1203 = vpop.f32.mrb[0].mxu0
      %v1204 = vadd.f32 0.0, %v1203
      %v1205 = vpop.f32.mrb[0].mxu0
      %v1206 = vpop.f32.mrb[0].mxu0
      %v1207 = vadd.f32 0.0, %v1206
      %v1208 = vpop.f32.mrb[0].mxu0
      %1209 = vmatprep.mubr.bf16.mxu0 0
      %1210 = vmatmul.mubr.bf16.gmra.mrb[0].mxu0 %v1040
      %v1211 = vpop.f32.mrb[0].mxu0
      %v1212 = vadd.f32 0.0, %v1211
      %v1213 = vpop.f32.mrb[0].mxu0
      %v1214 = vpop.f32.mrb[0].mxu0
      %v1215 = vadd.f32 0.0, %v1214
      %v1216 = vpop.f32.mrb[0].mxu0
      %1217 = vmatprep.mubr.bf16.mxu0 0
      %1218 = vmatmul.mubr.bf16.gmra.mrb[0].mxu0 %v1041
      %v1219 = vpop.f32.mrb[0].mxu0
      %v1220 = vadd.f32 0.0, %v1219
      %v1221 = vpop.f32.mrb[0].mxu0
      %v1222 = vpop.f32.mrb[0].mxu0
      %v1223 = vadd.f32 0.0, %v1222
      %v1224 = vpop.f32.mrb[0].mxu0
      %1225 = vmatprep.mubr.bf16.mxu0 0
      %1226 = vmatmul.mubr.bf16.gmra.mrb[0].mxu0 %v1042
      %v1227 = vpop.f32.mrb[0].mxu0
      %v1228 = vadd.f32 0.0, %v1227
      %v1229 = vpop.f32.mrb[0].mxu0
      %v1230 = vpop.f32.mrb[0].mxu0
      %v1231 = vadd.f32 0.0, %v1230
      %v1232 = vpop.f32.mrb[0].mxu0
      %1233 = vmatprep.mubr.bf16.mxu0 0
      %1234 = vmatmul.mubr.bf16.gmra.mrb[0].mxu0 %v1043
      %v1235 = vpop.f32.mrb[0].mxu0
      %v1236 = vadd.f32 0.0, %v1235
      %v1237 = vpop.f32.mrb[0].mxu0
      %v1238 = vpop.f32.mrb[0].mxu0
      %v1239 = vadd.f32 0.0, %v1238
      %v1240 = vpop.f32.mrb[0].mxu0
      %1241 = vmatprep.mubr.bf16.mxu0 0
      %1242 = vmatmul.mubr.bf16.gmra.mrb[0].mxu0 %v1044
      %v1243 = vpop.f32.mrb[0].mxu0
      %v1244 = vadd.f32 0.0, %v1243
      %v1245 = vpop.f32.mrb[0].mxu0
      %v1246 = vpop.f32.mrb[0].mxu0
      %v1247 = vadd.f32 0.0, %v1246
      %v1248 = vpop.f32.mrb[0].mxu0
      %1249 = vmatprep.mubr.bf16.mxu0 0
      %1250 = vmatmul.mubr.bf16.gmra.mrb[0].mxu0 %v1045
      %v1251 = vpop.f32.mrb[0].mxu0
      %v1252 = vadd.f32 0.0, %v1251
      %v1253 = vpop.f32.mrb[0].mxu0
      %v1254 = vpop.f32.mrb[0].mxu0
      %v1255 = vadd.f32 0.0, %v1254
      %v1256 = vpop.f32.mrb[0].mxu0
      %1257 = vmatprep.mubr.bf16.mxu0 0
      %1258 = vmatmul.mubr.bf16.gmra.mrb[0].mxu0 %v1046
      %v1259 = vpop.f32.mrb[0].mxu0
      %v1260 = vadd.f32 0.0, %v1259
      %v1261 = vpop.f32.mrb[0].mxu0
      %v1262 = vpop.f32.mrb[0].mxu0
      %v1263 = vadd.f32 0.0, %v1262
      %v1264 = vpop.f32.mrb[0].mxu0
      %1265 = vmatprep.mubr.bf16.mxu0 0
      %1266 = vmatmul.mubr.bf16.gmra.mrb[0].mxu0 %v1047
      %v1267 = vpop.f32.mrb[0].mxu0
      %v1268 = vadd.f32 0.0, %v1267
      %v1269 = vpop.f32.mrb[0].mxu0
      %v1270 = vpop.f32.mrb[0].mxu0
      %v1271 = vadd.f32 0.0, %v1270
      %v1272 = vpop.f32.mrb[0].mxu0
      %1273 = vdwg.mxu0
      %v1274 = vadd.f32 %v967, %v1148
      %v1275 = vadd.f32 %v968, %v1151
      %v1276 = vadd.f32 %v969, %v1156
      %v1277 = vadd.f32 %v970, %v1159
      %v1278 = vadd.f32 %v971, %v1164
      %v1279 = vadd.f32 %v972, %v1167
      %v1280 = vadd.f32 %v973, %v1172
      %v1281 = vadd.f32 %v974, %v1175
      %v1282 = vadd.f32 %v975, %v1180
      %v1283 = vadd.f32 %v976, %v1183
      %v1284 = vadd.f32 %v977, %v1188
      %v1285 = vadd.f32 %v978, %v1191
      %v1286 = vadd.f32 %v979, %v1196
      %v1287 = vadd.f32 %v980, %v1199
      %v1288 = vadd.f32 %v981, %v1204
      %v1289 = vadd.f32 %v982, %v1207
      %v1290 = vadd.f32 %v983, %v1212
      %v1291 = vadd.f32 %v984, %v1215
      %v1292 = vadd.f32 %v985, %v1220
      %v1293 = vadd.f32 %v986, %v1223
      %v1294 = vadd.f32 %v987, %v1228
      %v1295 = vadd.f32 %v988, %v1231
      %v1296 = vadd.f32 %v989, %v1236
      %v1297 = vadd.f32 %v990, %v1239
      %v1298 = vadd.f32 %v991, %v1244
      %v1299 = vadd.f32 %v992, %v1247
      %v1300 = vadd.f32 %v993, %v1252
      %v1301 = vadd.f32 %v994, %v1255
      %v1302 = vadd.f32 %v995, %v1260
      %v1303 = vadd.f32 %v996, %v1263
      %v1304 = vadd.f32 %v997, %v1268
      %v1305 = vadd.f32 %v998, %v1271
      %v1306 = vld [vmem:[%s999 + $0x1] sm:$0xff]
      %v1307 = vld [vmem:[%s999 + $0x9] sm:$0xff]
      %v1308 = vld [vmem:[%s999 + $0x19] sm:$0xff]
      %v1309 = vld [vmem:[%s999 + $0x21] sm:$0xff]
      %v1310 = vld [vmem:[%s999 + $0x31] sm:$0xff]
      %v1311 = vld [vmem:[%s999 + $0x39] sm:$0xff]
      %v1312 = vld [vmem:[%s999 + $0x49] sm:$0xff]
      %v1313 = vld [vmem:[%s999 + $0x51] sm:$0xff]
      %v1314 = vld [vmem:[%s999 + $0x61] sm:$0xff]
      %v1315 = vld [vmem:[%s999 + $0x69] sm:$0xff]
      %v1316 = vld [vmem:[%s999 + $0x79] sm:$0xff]
      %v1317 = vld [vmem:[%s999 + $0x81] sm:$0xff]
      %v1318 = vld [vmem:[%s999 + $0x91] sm:$0xff]
      %v1319 = vld [vmem:[%s999 + $0x99] sm:$0xff]
      %v1320 = vld [vmem:[%s999 + $0xa9] sm:$0xff]
      %v1321 = vld [vmem:[%s999 + $0xb1] sm:$0xff]
      %v1322 = vld [vmem:[%s999 + $0xc1] sm:$0xff]
      %v1323 = vld [vmem:[%s999 + $0xc9] sm:$0xff]
      %v1324 = vld [vmem:[%s999 + $0xd9] sm:$0xff]
      %v1325 = vld [vmem:[%s999 + $0xe1] sm:$0xff]
      %v1326 = vld [vmem:[%s999 + $0xf1] sm:$0xff]
      %v1327 = vld [vmem:[%s999 + $0xf9] sm:$0xff]
      %v1328 = vld [vmem:[%s999 + $0x109] sm:$0xff]
      %v1329 = vld [vmem:[%s999 + $0x111] sm:$0xff]
      %v1330 = vld [vmem:[%s999 + $0x121] sm:$0xff]
      %v1331 = vld [vmem:[%s999 + $0x129] sm:$0xff]
      %v1332 = vld [vmem:[%s999 + $0x139] sm:$0xff]
      %v1333 = vld [vmem:[%s999 + $0x141] sm:$0xff]
      %v1334 = vld [vmem:[%s999 + $0x151] sm:$0xff]
      %v1335 = vld [vmem:[%s999 + $0x159] sm:$0xff]
      %v1336 = vld [vmem:[%s999 + $0x169] sm:$0xff]
      %v1337 = vld [vmem:[%s999 + $0x171] sm:$0xff]
      %v1338 = vpack.c.bf16 %v1307, %v1306
      %v1339 = vpack.c.bf16 %v1309, %v1308
      %v1340 = vpack.c.bf16 %v1311, %v1310
      %v1341 = vpack.c.bf16 %v1313, %v1312
      %v1342 = vpack.c.bf16 %v1315, %v1314
      %v1343 = vpack.c.bf16 %v1317, %v1316
      %v1344 = vpack.c.bf16 %v1319, %v1318
      %v1345 = vpack.c.bf16 %v1321, %v1320
      %v1346 = vpack.c.bf16 %v1323, %v1322
      %v1347 = vpack.c.bf16 %v1325, %v1324
      %v1348 = vpack.c.bf16 %v1327, %v1326
      %v1349 = vpack.c.bf16 %v1329, %v1328
      %v1350 = vpack.c.bf16 %v1331, %v1330
      %v1351 = vpack.c.bf16 %v1333, %v1332
      %v1352 = vpack.c.bf16 %v1335, %v1334
      %v1353 = vpack.c.bf16 %v1337, %v1336
      %s1354 = scalar_lea.vmem %s1, 256
      %v1355 = vld [vmem:[%s1354] sm:$0xf]
      %v1356 = vld [vmem:[%s1354 + $0x4] sm:$0xf]
      %v1357 = vld [vmem:[%s1354 + $0x8] sm:$0xf]
      %v1358 = vld [vmem:[%s1354 + $0xc] sm:$0xf]
      %v1359 = vld [vmem:[%s1354 + $0x10] sm:$0xf]
      %v1360 = vld [vmem:[%s1354 + $0x14] sm:$0xf]
      %v1361 = vld [vmem:[%s1354 + $0x18] sm:$0xf]
      %v1362 = vld [vmem:[%s1354 + $0x1c] sm:$0xf]
      %v1363 = vld [vmem:[%s1354 + $0x20] sm:$0xf]
      %v1364 = vld [vmem:[%s1354 + $0x24] sm:$0xf]
      %v1365 = vld [vmem:[%s1354 + $0x28] sm:$0xf]
      %v1366 = vld [vmem:[%s1354 + $0x2c] sm:$0xf]
      %v1367 = vld [vmem:[%s1354 + $0x30] sm:$0xf]
      %v1368 = vld [vmem:[%s1354 + $0x34] sm:$0xf]
      %v1369 = vld [vmem:[%s1354 + $0x38] sm:$0xf]
      %v1370 = vld [vmem:[%s1354 + $0x3c] sm:$0xf]
      %v1387 = vunpack.c.l.b16 %v1355
      %v1388 = vunpack.c.l.b16 %v1356
      %v1389 = vunpack.c.l.b16 %v1357
      %v1390 = vunpack.c.l.b16 %v1358
      %v1391 = vunpack.c.l.b16 %v1359
      %v1392 = vunpack.c.l.b16 %v1360
      %v1393 = vunpack.c.l.b16 %v1361
      %v1394 = vunpack.c.l.b16 %v1362
      %v1395 = vunpack.c.l.b16 %v1363
      %v1396 = vunpack.c.l.b16 %v1364
      %v1397 = vunpack.c.l.b16 %v1365
      %v1398 = vunpack.c.l.b16 %v1366
      %v1399 = vunpack.c.l.b16 %v1367
      %v1400 = vunpack.c.l.b16 %v1368
      %v1401 = vunpack.c.l.b16 %v1369
      %v1402 = vunpack.c.l.b16 %v1370
      %v1403 = vpack.c.b16 %v1388, %v1387
      %v1404 = vpack.c.b16 %v1390, %v1389
      %v1405 = vpack.c.b16 %v1392, %v1391
      %v1406 = vpack.c.b16 %v1394, %v1393
      %v1407 = vpack.c.b16 %v1396, %v1395
      %v1408 = vpack.c.b16 %v1398, %v1397
      %v1409 = vpack.c.b16 %v1400, %v1399
      %v1410 = vpack.c.b16 %v1402, %v1401
      %1419 = vmatprep.subr.bf16.mxu0 0
      %1420 = vmatpush1.bf16.msra.mxu0 %v1403
      %1421 = vmatprep.subr.bf16.mxu0 0
      %1422 = vmatpush1.bf16.msra.mxu0 %v1404
      %1423 = vmatprep.subr.bf16.mxu0 0
      %1424 = vmatpush1.bf16.msra.mxu0 %v1405
      %1425 = vmatprep.subr.bf16.mxu0 0
      %1426 = vmatpush1.bf16.msra.mxu0 %v1406
      %1427 = vmatprep.subr.bf16.mxu0 0
      %1428 = vmatpush1.bf16.msra.mxu0 %v1407
      %1429 = vmatprep.subr.bf16.mxu0 0
      %1430 = vmatpush1.bf16.msra.mxu0 %v1408
      %1431 = vmatprep.subr.bf16.mxu0 0
      %1432 = vmatpush1.bf16.msra.mxu0 %v1409
      %1433 = vmatprep.subr.bf16.mxu0 0
      %1434 = vmatpush1.bf16.msra.mxu0 %v1410
      %1435 = vmatprep.subr.bf16.mxu0 0
      %1436 = vmatpush1.bf16.msra.mxu0 0
      %1437 = vmatprep.subr.bf16.mxu0 0
      %1438 = vmatpush1.bf16.msra.mxu0 0
      %1439 = vmatprep.subr.bf16.mxu0 0
      %1440 = vmatpush1.bf16.msra.mxu0 0
      %1441 = vmatprep.subr.bf16.mxu0 0
      %1442 = vmatpush1.bf16.msra.mxu0 0
      %1443 = vmatprep.subr.bf16.mxu0 0
      %1444 = vmatpush1.bf16.msra.mxu0 0
      %1445 = vmatprep.subr.bf16.mxu0 0
      %1446 = vmatpush1.bf16.msra.mxu0 0
      %1447 = vmatprep.subr.bf16.mxu0 0
      %1448 = vmatpush1.bf16.msra.mxu0 0
      %1449 = vmatprep.subr.bf16.mxu0 0
      %1450 = vmatpush1.bf16.msra.mxu0 0
      %1451 = vmatprep.mubr.bf16.mxu0 0
      %1452 = vmatmul.mubr.bf16.gmra.mrb[0].mxu0 %v1338
      %v1453 = vpop.f32.mrb[0].mxu0
      %v1454 = vadd.f32 0.0, %v1453
      %v1455 = vpop.f32.mrb[0].mxu0
      %v1456 = vpop.f32.mrb[0].mxu0
      %v1457 = vadd.f32 0.0, %v1456
      %v1458 = vpop.f32.mrb[0].mxu0
      %1459 = vmatprep.mubr.bf16.mxu0 0
      %1460 = vmatmul.mubr.bf16.gmra.mrb[0].mxu0 %v1339
      %v1461 = vpop.f32.mrb[0].mxu0
      %v1462 = vadd.f32 0.0, %v1461
      %v1463 = vpop.f32.mrb[0].mxu0
      %v1464 = vpop.f32.mrb[0].mxu0
      %v1465 = vadd.f32 0.0, %v1464
      %v1466 = vpop.f32.mrb[0].mxu0
      %1467 = vmatprep.mubr.bf16.mxu0 0
      %1468 = vmatmul.mubr.bf16.gmra.mrb[0].mxu0 %v1340
      %v1469 = vpop.f32.mrb[0].mxu0
      %v1470 = vadd.f32 0.0, %v1469
      %v1471 = vpop.f32.mrb[0].mxu0
      %v1472 = vpop.f32.mrb[0].mxu0
      %v1473 = vadd.f32 0.0, %v1472
      %v1474 = vpop.f32.mrb[0].mxu0
      %1475 = vmatprep.mubr.bf16.mxu0 0
      %1476 = vmatmul.mubr.bf16.gmra.mrb[0].mxu0 %v1341
      %v1477 = vpop.f32.mrb[0].mxu0
      %v1478 = vadd.f32 0.0, %v1477
      %v1479 = vpop.f32.mrb[0].mxu0
      %v1480 = vpop.f32.mrb[0].mxu0
      %v1481 = vadd.f32 0.0, %v1480
      %v1482 = vpop.f32.mrb[0].mxu0
      %1483 = vmatprep.mubr.bf16.mxu0 0
      %1484 = vmatmul.mubr.bf16.gmra.mrb[0].mxu0 %v1342
      %v1485 = vpop.f32.mrb[0].mxu0
      %v1486 = vadd.f32 0.0, %v1485
      %v1487 = vpop.f32.mrb[0].mxu0
      %v1488 = vpop.f32.mrb[0].mxu0
      %v1489 = vadd.f32 0.0, %v1488
      %v1490 = vpop.f32.mrb[0].mxu0
      %1491 = vmatprep.mubr.bf16.mxu0 0
      %1492 = vmatmul.mubr.bf16.gmra.mrb[0].mxu0 %v1343
      %v1493 = vpop.f32.mrb[0].mxu0
      %v1494 = vadd.f32 0.0, %v1493
      %v1495 = vpop.f32.mrb[0].mxu0
      %v1496 = vpop.f32.mrb[0].mxu0
      %v1497 = vadd.f32 0.0, %v1496
      %v1498 = vpop.f32.mrb[0].mxu0
      %1499 = vmatprep.mubr.bf16.mxu0 0
      %1500 = vmatmul.mubr.bf16.gmra.mrb[0].mxu0 %v1344
      %v1501 = vpop.f32.mrb[0].mxu0
      %v1502 = vadd.f32 0.0, %v1501
      %v1503 = vpop.f32.mrb[0].mxu0
      %v1504 = vpop.f32.mrb[0].mxu0
      %v1505 = vadd.f32 0.0, %v1504
      %v1506 = vpop.f32.mrb[0].mxu0
      %1507 = vmatprep.mubr.bf16.mxu0 0
      %1508 = vmatmul.mubr.bf16.gmra.mrb[0].mxu0 %v1345
      %v1509 = vpop.f32.mrb[0].mxu0
      %v1510 = vadd.f32 0.0, %v1509
      %v1511 = vpop.f32.mrb[0].mxu0
      %v1512 = vpop.f32.mrb[0].mxu0
      %v1513 = vadd.f32 0.0, %v1512
      %v1514 = vpop.f32.mrb[0].mxu0
      %1515 = vmatprep.mubr.bf16.mxu0 0
      %1516 = vmatmul.mubr.bf16.gmra.mrb[0].mxu0 %v1346
      %v1517 = vpop.f32.mrb[0].mxu0
      %v1518 = vadd.f32 0.0, %v1517
      %v1519 = vpop.f32.mrb[0].mxu0
      %v1520 = vpop.f32.mrb[0].mxu0
      %v1521 = vadd.f32 0.0, %v1520
      %v1522 = vpop.f32.mrb[0].mxu0
      %1523 = vmatprep.mubr.bf16.mxu0 0
      %1524 = vmatmul.mubr.bf16.gmra.mrb[0].mxu0 %v1347
      %v1525 = vpop.f32.mrb[0].mxu0
      %v1526 = vadd.f32 0.0, %v1525
      %v1527 = vpop.f32.mrb[0].mxu0
      %v1528 = vpop.f32.mrb[0].mxu0
      %v1529 = vadd.f32 0.0, %v1528
      %v1530 = vpop.f32.mrb[0].mxu0
      %1531 = vmatprep.mubr.bf16.mxu0 0
      %1532 = vmatmul.mubr.bf16.gmra.mrb[0].mxu0 %v1348
      %v1533 = vpop.f32.mrb[0].mxu0
      %v1534 = vadd.f32 0.0, %v1533
      %v1535 = vpop.f32.mrb[0].mxu0
      %v1536 = vpop.f32.mrb[0].mxu0
      %v1537 = vadd.f32 0.0, %v1536
      %v1538 = vpop.f32.mrb[0].mxu0
      %1539 = vmatprep.mubr.bf16.mxu0 0
      %1540 = vmatmul.mubr.bf16.gmra.mrb[0].mxu0 %v1349
      %v1541 = vpop.f32.mrb[0].mxu0
      %v1542 = vadd.f32 0.0, %v1541
      %v1543 = vpop.f32.mrb[0].mxu0
      %v1544 = vpop.f32.mrb[0].mxu0
      %v1545 = vadd.f32 0.0, %v1544
      %v1546 = vpop.f32.mrb[0].mxu0
      %1547 = vmatprep.mubr.bf16.mxu0 0
      %1548 = vmatmul.mubr.bf16.gmra.mrb[0].mxu0 %v1350
      %v1549 = vpop.f32.mrb[0].mxu0
      %v1550 = vadd.f32 0.0, %v1549
      %v1551 = vpop.f32.mrb[0].mxu0
      %v1552 = vpop.f32.mrb[0].mxu0
      %v1553 = vadd.f32 0.0, %v1552
      %v1554 = vpop.f32.mrb[0].mxu0
      %1555 = vmatprep.mubr.bf16.mxu0 0
      %1556 = vmatmul.mubr.bf16.gmra.mrb[0].mxu0 %v1351
      %v1557 = vpop.f32.mrb[0].mxu0
      %v1558 = vadd.f32 0.0, %v1557
      %v1559 = vpop.f32.mrb[0].mxu0
      %v1560 = vpop.f32.mrb[0].mxu0
      %v1561 = vadd.f32 0.0, %v1560
      %v1562 = vpop.f32.mrb[0].mxu0
      %1563 = vmatprep.mubr.bf16.mxu0 0
      %1564 = vmatmul.mubr.bf16.gmra.mrb[0].mxu0 %v1352
      %v1565 = vpop.f32.mrb[0].mxu0
      %v1566 = vadd.f32 0.0, %v1565
      %v1567 = vpop.f32.mrb[0].mxu0
      %v1568 = vpop.f32.mrb[0].mxu0
      %v1569 = vadd.f32 0.0, %v1568
      %v1570 = vpop.f32.mrb[0].mxu0
      %1571 = vmatprep.mubr.bf16.mxu0 0
      %1572 = vmatmul.mubr.bf16.gmra.mrb[0].mxu0 %v1353
      %v1573 = vpop.f32.mrb[0].mxu0
      %v1574 = vadd.f32 0.0, %v1573
      %v1575 = vpop.f32.mrb[0].mxu0
      %v1576 = vpop.f32.mrb[0].mxu0
      %v1577 = vadd.f32 0.0, %v1576
      %v1578 = vpop.f32.mrb[0].mxu0
      %1579 = vdwg.mxu0
      %v1580 = vadd.f32 %v1274, %v1454
      %v1581 = vadd.f32 %v1275, %v1457
      %v1582 = vadd.f32 %v1276, %v1462
      %v1583 = vadd.f32 %v1277, %v1465
      %v1584 = vadd.f32 %v1278, %v1470
      %v1585 = vadd.f32 %v1279, %v1473
      %v1586 = vadd.f32 %v1280, %v1478
      %v1587 = vadd.f32 %v1281, %v1481
      %v1588 = vadd.f32 %v1282, %v1486
      %v1589 = vadd.f32 %v1283, %v1489
      %v1590 = vadd.f32 %v1284, %v1494
      %v1591 = vadd.f32 %v1285, %v1497
      %v1592 = vadd.f32 %v1286, %v1502
      %v1593 = vadd.f32 %v1287, %v1505
      %v1594 = vadd.f32 %v1288, %v1510
      %v1595 = vadd.f32 %v1289, %v1513
      %v1596 = vadd.f32 %v1290, %v1518
      %v1597 = vadd.f32 %v1291, %v1521
      %v1598 = vadd.f32 %v1292, %v1526
      %v1599 = vadd.f32 %v1293, %v1529
      %v1600 = vadd.f32 %v1294, %v1534
      %v1601 = vadd.f32 %v1295, %v1537
      %v1602 = vadd.f32 %v1296, %v1542
      %v1603 = vadd.f32 %v1297, %v1545
      %v1604 = vadd.f32 %v1298, %v1550
      %v1605 = vadd.f32 %v1299, %v1553
      %v1606 = vadd.f32 %v1300, %v1558
      %v1607 = vadd.f32 %v1301, %v1561
      %v1608 = vadd.f32 %v1302, %v1566
      %v1609 = vadd.f32 %v1303, %v1569
      %v1610 = vadd.f32 %v1304, %v1574
      %v1611 = vadd.f32 %v1305, %v1577
      %v1612 = vld [vmem:[%s999 + $0x2] sm:$0xff]
      %v1613 = vld [vmem:[%s999 + $0xa] sm:$0xff]
      %v1614 = vld [vmem:[%s999 + $0x1a] sm:$0xff]
      %v1615 = vld [vmem:[%s999 + $0x22] sm:$0xff]
      %v1616 = vld [vmem:[%s999 + $0x32] sm:$0xff]
      %v1617 = vld [vmem:[%s999 + $0x3a] sm:$0xff]
      %v1618 = vld [vmem:[%s999 + $0x4a] sm:$0xff]
      %v1619 = vld [vmem:[%s999 + $0x52] sm:$0xff]
      %v1620 = vld [vmem:[%s999 + $0x62] sm:$0xff]
      %v1621 = vld [vmem:[%s999 + $0x6a] sm:$0xff]
      %v1622 = vld [vmem:[%s999 + $0x7a] sm:$0xff]
      %v1623 = vld [vmem:[%s999 + $0x82] sm:$0xff]
      %v1624 = vld [vmem:[%s999 + $0x92] sm:$0xff]
      %v1625 = vld [vmem:[%s999 + $0x9a] sm:$0xff]
      %v1626 = vld [vmem:[%s999 + $0xaa] sm:$0xff]
      %v1627 = vld [vmem:[%s999 + $0xb2] sm:$0xff]
      %v1628 = vld [vmem:[%s999 + $0xc2] sm:$0xff]
      %v1629 = vld [vmem:[%s999 + $0xca] sm:$0xff]
      %v1630 = vld [vmem:[%s999 + $0xda] sm:$0xff]
      %v1631 = vld [vmem:[%s999 + $0xe2] sm:$0xff]
      %v1632 = vld [vmem:[%s999 + $0xf2] sm:$0xff]
      %v1633 = vld [vmem:[%s999 + $0xfa] sm:$0xff]
      %v1634 = vld [vmem:[%s999 + $0x10a] sm:$0xff]
      %v1635 = vld [vmem:[%s999 + $0x112] sm:$0xff]
      %v1636 = vld [vmem:[%s999 + $0x122] sm:$0xff]
      %v1637 = vld [vmem:[%s999 + $0x12a] sm:$0xff]
      %v1638 = vld [vmem:[%s999 + $0x13a] sm:$0xff]
      %v1639 = vld [vmem:[%s999 + $0x142] sm:$0xff]
      %v1640 = vld [vmem:[%s999 + $0x152] sm:$0xff]
      %v1641 = vld [vmem:[%s999 + $0x15a] sm:$0xff]
      %v1642 = vld [vmem:[%s999 + $0x16a] sm:$0xff]
      %v1643 = vld [vmem:[%s999 + $0x172] sm:$0xff]
      %v1644 = vpack.c.bf16 %v1613, %v1612
      %v1645 = vpack.c.bf16 %v1615, %v1614
      %v1646 = vpack.c.bf16 %v1617, %v1616
      %v1647 = vpack.c.bf16 %v1619, %v1618
      %v1648 = vpack.c.bf16 %v1621, %v1620
      %v1649 = vpack.c.bf16 %v1623, %v1622
      %v1650 = vpack.c.bf16 %v1625, %v1624
      %v1651 = vpack.c.bf16 %v1627, %v1626
      %v1652 = vpack.c.bf16 %v1629, %v1628
      %v1653 = vpack.c.bf16 %v1631, %v1630
      %v1654 = vpack.c.bf16 %v1633, %v1632
      %v1655 = vpack.c.bf16 %v1635, %v1634
      %v1656 = vpack.c.bf16 %v1637, %v1636
      %v1657 = vpack.c.bf16 %v1639, %v1638
      %v1658 = vpack.c.bf16 %v1641, %v1640
      %v1659 = vpack.c.bf16 %v1643, %v1642
      %s1660 = scalar_lea.vmem %s1, 320
      %v1661 = vld [vmem:[%s1660] sm:$0xf]
      %v1662 = vld [vmem:[%s1660 + $0x4] sm:$0xf]
      %v1663 = vld [vmem:[%s1660 + $0x8] sm:$0xf]
      %v1664 = vld [vmem:[%s1660 + $0xc] sm:$0xf]
      %v1665 = vld [vmem:[%s1660 + $0x10] sm:$0xf]
      %v1666 = vld [vmem:[%s1660 + $0x14] sm:$0xf]
      %v1667 = vld [vmem:[%s1660 + $0x18] sm:$0xf]
      %v1668 = vld [vmem:[%s1660 + $0x1c] sm:$0xf]
      %v1669 = vld [vmem:[%s1660 + $0x20] sm:$0xf]
      %v1670 = vld [vmem:[%s1660 + $0x24] sm:$0xf]
      %v1671 = vld [vmem:[%s1660 + $0x28] sm:$0xf]
      %v1672 = vld [vmem:[%s1660 + $0x2c] sm:$0xf]
      %v1673 = vld [vmem:[%s1660 + $0x30] sm:$0xf]
      %v1674 = vld [vmem:[%s1660 + $0x34] sm:$0xf]
      %v1675 = vld [vmem:[%s1660 + $0x38] sm:$0xf]
      %v1676 = vld [vmem:[%s1660 + $0x3c] sm:$0xf]
      %v1693 = vunpack.c.l.b16 %v1661
      %v1694 = vunpack.c.l.b16 %v1662
      %v1695 = vunpack.c.l.b16 %v1663
      %v1696 = vunpack.c.l.b16 %v1664
      %v1697 = vunpack.c.l.b16 %v1665
      %v1698 = vunpack.c.l.b16 %v1666
      %v1699 = vunpack.c.l.b16 %v1667
      %v1700 = vunpack.c.l.b16 %v1668
      %v1701 = vunpack.c.l.b16 %v1669
      %v1702 = vunpack.c.l.b16 %v1670
      %v1703 = vunpack.c.l.b16 %v1671
      %v1704 = vunpack.c.l.b16 %v1672
      %v1705 = vunpack.c.l.b16 %v1673
      %v1706 = vunpack.c.l.b16 %v1674
      %v1707 = vunpack.c.l.b16 %v1675
      %v1708 = vunpack.c.l.b16 %v1676
      %v1709 = vpack.c.b16 %v1694, %v1693
      %v1710 = vpack.c.b16 %v1696, %v1695
      %v1711 = vpack.c.b16 %v1698, %v1697
      %v1712 = vpack.c.b16 %v1700, %v1699
      %v1713 = vpack.c.b16 %v1702, %v1701
      %v1714 = vpack.c.b16 %v1704, %v1703
      %v1715 = vpack.c.b16 %v1706, %v1705
      %v1716 = vpack.c.b16 %v1708, %v1707
      %1725 = vmatprep.subr.bf16.mxu0 0
      %1726 = vmatpush1.bf16.msra.mxu0 %v1709
      %1727 = vmatprep.subr.bf16.mxu0 0
      %1728 = vmatpush1.bf16.msra.mxu0 %v1710
      %1729 = vmatprep.subr.bf16.mxu0 0
      %1730 = vmatpush1.bf16.msra.mxu0 %v1711
      %1731 = vmatprep.subr.bf16.mxu0 0
      %1732 = vmatpush1.bf16.msra.mxu0 %v1712
      %1733 = vmatprep.subr.bf16.mxu0 0
      %1734 = vmatpush1.bf16.msra.mxu0 %v1713
      %1735 = vmatprep.subr.bf16.mxu0 0
      %1736 = vmatpush1.bf16.msra.mxu0 %v1714
      %1737 = vmatprep.subr.bf16.mxu0 0
      %1738 = vmatpush1.bf16.msra.mxu0 %v1715
      %1739 = vmatprep.subr.bf16.mxu0 0
      %1740 = vmatpush1.bf16.msra.mxu0 %v1716
      %1741 = vmatprep.subr.bf16.mxu0 0
      %1742 = vmatpush1.bf16.msra.mxu0 0
      %1743 = vmatprep.subr.bf16.mxu0 0
      %1744 = vmatpush1.bf16.msra.mxu0 0
      %1745 = vmatprep.subr.bf16.mxu0 0
      %1746 = vmatpush1.bf16.msra.mxu0 0
      %1747 = vmatprep.subr.bf16.mxu0 0
      %1748 = vmatpush1.bf16.msra.mxu0 0
      %1749 = vmatprep.subr.bf16.mxu0 0
      %1750 = vmatpush1.bf16.msra.mxu0 0
      %1751 = vmatprep.subr.bf16.mxu0 0
      %1752 = vmatpush1.bf16.msra.mxu0 0
      %1753 = vmatprep.subr.bf16.mxu0 0
      %1754 = vmatpush1.bf16.msra.mxu0 0
      %1755 = vmatprep.subr.bf16.mxu0 0
      %1756 = vmatpush1.bf16.msra.mxu0 0
      %1757 = vmatprep.mubr.bf16.mxu0 0
      %1758 = vmatmul.mubr.bf16.gmra.mrb[0].mxu0 %v1644
      %v1759 = vpop.f32.mrb[0].mxu0
      %v1760 = vadd.f32 0.0, %v1759
      %v1761 = vpop.f32.mrb[0].mxu0
      %v1762 = vpop.f32.mrb[0].mxu0
      %v1763 = vadd.f32 0.0, %v1762
      %v1764 = vpop.f32.mrb[0].mxu0
      %1765 = vmatprep.mubr.bf16.mxu0 0
      %1766 = vmatmul.mubr.bf16.gmra.mrb[0].mxu0 %v1645
      %v1767 = vpop.f32.mrb[0].mxu0
      %v1768 = vadd.f32 0.0, %v1767
      %v1769 = vpop.f32.mrb[0].mxu0
      %v1770 = vpop.f32.mrb[0].mxu0
      %v1771 = vadd.f32 0.0, %v1770
      %v1772 = vpop.f32.mrb[0].mxu0
      %1773 = vmatprep.mubr.bf16.mxu0 0
      %1774 = vmatmul.mubr.bf16.gmra.mrb[0].mxu0 %v1646
      %v1775 = vpop.f32.mrb[0].mxu0
      %v1776 = vadd.f32 0.0, %v1775
      %v1777 = vpop.f32.mrb[0].mxu0
      %v1778 = vpop.f32.mrb[0].mxu0
      %v1779 = vadd.f32 0.0, %v1778
      %v1780 = vpop.f32.mrb[0].mxu0
      %1781 = vmatprep.mubr.bf16.mxu0 0
      %1782 = vmatmul.mubr.bf16.gmra.mrb[0].mxu0 %v1647
      %v1783 = vpop.f32.mrb[0].mxu0
      %v1784 = vadd.f32 0.0, %v1783
      %v1785 = vpop.f32.mrb[0].mxu0
      %v1786 = vpop.f32.mrb[0].mxu0
      %v1787 = vadd.f32 0.0, %v1786
      %v1788 = vpop.f32.mrb[0].mxu0
      %1789 = vmatprep.mubr.bf16.mxu0 0
      %1790 = vmatmul.mubr.bf16.gmra.mrb[0].mxu0 %v1648
      %v1791 = vpop.f32.mrb[0].mxu0
      %v1792 = vadd.f32 0.0, %v1791
      %v1793 = vpop.f32.mrb[0].mxu0
      %v1794 = vpop.f32.mrb[0].mxu0
      %v1795 = vadd.f32 0.0, %v1794
      %v1796 = vpop.f32.mrb[0].mxu0
      %1797 = vmatprep.mubr.bf16.mxu0 0
      %1798 = vmatmul.mubr.bf16.gmra.mrb[0].mxu0 %v1649
      %v1799 = vpop.f32.mrb[0].mxu0
      %v1800 = vadd.f32 0.0, %v1799
      %v1801 = vpop.f32.mrb[0].mxu0
      %v1802 = vpop.f32.mrb[0].mxu0
      %v1803 = vadd.f32 0.0, %v1802
      %v1804 = vpop.f32.mrb[0].mxu0
      %1805 = vmatprep.mubr.bf16.mxu0 0
      %1806 = vmatmul.mubr.bf16.gmra.mrb[0].mxu0 %v1650
      %v1807 = vpop.f32.mrb[0].mxu0
      %v1808 = vadd.f32 0.0, %v1807
      %v1809 = vpop.f32.mrb[0].mxu0
      %v1810 = vpop.f32.mrb[0].mxu0
      %v1811 = vadd.f32 0.0, %v1810
      %v1812 = vpop.f32.mrb[0].mxu0
      %1813 = vmatprep.mubr.bf16.mxu0 0
      %1814 = vmatmul.mubr.bf16.gmra.mrb[0].mxu0 %v1651
      %v1815 = vpop.f32.mrb[0].mxu0
      %v1816 = vadd.f32 0.0, %v1815
      %v1817 = vpop.f32.mrb[0].mxu0
      %v1818 = vpop.f32.mrb[0].mxu0
      %v1819 = vadd.f32 0.0, %v1818
      %v1820 = vpop.f32.mrb[0].mxu0
      %1821 = vmatprep.mubr.bf16.mxu0 0
      %1822 = vmatmul.mubr.bf16.gmra.mrb[0].mxu0 %v1652
      %v1823 = vpop.f32.mrb[0].mxu0
      %v1824 = vadd.f32 0.0, %v1823
      %v1825 = vpop.f32.mrb[0].mxu0
      %v1826 = vpop.f32.mrb[0].mxu0
      %v1827 = vadd.f32 0.0, %v1826
      %v1828 = vpop.f32.mrb[0].mxu0
      %1829 = vmatprep.mubr.bf16.mxu0 0
      %1830 = vmatmul.mubr.bf16.gmra.mrb[0].mxu0 %v1653
      %v1831 = vpop.f32.mrb[0].mxu0
      %v1832 = vadd.f32 0.0, %v1831
      %v1833 = vpop.f32.mrb[0].mxu0
      %v1834 = vpop.f32.mrb[0].mxu0
      %v1835 = vadd.f32 0.0, %v1834
      %v1836 = vpop.f32.mrb[0].mxu0
      %1837 = vmatprep.mubr.bf16.mxu0 0
      %1838 = vmatmul.mubr.bf16.gmra.mrb[0].mxu0 %v1654
      %v1839 = vpop.f32.mrb[0].mxu0
      %v1840 = vadd.f32 0.0, %v1839
      %v1841 = vpop.f32.mrb[0].mxu0
      %v1842 = vpop.f32.mrb[0].mxu0
      %v1843 = vadd.f32 0.0, %v1842
      %v1844 = vpop.f32.mrb[0].mxu0
      %1845 = vmatprep.mubr.bf16.mxu0 0
      %1846 = vmatmul.mubr.bf16.gmra.mrb[0].mxu0 %v1655
      %v1847 = vpop.f32.mrb[0].mxu0
      %v1848 = vadd.f32 0.0, %v1847
      %v1849 = vpop.f32.mrb[0].mxu0
      %v1850 = vpop.f32.mrb[0].mxu0
      %v1851 = vadd.f32 0.0, %v1850
      %v1852 = vpop.f32.mrb[0].mxu0
      %1853 = vmatprep.mubr.bf16.mxu0 0
      %1854 = vmatmul.mubr.bf16.gmra.mrb[0].mxu0 %v1656
      %v1855 = vpop.f32.mrb[0].mxu0
      %v1856 = vadd.f32 0.0, %v1855
      %v1857 = vpop.f32.mrb[0].mxu0
      %v1858 = vpop.f32.mrb[0].mxu0
      %v1859 = vadd.f32 0.0, %v1858
      %v1860 = vpop.f32.mrb[0].mxu0
      %1861 = vmatprep.mubr.bf16.mxu0 0
      %1862 = vmatmul.mubr.bf16.gmra.mrb[0].mxu0 %v1657
      %v1863 = vpop.f32.mrb[0].mxu0
      %v1864 = vadd.f32 0.0, %v1863
      %v1865 = vpop.f32.mrb[0].mxu0
      %v1866 = vpop.f32.mrb[0].mxu0
      %v1867 = vadd.f32 0.0, %v1866
      %v1868 = vpop.f32.mrb[0].mxu0
      %1869 = vmatprep.mubr.bf16.mxu0 0
      %1870 = vmatmul.mubr.bf16.gmra.mrb[0].mxu0 %v1658
      %v1871 = vpop.f32.mrb[0].mxu0
      %v1872 = vadd.f32 0.0, %v1871
      %v1873 = vpop.f32.mrb[0].mxu0
      %v1874 = vpop.f32.mrb[0].mxu0
      %v1875 = vadd.f32 0.0, %v1874
      %v1876 = vpop.f32.mrb[0].mxu0
      %1877 = vmatprep.mubr.bf16.mxu0 0
      %1878 = vmatmul.mubr.bf16.gmra.mrb[0].mxu0 %v1659
      %v1879 = vpop.f32.mrb[0].mxu0
      %v1880 = vadd.f32 0.0, %v1879
      %v1881 = vpop.f32.mrb[0].mxu0
      %v1882 = vpop.f32.mrb[0].mxu0
      %v1883 = vadd.f32 0.0, %v1882
      %v1884 = vpop.f32.mrb[0].mxu0
      %1885 = vdwg.mxu0
      %v1886 = vadd.f32 %v1580, %v1760
      %v1887 = vadd.f32 %v1581, %v1763
      %v1888 = vadd.f32 %v1582, %v1768
      %v1889 = vadd.f32 %v1583, %v1771
      %v1890 = vadd.f32 %v1584, %v1776
      %v1891 = vadd.f32 %v1585, %v1779
      %v1892 = vadd.f32 %v1586, %v1784
      %v1893 = vadd.f32 %v1587, %v1787
      %v1894 = vadd.f32 %v1588, %v1792
      %v1895 = vadd.f32 %v1589, %v1795
      %v1896 = vadd.f32 %v1590, %v1800
      %v1897 = vadd.f32 %v1591, %v1803
      %v1898 = vadd.f32 %v1592, %v1808
      %v1899 = vadd.f32 %v1593, %v1811
      %v1900 = vadd.f32 %v1594, %v1816
      %v1901 = vadd.f32 %v1595, %v1819
      %v1902 = vadd.f32 %v1596, %v1824
      %v1903 = vadd.f32 %v1597, %v1827
      %v1904 = vadd.f32 %v1598, %v1832
      %v1905 = vadd.f32 %v1599, %v1835
      %v1906 = vadd.f32 %v1600, %v1840
      %v1907 = vadd.f32 %v1601, %v1843
      %v1908 = vadd.f32 %v1602, %v1848
      %v1909 = vadd.f32 %v1603, %v1851
      %v1910 = vadd.f32 %v1604, %v1856
      %v1911 = vadd.f32 %v1605, %v1859
      %v1912 = vadd.f32 %v1606, %v1864
      %v1913 = vadd.f32 %v1607, %v1867
      %v1914 = vadd.f32 %v1608, %v1872
      %v1915 = vadd.f32 %v1609, %v1875
      %v1916 = vadd.f32 %v1610, %v1880
      %v1917 = vadd.f32 %v1611, %v1883
      %s1918 = scalar_lea.vmem %s138, 48
      %v1919 = vld [vmem:[%s1918] sm:$0xff]
      %v1920 = vld [vmem:[%s1918 + $0x8] sm:$0xff]
      %v1921 = vld [vmem:[%s1918 + $0x18] sm:$0xff]
      %v1922 = vld [vmem:[%s1918 + $0x20] sm:$0xff]
      %v1923 = vld [vmem:[%s1918 + $0x30] sm:$0xff]
      %v1924 = vld [vmem:[%s1918 + $0x38] sm:$0xff]
      %v1925 = vld [vmem:[%s1918 + $0x48] sm:$0xff]
      %v1926 = vld [vmem:[%s1918 + $0x50] sm:$0xff]
      %v1927 = vld [vmem:[%s1918 + $0x60] sm:$0xff]
      %v1928 = vld [vmem:[%s1918 + $0x68] sm:$0xff]
      %v1929 = vld [vmem:[%s1918 + $0x78] sm:$0xff]
      %v1930 = vld [vmem:[%s1918 + $0x80] sm:$0xff]
      %v1931 = vld [vmem:[%s1918 + $0x90] sm:$0xff]
      %v1932 = vld [vmem:[%s1918 + $0x98] sm:$0xff]
      %v1933 = vld [vmem:[%s1918 + $0xa8] sm:$0xff]
      %v1934 = vld [vmem:[%s1918 + $0xb0] sm:$0xff]
      %v1935 = vld [vmem:[%s1918 + $0xc0] sm:$0xff]
      %v1936 = vld [vmem:[%s1918 + $0xc8] sm:$0xff]
      %v1937 = vld [vmem:[%s1918 + $0xd8] sm:$0xff]
      %v1938 = vld [vmem:[%s1918 + $0xe0] sm:$0xff]
      %v1939 = vld [vmem:[%s1918 + $0xf0] sm:$0xff]
      %v1940 = vld [vmem:[%s1918 + $0xf8] sm:$0xff]
      %v1941 = vld [vmem:[%s1918 + $0x108] sm:$0xff]
      %v1942 = vld [vmem:[%s1918 + $0x110] sm:$0xff]
      %v1943 = vld [vmem:[%s1918 + $0x120] sm:$0xff]
      %v1944 = vld [vmem:[%s1918 + $0x128] sm:$0xff]
      %v1945 = vld [vmem:[%s1918 + $0x138] sm:$0xff]
      %v1946 = vld [vmem:[%s1918 + $0x140] sm:$0xff]
      %v1947 = vld [vmem:[%s1918 + $0x150] sm:$0xff]
      %v1948 = vld [vmem:[%s1918 + $0x158] sm:$0xff]
      %v1949 = vld [vmem:[%s1918 + $0x168] sm:$0xff]
      %v1950 = vld [vmem:[%s1918 + $0x170] sm:$0xff]
      %v1951 = vpack.c.bf16 %v1920, %v1919
      %v1952 = vpack.c.bf16 %v1922, %v1921
      %v1953 = vpack.c.bf16 %v1924, %v1923
      %v1954 = vpack.c.bf16 %v1926, %v1925
      %v1955 = vpack.c.bf16 %v1928, %v1927
      %v1956 = vpack.c.bf16 %v1930, %v1929
      %v1957 = vpack.c.bf16 %v1932, %v1931
      %v1958 = vpack.c.bf16 %v1934, %v1933
      %v1959 = vpack.c.bf16 %v1936, %v1935
      %v1960 = vpack.c.bf16 %v1938, %v1937
      %v1961 = vpack.c.bf16 %v1940, %v1939
      %v1962 = vpack.c.bf16 %v1942, %v1941
      %v1963 = vpack.c.bf16 %v1944, %v1943
      %v1964 = vpack.c.bf16 %v1946, %v1945
      %v1965 = vpack.c.bf16 %v1948, %v1947
      %v1966 = vpack.c.bf16 %v1950, %v1949
      %s1967 = scalar_lea.vmem %s1, 384
      %v1968 = vld [vmem:[%s1967] sm:$0xf]
      %v1969 = vld [vmem:[%s1967 + $0x4] sm:$0xf]
      %v1970 = vld [vmem:[%s1967 + $0x8] sm:$0xf]
      %v1971 = vld [vmem:[%s1967 + $0xc] sm:$0xf]
      %v1972 = vld [vmem:[%s1967 + $0x10] sm:$0xf]
      %v1973 = vld [vmem:[%s1967 + $0x14] sm:$0xf]
      %v1974 = vld [vmem:[%s1967 + $0x18] sm:$0xf]
      %v1975 = vld [vmem:[%s1967 + $0x1c] sm:$0xf]
      %v1976 = vld [vmem:[%s1967 + $0x20] sm:$0xf]
      %v1977 = vld [vmem:[%s1967 + $0x24] sm:$0xf]
      %v1978 = vld [vmem:[%s1967 + $0x28] sm:$0xf]
      %v1979 = vld [vmem:[%s1967 + $0x2c] sm:$0xf]
      %v1980 = vld [vmem:[%s1967 + $0x30] sm:$0xf]
      %v1981 = vld [vmem:[%s1967 + $0x34] sm:$0xf]
      %v1982 = vld [vmem:[%s1967 + $0x38] sm:$0xf]
      %v1983 = vld [vmem:[%s1967 + $0x3c] sm:$0xf]
      %v2000 = vunpack.c.l.b16 %v1968
      %v2001 = vunpack.c.l.b16 %v1969
      %v2002 = vunpack.c.l.b16 %v1970
      %v2003 = vunpack.c.l.b16 %v1971
      %v2004 = vunpack.c.l.b16 %v1972
      %v2005 = vunpack.c.l.b16 %v1973
      %v2006 = vunpack.c.l.b16 %v1974
      %v2007 = vunpack.c.l.b16 %v1975
      %v2008 = vunpack.c.l.b16 %v1976
      %v2009 = vunpack.c.l.b16 %v1977
      %v2010 = vunpack.c.l.b16 %v1978
      %v2011 = vunpack.c.l.b16 %v1979
      %v2012 = vunpack.c.l.b16 %v1980
      %v2013 = vunpack.c.l.b16 %v1981
      %v2014 = vunpack.c.l.b16 %v1982
      %v2015 = vunpack.c.l.b16 %v1983
      %v2016 = vpack.c.b16 %v2001, %v2000
      %v2017 = vpack.c.b16 %v2003, %v2002
      %v2018 = vpack.c.b16 %v2005, %v2004
      %v2019 = vpack.c.b16 %v2007, %v2006
      %v2020 = vpack.c.b16 %v2009, %v2008
      %v2021 = vpack.c.b16 %v2011, %v2010
      %v2022 = vpack.c.b16 %v2013, %v2012
      %v2023 = vpack.c.b16 %v2015, %v2014
      %2032 = vmatprep.subr.bf16.mxu0 0
      %2033 = vmatpush1.bf16.msra.mxu0 %v2016
      %2034 = vmatprep.subr.bf16.mxu0 0
      %2035 = vmatpush1.bf16.msra.mxu0 %v2017
      %2036 = vmatprep.subr.bf16.mxu0 0
      %2037 = vmatpush1.bf16.msra.mxu0 %v2018
      %2038 = vmatprep.subr.bf16.mxu0 0
      %2039 = vmatpush1.bf16.msra.mxu0 %v2019
      %2040 = vmatprep.subr.bf16.mxu0 0
      %2041 = vmatpush1.bf16.msra.mxu0 %v2020
      %2042 = vmatprep.subr.bf16.mxu0 0
      %2043 = vmatpush1.bf16.msra.mxu0 %v2021
      %2044 = vmatprep.subr.bf16.mxu0 0
      %2045 = vmatpush1.bf16.msra.mxu0 %v2022
      %2046 = vmatprep.subr.bf16.mxu0 0
      %2047 = vmatpush1.bf16.msra.mxu0 %v2023
      %2048 = vmatprep.subr.bf16.mxu0 0
      %2049 = vmatpush1.bf16.msra.mxu0 0
      %2050 = vmatprep.subr.bf16.mxu0 0
      %2051 = vmatpush1.bf16.msra.mxu0 0
      %2052 = vmatprep.subr.bf16.mxu0 0
      %2053 = vmatpush1.bf16.msra.mxu0 0
      %2054 = vmatprep.subr.bf16.mxu0 0
      %2055 = vmatpush1.bf16.msra.mxu0 0
      %2056 = vmatprep.subr.bf16.mxu0 0
      %2057 = vmatpush1.bf16.msra.mxu0 0
      %2058 = vmatprep.subr.bf16.mxu0 0
      %2059 = vmatpush1.bf16.msra.mxu0 0
      %2060 = vmatprep.subr.bf16.mxu0 0
      %2061 = vmatpush1.bf16.msra.mxu0 0
      %2062 = vmatprep.subr.bf16.mxu0 0
      %2063 = vmatpush1.bf16.msra.mxu0 0
      %2064 = vmatprep.mubr.bf16.mxu0 0
      %2065 = vmatmul.mubr.bf16.gmra.mrb[0].mxu0 %v1951
      %v2066 = vpop.f32.mrb[0].mxu0
      %v2067 = vadd.f32 0.0, %v2066
      %v2068 = vpop.f32.mrb[0].mxu0
      %v2069 = vpop.f32.mrb[0].mxu0
      %v2070 = vadd.f32 0.0, %v2069
      %v2071 = vpop.f32.mrb[0].mxu0
      %2072 = vmatprep.mubr.bf16.mxu0 0
      %2073 = vmatmul.mubr.bf16.gmra.mrb[0].mxu0 %v1952
      %v2074 = vpop.f32.mrb[0].mxu0
      %v2075 = vadd.f32 0.0, %v2074
      %v2076 = vpop.f32.mrb[0].mxu0
      %v2077 = vpop.f32.mrb[0].mxu0
      %v2078 = vadd.f32 0.0, %v2077
      %v2079 = vpop.f32.mrb[0].mxu0
      %2080 = vmatprep.mubr.bf16.mxu0 0
      %2081 = vmatmul.mubr.bf16.gmra.mrb[0].mxu0 %v1953
      %v2082 = vpop.f32.mrb[0].mxu0
      %v2083 = vadd.f32 0.0, %v2082
      %v2084 = vpop.f32.mrb[0].mxu0
      %v2085 = vpop.f32.mrb[0].mxu0
      %v2086 = vadd.f32 0.0, %v2085
      %v2087 = vpop.f32.mrb[0].mxu0
      %2088 = vmatprep.mubr.bf16.mxu0 0
      %2089 = vmatmul.mubr.bf16.gmra.mrb[0].mxu0 %v1954
      %v2090 = vpop.f32.mrb[0].mxu0
      %v2091 = vadd.f32 0.0, %v2090
      %v2092 = vpop.f32.mrb[0].mxu0
      %v2093 = vpop.f32.mrb[0].mxu0
      %v2094 = vadd.f32 0.0, %v2093
      %v2095 = vpop.f32.mrb[0].mxu0
      %2096 = vmatprep.mubr.bf16.mxu0 0
      %2097 = vmatmul.mubr.bf16.gmra.mrb[0].mxu0 %v1955
      %v2098 = vpop.f32.mrb[0].mxu0
      %v2099 = vadd.f32 0.0, %v2098
      %v2100 = vpop.f32.mrb[0].mxu0
      %v2101 = vpop.f32.mrb[0].mxu0
      %v2102 = vadd.f32 0.0, %v2101
      %v2103 = vpop.f32.mrb[0].mxu0
      %2104 = vmatprep.mubr.bf16.mxu0 0
      %2105 = vmatmul.mubr.bf16.gmra.mrb[0].mxu0 %v1956
      %v2106 = vpop.f32.mrb[0].mxu0
      %v2107 = vadd.f32 0.0, %v2106
      %v2108 = vpop.f32.mrb[0].mxu0
      %v2109 = vpop.f32.mrb[0].mxu0
      %v2110 = vadd.f32 0.0, %v2109
      %v2111 = vpop.f32.mrb[0].mxu0
      %2112 = vmatprep.mubr.bf16.mxu0 0
      %2113 = vmatmul.mubr.bf16.gmra.mrb[0].mxu0 %v1957
      %v2114 = vpop.f32.mrb[0].mxu0
      %v2115 = vadd.f32 0.0, %v2114
      %v2116 = vpop.f32.mrb[0].mxu0
      %v2117 = vpop.f32.mrb[0].mxu0
      %v2118 = vadd.f32 0.0, %v2117
      %v2119 = vpop.f32.mrb[0].mxu0
      %2120 = vmatprep.mubr.bf16.mxu0 0
      %2121 = vmatmul.mubr.bf16.gmra.mrb[0].mxu0 %v1958
      %v2122 = vpop.f32.mrb[0].mxu0
      %v2123 = vadd.f32 0.0, %v2122
      %v2124 = vpop.f32.mrb[0].mxu0
      %v2125 = vpop.f32.mrb[0].mxu0
      %v2126 = vadd.f32 0.0, %v2125
      %v2127 = vpop.f32.mrb[0].mxu0
      %2128 = vmatprep.mubr.bf16.mxu0 0
      %2129 = vmatmul.mubr.bf16.gmra.mrb[0].mxu0 %v1959
      %v2130 = vpop.f32.mrb[0].mxu0
      %v2131 = vadd.f32 0.0, %v2130
      %v2132 = vpop.f32.mrb[0].mxu0
      %v2133 = vpop.f32.mrb[0].mxu0
      %v2134 = vadd.f32 0.0, %v2133
      %v2135 = vpop.f32.mrb[0].mxu0
      %2136 = vmatprep.mubr.bf16.mxu0 0
      %2137 = vmatmul.mubr.bf16.gmra.mrb[0].mxu0 %v1960
      %v2138 = vpop.f32.mrb[0].mxu0
      %v2139 = vadd.f32 0.0, %v2138
      %v2140 = vpop.f32.mrb[0].mxu0
      %v2141 = vpop.f32.mrb[0].mxu0
      %v2142 = vadd.f32 0.0, %v2141
      %v2143 = vpop.f32.mrb[0].mxu0
      %2144 = vmatprep.mubr.bf16.mxu0 0
      %2145 = vmatmul.mubr.bf16.gmra.mrb[0].mxu0 %v1961
      %v2146 = vpop.f32.mrb[0].mxu0
      %v2147 = vadd.f32 0.0, %v2146
      %v2148 = vpop.f32.mrb[0].mxu0
      %v2149 = vpop.f32.mrb[0].mxu0
      %v2150 = vadd.f32 0.0, %v2149
      %v2151 = vpop.f32.mrb[0].mxu0
      %2152 = vmatprep.mubr.bf16.mxu0 0
      %2153 = vmatmul.mubr.bf16.gmra.mrb[0].mxu0 %v1962
      %v2154 = vpop.f32.mrb[0].mxu0
      %v2155 = vadd.f32 0.0, %v2154
      %v2156 = vpop.f32.mrb[0].mxu0
      %v2157 = vpop.f32.mrb[0].mxu0
      %v2158 = vadd.f32 0.0, %v2157
      %v2159 = vpop.f32.mrb[0].mxu0
      %2160 = vmatprep.mubr.bf16.mxu0 0
      %2161 = vmatmul.mubr.bf16.gmra.mrb[0].mxu0 %v1963
      %v2162 = vpop.f32.mrb[0].mxu0
      %v2163 = vadd.f32 0.0, %v2162
      %v2164 = vpop.f32.mrb[0].mxu0
      %v2165 = vpop.f32.mrb[0].mxu0
      %v2166 = vadd.f32 0.0, %v2165
      %v2167 = vpop.f32.mrb[0].mxu0
      %2168 = vmatprep.mubr.bf16.mxu0 0
      %2169 = vmatmul.mubr.bf16.gmra.mrb[0].mxu0 %v1964
      %v2170 = vpop.f32.mrb[0].mxu0
      %v2171 = vadd.f32 0.0, %v2170
      %v2172 = vpop.f32.mrb[0].mxu0
      %v2173 = vpop.f32.mrb[0].mxu0
      %v2174 = vadd.f32 0.0, %v2173
      %v2175 = vpop.f32.mrb[0].mxu0
      %2176 = vmatprep.mubr.bf16.mxu0 0
      %2177 = vmatmul.mubr.bf16.gmra.mrb[0].mxu0 %v1965
      %v2178 = vpop.f32.mrb[0].mxu0
      %v2179 = vadd.f32 0.0, %v2178
      %v2180 = vpop.f32.mrb[0].mxu0
      %v2181 = vpop.f32.mrb[0].mxu0
      %v2182 = vadd.f32 0.0, %v2181
      %v2183 = vpop.f32.mrb[0].mxu0
      %2184 = vmatprep.mubr.bf16.mxu0 0
      %2185 = vmatmul.mubr.bf16.gmra.mrb[0].mxu0 %v1966
      %v2186 = vpop.f32.mrb[0].mxu0
      %v2187 = vadd.f32 0.0, %v2186
      %v2188 = vpop.f32.mrb[0].mxu0
      %v2189 = vpop.f32.mrb[0].mxu0
      %v2190 = vadd.f32 0.0, %v2189
      %v2191 = vpop.f32.mrb[0].mxu0
      %2192 = vdwg.mxu0
      %v2193 = vadd.f32 %v1886, %v2067
      %v2194 = vadd.f32 %v1887, %v2070
      %v2195 = vadd.f32 %v1888, %v2075
      %v2196 = vadd.f32 %v1889, %v2078
      %v2197 = vadd.f32 %v1890, %v2083
      %v2198 = vadd.f32 %v1891, %v2086
      %v2199 = vadd.f32 %v1892, %v2091
      %v2200 = vadd.f32 %v1893, %v2094
      %v2201 = vadd.f32 %v1894, %v2099
      %v2202 = vadd.f32 %v1895, %v2102
      %v2203 = vadd.f32 %v1896, %v2107
      %v2204 = vadd.f32 %v1897, %v2110
      %v2205 = vadd.f32 %v1898, %v2115
      %v2206 = vadd.f32 %v1899, %v2118
      %v2207 = vadd.f32 %v1900, %v2123
      %v2208 = vadd.f32 %v1901, %v2126
      %v2209 = vadd.f32 %v1902, %v2131
      %v2210 = vadd.f32 %v1903, %v2134
      %v2211 = vadd.f32 %v1904, %v2139
      %v2212 = vadd.f32 %v1905, %v2142
      %v2213 = vadd.f32 %v1906, %v2147
      %v2214 = vadd.f32 %v1907, %v2150
      %v2215 = vadd.f32 %v1908, %v2155
      %v2216 = vadd.f32 %v1909, %v2158
      %v2217 = vadd.f32 %v1910, %v2163
      %v2218 = vadd.f32 %v1911, %v2166
      %v2219 = vadd.f32 %v1912, %v2171
      %v2220 = vadd.f32 %v1913, %v2174
      %v2221 = vadd.f32 %v1914, %v2179
      %v2222 = vadd.f32 %v1915, %v2182
      %v2223 = vadd.f32 %v1916, %v2187
      %v2224 = vadd.f32 %v1917, %v2190
      %v2225 = vld [vmem:[%s1918 + $0x1] sm:$0xff]
      %v2226 = vld [vmem:[%s1918 + $0x9] sm:$0xff]
      %v2227 = vld [vmem:[%s1918 + $0x19] sm:$0xff]
      %v2228 = vld [vmem:[%s1918 + $0x21] sm:$0xff]
      %v2229 = vld [vmem:[%s1918 + $0x31] sm:$0xff]
      %v2230 = vld [vmem:[%s1918 + $0x39] sm:$0xff]
      %v2231 = vld [vmem:[%s1918 + $0x49] sm:$0xff]
      %v2232 = vld [vmem:[%s1918 + $0x51] sm:$0xff]
      %v2233 = vld [vmem:[%s1918 + $0x61] sm:$0xff]
      %v2234 = vld [vmem:[%s1918 + $0x69] sm:$0xff]
      %v2235 = vld [vmem:[%s1918 + $0x79] sm:$0xff]
      %v2236 = vld [vmem:[%s1918 + $0x81] sm:$0xff]
      %v2237 = vld [vmem:[%s1918 + $0x91] sm:$0xff]
      %v2238 = vld [vmem:[%s1918 + $0x99] sm:$0xff]
      %v2239 = vld [vmem:[%s1918 + $0xa9] sm:$0xff]
      %v2240 = vld [vmem:[%s1918 + $0xb1] sm:$0xff]
      %v2241 = vld [vmem:[%s1918 + $0xc1] sm:$0xff]
      %v2242 = vld [vmem:[%s1918 + $0xc9] sm:$0xff]
      %v2243 = vld [vmem:[%s1918 + $0xd9] sm:$0xff]
      %v2244 = vld [vmem:[%s1918 + $0xe1] sm:$0xff]
      %v2245 = vld [vmem:[%s1918 + $0xf1] sm:$0xff]
      %v2246 = vld [vmem:[%s1918 + $0xf9] sm:$0xff]
      %v2247 = vld [vmem:[%s1918 + $0x109] sm:$0xff]
      %v2248 = vld [vmem:[%s1918 + $0x111] sm:$0xff]
      %v2249 = vld [vmem:[%s1918 + $0x121] sm:$0xff]
      %v2250 = vld [vmem:[%s1918 + $0x129] sm:$0xff]
      %v2251 = vld [vmem:[%s1918 + $0x139] sm:$0xff]
      %v2252 = vld [vmem:[%s1918 + $0x141] sm:$0xff]
      %v2253 = vld [vmem:[%s1918 + $0x151] sm:$0xff]
      %v2254 = vld [vmem:[%s1918 + $0x159] sm:$0xff]
      %v2255 = vld [vmem:[%s1918 + $0x169] sm:$0xff]
      %v2256 = vld [vmem:[%s1918 + $0x171] sm:$0xff]
      %v2257 = vpack.c.bf16 %v2226, %v2225
      %v2258 = vpack.c.bf16 %v2228, %v2227
      %v2259 = vpack.c.bf16 %v2230, %v2229
      %v2260 = vpack.c.bf16 %v2232, %v2231
      %v2261 = vpack.c.bf16 %v2234, %v2233
      %v2262 = vpack.c.bf16 %v2236, %v2235
      %v2263 = vpack.c.bf16 %v2238, %v2237
      %v2264 = vpack.c.bf16 %v2240, %v2239
      %v2265 = vpack.c.bf16 %v2242, %v2241
      %v2266 = vpack.c.bf16 %v2244, %v2243
      %v2267 = vpack.c.bf16 %v2246, %v2245
      %v2268 = vpack.c.bf16 %v2248, %v2247
      %v2269 = vpack.c.bf16 %v2250, %v2249
      %v2270 = vpack.c.bf16 %v2252, %v2251
      %v2271 = vpack.c.bf16 %v2254, %v2253
      %v2272 = vpack.c.bf16 %v2256, %v2255
      %s2273 = scalar_lea.vmem %s1, 448
      %v2274 = vld [vmem:[%s2273] sm:$0xf]
      %v2275 = vld [vmem:[%s2273 + $0x4] sm:$0xf]
      %v2276 = vld [vmem:[%s2273 + $0x8] sm:$0xf]
      %v2277 = vld [vmem:[%s2273 + $0xc] sm:$0xf]
      %v2278 = vld [vmem:[%s2273 + $0x10] sm:$0xf]
      %v2279 = vld [vmem:[%s2273 + $0x14] sm:$0xf]
      %v2280 = vld [vmem:[%s2273 + $0x18] sm:$0xf]
      %v2281 = vld [vmem:[%s2273 + $0x1c] sm:$0xf]
      %v2282 = vld [vmem:[%s2273 + $0x20] sm:$0xf]
      %v2283 = vld [vmem:[%s2273 + $0x24] sm:$0xf]
      %v2284 = vld [vmem:[%s2273 + $0x28] sm:$0xf]
      %v2285 = vld [vmem:[%s2273 + $0x2c] sm:$0xf]
      %v2286 = vld [vmem:[%s2273 + $0x30] sm:$0xf]
      %v2287 = vld [vmem:[%s2273 + $0x34] sm:$0xf]
      %v2288 = vld [vmem:[%s2273 + $0x38] sm:$0xf]
      %v2289 = vld [vmem:[%s2273 + $0x3c] sm:$0xf]
      %v2306 = vunpack.c.l.b16 %v2274
      %v2307 = vunpack.c.l.b16 %v2275
      %v2308 = vunpack.c.l.b16 %v2276
      %v2309 = vunpack.c.l.b16 %v2277
      %v2310 = vunpack.c.l.b16 %v2278
      %v2311 = vunpack.c.l.b16 %v2279
      %v2312 = vunpack.c.l.b16 %v2280
      %v2313 = vunpack.c.l.b16 %v2281
      %v2314 = vunpack.c.l.b16 %v2282
      %v2315 = vunpack.c.l.b16 %v2283
      %v2316 = vunpack.c.l.b16 %v2284
      %v2317 = vunpack.c.l.b16 %v2285
      %v2318 = vunpack.c.l.b16 %v2286
      %v2319 = vunpack.c.l.b16 %v2287
      %v2320 = vunpack.c.l.b16 %v2288
      %v2321 = vunpack.c.l.b16 %v2289
      %v2322 = vpack.c.b16 %v2307, %v2306
      %v2323 = vpack.c.b16 %v2309, %v2308
      %v2324 = vpack.c.b16 %v2311, %v2310
      %v2325 = vpack.c.b16 %v2313, %v2312
      %v2326 = vpack.c.b16 %v2315, %v2314
      %v2327 = vpack.c.b16 %v2317, %v2316
      %v2328 = vpack.c.b16 %v2319, %v2318
      %v2329 = vpack.c.b16 %v2321, %v2320
      %2338 = vmatprep.subr.bf16.mxu0 0
      %2339 = vmatpush1.bf16.msra.mxu0 %v2322
      %2340 = vmatprep.subr.bf16.mxu0 0
      %2341 = vmatpush1.bf16.msra.mxu0 %v2323
      %2342 = vmatprep.subr.bf16.mxu0 0
      %2343 = vmatpush1.bf16.msra.mxu0 %v2324
      %2344 = vmatprep.subr.bf16.mxu0 0
      %2345 = vmatpush1.bf16.msra.mxu0 %v2325
      %2346 = vmatprep.subr.bf16.mxu0 0
      %2347 = vmatpush1.bf16.msra.mxu0 %v2326
      %2348 = vmatprep.subr.bf16.mxu0 0
      %2349 = vmatpush1.bf16.msra.mxu0 %v2327
      %2350 = vmatprep.subr.bf16.mxu0 0
      %2351 = vmatpush1.bf16.msra.mxu0 %v2328
      %2352 = vmatprep.subr.bf16.mxu0 0
      %2353 = vmatpush1.bf16.msra.mxu0 %v2329
      %2354 = vmatprep.subr.bf16.mxu0 0
      %2355 = vmatpush1.bf16.msra.mxu0 0
      %2356 = vmatprep.subr.bf16.mxu0 0
      %2357 = vmatpush1.bf16.msra.mxu0 0
      %2358 = vmatprep.subr.bf16.mxu0 0
      %2359 = vmatpush1.bf16.msra.mxu0 0
      %2360 = vmatprep.subr.bf16.mxu0 0
      %2361 = vmatpush1.bf16.msra.mxu0 0
      %2362 = vmatprep.subr.bf16.mxu0 0
      %2363 = vmatpush1.bf16.msra.mxu0 0
      %2364 = vmatprep.subr.bf16.mxu0 0
      %2365 = vmatpush1.bf16.msra.mxu0 0
      %2366 = vmatprep.subr.bf16.mxu0 0
      %2367 = vmatpush1.bf16.msra.mxu0 0
      %2368 = vmatprep.subr.bf16.mxu0 0
      %2369 = vmatpush1.bf16.msra.mxu0 0
      %2370 = vmatprep.mubr.bf16.mxu0 0
      %2371 = vmatmul.mubr.bf16.gmra.mrb[0].mxu0 %v2257
      %v2372 = vpop.f32.mrb[0].mxu0
      %v2373 = vadd.f32 0.0, %v2372
      %v2374 = vpop.f32.mrb[0].mxu0
      %v2375 = vpop.f32.mrb[0].mxu0
      %v2376 = vadd.f32 0.0, %v2375
      %v2377 = vpop.f32.mrb[0].mxu0
      %2378 = vmatprep.mubr.bf16.mxu0 0
      %2379 = vmatmul.mubr.bf16.gmra.mrb[0].mxu0 %v2258
      %v2380 = vpop.f32.mrb[0].mxu0
      %v2381 = vadd.f32 0.0, %v2380
      %v2382 = vpop.f32.mrb[0].mxu0
      %v2383 = vpop.f32.mrb[0].mxu0
      %v2384 = vadd.f32 0.0, %v2383
      %v2385 = vpop.f32.mrb[0].mxu0
      %2386 = vmatprep.mubr.bf16.mxu0 0
      %2387 = vmatmul.mubr.bf16.gmra.mrb[0].mxu0 %v2259
      %v2388 = vpop.f32.mrb[0].mxu0
      %v2389 = vadd.f32 0.0, %v2388
      %v2390 = vpop.f32.mrb[0].mxu0
      %v2391 = vpop.f32.mrb[0].mxu0
      %v2392 = vadd.f32 0.0, %v2391
      %v2393 = vpop.f32.mrb[0].mxu0
      %2394 = vmatprep.mubr.bf16.mxu0 0
      %2395 = vmatmul.mubr.bf16.gmra.mrb[0].mxu0 %v2260
      %v2396 = vpop.f32.mrb[0].mxu0
      %v2397 = vadd.f32 0.0, %v2396
      %v2398 = vpop.f32.mrb[0].mxu0
      %v2399 = vpop.f32.mrb[0].mxu0
      %v2400 = vadd.f32 0.0, %v2399
      %v2401 = vpop.f32.mrb[0].mxu0
      %2402 = vmatprep.mubr.bf16.mxu0 0
      %2403 = vmatmul.mubr.bf16.gmra.mrb[0].mxu0 %v2261
      %v2404 = vpop.f32.mrb[0].mxu0
      %v2405 = vadd.f32 0.0, %v2404
      %v2406 = vpop.f32.mrb[0].mxu0
      %v2407 = vpop.f32.mrb[0].mxu0
      %v2408 = vadd.f32 0.0, %v2407
      %v2409 = vpop.f32.mrb[0].mxu0
      %2410 = vmatprep.mubr.bf16.mxu0 0
      %2411 = vmatmul.mubr.bf16.gmra.mrb[0].mxu0 %v2262
      %v2412 = vpop.f32.mrb[0].mxu0
      %v2413 = vadd.f32 0.0, %v2412
      %v2414 = vpop.f32.mrb[0].mxu0
      %v2415 = vpop.f32.mrb[0].mxu0
      %v2416 = vadd.f32 0.0, %v2415
      %v2417 = vpop.f32.mrb[0].mxu0
      %2418 = vmatprep.mubr.bf16.mxu0 0
      %2419 = vmatmul.mubr.bf16.gmra.mrb[0].mxu0 %v2263
      %v2420 = vpop.f32.mrb[0].mxu0
      %v2421 = vadd.f32 0.0, %v2420
      %v2422 = vpop.f32.mrb[0].mxu0
      %v2423 = vpop.f32.mrb[0].mxu0
      %v2424 = vadd.f32 0.0, %v2423
      %v2425 = vpop.f32.mrb[0].mxu0
      %2426 = vmatprep.mubr.bf16.mxu0 0
      %2427 = vmatmul.mubr.bf16.gmra.mrb[0].mxu0 %v2264
      %v2428 = vpop.f32.mrb[0].mxu0
      %v2429 = vadd.f32 0.0, %v2428
      %v2430 = vpop.f32.mrb[0].mxu0
      %v2431 = vpop.f32.mrb[0].mxu0
      %v2432 = vadd.f32 0.0, %v2431
      %v2433 = vpop.f32.mrb[0].mxu0
      %2434 = vmatprep.mubr.bf16.mxu0 0
      %2435 = vmatmul.mubr.bf16.gmra.mrb[0].mxu0 %v2265
      %v2436 = vpop.f32.mrb[0].mxu0
      %v2437 = vadd.f32 0.0, %v2436
      %v2438 = vpop.f32.mrb[0].mxu0
      %v2439 = vpop.f32.mrb[0].mxu0
      %v2440 = vadd.f32 0.0, %v2439
      %v2441 = vpop.f32.mrb[0].mxu0
      %2442 = vmatprep.mubr.bf16.mxu0 0
      %2443 = vmatmul.mubr.bf16.gmra.mrb[0].mxu0 %v2266
      %v2444 = vpop.f32.mrb[0].mxu0
      %v2445 = vadd.f32 0.0, %v2444
      %v2446 = vpop.f32.mrb[0].mxu0
      %v2447 = vpop.f32.mrb[0].mxu0
      %v2448 = vadd.f32 0.0, %v2447
      %v2449 = vpop.f32.mrb[0].mxu0
      %2450 = vmatprep.mubr.bf16.mxu0 0
      %2451 = vmatmul.mubr.bf16.gmra.mrb[0].mxu0 %v2267
      %v2452 = vpop.f32.mrb[0].mxu0
      %v2453 = vadd.f32 0.0, %v2452
      %v2454 = vpop.f32.mrb[0].mxu0
      %v2455 = vpop.f32.mrb[0].mxu0
      %v2456 = vadd.f32 0.0, %v2455
      %v2457 = vpop.f32.mrb[0].mxu0
      %2458 = vmatprep.mubr.bf16.mxu0 0
      %2459 = vmatmul.mubr.bf16.gmra.mrb[0].mxu0 %v2268
      %v2460 = vpop.f32.mrb[0].mxu0
      %v2461 = vadd.f32 0.0, %v2460
      %v2462 = vpop.f32.mrb[0].mxu0
      %v2463 = vpop.f32.mrb[0].mxu0
      %v2464 = vadd.f32 0.0, %v2463
      %v2465 = vpop.f32.mrb[0].mxu0
      %2466 = vmatprep.mubr.bf16.mxu0 0
      %2467 = vmatmul.mubr.bf16.gmra.mrb[0].mxu0 %v2269
      %v2468 = vpop.f32.mrb[0].mxu0
      %v2469 = vadd.f32 0.0, %v2468
      %v2470 = vpop.f32.mrb[0].mxu0
      %v2471 = vpop.f32.mrb[0].mxu0
      %v2472 = vadd.f32 0.0, %v2471
      %v2473 = vpop.f32.mrb[0].mxu0
      %2474 = vmatprep.mubr.bf16.mxu0 0
      %2475 = vmatmul.mubr.bf16.gmra.mrb[0].mxu0 %v2270
      %v2476 = vpop.f32.mrb[0].mxu0
      %v2477 = vadd.f32 0.0, %v2476
      %v2478 = vpop.f32.mrb[0].mxu0
      %v2479 = vpop.f32.mrb[0].mxu0
      %v2480 = vadd.f32 0.0, %v2479
      %v2481 = vpop.f32.mrb[0].mxu0
      %2482 = vmatprep.mubr.bf16.mxu0 0
      %2483 = vmatmul.mubr.bf16.gmra.mrb[0].mxu0 %v2271
      %v2484 = vpop.f32.mrb[0].mxu0
      %v2485 = vadd.f32 0.0, %v2484
      %v2486 = vpop.f32.mrb[0].mxu0
      %v2487 = vpop.f32.mrb[0].mxu0
      %v2488 = vadd.f32 0.0, %v2487
      %v2489 = vpop.f32.mrb[0].mxu0
      %2490 = vmatprep.mubr.bf16.mxu0 0
      %2491 = vmatmul.mubr.bf16.gmra.mrb[0].mxu0 %v2272
      %v2492 = vpop.f32.mrb[0].mxu0
      %v2493 = vadd.f32 0.0, %v2492
      %v2494 = vpop.f32.mrb[0].mxu0
      %v2495 = vpop.f32.mrb[0].mxu0
      %v2496 = vadd.f32 0.0, %v2495
      %v2497 = vpop.f32.mrb[0].mxu0
      %2498 = vdwg.mxu0
      %v2499 = vadd.f32 %v2193, %v2373
      %v2500 = vadd.f32 %v2194, %v2376
      %v2501 = vadd.f32 %v2195, %v2381
      %v2502 = vadd.f32 %v2196, %v2384
      %v2503 = vadd.f32 %v2197, %v2389
      %v2504 = vadd.f32 %v2198, %v2392
      %v2505 = vadd.f32 %v2199, %v2397
      %v2506 = vadd.f32 %v2200, %v2400
      %v2507 = vadd.f32 %v2201, %v2405
      %v2508 = vadd.f32 %v2202, %v2408
      %v2509 = vadd.f32 %v2203, %v2413
      %v2510 = vadd.f32 %v2204, %v2416
      %v2511 = vadd.f32 %v2205, %v2421
      %v2512 = vadd.f32 %v2206, %v2424
      %v2513 = vadd.f32 %v2207, %v2429
      %v2514 = vadd.f32 %v2208, %v2432
      %v2515 = vadd.f32 %v2209, %v2437
      %v2516 = vadd.f32 %v2210, %v2440
      %v2517 = vadd.f32 %v2211, %v2445
      %v2518 = vadd.f32 %v2212, %v2448
      %v2519 = vadd.f32 %v2213, %v2453
      %v2520 = vadd.f32 %v2214, %v2456
      %v2521 = vadd.f32 %v2215, %v2461
      %v2522 = vadd.f32 %v2216, %v2464
      %v2523 = vadd.f32 %v2217, %v2469
      %v2524 = vadd.f32 %v2218, %v2472
      %v2525 = vadd.f32 %v2219, %v2477
      %v2526 = vadd.f32 %v2220, %v2480
      %v2527 = vadd.f32 %v2221, %v2485
      %v2528 = vadd.f32 %v2222, %v2488
      %v2529 = vadd.f32 %v2223, %v2493
      %v2530 = vadd.f32 %v2224, %v2496
      %v2531 = vld [vmem:[%s1918 + $0x2] sm:$0xff]
      %v2532 = vld [vmem:[%s1918 + $0xa] sm:$0xff]
      %v2533 = vld [vmem:[%s1918 + $0x1a] sm:$0xff]
      %v2534 = vld [vmem:[%s1918 + $0x22] sm:$0xff]
      %v2535 = vld [vmem:[%s1918 + $0x32] sm:$0xff]
      %v2536 = vld [vmem:[%s1918 + $0x3a] sm:$0xff]
      %v2537 = vld [vmem:[%s1918 + $0x4a] sm:$0xff]
      %v2538 = vld [vmem:[%s1918 + $0x52] sm:$0xff]
      %v2539 = vld [vmem:[%s1918 + $0x62] sm:$0xff]
      %v2540 = vld [vmem:[%s1918 + $0x6a] sm:$0xff]
      %v2541 = vld [vmem:[%s1918 + $0x7a] sm:$0xff]
      %v2542 = vld [vmem:[%s1918 + $0x82] sm:$0xff]
      %v2543 = vld [vmem:[%s1918 + $0x92] sm:$0xff]
      %v2544 = vld [vmem:[%s1918 + $0x9a] sm:$0xff]
      %v2545 = vld [vmem:[%s1918 + $0xaa] sm:$0xff]
      %v2546 = vld [vmem:[%s1918 + $0xb2] sm:$0xff]
      %v2547 = vld [vmem:[%s1918 + $0xc2] sm:$0xff]
      %v2548 = vld [vmem:[%s1918 + $0xca] sm:$0xff]
      %v2549 = vld [vmem:[%s1918 + $0xda] sm:$0xff]
      %v2550 = vld [vmem:[%s1918 + $0xe2] sm:$0xff]
      %v2551 = vld [vmem:[%s1918 + $0xf2] sm:$0xff]
      %v2552 = vld [vmem:[%s1918 + $0xfa] sm:$0xff]
      %v2553 = vld [vmem:[%s1918 + $0x10a] sm:$0xff]
      %v2554 = vld [vmem:[%s1918 + $0x112] sm:$0xff]
      %v2555 = vld [vmem:[%s1918 + $0x122] sm:$0xff]
      %v2556 = vld [vmem:[%s1918 + $0x12a] sm:$0xff]
      %v2557 = vld [vmem:[%s1918 + $0x13a] sm:$0xff]
      %v2558 = vld [vmem:[%s1918 + $0x142] sm:$0xff]
      %v2559 = vld [vmem:[%s1918 + $0x152] sm:$0xff]
      %v2560 = vld [vmem:[%s1918 + $0x15a] sm:$0xff]
      %v2561 = vld [vmem:[%s1918 + $0x16a] sm:$0xff]
      %v2562 = vld [vmem:[%s1918 + $0x172] sm:$0xff]
      %v2563 = vpack.c.bf16 %v2532, %v2531
      %v2564 = vpack.c.bf16 %v2534, %v2533
      %v2565 = vpack.c.bf16 %v2536, %v2535
      %v2566 = vpack.c.bf16 %v2538, %v2537
      %v2567 = vpack.c.bf16 %v2540, %v2539
      %v2568 = vpack.c.bf16 %v2542, %v2541
      %v2569 = vpack.c.bf16 %v2544, %v2543
      %v2570 = vpack.c.bf16 %v2546, %v2545
      %v2571 = vpack.c.bf16 %v2548, %v2547
      %v2572 = vpack.c.bf16 %v2550, %v2549
      %v2573 = vpack.c.bf16 %v2552, %v2551
      %v2574 = vpack.c.bf16 %v2554, %v2553
      %v2575 = vpack.c.bf16 %v2556, %v2555
      %v2576 = vpack.c.bf16 %v2558, %v2557
      %v2577 = vpack.c.bf16 %v2560, %v2559
      %v2578 = vpack.c.bf16 %v2562, %v2561
      %s2579 = scalar_lea.vmem %s1, 512
      %v2580 = vld [vmem:[%s2579] sm:$0xf]
      %v2581 = vld [vmem:[%s2579 + $0x4] sm:$0xf]
      %v2582 = vld [vmem:[%s2579 + $0x8] sm:$0xf]
      %v2583 = vld [vmem:[%s2579 + $0xc] sm:$0xf]
      %v2584 = vld [vmem:[%s2579 + $0x10] sm:$0xf]
      %v2585 = vld [vmem:[%s2579 + $0x14] sm:$0xf]
      %v2586 = vld [vmem:[%s2579 + $0x18] sm:$0xf]
      %v2587 = vld [vmem:[%s2579 + $0x1c] sm:$0xf]
      %v2588 = vld [vmem:[%s2579 + $0x20] sm:$0xf]
      %v2589 = vld [vmem:[%s2579 + $0x24] sm:$0xf]
      %v2590 = vld [vmem:[%s2579 + $0x28] sm:$0xf]
      %v2591 = vld [vmem:[%s2579 + $0x2c] sm:$0xf]
      %v2592 = vld [vmem:[%s2579 + $0x30] sm:$0xf]
      %v2593 = vld [vmem:[%s2579 + $0x34] sm:$0xf]
      %v2594 = vld [vmem:[%s2579 + $0x38] sm:$0xf]
      %v2595 = vld [vmem:[%s2579 + $0x3c] sm:$0xf]
      %v2612 = vunpack.c.l.b16 %v2580
      %v2613 = vunpack.c.l.b16 %v2581
      %v2614 = vunpack.c.l.b16 %v2582
      %v2615 = vunpack.c.l.b16 %v2583
      %v2616 = vunpack.c.l.b16 %v2584
      %v2617 = vunpack.c.l.b16 %v2585
      %v2618 = vunpack.c.l.b16 %v2586
      %v2619 = vunpack.c.l.b16 %v2587
      %v2620 = vunpack.c.l.b16 %v2588
      %v2621 = vunpack.c.l.b16 %v2589
      %v2622 = vunpack.c.l.b16 %v2590
      %v2623 = vunpack.c.l.b16 %v2591
      %v2624 = vunpack.c.l.b16 %v2592
      %v2625 = vunpack.c.l.b16 %v2593
      %v2626 = vunpack.c.l.b16 %v2594
      %v2627 = vunpack.c.l.b16 %v2595
      %v2628 = vpack.c.b16 %v2613, %v2612
      %v2629 = vpack.c.b16 %v2615, %v2614
      %v2630 = vpack.c.b16 %v2617, %v2616
      %v2631 = vpack.c.b16 %v2619, %v2618
      %v2632 = vpack.c.b16 %v2621, %v2620
      %v2633 = vpack.c.b16 %v2623, %v2622
      %v2634 = vpack.c.b16 %v2625, %v2624
      %v2635 = vpack.c.b16 %v2627, %v2626
      %2644 = vmatprep.subr.bf16.mxu0 0
      %2645 = vmatpush1.bf16.msra.mxu0 %v2628
      %2646 = vmatprep.subr.bf16.mxu0 0
      %2647 = vmatpush1.bf16.msra.mxu0 %v2629
      %2648 = vmatprep.subr.bf16.mxu0 0
      %2649 = vmatpush1.bf16.msra.mxu0 %v2630
      %2650 = vmatprep.subr.bf16.mxu0 0
      %2651 = vmatpush1.bf16.msra.mxu0 %v2631
      %2652 = vmatprep.subr.bf16.mxu0 0
      %2653 = vmatpush1.bf16.msra.mxu0 %v2632
      %2654 = vmatprep.subr.bf16.mxu0 0
      %2655 = vmatpush1.bf16.msra.mxu0 %v2633
      %2656 = vmatprep.subr.bf16.mxu0 0
      %2657 = vmatpush1.bf16.msra.mxu0 %v2634
      %2658 = vmatprep.subr.bf16.mxu0 0
      %2659 = vmatpush1.bf16.msra.mxu0 %v2635
      %2660 = vmatprep.subr.bf16.mxu0 0
      %2661 = vmatpush1.bf16.msra.mxu0 0
      %2662 = vmatprep.subr.bf16.mxu0 0
      %2663 = vmatpush1.bf16.msra.mxu0 0
      %2664 = vmatprep.subr.bf16.mxu0 0
      %2665 = vmatpush1.bf16.msra.mxu0 0
      %2666 = vmatprep.subr.bf16.mxu0 0
      %2667 = vmatpush1.bf16.msra.mxu0 0
      %2668 = vmatprep.subr.bf16.mxu0 0
      %2669 = vmatpush1.bf16.msra.mxu0 0
      %2670 = vmatprep.subr.bf16.mxu0 0
      %2671 = vmatpush1.bf16.msra.mxu0 0
      %2672 = vmatprep.subr.bf16.mxu0 0
      %2673 = vmatpush1.bf16.msra.mxu0 0
      %2674 = vmatprep.subr.bf16.mxu0 0
      %2675 = vmatpush1.bf16.msra.mxu0 0
      %2676 = vmatprep.mubr.bf16.mxu0 0
      %2677 = vmatmul.mubr.bf16.gmra.mrb[0].mxu0 %v2563
      %v2678 = vpop.f32.mrb[0].mxu0
      %v2679 = vadd.f32 0.0, %v2678
      %v2680 = vpop.f32.mrb[0].mxu0
      %v2681 = vpop.f32.mrb[0].mxu0
      %v2682 = vadd.f32 0.0, %v2681
      %v2683 = vpop.f32.mrb[0].mxu0
      %2684 = vmatprep.mubr.bf16.mxu0 0
      %2685 = vmatmul.mubr.bf16.gmra.mrb[0].mxu0 %v2564
      %v2686 = vpop.f32.mrb[0].mxu0
      %v2687 = vadd.f32 0.0, %v2686
      %v2688 = vpop.f32.mrb[0].mxu0
      %v2689 = vpop.f32.mrb[0].mxu0
      %v2690 = vadd.f32 0.0, %v2689
      %v2691 = vpop.f32.mrb[0].mxu0
      %2692 = vmatprep.mubr.bf16.mxu0 0
      %2693 = vmatmul.mubr.bf16.gmra.mrb[0].mxu0 %v2565
      %v2694 = vpop.f32.mrb[0].mxu0
      %v2695 = vadd.f32 0.0, %v2694
      %v2696 = vpop.f32.mrb[0].mxu0
      %v2697 = vpop.f32.mrb[0].mxu0
      %v2698 = vadd.f32 0.0, %v2697
      %v2699 = vpop.f32.mrb[0].mxu0
      %2700 = vmatprep.mubr.bf16.mxu0 0
      %2701 = vmatmul.mubr.bf16.gmra.mrb[0].mxu0 %v2566
      %v2702 = vpop.f32.mrb[0].mxu0
      %v2703 = vadd.f32 0.0, %v2702
      %v2704 = vpop.f32.mrb[0].mxu0
      %v2705 = vpop.f32.mrb[0].mxu0
      %v2706 = vadd.f32 0.0, %v2705
      %v2707 = vpop.f32.mrb[0].mxu0
      %2708 = vmatprep.mubr.bf16.mxu0 0
      %2709 = vmatmul.mubr.bf16.gmra.mrb[0].mxu0 %v2567
      %v2710 = vpop.f32.mrb[0].mxu0
      %v2711 = vadd.f32 0.0, %v2710
      %v2712 = vpop.f32.mrb[0].mxu0
      %v2713 = vpop.f32.mrb[0].mxu0
      %v2714 = vadd.f32 0.0, %v2713
      %v2715 = vpop.f32.mrb[0].mxu0
      %2716 = vmatprep.mubr.bf16.mxu0 0
      %2717 = vmatmul.mubr.bf16.gmra.mrb[0].mxu0 %v2568
      %v2718 = vpop.f32.mrb[0].mxu0
      %v2719 = vadd.f32 0.0, %v2718
      %v2720 = vpop.f32.mrb[0].mxu0
      %v2721 = vpop.f32.mrb[0].mxu0
      %v2722 = vadd.f32 0.0, %v2721
      %v2723 = vpop.f32.mrb[0].mxu0
      %2724 = vmatprep.mubr.bf16.mxu0 0
      %2725 = vmatmul.mubr.bf16.gmra.mrb[0].mxu0 %v2569
      %v2726 = vpop.f32.mrb[0].mxu0
      %v2727 = vadd.f32 0.0, %v2726
      %v2728 = vpop.f32.mrb[0].mxu0
      %v2729 = vpop.f32.mrb[0].mxu0
      %v2730 = vadd.f32 0.0, %v2729
      %v2731 = vpop.f32.mrb[0].mxu0
      %2732 = vmatprep.mubr.bf16.mxu0 0
      %2733 = vmatmul.mubr.bf16.gmra.mrb[0].mxu0 %v2570
      %v2734 = vpop.f32.mrb[0].mxu0
      %v2735 = vadd.f32 0.0, %v2734
      %v2736 = vpop.f32.mrb[0].mxu0
      %v2737 = vpop.f32.mrb[0].mxu0
      %v2738 = vadd.f32 0.0, %v2737
      %v2739 = vpop.f32.mrb[0].mxu0
      %2740 = vmatprep.mubr.bf16.mxu0 0
      %2741 = vmatmul.mubr.bf16.gmra.mrb[0].mxu0 %v2571
      %v2742 = vpop.f32.mrb[0].mxu0
      %v2743 = vadd.f32 0.0, %v2742
      %v2744 = vpop.f32.mrb[0].mxu0
      %v2745 = vpop.f32.mrb[0].mxu0
      %v2746 = vadd.f32 0.0, %v2745
      %v2747 = vpop.f32.mrb[0].mxu0
      %2748 = vmatprep.mubr.bf16.mxu0 0
      %2749 = vmatmul.mubr.bf16.gmra.mrb[0].mxu0 %v2572
      %v2750 = vpop.f32.mrb[0].mxu0
      %v2751 = vadd.f32 0.0, %v2750
      %v2752 = vpop.f32.mrb[0].mxu0
      %v2753 = vpop.f32.mrb[0].mxu0
      %v2754 = vadd.f32 0.0, %v2753
      %v2755 = vpop.f32.mrb[0].mxu0
      %2756 = vmatprep.mubr.bf16.mxu0 0
      %2757 = vmatmul.mubr.bf16.gmra.mrb[0].mxu0 %v2573
      %v2758 = vpop.f32.mrb[0].mxu0
      %v2759 = vadd.f32 0.0, %v2758
      %v2760 = vpop.f32.mrb[0].mxu0
      %v2761 = vpop.f32.mrb[0].mxu0
      %v2762 = vadd.f32 0.0, %v2761
      %v2763 = vpop.f32.mrb[0].mxu0
      %2764 = vmatprep.mubr.bf16.mxu0 0
      %2765 = vmatmul.mubr.bf16.gmra.mrb[0].mxu0 %v2574
      %v2766 = vpop.f32.mrb[0].mxu0
      %v2767 = vadd.f32 0.0, %v2766
      %v2768 = vpop.f32.mrb[0].mxu0
      %v2769 = vpop.f32.mrb[0].mxu0
      %v2770 = vadd.f32 0.0, %v2769
      %v2771 = vpop.f32.mrb[0].mxu0
      %2772 = vmatprep.mubr.bf16.mxu0 0
      %2773 = vmatmul.mubr.bf16.gmra.mrb[0].mxu0 %v2575
      %v2774 = vpop.f32.mrb[0].mxu0
      %v2775 = vadd.f32 0.0, %v2774
      %v2776 = vpop.f32.mrb[0].mxu0
      %v2777 = vpop.f32.mrb[0].mxu0
      %v2778 = vadd.f32 0.0, %v2777
      %v2779 = vpop.f32.mrb[0].mxu0
      %2780 = vmatprep.mubr.bf16.mxu0 0
      %2781 = vmatmul.mubr.bf16.gmra.mrb[0].mxu0 %v2576
      %v2782 = vpop.f32.mrb[0].mxu0
      %v2783 = vadd.f32 0.0, %v2782
      %v2784 = vpop.f32.mrb[0].mxu0
      %v2785 = vpop.f32.mrb[0].mxu0
      %v2786 = vadd.f32 0.0, %v2785
      %v2787 = vpop.f32.mrb[0].mxu0
      %2788 = vmatprep.mubr.bf16.mxu0 0
      %2789 = vmatmul.mubr.bf16.gmra.mrb[0].mxu0 %v2577
      %v2790 = vpop.f32.mrb[0].mxu0
      %v2791 = vadd.f32 0.0, %v2790
      %v2792 = vpop.f32.mrb[0].mxu0
      %v2793 = vpop.f32.mrb[0].mxu0
      %v2794 = vadd.f32 0.0, %v2793
      %v2795 = vpop.f32.mrb[0].mxu0
      %2796 = vmatprep.mubr.bf16.mxu0 0
      %2797 = vmatmul.mubr.bf16.gmra.mrb[0].mxu0 %v2578
      %v2798 = vpop.f32.mrb[0].mxu0
      %v2799 = vadd.f32 0.0, %v2798
      %v2800 = vpop.f32.mrb[0].mxu0
      %v2801 = vpop.f32.mrb[0].mxu0
      %v2802 = vadd.f32 0.0, %v2801
      %v2803 = vpop.f32.mrb[0].mxu0
      %2804 = vdwg.mxu0
      %v2805 = vadd.f32 %v2499, %v2679
      %v2806 = vadd.f32 %v2500, %v2682
      %v2807 = vadd.f32 %v2501, %v2687
      %v2808 = vadd.f32 %v2502, %v2690
      %v2809 = vadd.f32 %v2503, %v2695
      %v2810 = vadd.f32 %v2504, %v2698
      %v2811 = vadd.f32 %v2505, %v2703
      %v2812 = vadd.f32 %v2506, %v2706
      %v2813 = vadd.f32 %v2507, %v2711
      %v2814 = vadd.f32 %v2508, %v2714
      %v2815 = vadd.f32 %v2509, %v2719
      %v2816 = vadd.f32 %v2510, %v2722
      %v2817 = vadd.f32 %v2511, %v2727
      %v2818 = vadd.f32 %v2512, %v2730
      %v2819 = vadd.f32 %v2513, %v2735
      %v2820 = vadd.f32 %v2514, %v2738
      %v2821 = vadd.f32 %v2515, %v2743
      %v2822 = vadd.f32 %v2516, %v2746
      %v2823 = vadd.f32 %v2517, %v2751
      %v2824 = vadd.f32 %v2518, %v2754
      %v2825 = vadd.f32 %v2519, %v2759
      %v2826 = vadd.f32 %v2520, %v2762
      %v2827 = vadd.f32 %v2521, %v2767
      %v2828 = vadd.f32 %v2522, %v2770
      %v2829 = vadd.f32 %v2523, %v2775
      %v2830 = vadd.f32 %v2524, %v2778
      %v2831 = vadd.f32 %v2525, %v2783
      %v2832 = vadd.f32 %v2526, %v2786
      %v2833 = vadd.f32 %v2527, %v2791
      %v2834 = vadd.f32 %v2528, %v2794
      %v2835 = vadd.f32 %v2529, %v2799
      %v2836 = vadd.f32 %v2530, %v2802
      %v2837 = vpack.c.bf16 %v2806, %v2805
      %v2838 = vpack.c.bf16 %v2808, %v2807
      %v2839 = vpack.c.bf16 %v2810, %v2809
      %v2840 = vpack.c.bf16 %v2812, %v2811
      %v2841 = vpack.c.bf16 %v2814, %v2813
      %v2842 = vpack.c.bf16 %v2816, %v2815
      %v2843 = vpack.c.bf16 %v2818, %v2817
      %v2844 = vpack.c.bf16 %v2820, %v2819
      %v2845 = vpack.c.bf16 %v2822, %v2821
      %v2846 = vpack.c.bf16 %v2824, %v2823
      %v2847 = vpack.c.bf16 %v2826, %v2825
      %v2848 = vpack.c.bf16 %v2828, %v2827
      %v2849 = vpack.c.bf16 %v2830, %v2829
      %v2850 = vpack.c.bf16 %v2832, %v2831
      %v2851 = vpack.c.bf16 %v2834, %v2833
      %v2852 = vpack.c.bf16 %v2836, %v2835
      %v2869 = vunpack.c.l.b16 %v2837
      %v2870 = vunpack.c.h.b16 %v2837
      %v2871 = vunpack.c.l.b16 %v2838
      %v2872 = vunpack.c.h.b16 %v2838
      %v2873 = vunpack.c.l.b16 %v2839
      %v2874 = vunpack.c.h.b16 %v2839
      %v2875 = vunpack.c.l.b16 %v2840
      %v2876 = vunpack.c.h.b16 %v2840
      %v2877 = vunpack.c.l.b16 %v2841
      %v2878 = vunpack.c.h.b16 %v2841
      %v2879 = vunpack.c.l.b16 %v2842
      %v2880 = vunpack.c.h.b16 %v2842
      %v2881 = vunpack.c.l.b16 %v2843
      %v2882 = vunpack.c.h.b16 %v2843
      %v2883 = vunpack.c.l.b16 %v2844
      %v2884 = vunpack.c.h.b16 %v2844
      %v2885 = vunpack.c.l.b16 %v2845
      %v2886 = vunpack.c.h.b16 %v2845
      %v2887 = vunpack.c.l.b16 %v2846
      %v2888 = vunpack.c.h.b16 %v2846
      %v2889 = vunpack.c.l.b16 %v2847
      %v2890 = vunpack.c.h.b16 %v2847
      %v2891 = vunpack.c.l.b16 %v2848
      %v2892 = vunpack.c.h.b16 %v2848
      %v2893 = vunpack.c.l.b16 %v2849
      %v2894 = vunpack.c.h.b16 %v2849
      %v2895 = vunpack.c.l.b16 %v2850
      %v2896 = vunpack.c.h.b16 %v2850
      %v2897 = vunpack.c.l.b16 %v2851
      %v2898 = vunpack.c.h.b16 %v2851
      %v2899 = vunpack.c.l.b16 %v2852
      %v2900 = vunpack.c.h.b16 %v2852
      %v2901 = vpack.c.b16 %v2869, %v2869
      %v2902 = vpack.c.b16 %v2870, %v2870
      %v2903 = vpack.c.b16 %v2871, %v2871
      %v2904 = vpack.c.b16 %v2872, %v2872
      %v2905 = vpack.c.b16 %v2873, %v2873
      %v2906 = vpack.c.b16 %v2874, %v2874
      %v2907 = vpack.c.b16 %v2875, %v2875
      %v2908 = vpack.c.b16 %v2876, %v2876
      %v2909 = vpack.c.b16 %v2877, %v2877
      %v2910 = vpack.c.b16 %v2878, %v2878
      %v2911 = vpack.c.b16 %v2879, %v2879
      %v2912 = vpack.c.b16 %v2880, %v2880
      %v2913 = vpack.c.b16 %v2881, %v2881
      %v2914 = vpack.c.b16 %v2882, %v2882
      %v2915 = vpack.c.b16 %v2883, %v2883
      %v2916 = vpack.c.b16 %v2884, %v2884
      %v2917 = vpack.c.b16 %v2885, %v2885
      %v2918 = vpack.c.b16 %v2886, %v2886
      %v2919 = vpack.c.b16 %v2887, %v2887
      %v2920 = vpack.c.b16 %v2888, %v2888
      %v2921 = vpack.c.b16 %v2889, %v2889
      %v2922 = vpack.c.b16 %v2890, %v2890
      %v2923 = vpack.c.b16 %v2891, %v2891
      %v2924 = vpack.c.b16 %v2892, %v2892
      %v2925 = vpack.c.b16 %v2893, %v2893
      %v2926 = vpack.c.b16 %v2894, %v2894
      %v2927 = vpack.c.b16 %v2895, %v2895
      %v2928 = vpack.c.b16 %v2896, %v2896
      %v2929 = vpack.c.b16 %v2897, %v2897
      %v2930 = vpack.c.b16 %v2898, %v2898
      %v2931 = vpack.c.b16 %v2899, %v2899
      %v2932 = vpack.c.b16 %v2900, %v2900
      %2965 = vst [vmem:[%s143] sm:$0xf] %v2901
      %2966 = vst [vmem:[%s143 + $0x4] sm:$0xf] %v2902
      %2967 = vst [vmem:[%s143 + $0x8] sm:$0xf] %v2903
      %2968 = vst [vmem:[%s143 + $0xc] sm:$0xf] %v2904
      %2969 = vst [vmem:[%s143 + $0x10] sm:$0xf] %v2905
      %2970 = vst [vmem:[%s143 + $0x14] sm:$0xf] %v2906
      %2971 = vst [vmem:[%s143 + $0x18] sm:$0xf] %v2907
      %2972 = vst [vmem:[%s143 + $0x1c] sm:$0xf] %v2908
      %2973 = vst [vmem:[%s143 + $0x20] sm:$0xf] %v2909
      %2974 = vst [vmem:[%s143 + $0x24] sm:$0xf] %v2910
      %2975 = vst [vmem:[%s143 + $0x28] sm:$0xf] %v2911
      %2976 = vst [vmem:[%s143 + $0x2c] sm:$0xf] %v2912
      %2977 = vst [vmem:[%s143 + $0x30] sm:$0xf] %v2913
      %2978 = vst [vmem:[%s143 + $0x34] sm:$0xf] %v2914
      %2979 = vst [vmem:[%s143 + $0x38] sm:$0xf] %v2915
      %2980 = vst [vmem:[%s143 + $0x3c] sm:$0xf] %v2916
      %2981 = vst [vmem:[%s143 + $0x40] sm:$0xf] %v2917
      %2982 = vst [vmem:[%s143 + $0x44] sm:$0xf] %v2918
      %2983 = vst [vmem:[%s143 + $0x48] sm:$0xf] %v2919
      %2984 = vst [vmem:[%s143 + $0x4c] sm:$0xf] %v2920
      %2985 = vst [vmem:[%s143 + $0x50] sm:$0xf] %v2921
      %2986 = vst [vmem:[%s143 + $0x54] sm:$0xf] %v2922
      %2987 = vst [vmem:[%s143 + $0x58] sm:$0xf] %v2923
      %2988 = vst [vmem:[%s143 + $0x5c] sm:$0xf] %v2924
      %2989 = vst [vmem:[%s143 + $0x60] sm:$0xf] %v2925
      %2990 = vst [vmem:[%s143 + $0x64] sm:$0xf] %v2926
      %2991 = vst [vmem:[%s143 + $0x68] sm:$0xf] %v2927
      %2992 = vst [vmem:[%s143 + $0x6c] sm:$0xf] %v2928
      %2993 = vst [vmem:[%s143 + $0x70] sm:$0xf] %v2929
      %2994 = vst [vmem:[%s143 + $0x74] sm:$0xf] %v2930
      %2995 = vst [vmem:[%s143 + $0x78] sm:$0xf] %v2931
      %2996 = vst [vmem:[%s143 + $0x7c] sm:$0xf] %v2932
      %s2997 = smul.u32 32, %s13
      %p2998 = scmp.lt.s32.totalorder %s2997, 63
      %s2999 = scalar_select %p2998, %s2997, 63
      %s3000 = smul.addr %s2999, 4
      %s3001 = scalar_lea.vmem %s2, %s3000
      // Predicated region
      $region29: #{model_forward.6} parent=27 // pred_check
        %p3002 = pneg %p78
      $region30: #{model_forward.6} parent=27 // pred_check_branch
        %3004 = sbr.rel (%p3002) target = $region32
      $region31: #{model_forward.6} parent=27 // pred_region
        %s3005 = smul.u32 32, %s13
      $region32: #{model_forward.6} parent=27 // pred_fallthru
        _
    $region28: #{model_forward.6} parent=5 // pred_fallthru
      _
    %p3006 = scmp.le.s32.totalorder 2, %s8
    // Predicated region
    $region33: #{model_forward.6} parent=5 // pred_check
      %p3007 = pneg %p3006
    $region34: #{model_forward.6} parent=5 // pred_check_branch
      %3009 = sbr.rel (%p3007) target = $region36
    $region35: #{model_forward.6} parent=5 // pred_region
      %s3010 = ssub.s32 %s8, 2
      // Predicated region
      $region37: #{model_forward.6} parent=35 // pred_check
        %p3011 = pneg %p84
      $region38: #{model_forward.6} parent=35 // pred_check_branch
        %3013 = sbr.rel (%p3011) target = $region40
      $region39: #{model_forward.6} parent=35 // pred_region
        %s3014 = smul.u32 32, %s14
        %p3015 = scmp.lt.s32.totalorder %s3014, 63
        %s3016 = scalar_select %p3015, %s3014, 63
        %s3017 = smul.addr %s3016, 4
        %s3018 = scalar_lea.vmem %s2, %s3017
      $region40: #{model_forward.6} parent=35 // pred_fallthru
        _
    $region36: #{model_forward.6} parent=5 // pred_fallthru
      _
  $region6: #{model_forward.6} parent=0 // loop_footer
    %s12 = sadd.s32 1, %s8
  $region7: #{model_forward.6} parent=0 // loop_footer_branch
    %7 = sbr.rel target = $region3
  $region8: #{model_forward.6} parent=0 // loop_exit
    _

// kernel: model_forward.8
$region0: #{model_forward.8}
  #allocation0 [shape = 'u32[]', space=smem, size = 0x4, offset = 0x4, fixed_abs, tag = 'smem constant byte address 0x4 - core index']
  #allocation1 [shape = 'u32[144,128]{1,0:T(1,128)}', space=vmem, size = 0x12000, scoped, tag = 'internal scratch']
  %s0 = inlined_call_operand.vmem [shape: bf16[128,128], index: 0, kind: input, shape index: {}]
  %s1 = inlined_call_operand.vmem [shape: bf16[128,128], index: 1, kind: input, shape index: {}]
  %s2 = inlined_call_operand.vmem [shape: bf16[128,256], index: 2, kind: input, shape index: {}]
  %s3 = inlined_call_operand.vmem [shape: bf16[128,256], index: 3, kind: input, shape index: {}]
  %s4 = inlined_call_operand.vmem [shape: bf16[128,128], index: 4, kind: input, shape index: {}]
  %s5 = inlined_call_operand.vmem [shape: bf16[256,128], index: 5, kind: input, shape index: {}]
  %s6 = inlined_call_operand.vmem [shape: bf16[128,256], index: 6, kind: input, shape index: {}]
  %s7 = inlined_call_operand.vmem [shape: bf16[128,256], index: 7, kind: input, shape index: {}]
  %s8 = inlined_call_operand.vmem [shape: bf16[128,256], index: 8, kind: input, shape index: {}]
  %s9 = inlined_call_operand.vmem [shape: bf16[128,256], index: 9, kind: input, shape index: {}]
  %s10 = inlined_call_operand.vmem [shape: bf16[128,256], index: 10, kind: output, shape index: {}]
  %s11 = sld [smem:[#allocation0]]
  $region73: #{model_forward.8} parent=0
    _
  %s13 = ssub.s32 1, %s11
  %s14 = scalar_select 0, %s13, %s11
  loop: start=0, step=1, limit=4
  $region2: #{model_forward.8} parent=0 // loop_pre_header
    _
  $region3: #{model_forward.8} parent=0 // loop_header
    %s16 = sphi 0, %s20
    %p17 = scmp.ge.s32.totalorder %s16, 4
    %s26 = sphi 0, %s28
    %s29 = sphi 0, %s26
    %s30 = sphi 0, %s29
    %s46 = sphi 0, %s30
    %s52 = sphi 0, %s54
    %s55 = sphi 0, %s52
    %s56 = sphi 0, %s55
    %s72 = sphi 0, %s56
    %s78 = sphi 0, %s80
    %s81 = sphi 0, %s78
    %s82 = sphi 0, %s81
    %s98 = sphi 0, %s82
    %s104 = sphi 0, %s106
    %s107 = sphi 0, %s104
    %s108 = sphi 0, %s107
    %s124 = sphi 0, %s108
    %s128 = sphi 0, %s128
    %s130 = sphi 0, %s128
    %s131 = sphi 0, %s130
    %s145 = sphi 0, %s131
    %s149 = sphi 0, %s149
    %s151 = sphi 0, %s149
    %s152 = sphi 0, %s151
    %s166 = sphi 0, %s152
    %s170 = sphi 0, %s170
    %s172 = sphi 0, %s170
    %s173 = sphi 0, %s172
    %s187 = sphi 0, %s173
    %s191 = sphi 0, %s191
    %s193 = sphi 0, %s191
    %s194 = sphi 0, %s193
    %s208 = sphi 0, %s194
    %s212 = sphi 0, %s212
    %s214 = sphi 0, %s212
    %s215 = sphi 0, %s214
    %s229 = sphi 0, %s215
    %s233 = sphi 0, %s233
    %s235 = sphi 0, %s233
    %s236 = sphi 0, %s235
    %s250 = sphi 0, %s236
    %s256 = sphi 0, %s258
    %s259 = sphi 0, %s256
    %s260 = sphi 0, %s259
    %s276 = sphi 0, %s260
  $region4: #{model_forward.8} parent=0 // loop_header_branch
    %19 = sbr.rel (%p17) target = $region8
  $region5: #{model_forward.8} parent=0 // loop_body
    %s21 = ssub.s32 %s16, 1
    %s22 = ssub.s32 %s16, 2
    %s23 = sadd.s32 %s16, 1
    %s24 = ssub.s32 %s16, %s23
    %p25 = scmp.eq.s32.totalorder %s24, 0
    %s27 = sadd.s32 %s26, 1
    %s28 = scalar_select %p25, %s26, %s27
    %p31 = pneg %p25
    %p32 = scmp.eq.s32.totalorder %s16, 1
    %p33 = por %p31, %p32
    %p34 = scmp.ne.s32.totalorder %s26, %s29
    %p35 = scmp.eq.s32.totalorder %s16, 0
    %p36 = por %p34, %p35
    %p37 = scmp.ne.s32.totalorder %s26, %s29
    %p38 = scmp.eq.s32.totalorder %s21, 1
    %p39 = por %p37, %p38
    %p40 = scmp.ne.s32.totalorder %s29, %s30
    %p41 = scmp.eq.s32.totalorder %s21, 0
    %p42 = por %p40, %p41
    %p43 = scmp.ne.s32.totalorder %s29, %s30
    %p44 = scmp.eq.s32.totalorder %s22, 1
    %p45 = por %p43, %p44
    %p47 = scmp.ne.s32.totalorder %s30, %s46
    %p48 = scmp.eq.s32.totalorder %s22, 0
    %p49 = por %p47, %p48
    %s50 = ssub.s32 %s16, %s23
    %p51 = scmp.eq.s32.totalorder %s50, 0
    %s53 = sadd.s32 %s52, 1
    %s54 = scalar_select %p51, %s52, %s53
    %p57 = pneg %p51
    %p58 = scmp.eq.s32.totalorder %s16, 1
    %p59 = por %p57, %p58
    %p60 = scmp.ne.s32.totalorder %s52, %s55
    %p61 = scmp.eq.s32.totalorder %s16, 0
    %p62 = por %p60, %p61
    %p63 = scmp.ne.s32.totalorder %s52, %s55
    %p64 = scmp.eq.s32.totalorder %s21, 1
    %p65 = por %p63, %p64
    %p66 = scmp.ne.s32.totalorder %s55, %s56
    %p67 = scmp.eq.s32.totalorder %s21, 0
    %p68 = por %p66, %p67
    %p69 = scmp.ne.s32.totalorder %s55, %s56
    %p70 = scmp.eq.s32.totalorder %s22, 1
    %p71 = por %p69, %p70
    %p73 = scmp.ne.s32.totalorder %s56, %s72
    %p74 = scmp.eq.s32.totalorder %s22, 0
    %p75 = por %p73, %p74
    %s76 = ssub.s32 %s16, %s23
    %p77 = scmp.eq.s32.totalorder %s76, 0
    %s79 = sadd.s32 %s78, 1
    %s80 = scalar_select %p77, %s78, %s79
    %p83 = pneg %p77
    %p84 = scmp.eq.s32.totalorder %s16, 1
    %p85 = por %p83, %p84
    %p86 = scmp.ne.s32.totalorder %s78, %s81
    %p87 = scmp.eq.s32.totalorder %s16, 0
    %p88 = por %p86, %p87
    %p89 = scmp.ne.s32.totalorder %s78, %s81
    %p90 = scmp.eq.s32.totalorder %s21, 1
    %p91 = por %p89, %p90
    %p92 = scmp.ne.s32.totalorder %s81, %s82
    %p93 = scmp.eq.s32.totalorder %s21, 0
    %p94 = por %p92, %p93
    %p95 = scmp.ne.s32.totalorder %s81, %s82
    %p96 = scmp.eq.s32.totalorder %s22, 1
    %p97 = por %p95, %p96
    %p99 = scmp.ne.s32.totalorder %s82, %s98
    %p100 = scmp.eq.s32.totalorder %s22, 0
    %p101 = por %p99, %p100
    %s102 = ssub.s32 %s16, %s23
    %p103 = scmp.eq.s32.totalorder %s102, 0
    %s105 = sadd.s32 %s104, 1
    %s106 = scalar_select %p103, %s104, %s105
    %p109 = pneg %p103
    %p110 = scmp.eq.s32.totalorder %s16, 1
    %p111 = por %p109, %p110
    %p112 = scmp.ne.s32.totalorder %s104, %s107
    %p113 = scmp.eq.s32.totalorder %s16, 0
    %p114 = por %p112, %p113
    %p115 = scmp.ne.s32.totalorder %s104, %s107
    %p116 = scmp.eq.s32.totalorder %s21, 1
    %p117 = por %p115, %p116
    %p118 = scmp.ne.s32.totalorder %s107, %s108
    %p119 = scmp.eq.s32.totalorder %s21, 0
    %p120 = por %p118, %p119
    %p121 = scmp.ne.s32.totalorder %s107, %s108
    %p122 = scmp.eq.s32.totalorder %s22, 1
    %p123 = por %p121, %p122
    %p125 = scmp.ne.s32.totalorder %s108, %s124
    %p126 = scmp.eq.s32.totalorder %s22, 0
    %p127 = por %p125, %p126
    %s129 = sadd.s32 %s128, 1
    %p132 = scmp.eq.s32.totalorder %s16, 1
    %p133 = scmp.ne.s32.totalorder %s128, %s130
    %p134 = scmp.eq.s32.totalorder %s16, 0
    %p135 = por %p133, %p134
    %p136 = scmp.ne.s32.totalorder %s128, %s130
    %p137 = scmp.eq.s32.totalorder %s21, 1
    %p138 = por %p136, %p137
    %p139 = scmp.ne.s32.totalorder %s130, %s131
    %p140 = scmp.eq.s32.totalorder %s21, 0
    %p141 = por %p139, %p140
    %p142 = scmp.ne.s32.totalorder %s130, %s131
    %p143 = scmp.eq.s32.totalorder %s22, 1
    %p144 = por %p142, %p143
    %p146 = scmp.ne.s32.totalorder %s131, %s145
    %p147 = scmp.eq.s32.totalorder %s22, 0
    %p148 = por %p146, %p147
    %s150 = sadd.s32 %s149, 1
    %p153 = scmp.eq.s32.totalorder %s16, 1
    %p154 = scmp.ne.s32.totalorder %s149, %s151
    %p155 = scmp.eq.s32.totalorder %s16, 0
    %p156 = por %p154, %p155
    %p157 = scmp.ne.s32.totalorder %s149, %s151
    %p158 = scmp.eq.s32.totalorder %s21, 1
    %p159 = por %p157, %p158
    %p160 = scmp.ne.s32.totalorder %s151, %s152
    %p161 = scmp.eq.s32.totalorder %s21, 0
    %p162 = por %p160, %p161
    %p163 = scmp.ne.s32.totalorder %s151, %s152
    %p164 = scmp.eq.s32.totalorder %s22, 1
    %p165 = por %p163, %p164
    %p167 = scmp.ne.s32.totalorder %s152, %s166
    %p168 = scmp.eq.s32.totalorder %s22, 0
    %p169 = por %p167, %p168
    %s171 = sadd.s32 %s170, 1
    %p174 = scmp.eq.s32.totalorder %s16, 1
    %p175 = scmp.ne.s32.totalorder %s170, %s172
    %p176 = scmp.eq.s32.totalorder %s16, 0
    %p177 = por %p175, %p176
    %p178 = scmp.ne.s32.totalorder %s170, %s172
    %p179 = scmp.eq.s32.totalorder %s21, 1
    %p180 = por %p178, %p179
    %p181 = scmp.ne.s32.totalorder %s172, %s173
    %p182 = scmp.eq.s32.totalorder %s21, 0
    %p183 = por %p181, %p182
    %p184 = scmp.ne.s32.totalorder %s172, %s173
    %p185 = scmp.eq.s32.totalorder %s22, 1
    %p186 = por %p184, %p185
    %p188 = scmp.ne.s32.totalorder %s173, %s187
    %p189 = scmp.eq.s32.totalorder %s22, 0
    %p190 = por %p188, %p189
    %s192 = sadd.s32 %s191, 1
    %p195 = scmp.eq.s32.totalorder %s16, 1
    %p196 = scmp.ne.s32.totalorder %s191, %s193
    %p197 = scmp.eq.s32.totalorder %s16, 0
    %p198 = por %p196, %p197
    %p199 = scmp.ne.s32.totalorder %s191, %s193
    %p200 = scmp.eq.s32.totalorder %s21, 1
    %p201 = por %p199, %p200
    %p202 = scmp.ne.s32.totalorder %s193, %s194
    %p203 = scmp.eq.s32.totalorder %s21, 0
    %p204 = por %p202, %p203
    %p205 = scmp.ne.s32.totalorder %s193, %s194
    %p206 = scmp.eq.s32.totalorder %s22, 1
    %p207 = por %p205, %p206
    %p209 = scmp.ne.s32.totalorder %s194, %s208
    %p210 = scmp.eq.s32.totalorder %s22, 0
    %p211 = por %p209, %p210
    %s213 = sadd.s32 %s212, 1
    %p216 = scmp.eq.s32.totalorder %s16, 1
    %p217 = scmp.ne.s32.totalorder %s212, %s214
    %p218 = scmp.eq.s32.totalorder %s16, 0
    %p219 = por %p217, %p218
    %p220 = scmp.ne.s32.totalorder %s212, %s214
    %p221 = scmp.eq.s32.totalorder %s21, 1
    %p222 = por %p220, %p221
    %p223 = scmp.ne.s32.totalorder %s214, %s215
    %p224 = scmp.eq.s32.totalorder %s21, 0
    %p225 = por %p223, %p224
    %p226 = scmp.ne.s32.totalorder %s214, %s215
    %p227 = scmp.eq.s32.totalorder %s22, 1
    %p228 = por %p226, %p227
    %p230 = scmp.ne.s32.totalorder %s215, %s229
    %p231 = scmp.eq.s32.totalorder %s22, 0
    %p232 = por %p230, %p231
    %s234 = sadd.s32 %s233, 1
    %p237 = scmp.eq.s32.totalorder %s16, 1
    %p238 = scmp.ne.s32.totalorder %s233, %s235
    %p239 = scmp.eq.s32.totalorder %s16, 0
    %p240 = por %p238, %p239
    %p241 = scmp.ne.s32.totalorder %s233, %s235
    %p242 = scmp.eq.s32.totalorder %s21, 1
    %p243 = por %p241, %p242
    %p244 = scmp.ne.s32.totalorder %s235, %s236
    %p245 = scmp.eq.s32.totalorder %s21, 0
    %p246 = por %p244, %p245
    %p247 = scmp.ne.s32.totalorder %s235, %s236
    %p248 = scmp.eq.s32.totalorder %s22, 1
    %p249 = por %p247, %p248
    %p251 = scmp.ne.s32.totalorder %s236, %s250
    %p252 = scmp.eq.s32.totalorder %s22, 0
    %p253 = por %p251, %p252
    %s254 = ssub.s32 %s16, %s23
    %p255 = scmp.eq.s32.totalorder %s254, 0
    %s257 = sadd.s32 %s256, 1
    %s258 = scalar_select %p255, %s256, %s257
    %p261 = pneg %p255
    %p262 = scmp.eq.s32.totalorder %s16, 1
    %p263 = por %p261, %p262
    %p264 = scmp.ne.s32.totalorder %s256, %s259
    %p265 = scmp.eq.s32.totalorder %s16, 0
    %p266 = por %p264, %p265
    %p267 = scmp.ne.s32.totalorder %s256, %s259
    %p268 = scmp.eq.s32.totalorder %s21, 1
    %p269 = por %p267, %p268
    %p270 = scmp.ne.s32.totalorder %s259, %s260
    %p271 = scmp.eq.s32.totalorder %s21, 0
    %p272 = por %p270, %p271
    %p273 = scmp.ne.s32.totalorder %s259, %s260
    %p274 = scmp.eq.s32.totalorder %s22, 1
    %p275 = por %p273, %p274
    %p277 = scmp.ne.s32.totalorder %s260, %s276
    %p278 = scmp.eq.s32.totalorder %s22, 0
    %p279 = por %p277, %p278
    %p280 = scmp.le.s32.totalorder 1, %s16
    %p281 = scmp.lt.s32.totalorder %s16, 3
    %p282 = pnand %p280, %p281
    %p283 = pneg %p282
    // Predicated region
    $region9: #{model_forward.8} parent=5 // pred_check
      _
    $region10: #{model_forward.8} parent=5 // pred_check_branch
      %285 = sbr.rel (%p282) target = $region12
    $region11: #{model_forward.8} parent=5 // pred_region
      %s286 = ssub.s32 %s16, 1
      // Predicated region
      $region13: #{model_forward.8} parent=11 // pred_check
        %p287 = pneg %p141
      $region14: #{model_forward.8} parent=11 // pred_check_branch
        %289 = sbr.rel (%p287) target = $region16
      $region15: #{model_forward.8} parent=11 // pred_region
        _
      $region16: #{model_forward.8} parent=11 // pred_fallthru
        _
      // Predicated region
      $region17: #{model_forward.8} parent=11 // pred_check
        %p290 = pneg %p162
      $region18: #{model_forward.8} parent=11 // pred_check_branch
        %292 = sbr.rel (%p290) target = $region20
      $region19: #{model_forward.8} parent=11 // pred_region
        _
      $region20: #{model_forward.8} parent=11 // pred_fallthru
        _
      // Predicated region
      $region21: #{model_forward.8} parent=11 // pred_check
        %p293 = pneg %p183
      $region22: #{model_forward.8} parent=11 // pred_check_branch
        %295 = sbr.rel (%p293) target = $region24
      $region23: #{model_forward.8} parent=11 // pred_region
        _
      $region24: #{model_forward.8} parent=11 // pred_fallthru
        _
      // Predicated region
      $region25: #{model_forward.8} parent=11 // pred_check
        %p296 = pneg %p204
      $region26: #{model_forward.8} parent=11 // pred_check_branch
        %298 = sbr.rel (%p296) target = $region28
      $region27: #{model_forward.8} parent=11 // pred_region
        _
      $region28: #{model_forward.8} parent=11 // pred_fallthru
        _
      // Predicated region
      $region29: #{model_forward.8} parent=11 // pred_check
        %p299 = pneg %p225
      $region30: #{model_forward.8} parent=11 // pred_check_branch
        %301 = sbr.rel (%p299) target = $region32
      $region31: #{model_forward.8} parent=11 // pred_region
        _
      $region32: #{model_forward.8} parent=11 // pred_fallthru
        _
      // Predicated region
      $region33: #{model_forward.8} parent=11 // pred_check
        %p302 = pneg %p246
      $region34: #{model_forward.8} parent=11 // pred_check_branch
        %304 = sbr.rel (%p302) target = $region36
      $region35: #{model_forward.8} parent=11 // pred_region
        _
      $region36: #{model_forward.8} parent=11 // pred_fallthru
        _
    $region12: #{model_forward.8} parent=5 // pred_fallthru
      _
    %p305 = scmp.lt.s32.totalorder %s16, 2
    // Predicated region
    $region37: #{model_forward.8} parent=5 // pred_check
      %p306 = pneg %p305
    $region38: #{model_forward.8} parent=5 // pred_check_branch
      %308 = sbr.rel (%p306) target = $region40
    $region39: #{model_forward.8} parent=5 // pred_region
      // Predicated region
      $region41: #{model_forward.8} parent=39 // pred_check
        %p309 = pneg %p36
      $region42: #{model_forward.8} parent=39 // pred_check_branch
        %311 = sbr.rel (%p309) target = $region44
      $region43: #{model_forward.8} parent=39 // pred_region
        %s312 = smul.u32 8, %s16
        %p313 = scmp.lt.s32.totalorder %s312, 15
        %s314 = scalar_select %p313, %s312, 15
        %s315 = smul.addr %s314, 4
        %s316 = scalar_lea.vmem %s0, %s315
        %s317 = smul.u32 8, %s16
      $region44: #{model_forward.8} parent=39 // pred_fallthru
        _
      // Predicated region
      $region45: #{model_forward.8} parent=39 // pred_check
        %p318 = pneg %p62
      $region46: #{model_forward.8} parent=39 // pred_check_branch
        %320 = sbr.rel (%p318) target = $region48
      $region47: #{model_forward.8} parent=39 // pred_region
        %s321 = smul.u32 8, %s16
        %p322 = scmp.lt.s32.totalorder %s321, 15
        %s323 = scalar_select %p322, %s321, 15
        %s324 = smul.addr %s323, 4
        %s325 = scalar_lea.vmem %s1, %s324
        %s326 = smul.u32 8, %s16
      $region48: #{model_forward.8} parent=39 // pred_fallthru
        _
      // Predicated region
      $region49: #{model_forward.8} parent=39 // pred_check
        %p327 = pneg %p88
      $region50: #{model_forward.8} parent=39 // pred_check_branch
        %329 = sbr.rel (%p327) target = $region52
      $region51: #{model_forward.8} parent=39 // pred_region
        %s330 = smul.u32 8, %s16
        %p331 = scmp.lt.s32.totalorder %s330, 15
        %s332 = scalar_select %p331, %s330, 15
        %s333 = smul.addr %s332, 2
        %s334 = smul.addr %s333, 4
        %s335 = scalar_lea.vmem %s2, %s334
        %s336 = smul.u32 8, %s16
      $region52: #{model_forward.8} parent=39 // pred_fallthru
        _
      // Predicated region
      $region53: #{model_forward.8} parent=39 // pred_check
        %p337 = pneg %p114
      $region54: #{model_forward.8} parent=39 // pred_check_branch
        %339 = sbr.rel (%p337) target = $region56
      $region55: #{model_forward.8} parent=39 // pred_region
        %s340 = smul.u32 8, %s16
        %p341 = scmp.lt.s32.totalorder %s340, 15
        %s342 = scalar_select %p341, %s340, 15
        %s343 = smul.addr %s342, 2
        %s344 = smul.addr %s343, 4
        %s345 = scalar_lea.vmem %s3, %s344
        %s346 = smul.u32 8, %s16
      $region56: #{model_forward.8} parent=39 // pred_fallthru
        _
    $region40: #{model_forward.8} parent=5 // pred_fallthru
      _
    %p347 = scmp.le.s32.totalorder 1, %s16
    %p348 = scmp.lt.s32.totalorder %s16, 3
    %p349 = pnand %p347, %p348
    %p350 = pneg %p349
    // Predicated region
    $region57: #{model_forward.8} parent=5 // pred_check
      _
    $region58: #{model_forward.8} parent=5 // pred_check_branch
      %352 = sbr.rel (%p349) target = $region60
    $region59: #{model_forward.8} parent=5 // pred_region
      %s353 = ssub.s32 %s16, 1
      %s354 = smul.u32 8, %s21
      %p355 = scmp.lt.s32.totalorder %s354, 15
      %s356 = scalar_select %p355, %s354, 15
      %s357 = smul.addr %s356, 4
      %s358 = scalar_lea.vmem %s0, %s357
      %p359 = pneg %p42
      %p360 = pneg %p39
      %s361 = smul.u32 8, %s21
      %p362 = scmp.lt.s32.totalorder %s361, 15
      %s363 = scalar_select %p362, %s361, 15
      %s364 = smul.addr %s363, 4
      %s365 = scalar_lea.vmem %s1, %s364
      %p366 = pneg %p68
      %p367 = pneg %p65
      %s368 = smul.u32 8, %s21
      %p369 = scmp.lt.s32.totalorder %s368, 15
      %s370 = scalar_select %p369, %s368, 15
      %s371 = smul.addr %s370, 2
      %s372 = smul.addr %s371, 4
      %s373 = scalar_lea.vmem %s2, %s372
      %p374 = pneg %p94
      %p375 = pneg %p91
      %s376 = smul.u32 8, %s21
      %p377 = scmp.lt.s32.totalorder %s376, 15
      %s378 = scalar_select %p377, %s376, 15
      %s379 = smul.addr %s378, 2
      %s380 = smul.addr %s379, 4
      %s381 = scalar_lea.vmem %s3, %s380
      %p382 = pneg %p120
      %p383 = pneg %p117
      %p384 = pneg %p141
      %p385 = pneg %p138
      %p386 = pneg %p162
      %p387 = pneg %p159
      %p388 = pneg %p183
      %p389 = pneg %p180
      %p390 = pneg %p204
      %p391 = pneg %p201
      %p392 = pneg %p225
      %p393 = pneg %p222
      %p394 = pneg %p246
      %p395 = pneg %p243
      %p396 = pneg %p272
      %p397 = pneg %p269
      %s398 = smul.u32 8, %s21
      %p399 = scmp.lt.s32.totalorder %s398, 15
      %s400 = scalar_select %p399, %s398, 15
      %s401 = smul.addr %s400, 2
      %s402 = smul.addr %s401, 4
      %s403 = scalar_lea.vmem %s10, %s402
      %s404 = smul.u32 8, %s21
      %p405 = scmp.lt.s32.totalorder %s404, 15
      %s406 = scalar_select %p405, %s404, 15
      %s407 = smul.addr %s406, 4
      %s408 = scalar_lea.vmem %s0, %s407
      %s409 = smul.u32 8, %s21
      %s410 = smul.u32 8, %s21
      %p411 = scmp.lt.s32.totalorder %s410, 15
      %s412 = scalar_select %p411, %s410, 15
      %s413 = smul.addr %s412, 4
      %s414 = scalar_lea.vmem %s1, %s413
      %s415 = smul.u32 8, %s21
      %s416 = smul.u32 8, %s21
      %p417 = scmp.lt.s32.totalorder %s416, 15
      %s418 = scalar_select %p417, %s416, 15
      %s419 = smul.addr %s418, 2
      %s420 = smul.addr %s419, 4
      %s421 = scalar_lea.vmem %s2, %s420
      %s422 = smul.u32 8, %s21
      %s423 = smul.u32 8, %s21
      %p424 = scmp.lt.s32.totalorder %s423, 15
      %s425 = scalar_select %p424, %s423, 15
      %s426 = smul.addr %s425, 2
      %s427 = smul.addr %s426, 4
      %s428 = scalar_lea.vmem %s3, %s427
      %s429 = smul.u32 8, %s21
      %s430 = smul.u32 8, %s21
      %p431 = scmp.lt.s32.totalorder %s430, 15
      %s432 = scalar_select %p431, %s430, 15
      %s433 = smul.addr %s432, 2
      %s434 = smul.addr %s433, 4
      %s435 = scalar_lea.vmem %s10, %s434
      %s436 = smul.u32 8, %s21
      %v438 = vld [vmem:[%s408] sm:$0xf]
      %v439 = vld [vmem:[%s408 + $0x4] sm:$0xf]
      %v440 = vld [vmem:[%s408 + $0x8] sm:$0xf]
      %v441 = vld [vmem:[%s408 + $0xc] sm:$0xf]
      %v442 = vld [vmem:[%s408 + $0x10] sm:$0xf]
      %v443 = vld [vmem:[%s408 + $0x14] sm:$0xf]
      %v444 = vld [vmem:[%s408 + $0x18] sm:$0xf]
      %v445 = vld [vmem:[%s408 + $0x1c] sm:$0xf]
      %v446 = vmax.bf16 %v438, 0
      %v447 = vmax.bf16 %v439, 0
      %v448 = vmax.bf16 %v440, 0
      %v449 = vmax.bf16 %v441, 0
      %v450 = vmax.bf16 %v442, 0
      %v451 = vmax.bf16 %v443, 0
      %v452 = vmax.bf16 %v444, 0
      %v453 = vmax.bf16 %v445, 0
      %v454 = vld [vmem:[%s4] sm:$0xf]
      %v455 = vld [vmem:[%s4 + $0x4] sm:$0xf]
      %v456 = vld [vmem:[%s4 + $0x8] sm:$0xf]
      %v457 = vld [vmem:[%s4 + $0xc] sm:$0xf]
      %v458 = vld [vmem:[%s4 + $0x10] sm:$0xf]
      %v459 = vld [vmem:[%s4 + $0x14] sm:$0xf]
      %v460 = vld [vmem:[%s4 + $0x18] sm:$0xf]
      %v461 = vld [vmem:[%s4 + $0x1c] sm:$0xf]
      %v462 = vld [vmem:[%s4 + $0x20] sm:$0xf]
      %v463 = vld [vmem:[%s4 + $0x24] sm:$0xf]
      %v464 = vld [vmem:[%s4 + $0x28] sm:$0xf]
      %v465 = vld [vmem:[%s4 + $0x2c] sm:$0xf]
      %v466 = vld [vmem:[%s4 + $0x30] sm:$0xf]
      %v467 = vld [vmem:[%s4 + $0x34] sm:$0xf]
      %v468 = vld [vmem:[%s4 + $0x38] sm:$0xf]
      %v469 = vld [vmem:[%s4 + $0x3c] sm:$0xf]
      %v478 = vunpack.c.l.b16 %v446
      %v479 = vunpack.c.l.b16 %v447
      %v480 = vunpack.c.l.b16 %v448
      %v481 = vunpack.c.l.b16 %v449
      %v482 = vunpack.c.l.b16 %v450
      %v483 = vunpack.c.l.b16 %v451
      %v484 = vunpack.c.l.b16 %v452
      %v485 = vunpack.c.l.b16 %v453
      %v486 = vpack.c.b16 %v479, %v478
      %v487 = vpack.c.b16 %v481, %v480
      %v488 = vpack.c.b16 %v483, %v482
      %v489 = vpack.c.b16 %v485, %v484
      %v510 = vunpack.c.l.b16 %v454
      %v511 = vunpack.c.l.b16 %v455
      %v512 = vunpack.c.l.b16 %v456
      %v513 = vunpack.c.l.b16 %v457
      %v514 = vunpack.c.l.b16 %v458
      %v515 = vunpack.c.l.b16 %v459
      %v516 = vunpack.c.l.b16 %v460
      %v517 = vunpack.c.l.b16 %v461
      %v518 = vunpack.c.l.b16 %v462
      %v519 = vunpack.c.l.b16 %v463
      %v520 = vunpack.c.l.b16 %v464
      %v521 = vunpack.c.l.b16 %v465
      %v522 = vunpack.c.l.b16 %v466
      %v523 = vunpack.c.l.b16 %v467
      %v524 = vunpack.c.l.b16 %v468
      %v525 = vunpack.c.l.b16 %v469
      %v526 = vpack.c.b16 %v511, %v510
      %v527 = vpack.c.b16 %v513, %v512
      %v528 = vpack.c.b16 %v515, %v514
      %v529 = vpack.c.b16 %v517, %v516
      %v530 = vpack.c.b16 %v519, %v518
      %v531 = vpack.c.b16 %v521, %v520
      %v532 = vpack.c.b16 %v523, %v522
      %v533 = vpack.c.b16 %v525, %v524
      %542 = vmatprep.subr.bf16.mxu0 0
      %543 = vmatpush1.bf16.msra.mxu0 %v526
      %544 = vmatprep.subr.bf16.mxu0 0
      %545 = vmatpush1.bf16.msra.mxu0 %v527
      %546 = vmatprep.subr.bf16.mxu0 0
      %547 = vmatpush1.bf16.msra.mxu0 %v528
      %548 = vmatprep.subr.bf16.mxu0 0
      %549 = vmatpush1.bf16.msra.mxu0 %v529
      %550 = vmatprep.subr.bf16.mxu0 0
      %551 = vmatpush1.bf16.msra.mxu0 %v530
      %552 = vmatprep.subr.bf16.mxu0 0
      %553 = vmatpush1.bf16.msra.mxu0 %v531
      %554 = vmatprep.subr.bf16.mxu0 0
      %555 = vmatpush1.bf16.msra.mxu0 %v532
      %556 = vmatprep.subr.bf16.mxu0 0
      %557 = vmatpush1.bf16.msra.mxu0 %v533
      %558 = vmatprep.subr.bf16.mxu0 0
      %559 = vmatpush1.bf16.msra.mxu0 0
      %560 = vmatprep.subr.bf16.mxu0 0
      %561 = vmatpush1.bf16.msra.mxu0 0
      %562 = vmatprep.subr.bf16.mxu0 0
      %563 = vmatpush1.bf16.msra.mxu0 0
      %564 = vmatprep.subr.bf16.mxu0 0
      %565 = vmatpush1.bf16.msra.mxu0 0
      %566 = vmatprep.subr.bf16.mxu0 0
      %567 = vmatpush1.bf16.msra.mxu0 0
      %568 = vmatprep.subr.bf16.mxu0 0
      %569 = vmatpush1.bf16.msra.mxu0 0
      %570 = vmatprep.subr.bf16.mxu0 0
      %571 = vmatpush1.bf16.msra.mxu0 0
      %572 = vmatprep.subr.bf16.mxu0 0
      %573 = vmatpush1.bf16.msra.mxu0 0
      %574 = vmatprep.mubr.bf16.mxu0 0
      %575 = vmatmul.mubr.bf16.gmra.mrb[0].mxu0 %v486
      %v576 = vpop.f32.mrb[0].mxu0
      %v577 = vadd.f32 0.0, %v576
      %v578 = vpop.f32.mrb[0].mxu0
      %v579 = vpop.f32.mrb[0].mxu0
      %v580 = vadd.f32 0.0, %v579
      %v581 = vpop.f32.mrb[0].mxu0
      %582 = vmatprep.mubr.bf16.mxu0 0
      %583 = vmatmul.mubr.bf16.gmra.mrb[0].mxu0 %v487
      %v584 = vpop.f32.mrb[0].mxu0
      %v585 = vadd.f32 0.0, %v584
      %v586 = vpop.f32.mrb[0].mxu0
      %v587 = vpop.f32.mrb[0].mxu0
      %v588 = vadd.f32 0.0, %v587
      %v589 = vpop.f32.mrb[0].mxu0
      %590 = vmatprep.mubr.bf16.mxu0 0
      %591 = vmatmul.mubr.bf16.gmra.mrb[0].mxu0 %v488
      %v592 = vpop.f32.mrb[0].mxu0
      %v593 = vadd.f32 0.0, %v592
      %v594 = vpop.f32.mrb[0].mxu0
      %v595 = vpop.f32.mrb[0].mxu0
      %v596 = vadd.f32 0.0, %v595
      %v597 = vpop.f32.mrb[0].mxu0
      %598 = vmatprep.mubr.bf16.mxu0 0
      %599 = vmatmul.mubr.bf16.gmra.mrb[0].mxu0 %v489
      %v600 = vpop.f32.mrb[0].mxu0
      %v601 = vadd.f32 0.0, %v600
      %v602 = vpop.f32.mrb[0].mxu0
      %v603 = vpop.f32.mrb[0].mxu0
      %v604 = vadd.f32 0.0, %v603
      %v605 = vpop.f32.mrb[0].mxu0
      %606 = vdwg.mxu0
      %v607 = vld [vmem:[%s414] sm:$0xf]
      %v608 = vld [vmem:[%s414 + $0x4] sm:$0xf]
      %v609 = vld [vmem:[%s414 + $0x8] sm:$0xf]
      %v610 = vld [vmem:[%s414 + $0xc] sm:$0xf]
      %v611 = vld [vmem:[%s414 + $0x10] sm:$0xf]
      %v612 = vld [vmem:[%s414 + $0x14] sm:$0xf]
      %v613 = vld [vmem:[%s414 + $0x18] sm:$0xf]
      %v614 = vld [vmem:[%s414 + $0x1c] sm:$0xf]
      %v615 = vmax.bf16 %v607, 0
      %v616 = vmax.bf16 %v608, 0
      %v617 = vmax.bf16 %v609, 0
      %v618 = vmax.bf16 %v610, 0
      %v619 = vmax.bf16 %v611, 0
      %v620 = vmax.bf16 %v612, 0
      %v621 = vmax.bf16 %v613, 0
      %v622 = vmax.bf16 %v614, 0
      %v631 = vunpack.c.l.b16 %v615
      %v632 = vunpack.c.l.b16 %v616
      %v633 = vunpack.c.l.b16 %v617
      %v634 = vunpack.c.l.b16 %v618
      %v635 = vunpack.c.l.b16 %v619
      %v636 = vunpack.c.l.b16 %v620
      %v637 = vunpack.c.l.b16 %v621
      %v638 = vunpack.c.l.b16 %v622
      %v639 = vpack.c.b16 %v632, %v631
      %v640 = vpack.c.b16 %v634, %v633
      %v641 = vpack.c.b16 %v636, %v635
      %v642 = vpack.c.b16 %v638, %v637
      %647 = vmatprep.subr.bf16.mxu0 0
      %648 = vmatpush1.bf16.msra.mxu0 %v526
      %649 = vmatprep.subr.bf16.mxu0 0
      %650 = vmatpush1.bf16.msra.mxu0 %v527
      %651 = vmatprep.subr.bf16.mxu0 0
      %652 = vmatpush1.bf16.msra.mxu0 %v528
      %653 = vmatprep.subr.bf16.mxu0 0
      %654 = vmatpush1.bf16.msra.mxu0 %v529
      %655 = vmatprep.subr.bf16.mxu0 0
      %656 = vmatpush1.bf16.msra.mxu0 %v530
      %657 = vmatprep.subr.bf16.mxu0 0
      %658 = vmatpush1.bf16.msra.mxu0 %v531
      %659 = vmatprep.subr.bf16.mxu0 0
      %660 = vmatpush1.bf16.msra.mxu0 %v532
      %661 = vmatprep.subr.bf16.mxu0 0
      %662 = vmatpush1.bf16.msra.mxu0 %v533
      %663 = vmatprep.subr.bf16.mxu0 0
      %664 = vmatpush1.bf16.msra.mxu0 0
      %665 = vmatprep.subr.bf16.mxu0 0
      %666 = vmatpush1.bf16.msra.mxu0 0
      %667 = vmatprep.subr.bf16.mxu0 0
      %668 = vmatpush1.bf16.msra.mxu0 0
      %669 = vmatprep.subr.bf16.mxu0 0
      %670 = vmatpush1.bf16.msra.mxu0 0
      %671 = vmatprep.subr.bf16.mxu0 0
      %672 = vmatpush1.bf16.msra.mxu0 0
      %673 = vmatprep.subr.bf16.mxu0 0
      %674 = vmatpush1.bf16.msra.mxu0 0
      %675 = vmatprep.subr.bf16.mxu0 0
      %676 = vmatpush1.bf16.msra.mxu0 0
      %677 = vmatprep.subr.bf16.mxu0 0
      %678 = vmatpush1.bf16.msra.mxu0 0
      %679 = vmatprep.mubr.bf16.mxu0 0
      %680 = vmatmul.mubr.bf16.gmra.mrb[0].mxu0 %v639
      %v681 = vpop.f32.mrb[0].mxu0
      %v682 = vadd.f32 0.0, %v681
      %v683 = vpop.f32.mrb[0].mxu0
      %v684 = vpop.f32.mrb[0].mxu0
      %v685 = vadd.f32 0.0, %v684
      %v686 = vpop.f32.mrb[0].mxu0
      %687 = vmatprep.mubr.bf16.mxu0 0
      %688 = vmatmul.mubr.bf16.gmra.mrb[0].mxu0 %v640
      %v689 = vpop.f32.mrb[0].mxu0
      %v690 = vadd.f32 0.0, %v689
      %v691 = vpop.f32.mrb[0].mxu0
      %v692 = vpop.f32.mrb[0].mxu0
      %v693 = vadd.f32 0.0, %v692
      %v694 = vpop.f32.mrb[0].mxu0
      %695 = vmatprep.mubr.bf16.mxu0 0
      %696 = vmatmul.mubr.bf16.gmra.mrb[0].mxu0 %v641
      %v697 = vpop.f32.mrb[0].mxu0
      %v698 = vadd.f32 0.0, %v697
      %v699 = vpop.f32.mrb[0].mxu0
      %v700 = vpop.f32.mrb[0].mxu0
      %v701 = vadd.f32 0.0, %v700
      %v702 = vpop.f32.mrb[0].mxu0
      %703 = vmatprep.mubr.bf16.mxu0 0
      %704 = vmatmul.mubr.bf16.gmra.mrb[0].mxu0 %v642
      %v705 = vpop.f32.mrb[0].mxu0
      %v706 = vadd.f32 0.0, %v705
      %v707 = vpop.f32.mrb[0].mxu0
      %v708 = vpop.f32.mrb[0].mxu0
      %v709 = vadd.f32 0.0, %v708
      %v710 = vpop.f32.mrb[0].mxu0
      %711 = vdwg.mxu0
      %v712 = vld [vmem:[%s421] sm:$0xff]
      %v713 = vld [vmem:[%s421 + $0x8] sm:$0xff]
      %v714 = vld [vmem:[%s421 + $0x10] sm:$0xff]
      %v715 = vld [vmem:[%s421 + $0x18] sm:$0xff]
      %v716 = vld [vmem:[%s421 + $0x20] sm:$0xff]
      %v717 = vld [vmem:[%s421 + $0x28] sm:$0xff]
      %v718 = vld [vmem:[%s421 + $0x30] sm:$0xff]
      %v719 = vld [vmem:[%s421 + $0x38] sm:$0xff]
      %v720 = vmax.bf16 %v712, 0
      %v721 = vmax.bf16 %v713, 0
      %v722 = vmax.bf16 %v714, 0
      %v723 = vmax.bf16 %v715, 0
      %v724 = vmax.bf16 %v716, 0
      %v725 = vmax.bf16 %v717, 0
      %v726 = vmax.bf16 %v718, 0
      %v727 = vmax.bf16 %v719, 0
      %v728 = vld [vmem:[%s5] sm:$0xf]
      %v729 = vld [vmem:[%s5 + $0x4] sm:$0xf]
      %v730 = vld [vmem:[%s5 + $0x8] sm:$0xf]
      %v731 = vld [vmem:[%s5 + $0xc] sm:$0xf]
      %v732 = vld [vmem:[%s5 + $0x10] sm:$0xf]
      %v733 = vld [vmem:[%s5 + $0x14] sm:$0xf]
      %v734 = vld [vmem:[%s5 + $0x18] sm:$0xf]
      %v735 = vld [vmem:[%s5 + $0x1c] sm:$0xf]
      %v736 = vld [vmem:[%s5 + $0x20] sm:$0xf]
      %v737 = vld [vmem:[%s5 + $0x24] sm:$0xf]
      %v738 = vld [vmem:[%s5 + $0x28] sm:$0xf]
      %v739 = vld [vmem:[%s5 + $0x2c] sm:$0xf]
      %v740 = vld [vmem:[%s5 + $0x30] sm:$0xf]
      %v741 = vld [vmem:[%s5 + $0x34] sm:$0xf]
      %v742 = vld [vmem:[%s5 + $0x38] sm:$0xf]
      %v743 = vld [vmem:[%s5 + $0x3c] sm:$0xf]
      %v744 = vld [vmem:[%s5 + $0x40] sm:$0xf]
      %v745 = vld [vmem:[%s5 + $0x44] sm:$0xf]
      %v746 = vld [vmem:[%s5 + $0x48] sm:$0xf]
      %v747 = vld [vmem:[%s5 + $0x4c] sm:$0xf]
      %v748 = vld [vmem:[%s5 + $0x50] sm:$0xf]
      %v749 = vld [vmem:[%s5 + $0x54] sm:$0xf]
      %v750 = vld [vmem:[%s5 + $0x58] sm:$0xf]
      %v751 = vld [vmem:[%s5 + $0x5c] sm:$0xf]
      %v752 = vld [vmem:[%s5 + $0x60] sm:$0xf]
      %v753 = vld [vmem:[%s5 + $0x64] sm:$0xf]
      %v754 = vld [vmem:[%s5 + $0x68] sm:$0xf]
      %v755 = vld [vmem:[%s5 + $0x6c] sm:$0xf]
      %v756 = vld [vmem:[%s5 + $0x70] sm:$0xf]
      %v757 = vld [vmem:[%s5 + $0x74] sm:$0xf]
      %v758 = vld [vmem:[%s5 + $0x78] sm:$0xf]
      %v759 = vld [vmem:[%s5 + $0x7c] sm:$0xf]
      %v768 = vunpack.c.l.b16 %v720
      %v769 = vunpack.c.h.b16 %v720
      %v770 = vunpack.c.l.b16 %v721
      %v771 = vunpack.c.h.b16 %v721
      %v772 = vunpack.c.l.b16 %v722
      %v773 = vunpack.c.h.b16 %v722
      %v774 = vunpack.c.l.b16 %v723
      %v775 = vunpack.c.h.b16 %v723
      %v776 = vunpack.c.l.b16 %v724
      %v777 = vunpack.c.h.b16 %v724
      %v778 = vunpack.c.l.b16 %v725
      %v779 = vunpack.c.h.b16 %v725
      %v780 = vunpack.c.l.b16 %v726
      %v781 = vunpack.c.h.b16 %v726
      %v782 = vunpack.c.l.b16 %v727
      %v783 = vunpack.c.h.b16 %v727
      %v784 = vpack.c.b16 %v770, %v768
      %v785 = vpack.c.b16 %v771, %v769
      %v786 = vpack.c.b16 %v774, %v772
      %v787 = vpack.c.b16 %v775, %v773
      %v788 = vpack.c.b16 %v778, %v776
      %v789 = vpack.c.b16 %v779, %v777
      %v790 = vpack.c.b16 %v782, %v780
      %v791 = vpack.c.b16 %v783, %v781
      %v832 = vunpack.c.l.b16 %v728
      %v833 = vunpack.c.l.b16 %v729
      %v834 = vunpack.c.l.b16 %v730
      %v835 = vunpack.c.l.b16 %v731
      %v836 = vunpack.c.l.b16 %v732
      %v837 = vunpack.c.l.b16 %v733
      %v838 = vunpack.c.l.b16 %v734
      %v839 = vunpack.c.l.b16 %v735
      %v840 = vunpack.c.l.b16 %v736
      %v841 = vunpack.c.l.b16 %v737
      %v842 = vunpack.c.l.b16 %v738
      %v843 = vunpack.c.l.b16 %v739
      %v844 = vunpack.c.l.b16 %v740
      %v845 = vunpack.c.l.b16 %v741
      %v846 = vunpack.c.l.b16 %v742
      %v847 = vunpack.c.l.b16 %v743
      %v848 = vunpack.c.l.b16 %v744
      %v849 = vunpack.c.l.b16 %v745
      %v850 = vunpack.c.l.b16 %v746
      %v851 = vunpack.c.l.b16 %v747
      %v852 = vunpack.c.l.b16 %v748
      %v853 = vunpack.c.l.b16 %v749
      %v854 = vunpack.c.l.b16 %v750
      %v855 = vunpack.c.l.b16 %v751
      %v856 = vunpack.c.l.b16 %v752
      %v857 = vunpack.c.l.b16 %v753
      %v858 = vunpack.c.l.b16 %v754
      %v859 = vunpack.c.l.b16 %v755
      %v860 = vunpack.c.l.b16 %v756
      %v861 = vunpack.c.l.b16 %v757
      %v862 = vunpack.c.l.b16 %v758
      %v863 = vunpack.c.l.b16 %v759
      %v864 = vpack.c.b16 %v833, %v832
      %v865 = vpack.c.b16 %v835, %v834
      %v866 = vpack.c.b16 %v837, %v836
      %v867 = vpack.c.b16 %v839, %v838
      %v868 = vpack.c.b16 %v841, %v840
      %v869 = vpack.c.b16 %v843, %v842
      %v870 = vpack.c.b16 %v845, %v844
      %v871 = vpack.c.b16 %v847, %v846
      %v872 = vpack.c.b16 %v849, %v848
      %v873 = vpack.c.b16 %v851, %v850
      %v874 = vpack.c.b16 %v853, %v852
      %v875 = vpack.c.b16 %v855, %v854
      %v876 = vpack.c.b16 %v857, %v856
      %v877 = vpack.c.b16 %v859, %v858
      %v878 = vpack.c.b16 %v861, %v860
      %v879 = vpack.c.b16 %v863, %v862
      %896 = vmatprep.subr.bf16.mxu0 0
      %897 = vmatpush1.bf16.msra.mxu0 %v864
      %898 = vmatprep.subr.bf16.mxu0 0
      %899 = vmatpush1.bf16.msra.mxu0 %v865
      %900 = vmatprep.subr.bf16.mxu0 0
      %901 = vmatpush1.bf16.msra.mxu0 %v866
      %902 = vmatprep.subr.bf16.mxu0 0
      %903 = vmatpush1.bf16.msra.mxu0 %v867
      %904 = vmatprep.subr.bf16.mxu0 0
      %905 = vmatpush1.bf16.msra.mxu0 %v868
      %906 = vmatprep.subr.bf16.mxu0 0
      %907 = vmatpush1.bf16.msra.mxu0 %v869
      %908 = vmatprep.subr.bf16.mxu0 0
      %909 = vmatpush1.bf16.msra.mxu0 %v870
      %910 = vmatprep.subr.bf16.mxu0 0
      %911 = vmatpush1.bf16.msra.mxu0 %v871
      %912 = vmatprep.subr.bf16.mxu0 0
      %913 = vmatpush1.bf16.msra.mxu0 %v872
      %914 = vmatprep.subr.bf16.mxu0 0
      %915 = vmatpush1.bf16.msra.mxu0 %v873
      %916 = vmatprep.subr.bf16.mxu0 0
      %917 = vmatpush1.bf16.msra.mxu0 %v874
      %918 = vmatprep.subr.bf16.mxu0 0
      %919 = vmatpush1.bf16.msra.mxu0 %v875
      %920 = vmatprep.subr.bf16.mxu0 0
      %921 = vmatpush1.bf16.msra.mxu0 %v876
      %922 = vmatprep.subr.bf16.mxu0 0
      %923 = vmatpush1.bf16.msra.mxu0 %v877
      %924 = vmatprep.subr.bf16.mxu0 0
      %925 = vmatpush1.bf16.msra.mxu0 %v878
      %926 = vmatprep.subr.bf16.mxu0 0
      %927 = vmatpush1.bf16.msra.mxu0 %v879
      %928 = vmatprep.mubr.bf16.mxu0 %v785
      %929 = vmatmul.mubr.bf16.gmra.mrb[0].mxu0 %v784
      %v930 = vpop.f32.mrb[0].mxu0
      %v931 = vadd.f32 0.0, %v930
      %v932 = vpop.f32.mrb[0].mxu0
      %v933 = vpop.f32.mrb[0].mxu0
      %v934 = vadd.f32 0.0, %v933
      %v935 = vpop.f32.mrb[0].mxu0
      %936 = vmatprep.mubr.bf16.mxu0 %v787
      %937 = vmatmul.mubr.bf16.gmra.mrb[0].mxu0 %v786
      %v938 = vpop.f32.mrb[0].mxu0
      %v939 = vadd.f32 0.0, %v938
      %v940 = vpop.f32.mrb[0].mxu0
      %v941 = vpop.f32.mrb[0].mxu0
      %v942 = vadd.f32 0.0, %v941
      %v943 = vpop.f32.mrb[0].mxu0
      %944 = vmatprep.mubr.bf16.mxu0 %v789
      %945 = vmatmul.mubr.bf16.gmra.mrb[0].mxu0 %v788
      %v946 = vpop.f32.mrb[0].mxu0
      %v947 = vadd.f32 0.0, %v946
      %v948 = vpop.f32.mrb[0].mxu0
      %v949 = vpop.f32.mrb[0].mxu0
      %v950 = vadd.f32 0.0, %v949
      %v951 = vpop.f32.mrb[0].mxu0
      %952 = vmatprep.mubr.bf16.mxu0 %v791
      %953 = vmatmul.mubr.bf16.gmra.mrb[0].mxu0 %v790
      %v954 = vpop.f32.mrb[0].mxu0
      %v955 = vadd.f32 0.0, %v954
      %v956 = vpop.f32.mrb[0].mxu0
      %v957 = vpop.f32.mrb[0].mxu0
      %v958 = vadd.f32 0.0, %v957
      %v959 = vpop.f32.mrb[0].mxu0
      %960 = vdwg.mxu0
      %v961 = vld [vmem:[%s428] sm:$0xff]
      %v962 = vld [vmem:[%s428 + $0x8] sm:$0xff]
      %v963 = vld [vmem:[%s428 + $0x10] sm:$0xff]
      %v964 = vld [vmem:[%s428 + $0x18] sm:$0xff]
      %v965 = vld [vmem:[%s428 + $0x20] sm:$0xff]
      %v966 = vld [vmem:[%s428 + $0x28] sm:$0xff]
      %v967 = vld [vmem:[%s428 + $0x30] sm:$0xff]
      %v968 = vld [vmem:[%s428 + $0x38] sm:$0xff]
      %v969 = vmax.bf16 %v961, 0
      %v970 = vmax.bf16 %v962, 0
      %v971 = vmax.bf16 %v963, 0
      %v972 = vmax.bf16 %v964, 0
      %v973 = vmax.bf16 %v965, 0
      %v974 = vmax.bf16 %v966, 0
      %v975 = vmax.bf16 %v967, 0
      %v976 = vmax.bf16 %v968, 0
      %v985 = vunpack.c.l.b16 %v969
      %v986 = vunpack.c.h.b16 %v969
      %v987 = vunpack.c.l.b16 %v970
      %v988 = vunpack.c.h.b16 %v970
      %v989 = vunpack.c.l.b16 %v971
      %v990 = vunpack.c.h.b16 %v971
      %v991 = vunpack.c.l.b16 %v972
      %v992 = vunpack.c.h.b16 %v972
      %v993 = vunpack.c.l.b16 %v973
      %v994 = vunpack.c.h.b16 %v973
      %v995 = vunpack.c.l.b16 %v974
      %v996 = vunpack.c.h.b16 %v974
      %v997 = vunpack.c.l.b16 %v975
      %v998 = vunpack.c.h.b16 %v975
      %v999 = vunpack.c.l.b16 %v976
      %v1000 = vunpack.c.h.b16 %v976
      %v1001 = vpack.c.b16 %v987, %v985
      %v1002 = vpack.c.b16 %v988, %v986
      %v1003 = vpack.c.b16 %v991, %v989
      %v1004 = vpack.c.b16 %v992, %v990
      %v1005 = vpack.c.b16 %v995, %v993
      %v1006 = vpack.c.b16 %v996, %v994
      %v1007 = vpack.c.b16 %v999, %v997
      %v1008 = vpack.c.b16 %v1000, %v998
      %1017 = vmatprep.subr.bf16.mxu0 0
      %1018 = vmatpush1.bf16.msra.mxu0 %v864
      %1019 = vmatprep.subr.bf16.mxu0 0
      %1020 = vmatpush1.bf16.msra.mxu0 %v865
      %1021 = vmatprep.subr.bf16.mxu0 0
      %1022 = vmatpush1.bf16.msra.mxu0 %v866
      %1023 = vmatprep.subr.bf16.mxu0 0
      %1024 = vmatpush1.bf16.msra.mxu0 %v867
      %1025 = vmatprep.subr.bf16.mxu0 0
      %1026 = vmatpush1.bf16.msra.mxu0 %v868
      %1027 = vmatprep.subr.bf16.mxu0 0
      %1028 = vmatpush1.bf16.msra.mxu0 %v869
      %1029 = vmatprep.subr.bf16.mxu0 0
      %1030 = vmatpush1.bf16.msra.mxu0 %v870
      %1031 = vmatprep.subr.bf16.mxu0 0
      %1032 = vmatpush1.bf16.msra.mxu0 %v871
      %1033 = vmatprep.subr.bf16.mxu0 0
      %1034 = vmatpush1.bf16.msra.mxu0 %v872
      %1035 = vmatprep.subr.bf16.mxu0 0
      %1036 = vmatpush1.bf16.msra.mxu0 %v873
      %1037 = vmatprep.subr.bf16.mxu0 0
      %1038 = vmatpush1.bf16.msra.mxu0 %v874
      %1039 = vmatprep.subr.bf16.mxu0 0
      %1040 = vmatpush1.bf16.msra.mxu0 %v875
      %1041 = vmatprep.subr.bf16.mxu0 0
      %1042 = vmatpush1.bf16.msra.mxu0 %v876
      %1043 = vmatprep.subr.bf16.mxu0 0
      %1044 = vmatpush1.bf16.msra.mxu0 %v877
      %1045 = vmatprep.subr.bf16.mxu0 0
      %1046 = vmatpush1.bf16.msra.mxu0 %v878
      %1047 = vmatprep.subr.bf16.mxu0 0
      %1048 = vmatpush1.bf16.msra.mxu0 %v879
      %1049 = vmatprep.mubr.bf16.mxu0 %v1002
      %1050 = vmatmul.mubr.bf16.gmra.mrb[0].mxu0 %v1001
      %v1051 = vpop.f32.mrb[0].mxu0
      %v1052 = vadd.f32 0.0, %v1051
      %v1053 = vpop.f32.mrb[0].mxu0
      %v1054 = vpop.f32.mrb[0].mxu0
      %v1055 = vadd.f32 0.0, %v1054
      %v1056 = vpop.f32.mrb[0].mxu0
      %1057 = vmatprep.mubr.bf16.mxu0 %v1004
      %1058 = vmatmul.mubr.bf16.gmra.mrb[0].mxu0 %v1003
      %v1059 = vpop.f32.mrb[0].mxu0
      %v1060 = vadd.f32 0.0, %v1059
      %v1061 = vpop.f32.mrb[0].mxu0
      %v1062 = vpop.f32.mrb[0].mxu0
      %v1063 = vadd.f32 0.0, %v1062
      %v1064 = vpop.f32.mrb[0].mxu0
      %1065 = vmatprep.mubr.bf16.mxu0 %v1006
      %1066 = vmatmul.mubr.bf16.gmra.mrb[0].mxu0 %v1005
      %v1067 = vpop.f32.mrb[0].mxu0
      %v1068 = vadd.f32 0.0, %v1067
      %v1069 = vpop.f32.mrb[0].mxu0
      %v1070 = vpop.f32.mrb[0].mxu0
      %v1071 = vadd.f32 0.0, %v1070
      %v1072 = vpop.f32.mrb[0].mxu0
      %1073 = vmatprep.mubr.bf16.mxu0 %v1008
      %1074 = vmatmul.mubr.bf16.gmra.mrb[0].mxu0 %v1007
      %v1075 = vpop.f32.mrb[0].mxu0
      %v1076 = vadd.f32 0.0, %v1075
      %v1077 = vpop.f32.mrb[0].mxu0
      %v1078 = vpop.f32.mrb[0].mxu0
      %v1079 = vadd.f32 0.0, %v1078
      %v1080 = vpop.f32.mrb[0].mxu0
      %1081 = vdwg.mxu0
      %v1082 = vmax.f32 %v577, 0.0
      %v1083 = vmax.f32 %v580, 0.0
      %v1084 = vmax.f32 %v585, 0.0
      %v1085 = vmax.f32 %v588, 0.0
      %v1086 = vmax.f32 %v593, 0.0
      %v1087 = vmax.f32 %v596, 0.0
      %v1088 = vmax.f32 %v601, 0.0
      %v1089 = vmax.f32 %v604, 0.0
      %v1090 = vpack.c.bf16 %v1083, %v1082
      %v1091 = vpack.c.bf16 %v1085, %v1084
      %v1092 = vpack.c.bf16 %v1087, %v1086
      %v1093 = vpack.c.bf16 %v1089, %v1088
      %v1094 = vld [vmem:[%s6] sm:$0xff]
      %v1095 = vld [vmem:[%s6 + $0x8] sm:$0xff]
      %v1096 = vld [vmem:[%s6 + $0x10] sm:$0xff]
      %v1097 = vld [vmem:[%s6 + $0x18] sm:$0xff]
      %v1098 = vld [vmem:[%s6 + $0x20] sm:$0xff]
      %v1099 = vld [vmem:[%s6 + $0x28] sm:$0xff]
      %v1100 = vld [vmem:[%s6 + $0x30] sm:$0xff]
      %v1101 = vld [vmem:[%s6 + $0x38] sm:$0xff]
      %v1102 = vld [vmem:[%s6 + $0x40] sm:$0xff]
      %v1103 = vld [vmem:[%s6 + $0x48] sm:$0xff]
      %v1104 = vld [vmem:[%s6 + $0x50] sm:$0xff]
      %v1105 = vld [vmem:[%s6 + $0x58] sm:$0xff]
      %v1106 = vld [vmem:[%s6 + $0x60] sm:$0xff]
      %v1107 = vld [vmem:[%s6 + $0x68] sm:$0xff]
      %v1108 = vld [vmem:[%s6 + $0x70] sm:$0xff]
      %v1109 = vld [vmem:[%s6 + $0x78] sm:$0xff]
      %v1110 = vmax.f32 %v682, 0.0
      %v1111 = vmax.f32 %v685, 0.0
      %v1112 = vmax.f32 %v690, 0.0
      %v1113 = vmax.f32 %v693, 0.0
      %v1114 = vmax.f32 %v698, 0.0
      %v1115 = vmax.f32 %v701, 0.0
      %v1116 = vmax.f32 %v706, 0.0
      %v1117 = vmax.f32 %v709, 0.0
      %v1118 = vpack.c.bf16 %v1111, %v1110
      %v1119 = vpack.c.bf16 %v1113, %v1112
      %v1120 = vpack.c.bf16 %v1115, %v1114
      %v1121 = vpack.c.bf16 %v1117, %v1116
      %v1122 = vld [vmem:[%s7] sm:$0xff]
      %v1123 = vld [vmem:[%s7 + $0x8] sm:$0xff]
      %v1124 = vld [vmem:[%s7 + $0x10] sm:$0xff]
      %v1125 = vld [vmem:[%s7 + $0x18] sm:$0xff]
      %v1126 = vld [vmem:[%s7 + $0x20] sm:$0xff]
      %v1127 = vld [vmem:[%s7 + $0x28] sm:$0xff]
      %v1128 = vld [vmem:[%s7 + $0x30] sm:$0xff]
      %v1129 = vld [vmem:[%s7 + $0x38] sm:$0xff]
      %v1130 = vld [vmem:[%s7 + $0x40] sm:$0xff]
      %v1131 = vld [vmem:[%s7 + $0x48] sm:$0xff]
      %v1132 = vld [vmem:[%s7 + $0x50] sm:$0xff]
      %v1133 = vld [vmem:[%s7 + $0x58] sm:$0xff]
      %v1134 = vld [vmem:[%s7 + $0x60] sm:$0xff]
      %v1135 = vld [vmem:[%s7 + $0x68] sm:$0xff]
      %v1136 = vld [vmem:[%s7 + $0x70] sm:$0xff]
      %v1137 = vld [vmem:[%s7 + $0x78] sm:$0xff]
      %v1154 = vunpack.c.l.b16 %v1122
      %v1155 = vunpack.c.h.b16 %v1122
      %v1156 = vunpack.c.l.b16 %v1123
      %v1157 = vunpack.c.h.b16 %v1123
      %v1158 = vunpack.c.l.b16 %v1124
      %v1159 = vunpack.c.h.b16 %v1124
      %v1160 = vunpack.c.l.b16 %v1125
      %v1161 = vunpack.c.h.b16 %v1125
      %v1162 = vunpack.c.l.b16 %v1126
      %v1163 = vunpack.c.h.b16 %v1126
      %v1164 = vunpack.c.l.b16 %v1127
      %v1165 = vunpack.c.h.b16 %v1127
      %v1166 = vunpack.c.l.b16 %v1128
      %v1167 = vunpack.c.h.b16 %v1128
      %v1168 = vunpack.c.l.b16 %v1129
      %v1169 = vunpack.c.h.b16 %v1129
      %v1170 = vunpack.c.l.b16 %v1130
      %v1171 = vunpack.c.h.b16 %v1130
      %v1172 = vunpack.c.l.b16 %v1131
      %v1173 = vunpack.c.h.b16 %v1131
      %v1174 = vunpack.c.l.b16 %v1132
      %v1175 = vunpack.c.h.b16 %v1132
      %v1176 = vunpack.c.l.b16 %v1133
      %v1177 = vunpack.c.h.b16 %v1133
      %v1178 = vunpack.c.l.b16 %v1134
      %v1179 = vunpack.c.h.b16 %v1134
      %v1180 = vunpack.c.l.b16 %v1135
      %v1181 = vunpack.c.h.b16 %v1135
      %v1182 = vunpack.c.l.b16 %v1136
      %v1183 = vunpack.c.h.b16 %v1136
      %v1184 = vunpack.c.l.b16 %v1137
      %v1185 = vunpack.c.h.b16 %v1137
      %v1186 = vpack.c.b16 %v1156, %v1154
      %v1187 = vpack.c.b16 %v1157, %v1155
      %v1188 = vpack.c.b16 %v1160, %v1158
      %v1189 = vpack.c.b16 %v1161, %v1159
      %v1190 = vpack.c.b16 %v1164, %v1162
      %v1191 = vpack.c.b16 %v1165, %v1163
      %v1192 = vpack.c.b16 %v1168, %v1166
      %v1193 = vpack.c.b16 %v1169, %v1167
      %v1194 = vpack.c.b16 %v1172, %v1170
      %v1195 = vpack.c.b16 %v1173, %v1171
      %v1196 = vpack.c.b16 %v1176, %v1174
      %v1197 = vpack.c.b16 %v1177, %v1175
      %v1198 = vpack.c.b16 %v1180, %v1178
      %v1199 = vpack.c.b16 %v1181, %v1179
      %v1200 = vpack.c.b16 %v1184, %v1182
      %v1201 = vpack.c.b16 %v1185, %v1183
      %1218 = vmatprep.subr.bf16.mxu0 %v1187
      %1219 = vmatpush1.bf16.msra.mxu0 %v1186
      %1220 = vmatprep.subr.bf16.mxu0 %v1189
      %1221 = vmatpush1.bf16.msra.mxu0 %v1188
      %1222 = vmatprep.subr.bf16.mxu0 %v1191
      %1223 = vmatpush1.bf16.msra.mxu0 %v1190
      %1224 = vmatprep.subr.bf16.mxu0 %v1193
      %1225 = vmatpush1.bf16.msra.mxu0 %v1192
      %1226 = vmatprep.subr.bf16.mxu0 %v1195
      %1227 = vmatpush1.bf16.msra.mxu0 %v1194
      %1228 = vmatprep.subr.bf16.mxu0 %v1197
      %1229 = vmatpush1.bf16.msra.mxu0 %v1196
      %1230 = vmatprep.subr.bf16.mxu0 %v1199
      %1231 = vmatpush1.bf16.msra.mxu0 %v1198
      %1232 = vmatprep.subr.bf16.mxu0 %v1201
      %1233 = vmatpush1.bf16.msra.mxu0 %v1200
      %1234 = vmatprep.subr.bf16.mxu0 0
      %1235 = vmatpush1.bf16.msra.mxu0 0
      %1236 = vmatprep.subr.bf16.mxu0 0
      %1237 = vmatpush1.bf16.msra.mxu0 0
      %1238 = vmatprep.subr.bf16.mxu0 0
      %1239 = vmatpush1.bf16.msra.mxu0 0
      %1240 = vmatprep.subr.bf16.mxu0 0
      %1241 = vmatpush1.bf16.msra.mxu0 0
      %1242 = vmatprep.subr.bf16.mxu0 0
      %1243 = vmatpush1.bf16.msra.mxu0 0
      %1244 = vmatprep.subr.bf16.mxu0 0
      %1245 = vmatpush1.bf16.msra.mxu0 0
      %1246 = vmatprep.subr.bf16.mxu0 0
      %1247 = vmatpush1.bf16.msra.mxu0 0
      %1248 = vmatprep.subr.bf16.mxu0 0
      %1249 = vmatpush1.bf16.msra.mxu0 0
      %1250 = vmatprep.mubr.bf16.mxu0 0
      %1251 = vmatmul.mubr.bf16.gmra.mrb[0].mxu0 %v1118
      %v1252 = vpop.f32.mrb[0].mxu0
      %v1253 = vadd.f32 0.0, %v1252
      %v1254 = vpop.f32.mrb[0].mxu0
      %v1255 = vadd.f32 0.0, %v1254
      %v1256 = vpop.f32.mrb[0].mxu0
      %v1257 = vadd.f32 0.0, %v1256
      %v1258 = vpop.f32.mrb[0].mxu0
      %v1259 = vadd.f32 0.0, %v1258
      %1260 = vmatprep.mubr.bf16.mxu0 0
      %1261 = vmatmul.mubr.bf16.gmra.mrb[0].mxu0 %v1119
      %v1262 = vpop.f32.mrb[0].mxu0
      %v1263 = vadd.f32 0.0, %v1262
      %v1264 = vpop.f32.mrb[0].mxu0
      %v1265 = vadd.f32 0.0, %v1264
      %v1266 = vpop.f32.mrb[0].mxu0
      %v1267 = vadd.f32 0.0, %v1266
      %v1268 = vpop.f32.mrb[0].mxu0
      %v1269 = vadd.f32 0.0, %v1268
      %1270 = vmatprep.mubr.bf16.mxu0 0
      %1271 = vmatmul.mubr.bf16.gmra.mrb[0].mxu0 %v1120
      %v1272 = vpop.f32.mrb[0].mxu0
      %v1273 = vadd.f32 0.0, %v1272
      %v1274 = vpop.f32.mrb[0].mxu0
      %v1275 = vadd.f32 0.0, %v1274
      %v1276 = vpop.f32.mrb[0].mxu0
      %v1277 = vadd.f32 0.0, %v1276
      %v1278 = vpop.f32.mrb[0].mxu0
      %v1279 = vadd.f32 0.0, %v1278
      %1280 = vmatprep.mubr.bf16.mxu0 0
      %1281 = vmatmul.mubr.bf16.gmra.mrb[0].mxu0 %v1121
      %v1282 = vpop.f32.mrb[0].mxu0
      %v1283 = vadd.f32 0.0, %v1282
      %v1284 = vpop.f32.mrb[0].mxu0
      %v1285 = vadd.f32 0.0, %v1284
      %v1286 = vpop.f32.mrb[0].mxu0
      %v1287 = vadd.f32 0.0, %v1286
      %v1288 = vpop.f32.mrb[0].mxu0
      %v1289 = vadd.f32 0.0, %v1288
      %1290 = vdwg.mxu0
      %v1307 = vunpack.c.l.b16 %v1094
      %v1308 = vunpack.c.h.b16 %v1094
      %v1309 = vunpack.c.l.b16 %v1095
      %v1310 = vunpack.c.h.b16 %v1095
      %v1311 = vunpack.c.l.b16 %v1096
      %v1312 = vunpack.c.h.b16 %v1096
      %v1313 = vunpack.c.l.b16 %v1097
      %v1314 = vunpack.c.h.b16 %v1097
      %v1315 = vunpack.c.l.b16 %v1098
      %v1316 = vunpack.c.h.b16 %v1098
      %v1317 = vunpack.c.l.b16 %v1099
      %v1318 = vunpack.c.h.b16 %v1099
      %v1319 = vunpack.c.l.b16 %v1100
      %v1320 = vunpack.c.h.b16 %v1100
      %v1321 = vunpack.c.l.b16 %v1101
      %v1322 = vunpack.c.h.b16 %v1101
      %v1323 = vunpack.c.l.b16 %v1102
      %v1324 = vunpack.c.h.b16 %v1102
      %v1325 = vunpack.c.l.b16 %v1103
      %v1326 = vunpack.c.h.b16 %v1103
      %v1327 = vunpack.c.l.b16 %v1104
      %v1328 = vunpack.c.h.b16 %v1104
      %v1329 = vunpack.c.l.b16 %v1105
      %v1330 = vunpack.c.h.b16 %v1105
      %v1331 = vunpack.c.l.b16 %v1106
      %v1332 = vunpack.c.h.b16 %v1106
      %v1333 = vunpack.c.l.b16 %v1107
      %v1334 = vunpack.c.h.b16 %v1107
      %v1335 = vunpack.c.l.b16 %v1108
      %v1336 = vunpack.c.h.b16 %v1108
      %v1337 = vunpack.c.l.b16 %v1109
      %v1338 = vunpack.c.h.b16 %v1109
      %v1339 = vpack.c.b16 %v1309, %v1307
      %v1340 = vpack.c.b16 %v1310, %v1308
      %v1341 = vpack.c.b16 %v1313, %v1311
      %v1342 = vpack.c.b16 %v1314, %v1312
      %v1343 = vpack.c.b16 %v1317, %v1315
      %v1344 = vpack.c.b16 %v1318, %v1316
      %v1345 = vpack.c.b16 %v1321, %v1319
      %v1346 = vpack.c.b16 %v1322, %v1320
      %v1347 = vpack.c.b16 %v1325, %v1323
      %v1348 = vpack.c.b16 %v1326, %v1324
      %v1349 = vpack.c.b16 %v1329, %v1327
      %v1350 = vpack.c.b16 %v1330, %v1328
      %v1351 = vpack.c.b16 %v1333, %v1331
      %v1352 = vpack.c.b16 %v1334, %v1332
      %v1353 = vpack.c.b16 %v1337, %v1335
      %v1354 = vpack.c.b16 %v1338, %v1336
      %1371 = vmatprep.subr.bf16.mxu0 %v1340
      %1372 = vmatpush1.bf16.msra.mxu0 %v1339
      %1373 = vmatprep.subr.bf16.mxu0 %v1342
      %1374 = vmatpush1.bf16.msra.mxu0 %v1341
      %1375 = vmatprep.subr.bf16.mxu0 %v1344
      %1376 = vmatpush1.bf16.msra.mxu0 %v1343
      %1377 = vmatprep.subr.bf16.mxu0 %v1346
      %1378 = vmatpush1.bf16.msra.mxu0 %v1345
      %1379 = vmatprep.subr.bf16.mxu0 %v1348
      %1380 = vmatpush1.bf16.msra.mxu0 %v1347
      %1381 = vmatprep.subr.bf16.mxu0 %v1350
      %1382 = vmatpush1.bf16.msra.mxu0 %v1349
      %1383 = vmatprep.subr.bf16.mxu0 %v1352
      %1384 = vmatpush1.bf16.msra.mxu0 %v1351
      %1385 = vmatprep.subr.bf16.mxu0 %v1354
      %1386 = vmatpush1.bf16.msra.mxu0 %v1353
      %1387 = vmatprep.subr.bf16.mxu0 0
      %1388 = vmatpush1.bf16.msra.mxu0 0
      %1389 = vmatprep.subr.bf16.mxu0 0
      %1390 = vmatpush1.bf16.msra.mxu0 0
      %1391 = vmatprep.subr.bf16.mxu0 0
      %1392 = vmatpush1.bf16.msra.mxu0 0
      %1393 = vmatprep.subr.bf16.mxu0 0
      %1394 = vmatpush1.bf16.msra.mxu0 0
      %1395 = vmatprep.subr.bf16.mxu0 0
      %1396 = vmatpush1.bf16.msra.mxu0 0
      %1397 = vmatprep.subr.bf16.mxu0 0
      %1398 = vmatpush1.bf16.msra.mxu0 0
      %1399 = vmatprep.subr.bf16.mxu0 0
      %1400 = vmatpush1.bf16.msra.mxu0 0
      %1401 = vmatprep.subr.bf16.mxu0 0
      %1402 = vmatpush1.bf16.msra.mxu0 0
      %1403 = vmatprep.mubr.bf16.mxu0 0
      %1404 = vmatmul.mubr.bf16.gmra.mrb[0].mxu0 %v1090
      %v1405 = vpop.f32.mrb[0].mxu0
      %v1406 = vadd.f32 %v1253, %v1405
      %v1407 = vpop.f32.mrb[0].mxu0
      %v1408 = vadd.f32 %v1255, %v1407
      %v1409 = vpop.f32.mrb[0].mxu0
      %v1410 = vadd.f32 %v1257, %v1409
      %v1411 = vpop.f32.mrb[0].mxu0
      %v1412 = vadd.f32 %v1259, %v1411
      %1413 = vmatprep.mubr.bf16.mxu0 0
      %1414 = vmatmul.mubr.bf16.gmra.mrb[0].mxu0 %v1091
      %v1415 = vpop.f32.mrb[0].mxu0
      %v1416 = vadd.f32 %v1263, %v1415
      %v1417 = vpop.f32.mrb[0].mxu0
      %v1418 = vadd.f32 %v1265, %v1417
      %v1419 = vpop.f32.mrb[0].mxu0
      %v1420 = vadd.f32 %v1267, %v1419
      %v1421 = vpop.f32.mrb[0].mxu0
      %v1422 = vadd.f32 %v1269, %v1421
      %1423 = vmatprep.mubr.bf16.mxu0 0
      %1424 = vmatmul.mubr.bf16.gmra.mrb[0].mxu0 %v1092
      %v1425 = vpop.f32.mrb[0].mxu0
      %v1426 = vadd.f32 %v1273, %v1425
      %v1427 = vpop.f32.mrb[0].mxu0
      %v1428 = vadd.f32 %v1275, %v1427
      %v1429 = vpop.f32.mrb[0].mxu0
      %v1430 = vadd.f32 %v1277, %v1429
      %v1431 = vpop.f32.mrb[0].mxu0
      %v1432 = vadd.f32 %v1279, %v1431
      %1433 = vmatprep.mubr.bf16.mxu0 0
      %1434 = vmatmul.mubr.bf16.gmra.mrb[0].mxu0 %v1093
      %v1435 = vpop.f32.mrb[0].mxu0
      %v1436 = vadd.f32 %v1283, %v1435
      %v1437 = vpop.f32.mrb[0].mxu0
      %v1438 = vadd.f32 %v1285, %v1437
      %v1439 = vpop.f32.mrb[0].mxu0
      %v1440 = vadd.f32 %v1287, %v1439
      %v1441 = vpop.f32.mrb[0].mxu0
      %v1442 = vadd.f32 %v1289, %v1441
      %1443 = vdwg.mxu0
      %v1444 = vmax.f32 %v931, 0.0
      %v1445 = vmax.f32 %v934, 0.0
      %v1446 = vmax.f32 %v939, 0.0
      %v1447 = vmax.f32 %v942, 0.0
      %v1448 = vmax.f32 %v947, 0.0
      %v1449 = vmax.f32 %v950, 0.0
      %v1450 = vmax.f32 %v955, 0.0
      %v1451 = vmax.f32 %v958, 0.0
      %v1452 = vpack.c.bf16 %v1445, %v1444
      %v1453 = vpack.c.bf16 %v1447, %v1446
      %v1454 = vpack.c.bf16 %v1449, %v1448
      %v1455 = vpack.c.bf16 %v1451, %v1450
      %v1456 = vld [vmem:[%s8] sm:$0xff]
      %v1457 = vld [vmem:[%s8 + $0x8] sm:$0xff]
      %v1458 = vld [vmem:[%s8 + $0x10] sm:$0xff]
      %v1459 = vld [vmem:[%s8 + $0x18] sm:$0xff]
      %v1460 = vld [vmem:[%s8 + $0x20] sm:$0xff]
      %v1461 = vld [vmem:[%s8 + $0x28] sm:$0xff]
      %v1462 = vld [vmem:[%s8 + $0x30] sm:$0xff]
      %v1463 = vld [vmem:[%s8 + $0x38] sm:$0xff]
      %v1464 = vld [vmem:[%s8 + $0x40] sm:$0xff]
      %v1465 = vld [vmem:[%s8 + $0x48] sm:$0xff]
      %v1466 = vld [vmem:[%s8 + $0x50] sm:$0xff]
      %v1467 = vld [vmem:[%s8 + $0x58] sm:$0xff]
      %v1468 = vld [vmem:[%s8 + $0x60] sm:$0xff]
      %v1469 = vld [vmem:[%s8 + $0x68] sm:$0xff]
      %v1470 = vld [vmem:[%s8 + $0x70] sm:$0xff]
      %v1471 = vld [vmem:[%s8 + $0x78] sm:$0xff]
      %v1488 = vunpack.c.l.b16 %v1456
      %v1489 = vunpack.c.h.b16 %v1456
      %v1490 = vunpack.c.l.b16 %v1457
      %v1491 = vunpack.c.h.b16 %v1457
      %v1492 = vunpack.c.l.b16 %v1458
      %v1493 = vunpack.c.h.b16 %v1458
      %v1494 = vunpack.c.l.b16 %v1459
      %v1495 = vunpack.c.h.b16 %v1459
      %v1496 = vunpack.c.l.b16 %v1460
      %v1497 = vunpack.c.h.b16 %v1460
      %v1498 = vunpack.c.l.b16 %v1461
      %v1499 = vunpack.c.h.b16 %v1461
      %v1500 = vunpack.c.l.b16 %v1462
      %v1501 = vunpack.c.h.b16 %v1462
      %v1502 = vunpack.c.l.b16 %v1463
      %v1503 = vunpack.c.h.b16 %v1463
      %v1504 = vunpack.c.l.b16 %v1464
      %v1505 = vunpack.c.h.b16 %v1464
      %v1506 = vunpack.c.l.b16 %v1465
      %v1507 = vunpack.c.h.b16 %v1465
      %v1508 = vunpack.c.l.b16 %v1466
      %v1509 = vunpack.c.h.b16 %v1466
      %v1510 = vunpack.c.l.b16 %v1467
      %v1511 = vunpack.c.h.b16 %v1467
      %v1512 = vunpack.c.l.b16 %v1468
      %v1513 = vunpack.c.h.b16 %v1468
      %v1514 = vunpack.c.l.b16 %v1469
      %v1515 = vunpack.c.h.b16 %v1469
      %v1516 = vunpack.c.l.b16 %v1470
      %v1517 = vunpack.c.h.b16 %v1470
      %v1518 = vunpack.c.l.b16 %v1471
      %v1519 = vunpack.c.h.b16 %v1471
      %v1520 = vpack.c.b16 %v1490, %v1488
      %v1521 = vpack.c.b16 %v1491, %v1489
      %v1522 = vpack.c.b16 %v1494, %v1492
      %v1523 = vpack.c.b16 %v1495, %v1493
      %v1524 = vpack.c.b16 %v1498, %v1496
      %v1525 = vpack.c.b16 %v1499, %v1497
      %v1526 = vpack.c.b16 %v1502, %v1500
      %v1527 = vpack.c.b16 %v1503, %v1501
      %v1528 = vpack.c.b16 %v1506, %v1504
      %v1529 = vpack.c.b16 %v1507, %v1505
      %v1530 = vpack.c.b16 %v1510, %v1508
      %v1531 = vpack.c.b16 %v1511, %v1509
      %v1532 = vpack.c.b16 %v1514, %v1512
      %v1533 = vpack.c.b16 %v1515, %v1513
      %v1534 = vpack.c.b16 %v1518, %v1516
      %v1535 = vpack.c.b16 %v1519, %v1517
      %1552 = vmatprep.subr.bf16.mxu0 %v1521
      %1553 = vmatpush1.bf16.msra.mxu0 %v1520
      %1554 = vmatprep.subr.bf16.mxu0 %v1523
      %1555 = vmatpush1.bf16.msra.mxu0 %v1522
      %1556 = vmatprep.subr.bf16.mxu0 %v1525
      %1557 = vmatpush1.bf16.msra.mxu0 %v1524
      %1558 = vmatprep.subr.bf16.mxu0 %v1527
      %1559 = vmatpush1.bf16.msra.mxu0 %v1526
      %1560 = vmatprep.subr.bf16.mxu0 %v1529
      %1561 = vmatpush1.bf16.msra.mxu0 %v1528
      %1562 = vmatprep.subr.bf16.mxu0 %v1531
      %1563 = vmatpush1.bf16.msra.mxu0 %v1530
      %1564 = vmatprep.subr.bf16.mxu0 %v1533
      %1565 = vmatpush1.bf16.msra.mxu0 %v1532
      %1566 = vmatprep.subr.bf16.mxu0 %v1535
      %1567 = vmatpush1.bf16.msra.mxu0 %v1534
      %1568 = vmatprep.subr.bf16.mxu0 0
      %1569 = vmatpush1.bf16.msra.mxu0 0
      %1570 = vmatprep.subr.bf16.mxu0 0
      %1571 = vmatpush1.bf16.msra.mxu0 0
      %1572 = vmatprep.subr.bf16.mxu0 0
      %1573 = vmatpush1.bf16.msra.mxu0 0
      %1574 = vmatprep.subr.bf16.mxu0 0
      %1575 = vmatpush1.bf16.msra.mxu0 0
      %1576 = vmatprep.subr.bf16.mxu0 0
      %1577 = vmatpush1.bf16.msra.mxu0 0
      %1578 = vmatprep.subr.bf16.mxu0 0
      %1579 = vmatpush1.bf16.msra.mxu0 0
      %1580 = vmatprep.subr.bf16.mxu0 0
      %1581 = vmatpush1.bf16.msra.mxu0 0
      %1582 = vmatprep.subr.bf16.mxu0 0
      %1583 = vmatpush1.bf16.msra.mxu0 0
      %1584 = vmatprep.mubr.bf16.mxu0 0
      %1585 = vmatmul.mubr.bf16.gmra.mrb[0].mxu0 %v1452
      %v1586 = vpop.f32.mrb[0].mxu0
      %v1587 = vadd.f32 0.0, %v1586
      %v1588 = vpop.f32.mrb[0].mxu0
      %v1589 = vadd.f32 0.0, %v1588
      %v1590 = vpop.f32.mrb[0].mxu0
      %v1591 = vadd.f32 0.0, %v1590
      %v1592 = vpop.f32.mrb[0].mxu0
      %v1593 = vadd.f32 0.0, %v1592
      %1594 = vmatprep.mubr.bf16.mxu0 0
      %1595 = vmatmul.mubr.bf16.gmra.mrb[0].mxu0 %v1453
      %v1596 = vpop.f32.mrb[0].mxu0
      %v1597 = vadd.f32 0.0, %v1596
      %v1598 = vpop.f32.mrb[0].mxu0
      %v1599 = vadd.f32 0.0, %v1598
      %v1600 = vpop.f32.mrb[0].mxu0
      %v1601 = vadd.f32 0.0, %v1600
      %v1602 = vpop.f32.mrb[0].mxu0
      %v1603 = vadd.f32 0.0, %v1602
      %1604 = vmatprep.mubr.bf16.mxu0 0
      %1605 = vmatmul.mubr.bf16.gmra.mrb[0].mxu0 %v1454
      %v1606 = vpop.f32.mrb[0].mxu0
      %v1607 = vadd.f32 0.0, %v1606
      %v1608 = vpop.f32.mrb[0].mxu0
      %v1609 = vadd.f32 0.0, %v1608
      %v1610 = vpop.f32.mrb[0].mxu0
      %v1611 = vadd.f32 0.0, %v1610
      %v1612 = vpop.f32.mrb[0].mxu0
      %v1613 = vadd.f32 0.0, %v1612
      %1614 = vmatprep.mubr.bf16.mxu0 0
      %1615 = vmatmul.mubr.bf16.gmra.mrb[0].mxu0 %v1455
      %v1616 = vpop.f32.mrb[0].mxu0
      %v1617 = vadd.f32 0.0, %v1616
      %v1618 = vpop.f32.mrb[0].mxu0
      %v1619 = vadd.f32 0.0, %v1618
      %v1620 = vpop.f32.mrb[0].mxu0
      %v1621 = vadd.f32 0.0, %v1620
      %v1622 = vpop.f32.mrb[0].mxu0
      %v1623 = vadd.f32 0.0, %v1622
      %1624 = vdwg.mxu0
      %v1625 = vadd.f32 %v1406, %v1587
      %v1626 = vadd.f32 %v1408, %v1589
      %v1627 = vadd.f32 %v1410, %v1591
      %v1628 = vadd.f32 %v1412, %v1593
      %v1629 = vadd.f32 %v1416, %v1597
      %v1630 = vadd.f32 %v1418, %v1599
      %v1631 = vadd.f32 %v1420, %v1601
      %v1632 = vadd.f32 %v1422, %v1603
      %v1633 = vadd.f32 %v1426, %v1607
      %v1634 = vadd.f32 %v1428, %v1609
      %v1635 = vadd.f32 %v1430, %v1611
      %v1636 = vadd.f32 %v1432, %v1613
      %v1637 = vadd.f32 %v1436, %v1617
      %v1638 = vadd.f32 %v1438, %v1619
      %v1639 = vadd.f32 %v1440, %v1621
      %v1640 = vadd.f32 %v1442, %v1623
      %v1641 = vmax.f32 %v1052, 0.0
      %v1642 = vmax.f32 %v1055, 0.0
      %v1643 = vmax.f32 %v1060, 0.0
      %v1644 = vmax.f32 %v1063, 0.0
      %v1645 = vmax.f32 %v1068, 0.0
      %v1646 = vmax.f32 %v1071, 0.0
      %v1647 = vmax.f32 %v1076, 0.0
      %v1648 = vmax.f32 %v1079, 0.0
      %v1649 = vpack.c.bf16 %v1642, %v1641
      %v1650 = vpack.c.bf16 %v1644, %v1643
      %v1651 = vpack.c.bf16 %v1646, %v1645
      %v1652 = vpack.c.bf16 %v1648, %v1647
      %v1653 = vld [vmem:[%s9] sm:$0xff]
      %v1654 = vld [vmem:[%s9 + $0x8] sm:$0xff]
      %v1655 = vld [vmem:[%s9 + $0x10] sm:$0xff]
      %v1656 = vld [vmem:[%s9 + $0x18] sm:$0xff]
      %v1657 = vld [vmem:[%s9 + $0x20] sm:$0xff]
      %v1658 = vld [vmem:[%s9 + $0x28] sm:$0xff]
      %v1659 = vld [vmem:[%s9 + $0x30] sm:$0xff]
      %v1660 = vld [vmem:[%s9 + $0x38] sm:$0xff]
      %v1661 = vld [vmem:[%s9 + $0x40] sm:$0xff]
      %v1662 = vld [vmem:[%s9 + $0x48] sm:$0xff]
      %v1663 = vld [vmem:[%s9 + $0x50] sm:$0xff]
      %v1664 = vld [vmem:[%s9 + $0x58] sm:$0xff]
      %v1665 = vld [vmem:[%s9 + $0x60] sm:$0xff]
      %v1666 = vld [vmem:[%s9 + $0x68] sm:$0xff]
      %v1667 = vld [vmem:[%s9 + $0x70] sm:$0xff]
      %v1668 = vld [vmem:[%s9 + $0x78] sm:$0xff]
      %v1685 = vunpack.c.l.b16 %v1653
      %v1686 = vunpack.c.h.b16 %v1653
      %v1687 = vunpack.c.l.b16 %v1654
      %v1688 = vunpack.c.h.b16 %v1654
      %v1689 = vunpack.c.l.b16 %v1655
      %v1690 = vunpack.c.h.b16 %v1655
      %v1691 = vunpack.c.l.b16 %v1656
      %v1692 = vunpack.c.h.b16 %v1656
      %v1693 = vunpack.c.l.b16 %v1657
      %v1694 = vunpack.c.h.b16 %v1657
      %v1695 = vunpack.c.l.b16 %v1658
      %v1696 = vunpack.c.h.b16 %v1658
      %v1697 = vunpack.c.l.b16 %v1659
      %v1698 = vunpack.c.h.b16 %v1659
      %v1699 = vunpack.c.l.b16 %v1660
      %v1700 = vunpack.c.h.b16 %v1660
      %v1701 = vunpack.c.l.b16 %v1661
      %v1702 = vunpack.c.h.b16 %v1661
      %v1703 = vunpack.c.l.b16 %v1662
      %v1704 = vunpack.c.h.b16 %v1662
      %v1705 = vunpack.c.l.b16 %v1663
      %v1706 = vunpack.c.h.b16 %v1663
      %v1707 = vunpack.c.l.b16 %v1664
      %v1708 = vunpack.c.h.b16 %v1664
      %v1709 = vunpack.c.l.b16 %v1665
      %v1710 = vunpack.c.h.b16 %v1665
      %v1711 = vunpack.c.l.b16 %v1666
      %v1712 = vunpack.c.h.b16 %v1666
      %v1713 = vunpack.c.l.b16 %v1667
      %v1714 = vunpack.c.h.b16 %v1667
      %v1715 = vunpack.c.l.b16 %v1668
      %v1716 = vunpack.c.h.b16 %v1668
      %v1717 = vpack.c.b16 %v1687, %v1685
      %v1718 = vpack.c.b16 %v1688, %v1686
      %v1719 = vpack.c.b16 %v1691, %v1689
      %v1720 = vpack.c.b16 %v1692, %v1690
      %v1721 = vpack.c.b16 %v1695, %v1693
      %v1722 = vpack.c.b16 %v1696, %v1694
      %v1723 = vpack.c.b16 %v1699, %v1697
      %v1724 = vpack.c.b16 %v1700, %v1698
      %v1725 = vpack.c.b16 %v1703, %v1701
      %v1726 = vpack.c.b16 %v1704, %v1702
      %v1727 = vpack.c.b16 %v1707, %v1705
      %v1728 = vpack.c.b16 %v1708, %v1706
      %v1729 = vpack.c.b16 %v1711, %v1709
      %v1730 = vpack.c.b16 %v1712, %v1710
      %v1731 = vpack.c.b16 %v1715, %v1713
      %v1732 = vpack.c.b16 %v1716, %v1714
      %1749 = vmatprep.subr.bf16.mxu0 %v1718
      %1750 = vmatpush1.bf16.msra.mxu0 %v1717
      %1751 = vmatprep.subr.bf16.mxu0 %v1720
      %1752 = vmatpush1.bf16.msra.mxu0 %v1719
      %1753 = vmatprep.subr.bf16.mxu0 %v1722
      %1754 = vmatpush1.bf16.msra.mxu0 %v1721
      %1755 = vmatprep.subr.bf16.mxu0 %v1724
      %1756 = vmatpush1.bf16.msra.mxu0 %v1723
      %1757 = vmatprep.subr.bf16.mxu0 %v1726
      %1758 = vmatpush1.bf16.msra.mxu0 %v1725
      %1759 = vmatprep.subr.bf16.mxu0 %v1728
      %1760 = vmatpush1.bf16.msra.mxu0 %v1727
      %1761 = vmatprep.subr.bf16.mxu0 %v1730
      %1762 = vmatpush1.bf16.msra.mxu0 %v1729
      %1763 = vmatprep.subr.bf16.mxu0 %v1732
      %1764 = vmatpush1.bf16.msra.mxu0 %v1731
      %1765 = vmatprep.subr.bf16.mxu0 0
      %1766 = vmatpush1.bf16.msra.mxu0 0
      %1767 = vmatprep.subr.bf16.mxu0 0
      %1768 = vmatpush1.bf16.msra.mxu0 0
      %1769 = vmatprep.subr.bf16.mxu0 0
      %1770 = vmatpush1.bf16.msra.mxu0 0
      %1771 = vmatprep.subr.bf16.mxu0 0
      %1772 = vmatpush1.bf16.msra.mxu0 0
      %1773 = vmatprep.subr.bf16.mxu0 0
      %1774 = vmatpush1.bf16.msra.mxu0 0
      %1775 = vmatprep.subr.bf16.mxu0 0
      %1776 = vmatpush1.bf16.msra.mxu0 0
      %1777 = vmatprep.subr.bf16.mxu0 0
      %1778 = vmatpush1.bf16.msra.mxu0 0
      %1779 = vmatprep.subr.bf16.mxu0 0
      %1780 = vmatpush1.bf16.msra.mxu0 0
      %1781 = vmatprep.mubr.bf16.mxu0 0
      %1782 = vmatmul.mubr.bf16.gmra.mrb[0].mxu0 %v1649
      %v1783 = vpop.f32.mrb[0].mxu0
      %v1784 = vadd.f32 0.0, %v1783
      %v1785 = vpop.f32.mrb[0].mxu0
      %v1786 = vadd.f32 0.0, %v1785
      %v1787 = vpop.f32.mrb[0].mxu0
      %v1788 = vadd.f32 0.0, %v1787
      %v1789 = vpop.f32.mrb[0].mxu0
      %v1790 = vadd.f32 0.0, %v1789
      %1791 = vmatprep.mubr.bf16.mxu0 0
      %1792 = vmatmul.mubr.bf16.gmra.mrb[0].mxu0 %v1650
      %v1793 = vpop.f32.mrb[0].mxu0
      %v1794 = vadd.f32 0.0, %v1793
      %v1795 = vpop.f32.mrb[0].mxu0
      %v1796 = vadd.f32 0.0, %v1795
      %v1797 = vpop.f32.mrb[0].mxu0
      %v1798 = vadd.f32 0.0, %v1797
      %v1799 = vpop.f32.mrb[0].mxu0
      %v1800 = vadd.f32 0.0, %v1799
      %1801 = vmatprep.mubr.bf16.mxu0 0
      %1802 = vmatmul.mubr.bf16.gmra.mrb[0].mxu0 %v1651
      %v1803 = vpop.f32.mrb[0].mxu0
      %v1804 = vadd.f32 0.0, %v1803
      %v1805 = vpop.f32.mrb[0].mxu0
      %v1806 = vadd.f32 0.0, %v1805
      %v1807 = vpop.f32.mrb[0].mxu0
      %v1808 = vadd.f32 0.0, %v1807
      %v1809 = vpop.f32.mrb[0].mxu0
      %v1810 = vadd.f32 0.0, %v1809
      %1811 = vmatprep.mubr.bf16.mxu0 0
      %1812 = vmatmul.mubr.bf16.gmra.mrb[0].mxu0 %v1652
      %v1813 = vpop.f32.mrb[0].mxu0
      %v1814 = vadd.f32 0.0, %v1813
      %v1815 = vpop.f32.mrb[0].mxu0
      %v1816 = vadd.f32 0.0, %v1815
      %v1817 = vpop.f32.mrb[0].mxu0
      %v1818 = vadd.f32 0.0, %v1817
      %v1819 = vpop.f32.mrb[0].mxu0
      %v1820 = vadd.f32 0.0, %v1819
      %1821 = vdwg.mxu0
      %v1822 = vadd.f32 %v1625, %v1784
      %v1823 = vadd.f32 %v1626, %v1786
      %v1824 = vadd.f32 %v1627, %v1788
      %v1825 = vadd.f32 %v1628, %v1790
      %v1826 = vadd.f32 %v1629, %v1794
      %v1827 = vadd.f32 %v1630, %v1796
      %v1828 = vadd.f32 %v1631, %v1798
      %v1829 = vadd.f32 %v1632, %v1800
      %v1830 = vadd.f32 %v1633, %v1804
      %v1831 = vadd.f32 %v1634, %v1806
      %v1832 = vadd.f32 %v1635, %v1808
      %v1833 = vadd.f32 %v1636, %v1810
      %v1834 = vadd.f32 %v1637, %v1814
      %v1835 = vadd.f32 %v1638, %v1816
      %v1836 = vadd.f32 %v1639, %v1818
      %v1837 = vadd.f32 %v1640, %v1820
      %v1838 = vpack.c.bf16 %v1824, %v1822
      %v1839 = vpack.c.bf16 %v1825, %v1823
      %v1840 = vpack.c.bf16 %v1828, %v1826
      %v1841 = vpack.c.bf16 %v1829, %v1827
      %v1842 = vpack.c.bf16 %v1832, %v1830
      %v1843 = vpack.c.bf16 %v1833, %v1831
      %v1844 = vpack.c.bf16 %v1836, %v1834
      %v1845 = vpack.c.bf16 %v1837, %v1835
      %v1854 = vunpack.c.l.b16 %v1838
      %v1855 = vunpack.c.l.b16 %v1839
      %v1856 = vunpack.c.h.b16 %v1838
      %v1857 = vunpack.c.h.b16 %v1839
      %v1858 = vunpack.c.l.b16 %v1840
      %v1859 = vunpack.c.l.b16 %v1841
      %v1860 = vunpack.c.h.b16 %v1840
      %v1861 = vunpack.c.h.b16 %v1841
      %v1862 = vunpack.c.l.b16 %v1842
      %v1863 = vunpack.c.l.b16 %v1843
      %v1864 = vunpack.c.h.b16 %v1842
      %v1865 = vunpack.c.h.b16 %v1843
      %v1866 = vunpack.c.l.b16 %v1844
      %v1867 = vunpack.c.l.b16 %v1845
      %v1868 = vunpack.c.h.b16 %v1844
      %v1869 = vunpack.c.h.b16 %v1845
      %v1870 = vpack.c.b16 %v1855, %v1854
      %v1871 = vpack.c.b16 %v1857, %v1856
      %v1872 = vpack.c.b16 %v1859, %v1858
      %v1873 = vpack.c.b16 %v1861, %v1860
      %v1874 = vpack.c.b16 %v1863, %v1862
      %v1875 = vpack.c.b16 %v1865, %v1864
      %v1876 = vpack.c.b16 %v1867, %v1866
      %v1877 = vpack.c.b16 %v1869, %v1868
      %1886 = vst [vmem:[%s435] sm:$0xff] %v1870
      %1887 = vst [vmem:[%s435 + $0x8] sm:$0xff] %v1871
      %1888 = vst [vmem:[%s435 + $0x10] sm:$0xff] %v1872
      %1889 = vst [vmem:[%s435 + $0x18] sm:$0xff] %v1873
      %1890 = vst [vmem:[%s435 + $0x20] sm:$0xff] %v1874
      %1891 = vst [vmem:[%s435 + $0x28] sm:$0xff] %v1875
      %1892 = vst [vmem:[%s435 + $0x30] sm:$0xff] %v1876
      %1893 = vst [vmem:[%s435 + $0x38] sm:$0xff] %v1877
      %s1894 = smul.u32 8, %s21
      %p1895 = scmp.lt.s32.totalorder %s1894, 15
      %s1896 = scalar_select %p1895, %s1894, 15
      %s1897 = smul.addr %s1896, 2
      %s1898 = smul.addr %s1897, 4
      %s1899 = scalar_lea.vmem %s10, %s1898
      // Predicated region
      $region61: #{model_forward.8} parent=59 // pred_check
        %p1900 = pneg %p269
      $region62: #{model_forward.8} parent=59 // pred_check_branch
        %1902 = sbr.rel (%p1900) target = $region64
      $region63: #{model_forward.8} parent=59 // pred_region
        %s1903 = smul.u32 8, %s21
      $region64: #{model_forward.8} parent=59 // pred_fallthru
        _
    $region60: #{model_forward.8} parent=5 // pred_fallthru
      _
    %p1904 = scmp.le.s32.totalorder 2, %s16
    // Predicated region
    $region65: #{model_forward.8} parent=5 // pred_check
      %p1905 = pneg %p1904
    $region66: #{model_forward.8} parent=5 // pred_check_branch
      %1907 = sbr.rel (%p1905) target = $region68
    $region67: #{model_forward.8} parent=5 // pred_region
      %s1908 = ssub.s32 %s16, 2
      // Predicated region
      $region69: #{model_forward.8} parent=67 // pred_check
        %p1909 = pneg %p275
      $region70: #{model_forward.8} parent=67 // pred_check_branch
        %1911 = sbr.rel (%p1909) target = $region72
      $region71: #{model_forward.8} parent=67 // pred_region
        %s1912 = smul.u32 8, %s22
        %p1913 = scmp.lt.s32.totalorder %s1912, 15
        %s1914 = scalar_select %p1913, %s1912, 15
        %s1915 = smul.addr %s1914, 2
        %s1916 = smul.addr %s1915, 4
        %s1917 = scalar_lea.vmem %s10, %s1916
      $region72: #{model_forward.8} parent=67 // pred_fallthru
        _
    $region68: #{model_forward.8} parent=5 // pred_fallthru
      _
  $region6: #{model_forward.8} parent=0 // loop_footer
    %s20 = sadd.s32 1, %s16
  $region7: #{model_forward.8} parent=0 // loop_footer_branch
    %15 = sbr.rel target = $region3
  $region8: #{model_forward.8} parent=0 // loop_exit
    _

// kernel: model_forward.11
$region0: #{model_forward.11}
  #allocation0 [shape = 'u32[]', space=smem, size = 0x4, offset = 0x4, fixed_abs, tag = 'smem constant byte address 0x4 - core index']
  #allocation1 [shape = 'u32[144,128]{1,0:T(1,128)}', space=vmem, size = 0x12000, scoped, tag = 'internal scratch']
  %s0 = inlined_call_operand.vmem [shape: bf16[2,16,256], index: 0, kind: input, shape index: {}]
  %s1 = inlined_call_operand.vmem [shape: bf16[2,256,128], index: 1, kind: input, shape index: {}]
  %s2 = inlined_call_operand.vmem [shape: f32[2,1,128], index: 2, kind: input, shape index: {}]
  %s3 = inlined_call_operand.vmem [shape: f32[2,2,128], index: 3, kind: output, shape index: {}]
  %s4 = sld [smem:[#allocation0]]
  $region22: #{model_forward.11} parent=0
    _
  %s6 = ssub.s32 1, %s4
  %s7 = scalar_select 0, %s6, %s4
  // Predicated region
  $region2: #{model_forward.11} parent=0 // pred_check
    _
  $region3: #{model_forward.11} parent=0 // pred_check_branch
    %9 = sbr.rel (0) target = $region5
  $region4: #{model_forward.11} parent=0 // pred_region
    _
  $region5: #{model_forward.11} parent=0 // pred_fallthru
    _
  // Predicated region
  $region6: #{model_forward.11} parent=0 // pred_check
    _
  $region7: #{model_forward.11} parent=0 // pred_check_branch
    %11 = sbr.rel (0) target = $region9
  $region8: #{model_forward.11} parent=0 // pred_region
    _
  $region9: #{model_forward.11} parent=0 // pred_fallthru
    _
  // Predicated region
  $region10: #{model_forward.11} parent=0 // pred_check
    _
  $region11: #{model_forward.11} parent=0 // pred_check_branch
    %13 = sbr.rel (0) target = $region13
  $region12: #{model_forward.11} parent=0 // pred_region
    _
  $region13: #{model_forward.11} parent=0 // pred_fallthru
    _
  %v15 = vld [vmem:[%s0] sm:$0xff]
  %v16 = vld [vmem:[%s0 + $0x8] sm:$0xff]
  %v17 = vld [vmem:[%s0 + $0x10] sm:$0xff]
  %v18 = vld [vmem:[%s0 + $0x18] sm:$0xff]
  %v19 = vunpack.c.l.bf16 %v15
  %v20 = vunpack.c.h.bf16 %v15
  %v21 = vunpack.c.l.bf16 %v16
  %v22 = vunpack.c.h.bf16 %v16
  %v23 = vunpack.c.l.bf16 %v17
  %v24 = vunpack.c.h.bf16 %v17
  %v25 = vunpack.c.l.bf16 %v18
  %v26 = vunpack.c.h.bf16 %v18
  %v27 = vadd.f32 %v19, %v21
  %v28 = vrot.slane %v27, 4
  %v29 = vadd.f32 %v27, %v28
  %v30 = vrot.slane %v29, 2
  %v31 = vadd.f32 %v29, %v30
  %v32 = vrot.slane %v31, 1
  %v33 = vadd.f32 %v31, %v32
  %v34 = vadd.f32 %v20, %v22
  %v35 = vrot.slane %v34, 4
  %v36 = vadd.f32 %v34, %v35
  %v37 = vrot.slane %v36, 2
  %v38 = vadd.f32 %v36, %v37
  %v39 = vrot.slane %v38, 1
  %v40 = vadd.f32 %v38, %v39
  %v41 = vadd.f32 %v23, %v25
  %v42 = vrot.slane %v41, 4
  %v43 = vadd.f32 %v41, %v42
  %v44 = vrot.slane %v43, 2
  %v45 = vadd.f32 %v43, %v44
  %v46 = vrot.slane %v45, 1
  %v47 = vadd.f32 %v45, %v46
  %v48 = vadd.f32 %v24, %v26
  %v49 = vrot.slane %v48, 4
  %v50 = vadd.f32 %v48, %v49
  %v51 = vrot.slane %v50, 2
  %v52 = vadd.f32 %v50, %v51
  %v53 = vrot.slane %v52, 1
  %v54 = vadd.f32 %v52, %v53
  %v55 = vmul.f32 %v33, 0.0625
  %v56 = vmul.f32 %v40, 0.0625
  %v57 = vmul.f32 %v47, 0.0625
  %v58 = vmul.f32 %v54, 0.0625
  %v59 = vmax.f32 %v19, 0.0
  %v60 = vmax.f32 %v20, 0.0
  %v61 = vmax.f32 %v21, 0.0
  %v62 = vmax.f32 %v22, 0.0
  %v63 = vmax.f32 %v23, 0.0
  %v64 = vmax.f32 %v24, 0.0
  %v65 = vmax.f32 %v25, 0.0
  %v66 = vmax.f32 %v26, 0.0
  %v67 = vadd.f32 %v59, %v61
  %v68 = vrot.slane %v67, 4
  %v69 = vadd.f32 %v67, %v68
  %v70 = vrot.slane %v69, 2
  %v71 = vadd.f32 %v69, %v70
  %v72 = vrot.slane %v71, 1
  %v73 = vadd.f32 %v71, %v72
  %v74 = vadd.f32 %v60, %v62
  %v75 = vrot.slane %v74, 4
  %v76 = vadd.f32 %v74, %v75
  %v77 = vrot.slane %v76, 2
  %v78 = vadd.f32 %v76, %v77
  %v79 = vrot.slane %v78, 1
  %v80 = vadd.f32 %v78, %v79
  %v81 = vadd.f32 %v63, %v65
  %v82 = vrot.slane %v81, 4
  %v83 = vadd.f32 %v81, %v82
  %v84 = vrot.slane %v83, 2
  %v85 = vadd.f32 %v83, %v84
  %v86 = vrot.slane %v85, 1
  %v87 = vadd.f32 %v85, %v86
  %v88 = vadd.f32 %v64, %v66
  %v89 = vrot.slane %v88, 4
  %v90 = vadd.f32 %v88, %v89
  %v91 = vrot.slane %v90, 2
  %v92 = vadd.f32 %v90, %v91
  %v93 = vrot.slane %v92, 1
  %v94 = vadd.f32 %v92, %v93
  %v95 = vmul.f32 %v73, 0.0625
  %v96 = vmul.f32 %v80, 0.0625
  %v97 = vmul.f32 %v87, 0.0625
  %v98 = vmul.f32 %v94, 0.0625
  %v99 = vpack.c.bf16 %v95, %v95
  %v100 = vpack.c.bf16 %v96, %v96
  %v101 = vpack.c.bf16 %v97, %v97
  %v102 = vpack.c.bf16 %v98, %v98
  %v103 = vld [vmem:[%s1] sm:$0xf]
  %v104 = vld [vmem:[%s1 + $0x4] sm:$0xf]
  %v105 = vld [vmem:[%s1 + $0x8] sm:$0xf]
  %v106 = vld [vmem:[%s1 + $0xc] sm:$0xf]
  %v107 = vld [vmem:[%s1 + $0x10] sm:$0xf]
  %v108 = vld [vmem:[%s1 + $0x14] sm:$0xf]
  %v109 = vld [vmem:[%s1 + $0x18] sm:$0xf]
  %v110 = vld [vmem:[%s1 + $0x1c] sm:$0xf]
  %v111 = vld [vmem:[%s1 + $0x20] sm:$0xf]
  %v112 = vld [vmem:[%s1 + $0x24] sm:$0xf]
  %v113 = vld [vmem:[%s1 + $0x28] sm:$0xf]
  %v114 = vld [vmem:[%s1 + $0x2c] sm:$0xf]
  %v115 = vld [vmem:[%s1 + $0x30] sm:$0xf]
  %v116 = vld [vmem:[%s1 + $0x34] sm:$0xf]
  %v117 = vld [vmem:[%s1 + $0x38] sm:$0xf]
  %v118 = vld [vmem:[%s1 + $0x3c] sm:$0xf]
  %v119 = vld [vmem:[%s1 + $0x40] sm:$0xf]
  %v120 = vld [vmem:[%s1 + $0x44] sm:$0xf]
  %v121 = vld [vmem:[%s1 + $0x48] sm:$0xf]
  %v122 = vld [vmem:[%s1 + $0x4c] sm:$0xf]
  %v123 = vld [vmem:[%s1 + $0x50] sm:$0xf]
  %v124 = vld [vmem:[%s1 + $0x54] sm:$0xf]
  %v125 = vld [vmem:[%s1 + $0x58] sm:$0xf]
  %v126 = vld [vmem:[%s1 + $0x5c] sm:$0xf]
  %v127 = vld [vmem:[%s1 + $0x60] sm:$0xf]
  %v128 = vld [vmem:[%s1 + $0x64] sm:$0xf]
  %v129 = vld [vmem:[%s1 + $0x68] sm:$0xf]
  %v130 = vld [vmem:[%s1 + $0x6c] sm:$0xf]
  %v131 = vld [vmem:[%s1 + $0x70] sm:$0xf]
  %v132 = vld [vmem:[%s1 + $0x74] sm:$0xf]
  %v133 = vld [vmem:[%s1 + $0x78] sm:$0xf]
  %v134 = vld [vmem:[%s1 + $0x7c] sm:$0xf]
  %v135 = vld [vmem:[%s2] sm:$0x1]
  %v137 = vlaneseq
  %v138 = vshrl.u32 %v137, 7
  %v139 = vsub.s32 0, %v138
  %v140 = vrot.slane %v135, %v139
  %v146 = vunpack.c.l.b16 %v99
  %v147 = vunpack.c.l.b16 %v100
  %v148 = vunpack.c.l.b16 %v101
  %v149 = vunpack.c.l.b16 %v102
  %vm150 = vcmask 1041409
  %v151 = vsel %vm150, %v148, %v146
  %v152 = vsel %vm150, %v149, %v147
  %v153 = vpack.c.b16 %v151, %v151
  %v154 = vpack.c.b16 %v152, %v152
  %v189 = vunpack.c.l.b16 %v103
  %v190 = vunpack.c.l.b16 %v104
  %v191 = vunpack.c.l.b16 %v105
  %v192 = vunpack.c.l.b16 %v106
  %v193 = vunpack.c.l.b16 %v107
  %v194 = vunpack.c.l.b16 %v108
  %v195 = vunpack.c.l.b16 %v109
  %v196 = vunpack.c.l.b16 %v110
  %v197 = vunpack.c.l.b16 %v111
  %v198 = vunpack.c.l.b16 %v112
  %v199 = vunpack.c.l.b16 %v113
  %v200 = vunpack.c.l.b16 %v114
  %v201 = vunpack.c.l.b16 %v115
  %v202 = vunpack.c.l.b16 %v116
  %v203 = vunpack.c.l.b16 %v117
  %v204 = vunpack.c.l.b16 %v118
  %v205 = vunpack.c.l.b16 %v119
  %v206 = vunpack.c.l.b16 %v120
  %v207 = vunpack.c.l.b16 %v121
  %v208 = vunpack.c.l.b16 %v122
  %v209 = vunpack.c.l.b16 %v123
  %v210 = vunpack.c.l.b16 %v124
  %v211 = vunpack.c.l.b16 %v125
  %v212 = vunpack.c.l.b16 %v126
  %v213 = vunpack.c.l.b16 %v127
  %v214 = vunpack.c.l.b16 %v128
  %v215 = vunpack.c.l.b16 %v129
  %v216 = vunpack.c.l.b16 %v130
  %v217 = vunpack.c.l.b16 %v131
  %v218 = vunpack.c.l.b16 %v132
  %v219 = vunpack.c.l.b16 %v133
  %v220 = vunpack.c.l.b16 %v134
  %v221 = vpack.c.b16 %v190, %v189
  %v222 = vpack.c.b16 %v192, %v191
  %v223 = vpack.c.b16 %v194, %v193
  %v224 = vpack.c.b16 %v196, %v195
  %v225 = vpack.c.b16 %v198, %v197
  %v226 = vpack.c.b16 %v200, %v199
  %v227 = vpack.c.b16 %v202, %v201
  %v228 = vpack.c.b16 %v204, %v203
  %v229 = vpack.c.b16 %v206, %v205
  %v230 = vpack.c.b16 %v208, %v207
  %v231 = vpack.c.b16 %v210, %v209
  %v232 = vpack.c.b16 %v212, %v211
  %v233 = vpack.c.b16 %v214, %v213
  %v234 = vpack.c.b16 %v216, %v215
  %v235 = vpack.c.b16 %v218, %v217
  %v236 = vpack.c.b16 %v220, %v219
  %253 = vmatprep.subr.bf16.mxu0 0
  %254 = vmatpush1.bf16.msra.mxu0 %v221
  %255 = vmatprep.subr.bf16.mxu0 0
  %256 = vmatpush1.bf16.msra.mxu0 %v222
  %257 = vmatprep.subr.bf16.mxu0 0
  %258 = vmatpush1.bf16.msra.mxu0 %v223
  %259 = vmatprep.subr.bf16.mxu0 0
  %260 = vmatpush1.bf16.msra.mxu0 %v224
  %261 = vmatprep.subr.bf16.mxu0 0
  %262 = vmatpush1.bf16.msra.mxu0 %v225
  %263 = vmatprep.subr.bf16.mxu0 0
  %264 = vmatpush1.bf16.msra.mxu0 %v226
  %265 = vmatprep.subr.bf16.mxu0 0
  %266 = vmatpush1.bf16.msra.mxu0 %v227
  %267 = vmatprep.subr.bf16.mxu0 0
  %268 = vmatpush1.bf16.msra.mxu0 %v228
  %269 = vmatprep.subr.bf16.mxu0 0
  %270 = vmatpush1.bf16.msra.mxu0 %v229
  %271 = vmatprep.subr.bf16.mxu0 0
  %272 = vmatpush1.bf16.msra.mxu0 %v230
  %273 = vmatprep.subr.bf16.mxu0 0
  %274 = vmatpush1.bf16.msra.mxu0 %v231
  %275 = vmatprep.subr.bf16.mxu0 0
  %276 = vmatpush1.bf16.msra.mxu0 %v232
  %277 = vmatprep.subr.bf16.mxu0 0
  %278 = vmatpush1.bf16.msra.mxu0 %v233
  %279 = vmatprep.subr.bf16.mxu0 0
  %280 = vmatpush1.bf16.msra.mxu0 %v234
  %281 = vmatprep.subr.bf16.mxu0 0
  %282 = vmatpush1.bf16.msra.mxu0 %v235
  %283 = vmatprep.subr.bf16.mxu0 0
  %284 = vmatpush1.bf16.msra.mxu0 %v236
  %285 = vmatprep.mubr.bf16.mxu0 %v154
  %286 = vmatmul.mubr.bf16.gmra.mrb[0].mxu0 %v153
  %v287 = vpop.f32.mrb[0].mxu0
  %v288 = vadd.f32 %v140, %v287
  %v289 = vpop.f32.mrb[0].mxu0
  %v290 = vpop.f32.mrb[0].mxu0
  %v291 = vpop.f32.mrb[0].mxu0
  %292 = vdwg.mxu0
  %293 = vst [vmem:[%s3] sm:$0x3] %v288
  %v294 = vpack.c.bf16 %v55, %v55
  %v295 = vpack.c.bf16 %v56, %v56
  %v296 = vpack.c.bf16 %v57, %v57
  %v297 = vpack.c.bf16 %v58, %v58
  %s298 = scalar_lea.vmem %s1, 128
  %v299 = vld [vmem:[%s298] sm:$0xf]
  %v300 = vld [vmem:[%s298 + $0x4] sm:$0xf]
  %v301 = vld [vmem:[%s298 + $0x8] sm:$0xf]
  %v302 = vld [vmem:[%s298 + $0xc] sm:$0xf]
  %v303 = vld [vmem:[%s298 + $0x10] sm:$0xf]
  %v304 = vld [vmem:[%s298 + $0x14] sm:$0xf]
  %v305 = vld [vmem:[%s298 + $0x18] sm:$0xf]
  %v306 = vld [vmem:[%s298 + $0x1c] sm:$0xf]
  %v307 = vld [vmem:[%s298 + $0x20] sm:$0xf]
  %v308 = vld [vmem:[%s298 + $0x24] sm:$0xf]
  %v309 = vld [vmem:[%s298 + $0x28] sm:$0xf]
  %v310 = vld [vmem:[%s298 + $0x2c] sm:$0xf]
  %v311 = vld [vmem:[%s298 + $0x30] sm:$0xf]
  %v312 = vld [vmem:[%s298 + $0x34] sm:$0xf]
  %v313 = vld [vmem:[%s298 + $0x38] sm:$0xf]
  %v314 = vld [vmem:[%s298 + $0x3c] sm:$0xf]
  %v315 = vld [vmem:[%s298 + $0x40] sm:$0xf]
  %v316 = vld [vmem:[%s298 + $0x44] sm:$0xf]
  %v317 = vld [vmem:[%s298 + $0x48] sm:$0xf]
  %v318 = vld [vmem:[%s298 + $0x4c] sm:$0xf]
  %v319 = vld [vmem:[%s298 + $0x50] sm:$0xf]
  %v320 = vld [vmem:[%s298 + $0x54] sm:$0xf]
  %v321 = vld [vmem:[%s298 + $0x58] sm:$0xf]
  %v322 = vld [vmem:[%s298 + $0x5c] sm:$0xf]
  %v323 = vld [vmem:[%s298 + $0x60] sm:$0xf]
  %v324 = vld [vmem:[%s298 + $0x64] sm:$0xf]
  %v325 = vld [vmem:[%s298 + $0x68] sm:$0xf]
  %v326 = vld [vmem:[%s298 + $0x6c] sm:$0xf]
  %v327 = vld [vmem:[%s298 + $0x70] sm:$0xf]
  %v328 = vld [vmem:[%s298 + $0x74] sm:$0xf]
  %v329 = vld [vmem:[%s298 + $0x78] sm:$0xf]
  %v330 = vld [vmem:[%s298 + $0x7c] sm:$0xf]
  %s331 = scalar_lea.vmem %s2, 1
  %v332 = vld [vmem:[%s331] sm:$0x1]
  %v334 = vlaneseq
  %v335 = vshrl.u32 %v334, 7
  %v336 = vsub.s32 0, %v335
  %v337 = vrot.slane %v332, %v336
  %v343 = vunpack.c.l.b16 %v294
  %v344 = vunpack.c.l.b16 %v295
  %v345 = vunpack.c.l.b16 %v296
  %v346 = vunpack.c.l.b16 %v297
  %v347 = vsel %vm150, %v345, %v343
  %v348 = vsel %vm150, %v346, %v344
  %v349 = vpack.c.b16 %v347, %v347
  %v350 = vpack.c.b16 %v348, %v348
  %v385 = vunpack.c.l.b16 %v299
  %v386 = vunpack.c.l.b16 %v300
  %v387 = vunpack.c.l.b16 %v301
  %v388 = vunpack.c.l.b16 %v302
  %v389 = vunpack.c.l.b16 %v303
  %v390 = vunpack.c.l.b16 %v304
  %v391 = vunpack.c.l.b16 %v305
  %v392 = vunpack.c.l.b16 %v306
  %v393 = vunpack.c.l.b16 %v307
  %v394 = vunpack.c.l.b16 %v308
  %v395 = vunpack.c.l.b16 %v309
  %v396 = vunpack.c.l.b16 %v310
  %v397 = vunpack.c.l.b16 %v311
  %v398 = vunpack.c.l.b16 %v312
  %v399 = vunpack.c.l.b16 %v313
  %v400 = vunpack.c.l.b16 %v314
  %v401 = vunpack.c.l.b16 %v315
  %v402 = vunpack.c.l.b16 %v316
  %v403 = vunpack.c.l.b16 %v317
  %v404 = vunpack.c.l.b16 %v318
  %v405 = vunpack.c.l.b16 %v319
  %v406 = vunpack.c.l.b16 %v320
  %v407 = vunpack.c.l.b16 %v321
  %v408 = vunpack.c.l.b16 %v322
  %v409 = vunpack.c.l.b16 %v323
  %v410 = vunpack.c.l.b16 %v324
  %v411 = vunpack.c.l.b16 %v325
  %v412 = vunpack.c.l.b16 %v326
  %v413 = vunpack.c.l.b16 %v327
  %v414 = vunpack.c.l.b16 %v328
  %v415 = vunpack.c.l.b16 %v329
  %v416 = vunpack.c.l.b16 %v330
  %v417 = vpack.c.b16 %v386, %v385
  %v418 = vpack.c.b16 %v388, %v387
  %v419 = vpack.c.b16 %v390, %v389
  %v420 = vpack.c.b16 %v392, %v391
  %v421 = vpack.c.b16 %v394, %v393
  %v422 = vpack.c.b16 %v396, %v395
  %v423 = vpack.c.b16 %v398, %v397
  %v424 = vpack.c.b16 %v400, %v399
  %v425 = vpack.c.b16 %v402, %v401
  %v426 = vpack.c.b16 %v404, %v403
  %v427 = vpack.c.b16 %v406, %v405
  %v428 = vpack.c.b16 %v408, %v407
  %v429 = vpack.c.b16 %v410, %v409
  %v430 = vpack.c.b16 %v412, %v411
  %v431 = vpack.c.b16 %v414, %v413
  %v432 = vpack.c.b16 %v416, %v415
  %449 = vmatprep.subr.bf16.mxu0 0
  %450 = vmatpush1.bf16.msra.mxu0 %v417
  %451 = vmatprep.subr.bf16.mxu0 0
  %452 = vmatpush1.bf16.msra.mxu0 %v418
  %453 = vmatprep.subr.bf16.mxu0 0
  %454 = vmatpush1.bf16.msra.mxu0 %v419
  %455 = vmatprep.subr.bf16.mxu0 0
  %456 = vmatpush1.bf16.msra.mxu0 %v420
  %457 = vmatprep.subr.bf16.mxu0 0
  %458 = vmatpush1.bf16.msra.mxu0 %v421
  %459 = vmatprep.subr.bf16.mxu0 0
  %460 = vmatpush1.bf16.msra.mxu0 %v422
  %461 = vmatprep.subr.bf16.mxu0 0
  %462 = vmatpush1.bf16.msra.mxu0 %v423
  %463 = vmatprep.subr.bf16.mxu0 0
  %464 = vmatpush1.bf16.msra.mxu0 %v424
  %465 = vmatprep.subr.bf16.mxu0 0
  %466 = vmatpush1.bf16.msra.mxu0 %v425
  %467 = vmatprep.subr.bf16.mxu0 0
  %468 = vmatpush1.bf16.msra.mxu0 %v426
  %469 = vmatprep.subr.bf16.mxu0 0
  %470 = vmatpush1.bf16.msra.mxu0 %v427
  %471 = vmatprep.subr.bf16.mxu0 0
  %472 = vmatpush1.bf16.msra.mxu0 %v428
  %473 = vmatprep.subr.bf16.mxu0 0
  %474 = vmatpush1.bf16.msra.mxu0 %v429
  %475 = vmatprep.subr.bf16.mxu0 0
  %476 = vmatpush1.bf16.msra.mxu0 %v430
  %477 = vmatprep.subr.bf16.mxu0 0
  %478 = vmatpush1.bf16.msra.mxu0 %v431
  %479 = vmatprep.subr.bf16.mxu0 0
  %480 = vmatpush1.bf16.msra.mxu0 %v432
  %481 = vmatprep.mubr.bf16.mxu0 %v350
  %482 = vmatmul.mubr.bf16.gmra.mrb[0].mxu0 %v349
  %v483 = vpop.f32.mrb[0].mxu0
  %v484 = vadd.f32 %v337, %v483
  %v485 = vpop.f32.mrb[0].mxu0
  %v486 = vpop.f32.mrb[0].mxu0
  %v487 = vpop.f32.mrb[0].mxu0
  %488 = vdwg.mxu0
  %s489 = scalar_lea.vmem %s3, 2
  %490 = vst [vmem:[%s489] sm:$0x3] %v484
  // Predicated region
  $region14: #{model_forward.11} parent=0 // pred_check
    _
  $region15: #{model_forward.11} parent=0 // pred_check_branch
    %492 = sbr.rel (0) target = $region17
  $region16: #{model_forward.11} parent=0 // pred_region
    _
  $region17: #{model_forward.11} parent=0 // pred_fallthru
    _
  // Predicated region
  $region18: #{model_forward.11} parent=0 // pred_check
    _
  $region19: #{model_forward.11} parent=0 // pred_check_branch
    %494 = sbr.rel (0) target = $region21
  $region20: #{model_forward.11} parent=0 // pred_region
    _
  $region21: #{model_forward.11} parent=0 // pred_fallthru
    _

// kernel: model_forward.10
$region0: #{model_forward.10}
  #allocation0 [shape = 'u32[]', space=smem, size = 0x4, offset = 0x4, fixed_abs, tag = 'smem constant byte address 0x4 - core index']
  #allocation1 [shape = 'u32[144,128]{1,0:T(1,128)}', space=vmem, size = 0x12000, scoped, tag = 'internal scratch']
  %s0 = inlined_call_operand.vmem [shape: bf16[32,512], index: 0, kind: input, shape index: {}]
  %s1 = inlined_call_operand.vmem [shape: bf16[32,512], index: 1, kind: input, shape index: {}]
  %s2 = inlined_call_operand.vmem [shape: bf16[32,256], index: 2, kind: input, shape index: {}]
  %s3 = inlined_call_operand.vmem [shape: bf16[32,256], index: 3, kind: input, shape index: {}]
  %s4 = inlined_call_operand.vmem [shape: bf16[512,128], index: 4, kind: input, shape index: {}]
  %s5 = inlined_call_operand.vmem [shape: bf16[256,128], index: 5, kind: input, shape index: {}]
  %s6 = inlined_call_operand.vmem [shape: bf16[128,256], index: 6, kind: input, shape index: {}]
  %s7 = inlined_call_operand.vmem [shape: bf16[128,256], index: 7, kind: input, shape index: {}]
  %s8 = inlined_call_operand.vmem [shape: bf16[128,256], index: 8, kind: input, shape index: {}]
  %s9 = inlined_call_operand.vmem [shape: bf16[128,256], index: 9, kind: input, shape index: {}]
  %s10 = inlined_call_operand.vmem [shape: bf16[32,256], index: 10, kind: output, shape index: {}]
  %s11 = sld [smem:[#allocation0]]
  $region73: #{model_forward.10} parent=0
    _
  %s13 = ssub.s32 1, %s11
  %s14 = scalar_select 0, %s13, %s11
  loop: start=0, step=1, limit=4
  $region2: #{model_forward.10} parent=0 // loop_pre_header
    _
  $region3: #{model_forward.10} parent=0 // loop_header
    %s16 = sphi 0, %s20
    %p17 = scmp.ge.s32.totalorder %s16, 4
    %s26 = sphi 0, %s28
    %s29 = sphi 0, %s26
    %s30 = sphi 0, %s29
    %s46 = sphi 0, %s30
    %s52 = sphi 0, %s54
    %s55 = sphi 0, %s52
    %s56 = sphi 0, %s55
    %s72 = sphi 0, %s56
    %s78 = sphi 0, %s80
    %s81 = sphi 0, %s78
    %s82 = sphi 0, %s81
    %s98 = sphi 0, %s82
    %s104 = sphi 0, %s106
    %s107 = sphi 0, %s104
    %s108 = sphi 0, %s107
    %s124 = sphi 0, %s108
    %s128 = sphi 0, %s128
    %s130 = sphi 0, %s128
    %s131 = sphi 0, %s130
    %s145 = sphi 0, %s131
    %s149 = sphi 0, %s149
    %s151 = sphi 0, %s149
    %s152 = sphi 0, %s151
    %s166 = sphi 0, %s152
    %s170 = sphi 0, %s170
    %s172 = sphi 0, %s170
    %s173 = sphi 0, %s172
    %s187 = sphi 0, %s173
    %s191 = sphi 0, %s191
    %s193 = sphi 0, %s191
    %s194 = sphi 0, %s193
    %s208 = sphi 0, %s194
    %s212 = sphi 0, %s212
    %s214 = sphi 0, %s212
    %s215 = sphi 0, %s214
    %s229 = sphi 0, %s215
    %s233 = sphi 0, %s233
    %s235 = sphi 0, %s233
    %s236 = sphi 0, %s235
    %s250 = sphi 0, %s236
    %s256 = sphi 0, %s258
    %s259 = sphi 0, %s256
    %s260 = sphi 0, %s259
    %s276 = sphi 0, %s260
  $region4: #{model_forward.10} parent=0 // loop_header_branch
    %19 = sbr.rel (%p17) target = $region8
  $region5: #{model_forward.10} parent=0 // loop_body
    %s21 = ssub.s32 %s16, 1
    %s22 = ssub.s32 %s16, 2
    %s23 = sadd.s32 %s16, 1
    %s24 = ssub.s32 %s16, %s23
    %p25 = scmp.eq.s32.totalorder %s24, 0
    %s27 = sadd.s32 %s26, 1
    %s28 = scalar_select %p25, %s26, %s27
    %p31 = pneg %p25
    %p32 = scmp.eq.s32.totalorder %s16, 1
    %p33 = por %p31, %p32
    %p34 = scmp.ne.s32.totalorder %s26, %s29
    %p35 = scmp.eq.s32.totalorder %s16, 0
    %p36 = por %p34, %p35
    %p37 = scmp.ne.s32.totalorder %s26, %s29
    %p38 = scmp.eq.s32.totalorder %s21, 1
    %p39 = por %p37, %p38
    %p40 = scmp.ne.s32.totalorder %s29, %s30
    %p41 = scmp.eq.s32.totalorder %s21, 0
    %p42 = por %p40, %p41
    %p43 = scmp.ne.s32.totalorder %s29, %s30
    %p44 = scmp.eq.s32.totalorder %s22, 1
    %p45 = por %p43, %p44
    %p47 = scmp.ne.s32.totalorder %s30, %s46
    %p48 = scmp.eq.s32.totalorder %s22, 0
    %p49 = por %p47, %p48
    %s50 = ssub.s32 %s16, %s23
    %p51 = scmp.eq.s32.totalorder %s50, 0
    %s53 = sadd.s32 %s52, 1
    %s54 = scalar_select %p51, %s52, %s53
    %p57 = pneg %p51
    %p58 = scmp.eq.s32.totalorder %s16, 1
    %p59 = por %p57, %p58
    %p60 = scmp.ne.s32.totalorder %s52, %s55
    %p61 = scmp.eq.s32.totalorder %s16, 0
    %p62 = por %p60, %p61
    %p63 = scmp.ne.s32.totalorder %s52, %s55
    %p64 = scmp.eq.s32.totalorder %s21, 1
    %p65 = por %p63, %p64
    %p66 = scmp.ne.s32.totalorder %s55, %s56
    %p67 = scmp.eq.s32.totalorder %s21, 0
    %p68 = por %p66, %p67
    %p69 = scmp.ne.s32.totalorder %s55, %s56
    %p70 = scmp.eq.s32.totalorder %s22, 1
    %p71 = por %p69, %p70
    %p73 = scmp.ne.s32.totalorder %s56, %s72
    %p74 = scmp.eq.s32.totalorder %s22, 0
    %p75 = por %p73, %p74
    %s76 = ssub.s32 %s16, %s23
    %p77 = scmp.eq.s32.totalorder %s76, 0
    %s79 = sadd.s32 %s78, 1
    %s80 = scalar_select %p77, %s78, %s79
    %p83 = pneg %p77
    %p84 = scmp.eq.s32.totalorder %s16, 1
    %p85 = por %p83, %p84
    %p86 = scmp.ne.s32.totalorder %s78, %s81
    %p87 = scmp.eq.s32.totalorder %s16, 0
    %p88 = por %p86, %p87
    %p89 = scmp.ne.s32.totalorder %s78, %s81
    %p90 = scmp.eq.s32.totalorder %s21, 1
    %p91 = por %p89, %p90
    %p92 = scmp.ne.s32.totalorder %s81, %s82
    %p93 = scmp.eq.s32.totalorder %s21, 0
    %p94 = por %p92, %p93
    %p95 = scmp.ne.s32.totalorder %s81, %s82
    %p96 = scmp.eq.s32.totalorder %s22, 1
    %p97 = por %p95, %p96
    %p99 = scmp.ne.s32.totalorder %s82, %s98
    %p100 = scmp.eq.s32.totalorder %s22, 0
    %p101 = por %p99, %p100
    %s102 = ssub.s32 %s16, %s23
    %p103 = scmp.eq.s32.totalorder %s102, 0
    %s105 = sadd.s32 %s104, 1
    %s106 = scalar_select %p103, %s104, %s105
    %p109 = pneg %p103
    %p110 = scmp.eq.s32.totalorder %s16, 1
    %p111 = por %p109, %p110
    %p112 = scmp.ne.s32.totalorder %s104, %s107
    %p113 = scmp.eq.s32.totalorder %s16, 0
    %p114 = por %p112, %p113
    %p115 = scmp.ne.s32.totalorder %s104, %s107
    %p116 = scmp.eq.s32.totalorder %s21, 1
    %p117 = por %p115, %p116
    %p118 = scmp.ne.s32.totalorder %s107, %s108
    %p119 = scmp.eq.s32.totalorder %s21, 0
    %p120 = por %p118, %p119
    %p121 = scmp.ne.s32.totalorder %s107, %s108
    %p122 = scmp.eq.s32.totalorder %s22, 1
    %p123 = por %p121, %p122
    %p125 = scmp.ne.s32.totalorder %s108, %s124
    %p126 = scmp.eq.s32.totalorder %s22, 0
    %p127 = por %p125, %p126
    %s129 = sadd.s32 %s128, 1
    %p132 = scmp.eq.s32.totalorder %s16, 1
    %p133 = scmp.ne.s32.totalorder %s128, %s130
    %p134 = scmp.eq.s32.totalorder %s16, 0
    %p135 = por %p133, %p134
    %p136 = scmp.ne.s32.totalorder %s128, %s130
    %p137 = scmp.eq.s32.totalorder %s21, 1
    %p138 = por %p136, %p137
    %p139 = scmp.ne.s32.totalorder %s130, %s131
    %p140 = scmp.eq.s32.totalorder %s21, 0
    %p141 = por %p139, %p140
    %p142 = scmp.ne.s32.totalorder %s130, %s131
    %p143 = scmp.eq.s32.totalorder %s22, 1
    %p144 = por %p142, %p143
    %p146 = scmp.ne.s32.totalorder %s131, %s145
    %p147 = scmp.eq.s32.totalorder %s22, 0
    %p148 = por %p146, %p147
    %s150 = sadd.s32 %s149, 1
    %p153 = scmp.eq.s32.totalorder %s16, 1
    %p154 = scmp.ne.s32.totalorder %s149, %s151
    %p155 = scmp.eq.s32.totalorder %s16, 0
    %p156 = por %p154, %p155
    %p157 = scmp.ne.s32.totalorder %s149, %s151
    %p158 = scmp.eq.s32.totalorder %s21, 1
    %p159 = por %p157, %p158
    %p160 = scmp.ne.s32.totalorder %s151, %s152
    %p161 = scmp.eq.s32.totalorder %s21, 0
    %p162 = por %p160, %p161
    %p163 = scmp.ne.s32.totalorder %s151, %s152
    %p164 = scmp.eq.s32.totalorder %s22, 1
    %p165 = por %p163, %p164
    %p167 = scmp.ne.s32.totalorder %s152, %s166
    %p168 = scmp.eq.s32.totalorder %s22, 0
    %p169 = por %p167, %p168
    %s171 = sadd.s32 %s170, 1
    %p174 = scmp.eq.s32.totalorder %s16, 1
    %p175 = scmp.ne.s32.totalorder %s170, %s172
    %p176 = scmp.eq.s32.totalorder %s16, 0
    %p177 = por %p175, %p176
    %p178 = scmp.ne.s32.totalorder %s170, %s172
    %p179 = scmp.eq.s32.totalorder %s21, 1
    %p180 = por %p178, %p179
    %p181 = scmp.ne.s32.totalorder %s172, %s173
    %p182 = scmp.eq.s32.totalorder %s21, 0
    %p183 = por %p181, %p182
    %p184 = scmp.ne.s32.totalorder %s172, %s173
    %p185 = scmp.eq.s32.totalorder %s22, 1
    %p186 = por %p184, %p185
    %p188 = scmp.ne.s32.totalorder %s173, %s187
    %p189 = scmp.eq.s32.totalorder %s22, 0
    %p190 = por %p188, %p189
    %s192 = sadd.s32 %s191, 1
    %p195 = scmp.eq.s32.totalorder %s16, 1
    %p196 = scmp.ne.s32.totalorder %s191, %s193
    %p197 = scmp.eq.s32.totalorder %s16, 0
    %p198 = por %p196, %p197
    %p199 = scmp.ne.s32.totalorder %s191, %s193
    %p200 = scmp.eq.s32.totalorder %s21, 1
    %p201 = por %p199, %p200
    %p202 = scmp.ne.s32.totalorder %s193, %s194
    %p203 = scmp.eq.s32.totalorder %s21, 0
    %p204 = por %p202, %p203
    %p205 = scmp.ne.s32.totalorder %s193, %s194
    %p206 = scmp.eq.s32.totalorder %s22, 1
    %p207 = por %p205, %p206
    %p209 = scmp.ne.s32.totalorder %s194, %s208
    %p210 = scmp.eq.s32.totalorder %s22, 0
    %p211 = por %p209, %p210
    %s213 = sadd.s32 %s212, 1
    %p216 = scmp.eq.s32.totalorder %s16, 1
    %p217 = scmp.ne.s32.totalorder %s212, %s214
    %p218 = scmp.eq.s32.totalorder %s16, 0
    %p219 = por %p217, %p218
    %p220 = scmp.ne.s32.totalorder %s212, %s214
    %p221 = scmp.eq.s32.totalorder %s21, 1
    %p222 = por %p220, %p221
    %p223 = scmp.ne.s32.totalorder %s214, %s215
    %p224 = scmp.eq.s32.totalorder %s21, 0
    %p225 = por %p223, %p224
    %p226 = scmp.ne.s32.totalorder %s214, %s215
    %p227 = scmp.eq.s32.totalorder %s22, 1
    %p228 = por %p226, %p227
    %p230 = scmp.ne.s32.totalorder %s215, %s229
    %p231 = scmp.eq.s32.totalorder %s22, 0
    %p232 = por %p230, %p231
    %s234 = sadd.s32 %s233, 1
    %p237 = scmp.eq.s32.totalorder %s16, 1
    %p238 = scmp.ne.s32.totalorder %s233, %s235
    %p239 = scmp.eq.s32.totalorder %s16, 0
    %p240 = por %p238, %p239
    %p241 = scmp.ne.s32.totalorder %s233, %s235
    %p242 = scmp.eq.s32.totalorder %s21, 1
    %p243 = por %p241, %p242
    %p244 = scmp.ne.s32.totalorder %s235, %s236
    %p245 = scmp.eq.s32.totalorder %s21, 0
    %p246 = por %p244, %p245
    %p247 = scmp.ne.s32.totalorder %s235, %s236
    %p248 = scmp.eq.s32.totalorder %s22, 1
    %p249 = por %p247, %p248
    %p251 = scmp.ne.s32.totalorder %s236, %s250
    %p252 = scmp.eq.s32.totalorder %s22, 0
    %p253 = por %p251, %p252
    %s254 = ssub.s32 %s16, %s23
    %p255 = scmp.eq.s32.totalorder %s254, 0
    %s257 = sadd.s32 %s256, 1
    %s258 = scalar_select %p255, %s256, %s257
    %p261 = pneg %p255
    %p262 = scmp.eq.s32.totalorder %s16, 1
    %p263 = por %p261, %p262
    %p264 = scmp.ne.s32.totalorder %s256, %s259
    %p265 = scmp.eq.s32.totalorder %s16, 0
    %p266 = por %p264, %p265
    %p267 = scmp.ne.s32.totalorder %s256, %s259
    %p268 = scmp.eq.s32.totalorder %s21, 1
    %p269 = por %p267, %p268
    %p270 = scmp.ne.s32.totalorder %s259, %s260
    %p271 = scmp.eq.s32.totalorder %s21, 0
    %p272 = por %p270, %p271
    %p273 = scmp.ne.s32.totalorder %s259, %s260
    %p274 = scmp.eq.s32.totalorder %s22, 1
    %p275 = por %p273, %p274
    %p277 = scmp.ne.s32.totalorder %s260, %s276
    %p278 = scmp.eq.s32.totalorder %s22, 0
    %p279 = por %p277, %p278
    %p280 = scmp.le.s32.totalorder 1, %s16
    %p281 = scmp.lt.s32.totalorder %s16, 3
    %p282 = pnand %p280, %p281
    %p283 = pneg %p282
    // Predicated region
    $region9: #{model_forward.10} parent=5 // pred_check
      _
    $region10: #{model_forward.10} parent=5 // pred_check_branch
      %285 = sbr.rel (%p282) target = $region12
    $region11: #{model_forward.10} parent=5 // pred_region
      %s286 = ssub.s32 %s16, 1
      // Predicated region
      $region13: #{model_forward.10} parent=11 // pred_check
        %p287 = pneg %p141
      $region14: #{model_forward.10} parent=11 // pred_check_branch
        %289 = sbr.rel (%p287) target = $region16
      $region15: #{model_forward.10} parent=11 // pred_region
        _
      $region16: #{model_forward.10} parent=11 // pred_fallthru
        _
      // Predicated region
      $region17: #{model_forward.10} parent=11 // pred_check
        %p290 = pneg %p162
      $region18: #{model_forward.10} parent=11 // pred_check_branch
        %292 = sbr.rel (%p290) target = $region20
      $region19: #{model_forward.10} parent=11 // pred_region
        _
      $region20: #{model_forward.10} parent=11 // pred_fallthru
        _
      // Predicated region
      $region21: #{model_forward.10} parent=11 // pred_check
        %p293 = pneg %p183
      $region22: #{model_forward.10} parent=11 // pred_check_branch
        %295 = sbr.rel (%p293) target = $region24
      $region23: #{model_forward.10} parent=11 // pred_region
        _
      $region24: #{model_forward.10} parent=11 // pred_fallthru
        _
      // Predicated region
      $region25: #{model_forward.10} parent=11 // pred_check
        %p296 = pneg %p204
      $region26: #{model_forward.10} parent=11 // pred_check_branch
        %298 = sbr.rel (%p296) target = $region28
      $region27: #{model_forward.10} parent=11 // pred_region
        _
      $region28: #{model_forward.10} parent=11 // pred_fallthru
        _
      // Predicated region
      $region29: #{model_forward.10} parent=11 // pred_check
        %p299 = pneg %p225
      $region30: #{model_forward.10} parent=11 // pred_check_branch
        %301 = sbr.rel (%p299) target = $region32
      $region31: #{model_forward.10} parent=11 // pred_region
        _
      $region32: #{model_forward.10} parent=11 // pred_fallthru
        _
      // Predicated region
      $region33: #{model_forward.10} parent=11 // pred_check
        %p302 = pneg %p246
      $region34: #{model_forward.10} parent=11 // pred_check_branch
        %304 = sbr.rel (%p302) target = $region36
      $region35: #{model_forward.10} parent=11 // pred_region
        _
      $region36: #{model_forward.10} parent=11 // pred_fallthru
        _
    $region12: #{model_forward.10} parent=5 // pred_fallthru
      _
    %p305 = scmp.lt.s32.totalorder %s16, 2
    // Predicated region
    $region37: #{model_forward.10} parent=5 // pred_check
      %p306 = pneg %p305
    $region38: #{model_forward.10} parent=5 // pred_check_branch
      %308 = sbr.rel (%p306) target = $region40
    $region39: #{model_forward.10} parent=5 // pred_region
      // Predicated region
      $region41: #{model_forward.10} parent=39 // pred_check
        %p309 = pneg %p36
      $region42: #{model_forward.10} parent=39 // pred_check_branch
        %311 = sbr.rel (%p309) target = $region44
      $region43: #{model_forward.10} parent=39 // pred_region
        %s312 = smul.u32 2, %s16
        %p313 = scmp.lt.s32.totalorder %s312, 3
        %s314 = scalar_select %p313, %s312, 3
        %s315 = smul.addr %s314, 4
        %s316 = smul.addr %s315, 4
        %s317 = scalar_lea.vmem %s0, %s316
        %s318 = smul.u32 2, %s16
      $region44: #{model_forward.10} parent=39 // pred_fallthru
        _
      // Predicated region
      $region45: #{model_forward.10} parent=39 // pred_check
        %p319 = pneg %p62
      $region46: #{model_forward.10} parent=39 // pred_check_branch
        %321 = sbr.rel (%p319) target = $region48
      $region47: #{model_forward.10} parent=39 // pred_region
        %s322 = smul.u32 2, %s16
        %p323 = scmp.lt.s32.totalorder %s322, 3
        %s324 = scalar_select %p323, %s322, 3
        %s325 = smul.addr %s324, 4
        %s326 = smul.addr %s325, 4
        %s327 = scalar_lea.vmem %s1, %s326
        %s328 = smul.u32 2, %s16
      $region48: #{model_forward.10} parent=39 // pred_fallthru
        _
      // Predicated region
      $region49: #{model_forward.10} parent=39 // pred_check
        %p329 = pneg %p88
      $region50: #{model_forward.10} parent=39 // pred_check_branch
        %331 = sbr.rel (%p329) target = $region52
      $region51: #{model_forward.10} parent=39 // pred_region
        %s332 = smul.u32 2, %s16
        %p333 = scmp.lt.s32.totalorder %s332, 3
        %s334 = scalar_select %p333, %s332, 3
        %s335 = smul.addr %s334, 2
        %s336 = smul.addr %s335, 4
        %s337 = scalar_lea.vmem %s2, %s336
        %s338 = smul.u32 2, %s16
      $region52: #{model_forward.10} parent=39 // pred_fallthru
        _
      // Predicated region
      $region53: #{model_forward.10} parent=39 // pred_check
        %p339 = pneg %p114
      $region54: #{model_forward.10} parent=39 // pred_check_branch
        %341 = sbr.rel (%p339) target = $region56
      $region55: #{model_forward.10} parent=39 // pred_region
        %s342 = smul.u32 2, %s16
        %p343 = scmp.lt.s32.totalorder %s342, 3
        %s344 = scalar_select %p343, %s342, 3
        %s345 = smul.addr %s344, 2
        %s346 = smul.addr %s345, 4
        %s347 = scalar_lea.vmem %s3, %s346
        %s348 = smul.u32 2, %s16
      $region56: #{model_forward.10} parent=39 // pred_fallthru
        _
    $region40: #{model_forward.10} parent=5 // pred_fallthru
      _
    %p349 = scmp.le.s32.totalorder 1, %s16
    %p350 = scmp.lt.s32.totalorder %s16, 3
    %p351 = pnand %p349, %p350
    %p352 = pneg %p351
    // Predicated region
    $region57: #{model_forward.10} parent=5 // pred_check
      _
    $region58: #{model_forward.10} parent=5 // pred_check_branch
      %354 = sbr.rel (%p351) target = $region60
    $region59: #{model_forward.10} parent=5 // pred_region
      %s355 = ssub.s32 %s16, 1
      %s356 = smul.u32 2, %s21
      %p357 = scmp.lt.s32.totalorder %s356, 3
      %s358 = scalar_select %p357, %s356, 3
      %s359 = smul.addr %s358, 4
      %s360 = smul.addr %s359, 4
      %s361 = scalar_lea.vmem %s0, %s360
      %p362 = pneg %p42
      %p363 = pneg %p39
      %s364 = smul.u32 2, %s21
      %p365 = scmp.lt.s32.totalorder %s364, 3
      %s366 = scalar_select %p365, %s364, 3
      %s367 = smul.addr %s366, 4
      %s368 = smul.addr %s367, 4
      %s369 = scalar_lea.vmem %s1, %s368
      %p370 = pneg %p68
      %p371 = pneg %p65
      %s372 = smul.u32 2, %s21
      %p373 = scmp.lt.s32.totalorder %s372, 3
      %s374 = scalar_select %p373, %s372, 3
      %s375 = smul.addr %s374, 2
      %s376 = smul.addr %s375, 4
      %s377 = scalar_lea.vmem %s2, %s376
      %p378 = pneg %p94
      %p379 = pneg %p91
      %s380 = smul.u32 2, %s21
      %p381 = scmp.lt.s32.totalorder %s380, 3
      %s382 = scalar_select %p381, %s380, 3
      %s383 = smul.addr %s382, 2
      %s384 = smul.addr %s383, 4
      %s385 = scalar_lea.vmem %s3, %s384
      %p386 = pneg %p120
      %p387 = pneg %p117
      %p388 = pneg %p141
      %p389 = pneg %p138
      %p390 = pneg %p162
      %p391 = pneg %p159
      %p392 = pneg %p183
      %p393 = pneg %p180
      %p394 = pneg %p204
      %p395 = pneg %p201
      %p396 = pneg %p225
      %p397 = pneg %p222
      %p398 = pneg %p246
      %p399 = pneg %p243
      %p400 = pneg %p272
      %p401 = pneg %p269
      %s402 = smul.u32 2, %s21
      %p403 = scmp.lt.s32.totalorder %s402, 3
      %s404 = scalar_select %p403, %s402, 3
      %s405 = smul.addr %s404, 2
      %s406 = smul.addr %s405, 4
      %s407 = scalar_lea.vmem %s10, %s406
      %s408 = smul.u32 2, %s21
      %p409 = scmp.lt.s32.totalorder %s408, 3
      %s410 = scalar_select %p409, %s408, 3
      %s411 = smul.addr %s410, 4
      %s412 = smul.addr %s411, 4
      %s413 = scalar_lea.vmem %s0, %s412
      %s414 = smul.u32 2, %s21
      %s415 = smul.u32 2, %s21
      %p416 = scmp.lt.s32.totalorder %s415, 3
      %s417 = scalar_select %p416, %s415, 3
      %s418 = smul.addr %s417, 4
      %s419 = smul.addr %s418, 4
      %s420 = scalar_lea.vmem %s1, %s419
      %s421 = smul.u32 2, %s21
      %s422 = smul.u32 2, %s21
      %p423 = scmp.lt.s32.totalorder %s422, 3
      %s424 = scalar_select %p423, %s422, 3
      %s425 = smul.addr %s424, 2
      %s426 = smul.addr %s425, 4
      %s427 = scalar_lea.vmem %s2, %s426
      %s428 = smul.u32 2, %s21
      %s429 = smul.u32 2, %s21
      %p430 = scmp.lt.s32.totalorder %s429, 3
      %s431 = scalar_select %p430, %s429, 3
      %s432 = smul.addr %s431, 2
      %s433 = smul.addr %s432, 4
      %s434 = scalar_lea.vmem %s3, %s433
      %s435 = smul.u32 2, %s21
      %s436 = smul.u32 2, %s21
      %p437 = scmp.lt.s32.totalorder %s436, 3
      %s438 = scalar_select %p437, %s436, 3
      %s439 = smul.addr %s438, 2
      %s440 = smul.addr %s439, 4
      %s441 = scalar_lea.vmem %s10, %s440
      %s442 = smul.u32 2, %s21
      %v444 = vld [vmem:[%s413] sm:$0xff]
      %v445 = vld [vmem:[%s413 + $0x8] sm:$0xff]
      %v446 = vld [vmem:[%s413 + $0x10] sm:$0xff]
      %v447 = vld [vmem:[%s413 + $0x18] sm:$0xff]
      %v448 = vmax.bf16 %v444, 0
      %v449 = vmax.bf16 %v445, 0
      %v450 = vmax.bf16 %v446, 0
      %v451 = vmax.bf16 %v447, 0
      %v452 = vld [vmem:[%s4] sm:$0xf]
      %v453 = vld [vmem:[%s4 + $0x4] sm:$0xf]
      %v454 = vld [vmem:[%s4 + $0x8] sm:$0xf]
      %v455 = vld [vmem:[%s4 + $0xc] sm:$0xf]
      %v456 = vld [vmem:[%s4 + $0x10] sm:$0xf]
      %v457 = vld [vmem:[%s4 + $0x14] sm:$0xf]
      %v458 = vld [vmem:[%s4 + $0x18] sm:$0xf]
      %v459 = vld [vmem:[%s4 + $0x1c] sm:$0xf]
      %v460 = vld [vmem:[%s4 + $0x20] sm:$0xf]
      %v461 = vld [vmem:[%s4 + $0x24] sm:$0xf]
      %v462 = vld [vmem:[%s4 + $0x28] sm:$0xf]
      %v463 = vld [vmem:[%s4 + $0x2c] sm:$0xf]
      %v464 = vld [vmem:[%s4 + $0x30] sm:$0xf]
      %v465 = vld [vmem:[%s4 + $0x34] sm:$0xf]
      %v466 = vld [vmem:[%s4 + $0x38] sm:$0xf]
      %v467 = vld [vmem:[%s4 + $0x3c] sm:$0xf]
      %v468 = vld [vmem:[%s4 + $0x40] sm:$0xf]
      %v469 = vld [vmem:[%s4 + $0x44] sm:$0xf]
      %v470 = vld [vmem:[%s4 + $0x48] sm:$0xf]
      %v471 = vld [vmem:[%s4 + $0x4c] sm:$0xf]
      %v472 = vld [vmem:[%s4 + $0x50] sm:$0xf]
      %v473 = vld [vmem:[%s4 + $0x54] sm:$0xf]
      %v474 = vld [vmem:[%s4 + $0x58] sm:$0xf]
      %v475 = vld [vmem:[%s4 + $0x5c] sm:$0xf]
      %v476 = vld [vmem:[%s4 + $0x60] sm:$0xf]
      %v477 = vld [vmem:[%s4 + $0x64] sm:$0xf]
      %v478 = vld [vmem:[%s4 + $0x68] sm:$0xf]
      %v479 = vld [vmem:[%s4 + $0x6c] sm:$0xf]
      %v480 = vld [vmem:[%s4 + $0x70] sm:$0xf]
      %v481 = vld [vmem:[%s4 + $0x74] sm:$0xf]
      %v482 = vld [vmem:[%s4 + $0x78] sm:$0xf]
      %v483 = vld [vmem:[%s4 + $0x7c] sm:$0xf]
      %v484 = vld [vmem:[%s4 + $0x80] sm:$0xf]
      %v485 = vld [vmem:[%s4 + $0x84] sm:$0xf]
      %v486 = vld [vmem:[%s4 + $0x88] sm:$0xf]
      %v487 = vld [vmem:[%s4 + $0x8c] sm:$0xf]
      %v488 = vld [vmem:[%s4 + $0x90] sm:$0xf]
      %v489 = vld [vmem:[%s4 + $0x94] sm:$0xf]
      %v490 = vld [vmem:[%s4 + $0x98] sm:$0xf]
      %v491 = vld [vmem:[%s4 + $0x9c] sm:$0xf]
      %v492 = vld [vmem:[%s4 + $0xa0] sm:$0xf]
      %v493 = vld [vmem:[%s4 + $0xa4] sm:$0xf]
      %v494 = vld [vmem:[%s4 + $0xa8] sm:$0xf]
      %v495 = vld [vmem:[%s4 + $0xac] sm:$0xf]
      %v496 = vld [vmem:[%s4 + $0xb0] sm:$0xf]
      %v497 = vld [vmem:[%s4 + $0xb4] sm:$0xf]
      %v498 = vld [vmem:[%s4 + $0xb8] sm:$0xf]
      %v499 = vld [vmem:[%s4 + $0xbc] sm:$0xf]
      %v500 = vld [vmem:[%s4 + $0xc0] sm:$0xf]
      %v501 = vld [vmem:[%s4 + $0xc4] sm:$0xf]
      %v502 = vld [vmem:[%s4 + $0xc8] sm:$0xf]
      %v503 = vld [vmem:[%s4 + $0xcc] sm:$0xf]
      %v504 = vld [vmem:[%s4 + $0xd0] sm:$0xf]
      %v505 = vld [vmem:[%s4 + $0xd4] sm:$0xf]
      %v506 = vld [vmem:[%s4 + $0xd8] sm:$0xf]
      %v507 = vld [vmem:[%s4 + $0xdc] sm:$0xf]
      %v508 = vld [vmem:[%s4 + $0xe0] sm:$0xf]
      %v509 = vld [vmem:[%s4 + $0xe4] sm:$0xf]
      %v510 = vld [vmem:[%s4 + $0xe8] sm:$0xf]
      %v511 = vld [vmem:[%s4 + $0xec] sm:$0xf]
      %v512 = vld [vmem:[%s4 + $0xf0] sm:$0xf]
      %v513 = vld [vmem:[%s4 + $0xf4] sm:$0xf]
      %v514 = vld [vmem:[%s4 + $0xf8] sm:$0xf]
      %v515 = vld [vmem:[%s4 + $0xfc] sm:$0xf]
      %v520 = vunpack.c.l.b16 %v448
      %v521 = vunpack.c.h.b16 %v448
      %v522 = vunpack.c.l.b16 %v449
      %v523 = vunpack.c.h.b16 %v449
      %v524 = vunpack.c.l.b16 %v450
      %v525 = vunpack.c.h.b16 %v450
      %v526 = vunpack.c.l.b16 %v451
      %v527 = vunpack.c.h.b16 %v451
      %v528 = vpack.c.b16 %v524, %v520
      %v529 = vpack.c.b16 %v525, %v521
      %v530 = vpack.c.b16 %v526, %v522
      %v531 = vpack.c.b16 %v527, %v523
      %v600 = vunpack.c.l.b16 %v452
      %v601 = vunpack.c.l.b16 %v453
      %v602 = vunpack.c.l.b16 %v454
      %v603 = vunpack.c.l.b16 %v455
      %v604 = vunpack.c.l.b16 %v456
      %v605 = vunpack.c.l.b16 %v457
      %v606 = vunpack.c.l.b16 %v458
      %v607 = vunpack.c.l.b16 %v459
      %v608 = vunpack.c.l.b16 %v460
      %v609 = vunpack.c.l.b16 %v461
      %v610 = vunpack.c.l.b16 %v462
      %v611 = vunpack.c.l.b16 %v463
      %v612 = vunpack.c.l.b16 %v464
      %v613 = vunpack.c.l.b16 %v465
      %v614 = vunpack.c.l.b16 %v466
      %v615 = vunpack.c.l.b16 %v467
      %v616 = vunpack.c.l.b16 %v468
      %v617 = vunpack.c.l.b16 %v469
      %v618 = vunpack.c.l.b16 %v470
      %v619 = vunpack.c.l.b16 %v471
      %v620 = vunpack.c.l.b16 %v472
      %v621 = vunpack.c.l.b16 %v473
      %v622 = vunpack.c.l.b16 %v474
      %v623 = vunpack.c.l.b16 %v475
      %v624 = vunpack.c.l.b16 %v476
      %v625 = vunpack.c.l.b16 %v477
      %v626 = vunpack.c.l.b16 %v478
      %v627 = vunpack.c.l.b16 %v479
      %v628 = vunpack.c.l.b16 %v480
      %v629 = vunpack.c.l.b16 %v481
      %v630 = vunpack.c.l.b16 %v482
      %v631 = vunpack.c.l.b16 %v483
      %v632 = vunpack.c.l.b16 %v484
      %v633 = vunpack.c.l.b16 %v485
      %v634 = vunpack.c.l.b16 %v486
      %v635 = vunpack.c.l.b16 %v487
      %v636 = vunpack.c.l.b16 %v488
      %v637 = vunpack.c.l.b16 %v489
      %v638 = vunpack.c.l.b16 %v490
      %v639 = vunpack.c.l.b16 %v491
      %v640 = vunpack.c.l.b16 %v492
      %v641 = vunpack.c.l.b16 %v493
      %v642 = vunpack.c.l.b16 %v494
      %v643 = vunpack.c.l.b16 %v495
      %v644 = vunpack.c.l.b16 %v496
      %v645 = vunpack.c.l.b16 %v497
      %v646 = vunpack.c.l.b16 %v498
      %v647 = vunpack.c.l.b16 %v499
      %v648 = vunpack.c.l.b16 %v500
      %v649 = vunpack.c.l.b16 %v501
      %v650 = vunpack.c.l.b16 %v502
      %v651 = vunpack.c.l.b16 %v503
      %v652 = vunpack.c.l.b16 %v504
      %v653 = vunpack.c.l.b16 %v505
      %v654 = vunpack.c.l.b16 %v506
      %v655 = vunpack.c.l.b16 %v507
      %v656 = vunpack.c.l.b16 %v508
      %v657 = vunpack.c.l.b16 %v509
      %v658 = vunpack.c.l.b16 %v510
      %v659 = vunpack.c.l.b16 %v511
      %v660 = vunpack.c.l.b16 %v512
      %v661 = vunpack.c.l.b16 %v513
      %v662 = vunpack.c.l.b16 %v514
      %v663 = vunpack.c.l.b16 %v515
      %v664 = vpack.c.b16 %v601, %v600
      %v665 = vpack.c.b16 %v603, %v602
      %v666 = vpack.c.b16 %v605, %v604
      %v667 = vpack.c.b16 %v607, %v606
      %v668 = vpack.c.b16 %v609, %v608
      %v669 = vpack.c.b16 %v611, %v610
      %v670 = vpack.c.b16 %v613, %v612
      %v671 = vpack.c.b16 %v615, %v614
      %v672 = vpack.c.b16 %v617, %v616
      %v673 = vpack.c.b16 %v619, %v618
      %v674 = vpack.c.b16 %v621, %v620
      %v675 = vpack.c.b16 %v623, %v622
      %v676 = vpack.c.b16 %v625, %v624
      %v677 = vpack.c.b16 %v627, %v626
      %v678 = vpack.c.b16 %v629, %v628
      %v679 = vpack.c.b16 %v631, %v630
      %v680 = vpack.c.b16 %v633, %v632
      %v681 = vpack.c.b16 %v635, %v634
      %v682 = vpack.c.b16 %v637, %v636
      %v683 = vpack.c.b16 %v639, %v638
      %v684 = vpack.c.b16 %v641, %v640
      %v685 = vpack.c.b16 %v643, %v642
      %v686 = vpack.c.b16 %v645, %v644
      %v687 = vpack.c.b16 %v647, %v646
      %v688 = vpack.c.b16 %v649, %v648
      %v689 = vpack.c.b16 %v651, %v650
      %v690 = vpack.c.b16 %v653, %v652
      %v691 = vpack.c.b16 %v655, %v654
      %v692 = vpack.c.b16 %v657, %v656
      %v693 = vpack.c.b16 %v659, %v658
      %v694 = vpack.c.b16 %v661, %v660
      %v695 = vpack.c.b16 %v663, %v662
      %728 = vmatprep.subr.bf16.mxu0 0
      %729 = vmatpush1.bf16.msra.mxu0 %v664
      %730 = vmatprep.subr.bf16.mxu0 0
      %731 = vmatpush1.bf16.msra.mxu0 %v665
      %732 = vmatprep.subr.bf16.mxu0 0
      %733 = vmatpush1.bf16.msra.mxu0 %v666
      %734 = vmatprep.subr.bf16.mxu0 0
      %735 = vmatpush1.bf16.msra.mxu0 %v667
      %736 = vmatprep.subr.bf16.mxu0 0
      %737 = vmatpush1.bf16.msra.mxu0 %v668
      %738 = vmatprep.subr.bf16.mxu0 0
      %739 = vmatpush1.bf16.msra.mxu0 %v669
      %740 = vmatprep.subr.bf16.mxu0 0
      %741 = vmatpush1.bf16.msra.mxu0 %v670
      %742 = vmatprep.subr.bf16.mxu0 0
      %743 = vmatpush1.bf16.msra.mxu0 %v671
      %744 = vmatprep.subr.bf16.mxu0 0
      %745 = vmatpush1.bf16.msra.mxu0 %v672
      %746 = vmatprep.subr.bf16.mxu0 0
      %747 = vmatpush1.bf16.msra.mxu0 %v673
      %748 = vmatprep.subr.bf16.mxu0 0
      %749 = vmatpush1.bf16.msra.mxu0 %v674
      %750 = vmatprep.subr.bf16.mxu0 0
      %751 = vmatpush1.bf16.msra.mxu0 %v675
      %752 = vmatprep.subr.bf16.mxu0 0
      %753 = vmatpush1.bf16.msra.mxu0 %v676
      %754 = vmatprep.subr.bf16.mxu0 0
      %755 = vmatpush1.bf16.msra.mxu0 %v677
      %756 = vmatprep.subr.bf16.mxu0 0
      %757 = vmatpush1.bf16.msra.mxu0 %v678
      %758 = vmatprep.subr.bf16.mxu0 0
      %759 = vmatpush1.bf16.msra.mxu0 %v679
      %760 = vmatprep.mubr.bf16.mxu0 %v529
      %761 = vmatmul.mubr.bf16.gmra.mrb[0].mxu0 %v528
      %v762 = vpop.f32.mrb[0].mxu0
      %v763 = vadd.f32 0.0, %v762
      %v764 = vpop.f32.mrb[0].mxu0
      %v765 = vpop.f32.mrb[0].mxu0
      %v766 = vadd.f32 0.0, %v765
      %v767 = vpop.f32.mrb[0].mxu0
      %768 = vdwg.mxu0
      %769 = vmatprep.subr.bf16.mxu0 0
      %770 = vmatpush1.bf16.msra.mxu0 %v680
      %771 = vmatprep.subr.bf16.mxu0 0
      %772 = vmatpush1.bf16.msra.mxu0 %v681
      %773 = vmatprep.subr.bf16.mxu0 0
      %774 = vmatpush1.bf16.msra.mxu0 %v682
      %775 = vmatprep.subr.bf16.mxu0 0
      %776 = vmatpush1.bf16.msra.mxu0 %v683
      %777 = vmatprep.subr.bf16.mxu0 0
      %778 = vmatpush1.bf16.msra.mxu0 %v684
      %779 = vmatprep.subr.bf16.mxu0 0
      %780 = vmatpush1.bf16.msra.mxu0 %v685
      %781 = vmatprep.subr.bf16.mxu0 0
      %782 = vmatpush1.bf16.msra.mxu0 %v686
      %783 = vmatprep.subr.bf16.mxu0 0
      %784 = vmatpush1.bf16.msra.mxu0 %v687
      %785 = vmatprep.subr.bf16.mxu0 0
      %786 = vmatpush1.bf16.msra.mxu0 %v688
      %787 = vmatprep.subr.bf16.mxu0 0
      %788 = vmatpush1.bf16.msra.mxu0 %v689
      %789 = vmatprep.subr.bf16.mxu0 0
      %790 = vmatpush1.bf16.msra.mxu0 %v690
      %791 = vmatprep.subr.bf16.mxu0 0
      %792 = vmatpush1.bf16.msra.mxu0 %v691
      %793 = vmatprep.subr.bf16.mxu0 0
      %794 = vmatpush1.bf16.msra.mxu0 %v692
      %795 = vmatprep.subr.bf16.mxu0 0
      %796 = vmatpush1.bf16.msra.mxu0 %v693
      %797 = vmatprep.subr.bf16.mxu0 0
      %798 = vmatpush1.bf16.msra.mxu0 %v694
      %799 = vmatprep.subr.bf16.mxu0 0
      %800 = vmatpush1.bf16.msra.mxu0 %v695
      %801 = vmatprep.mubr.bf16.mxu0 %v531
      %802 = vmatmul.mubr.bf16.gmra.mrb[0].mxu0 %v530
      %v803 = vpop.f32.mrb[0].mxu0
      %v804 = vadd.f32 %v763, %v803
      %v805 = vpop.f32.mrb[0].mxu0
      %v806 = vpop.f32.mrb[0].mxu0
      %v807 = vadd.f32 %v766, %v806
      %v808 = vpop.f32.mrb[0].mxu0
      %809 = vdwg.mxu0
      %v810 = vld [vmem:[%s420] sm:$0xff]
      %v811 = vld [vmem:[%s420 + $0x8] sm:$0xff]
      %v812 = vld [vmem:[%s420 + $0x10] sm:$0xff]
      %v813 = vld [vmem:[%s420 + $0x18] sm:$0xff]
      %v814 = vmax.bf16 %v810, 0
      %v815 = vmax.bf16 %v811, 0
      %v816 = vmax.bf16 %v812, 0
      %v817 = vmax.bf16 %v813, 0
      %v822 = vunpack.c.l.b16 %v814
      %v823 = vunpack.c.h.b16 %v814
      %v824 = vunpack.c.l.b16 %v815
      %v825 = vunpack.c.h.b16 %v815
      %v826 = vunpack.c.l.b16 %v816
      %v827 = vunpack.c.h.b16 %v816
      %v828 = vunpack.c.l.b16 %v817
      %v829 = vunpack.c.h.b16 %v817
      %v830 = vpack.c.b16 %v826, %v822
      %v831 = vpack.c.b16 %v827, %v823
      %v832 = vpack.c.b16 %v828, %v824
      %v833 = vpack.c.b16 %v829, %v825
      %838 = vmatprep.subr.bf16.mxu0 0
      %839 = vmatpush1.bf16.msra.mxu0 %v664
      %840 = vmatprep.subr.bf16.mxu0 0
      %841 = vmatpush1.bf16.msra.mxu0 %v665
      %842 = vmatprep.subr.bf16.mxu0 0
      %843 = vmatpush1.bf16.msra.mxu0 %v666
      %844 = vmatprep.subr.bf16.mxu0 0
      %845 = vmatpush1.bf16.msra.mxu0 %v667
      %846 = vmatprep.subr.bf16.mxu0 0
      %847 = vmatpush1.bf16.msra.mxu0 %v668
      %848 = vmatprep.subr.bf16.mxu0 0
      %849 = vmatpush1.bf16.msra.mxu0 %v669
      %850 = vmatprep.subr.bf16.mxu0 0
      %851 = vmatpush1.bf16.msra.mxu0 %v670
      %852 = vmatprep.subr.bf16.mxu0 0
      %853 = vmatpush1.bf16.msra.mxu0 %v671
      %854 = vmatprep.subr.bf16.mxu0 0
      %855 = vmatpush1.bf16.msra.mxu0 %v672
      %856 = vmatprep.subr.bf16.mxu0 0
      %857 = vmatpush1.bf16.msra.mxu0 %v673
      %858 = vmatprep.subr.bf16.mxu0 0
      %859 = vmatpush1.bf16.msra.mxu0 %v674
      %860 = vmatprep.subr.bf16.mxu0 0
      %861 = vmatpush1.bf16.msra.mxu0 %v675
      %862 = vmatprep.subr.bf16.mxu0 0
      %863 = vmatpush1.bf16.msra.mxu0 %v676
      %864 = vmatprep.subr.bf16.mxu0 0
      %865 = vmatpush1.bf16.msra.mxu0 %v677
      %866 = vmatprep.subr.bf16.mxu0 0
      %867 = vmatpush1.bf16.msra.mxu0 %v678
      %868 = vmatprep.subr.bf16.mxu0 0
      %869 = vmatpush1.bf16.msra.mxu0 %v679
      %870 = vmatprep.mubr.bf16.mxu0 %v831
      %871 = vmatmul.mubr.bf16.gmra.mrb[0].mxu0 %v830
      %v872 = vpop.f32.mrb[0].mxu0
      %v873 = vadd.f32 0.0, %v872
      %v874 = vpop.f32.mrb[0].mxu0
      %v875 = vpop.f32.mrb[0].mxu0
      %v876 = vadd.f32 0.0, %v875
      %v877 = vpop.f32.mrb[0].mxu0
      %878 = vdwg.mxu0
      %879 = vmatprep.subr.bf16.mxu0 0
      %880 = vmatpush1.bf16.msra.mxu0 %v680
      %881 = vmatprep.subr.bf16.mxu0 0
      %882 = vmatpush1.bf16.msra.mxu0 %v681
      %883 = vmatprep.subr.bf16.mxu0 0
      %884 = vmatpush1.bf16.msra.mxu0 %v682
      %885 = vmatprep.subr.bf16.mxu0 0
      %886 = vmatpush1.bf16.msra.mxu0 %v683
      %887 = vmatprep.subr.bf16.mxu0 0
      %888 = vmatpush1.bf16.msra.mxu0 %v684
      %889 = vmatprep.subr.bf16.mxu0 0
      %890 = vmatpush1.bf16.msra.mxu0 %v685
      %891 = vmatprep.subr.bf16.mxu0 0
      %892 = vmatpush1.bf16.msra.mxu0 %v686
      %893 = vmatprep.subr.bf16.mxu0 0
      %894 = vmatpush1.bf16.msra.mxu0 %v687
      %895 = vmatprep.subr.bf16.mxu0 0
      %896 = vmatpush1.bf16.msra.mxu0 %v688
      %897 = vmatprep.subr.bf16.mxu0 0
      %898 = vmatpush1.bf16.msra.mxu0 %v689
      %899 = vmatprep.subr.bf16.mxu0 0
      %900 = vmatpush1.bf16.msra.mxu0 %v690
      %901 = vmatprep.subr.bf16.mxu0 0
      %902 = vmatpush1.bf16.msra.mxu0 %v691
      %903 = vmatprep.subr.bf16.mxu0 0
      %904 = vmatpush1.bf16.msra.mxu0 %v692
      %905 = vmatprep.subr.bf16.mxu0 0
      %906 = vmatpush1.bf16.msra.mxu0 %v693
      %907 = vmatprep.subr.bf16.mxu0 0
      %908 = vmatpush1.bf16.msra.mxu0 %v694
      %909 = vmatprep.subr.bf16.mxu0 0
      %910 = vmatpush1.bf16.msra.mxu0 %v695
      %911 = vmatprep.mubr.bf16.mxu0 %v833
      %912 = vmatmul.mubr.bf16.gmra.mrb[0].mxu0 %v832
      %v913 = vpop.f32.mrb[0].mxu0
      %v914 = vadd.f32 %v873, %v913
      %v915 = vpop.f32.mrb[0].mxu0
      %v916 = vpop.f32.mrb[0].mxu0
      %v917 = vadd.f32 %v876, %v916
      %v918 = vpop.f32.mrb[0].mxu0
      %919 = vdwg.mxu0
      %v920 = vld [vmem:[%s427] sm:$0xff]
      %v921 = vld [vmem:[%s427 + $0x8] sm:$0xff]
      %v922 = vmax.bf16 %v920, 0
      %v923 = vmax.bf16 %v921, 0
      %v924 = vld [vmem:[%s5] sm:$0xf]
      %v925 = vld [vmem:[%s5 + $0x4] sm:$0xf]
      %v926 = vld [vmem:[%s5 + $0x8] sm:$0xf]
      %v927 = vld [vmem:[%s5 + $0xc] sm:$0xf]
      %v928 = vld [vmem:[%s5 + $0x10] sm:$0xf]
      %v929 = vld [vmem:[%s5 + $0x14] sm:$0xf]
      %v930 = vld [vmem:[%s5 + $0x18] sm:$0xf]
      %v931 = vld [vmem:[%s5 + $0x1c] sm:$0xf]
      %v932 = vld [vmem:[%s5 + $0x20] sm:$0xf]
      %v933 = vld [vmem:[%s5 + $0x24] sm:$0xf]
      %v934 = vld [vmem:[%s5 + $0x28] sm:$0xf]
      %v935 = vld [vmem:[%s5 + $0x2c] sm:$0xf]
      %v936 = vld [vmem:[%s5 + $0x30] sm:$0xf]
      %v937 = vld [vmem:[%s5 + $0x34] sm:$0xf]
      %v938 = vld [vmem:[%s5 + $0x38] sm:$0xf]
      %v939 = vld [vmem:[%s5 + $0x3c] sm:$0xf]
      %v940 = vld [vmem:[%s5 + $0x40] sm:$0xf]
      %v941 = vld [vmem:[%s5 + $0x44] sm:$0xf]
      %v942 = vld [vmem:[%s5 + $0x48] sm:$0xf]
      %v943 = vld [vmem:[%s5 + $0x4c] sm:$0xf]
      %v944 = vld [vmem:[%s5 + $0x50] sm:$0xf]
      %v945 = vld [vmem:[%s5 + $0x54] sm:$0xf]
      %v946 = vld [vmem:[%s5 + $0x58] sm:$0xf]
      %v947 = vld [vmem:[%s5 + $0x5c] sm:$0xf]
      %v948 = vld [vmem:[%s5 + $0x60] sm:$0xf]
      %v949 = vld [vmem:[%s5 + $0x64] sm:$0xf]
      %v950 = vld [vmem:[%s5 + $0x68] sm:$0xf]
      %v951 = vld [vmem:[%s5 + $0x6c] sm:$0xf]
      %v952 = vld [vmem:[%s5 + $0x70] sm:$0xf]
      %v953 = vld [vmem:[%s5 + $0x74] sm:$0xf]
      %v954 = vld [vmem:[%s5 + $0x78] sm:$0xf]
      %v955 = vld [vmem:[%s5 + $0x7c] sm:$0xf]
      %v958 = vunpack.c.l.b16 %v922
      %v959 = vunpack.c.h.b16 %v922
      %v960 = vunpack.c.l.b16 %v923
      %v961 = vunpack.c.h.b16 %v923
      %v962 = vpack.c.b16 %v960, %v958
      %v963 = vpack.c.b16 %v961, %v959
      %v998 = vunpack.c.l.b16 %v924
      %v999 = vunpack.c.l.b16 %v925
      %v1000 = vunpack.c.l.b16 %v926
      %v1001 = vunpack.c.l.b16 %v927
      %v1002 = vunpack.c.l.b16 %v928
      %v1003 = vunpack.c.l.b16 %v929
      %v1004 = vunpack.c.l.b16 %v930
      %v1005 = vunpack.c.l.b16 %v931
      %v1006 = vunpack.c.l.b16 %v932
      %v1007 = vunpack.c.l.b16 %v933
      %v1008 = vunpack.c.l.b16 %v934
      %v1009 = vunpack.c.l.b16 %v935
      %v1010 = vunpack.c.l.b16 %v936
      %v1011 = vunpack.c.l.b16 %v937
      %v1012 = vunpack.c.l.b16 %v938
      %v1013 = vunpack.c.l.b16 %v939
      %v1014 = vunpack.c.l.b16 %v940
      %v1015 = vunpack.c.l.b16 %v941
      %v1016 = vunpack.c.l.b16 %v942
      %v1017 = vunpack.c.l.b16 %v943
      %v1018 = vunpack.c.l.b16 %v944
      %v1019 = vunpack.c.l.b16 %v945
      %v1020 = vunpack.c.l.b16 %v946
      %v1021 = vunpack.c.l.b16 %v947
      %v1022 = vunpack.c.l.b16 %v948
      %v1023 = vunpack.c.l.b16 %v949
      %v1024 = vunpack.c.l.b16 %v950
      %v1025 = vunpack.c.l.b16 %v951
      %v1026 = vunpack.c.l.b16 %v952
      %v1027 = vunpack.c.l.b16 %v953
      %v1028 = vunpack.c.l.b16 %v954
      %v1029 = vunpack.c.l.b16 %v955
      %v1030 = vpack.c.b16 %v999, %v998
      %v1031 = vpack.c.b16 %v1001, %v1000
      %v1032 = vpack.c.b16 %v1003, %v1002
      %v1033 = vpack.c.b16 %v1005, %v1004
      %v1034 = vpack.c.b16 %v1007, %v1006
      %v1035 = vpack.c.b16 %v1009, %v1008
      %v1036 = vpack.c.b16 %v1011, %v1010
      %v1037 = vpack.c.b16 %v1013, %v1012
      %v1038 = vpack.c.b16 %v1015, %v1014
      %v1039 = vpack.c.b16 %v1017, %v1016
      %v1040 = vpack.c.b16 %v1019, %v1018
      %v1041 = vpack.c.b16 %v1021, %v1020
      %v1042 = vpack.c.b16 %v1023, %v1022
      %v1043 = vpack.c.b16 %v1025, %v1024
      %v1044 = vpack.c.b16 %v1027, %v1026
      %v1045 = vpack.c.b16 %v1029, %v1028
      %1062 = vmatprep.subr.bf16.mxu0 0
      %1063 = vmatpush1.bf16.msra.mxu0 %v1030
      %1064 = vmatprep.subr.bf16.mxu0 0
      %1065 = vmatpush1.bf16.msra.mxu0 %v1031
      %1066 = vmatprep.subr.bf16.mxu0 0
      %1067 = vmatpush1.bf16.msra.mxu0 %v1032
      %1068 = vmatprep.subr.bf16.mxu0 0
      %1069 = vmatpush1.bf16.msra.mxu0 %v1033
      %1070 = vmatprep.subr.bf16.mxu0 0
      %1071 = vmatpush1.bf16.msra.mxu0 %v1034
      %1072 = vmatprep.subr.bf16.mxu0 0
      %1073 = vmatpush1.bf16.msra.mxu0 %v1035
      %1074 = vmatprep.subr.bf16.mxu0 0
      %1075 = vmatpush1.bf16.msra.mxu0 %v1036
      %1076 = vmatprep.subr.bf16.mxu0 0
      %1077 = vmatpush1.bf16.msra.mxu0 %v1037
      %1078 = vmatprep.subr.bf16.mxu0 0
      %1079 = vmatpush1.bf16.msra.mxu0 %v1038
      %1080 = vmatprep.subr.bf16.mxu0 0
      %1081 = vmatpush1.bf16.msra.mxu0 %v1039
      %1082 = vmatprep.subr.bf16.mxu0 0
      %1083 = vmatpush1.bf16.msra.mxu0 %v1040
      %1084 = vmatprep.subr.bf16.mxu0 0
      %1085 = vmatpush1.bf16.msra.mxu0 %v1041
      %1086 = vmatprep.subr.bf16.mxu0 0
      %1087 = vmatpush1.bf16.msra.mxu0 %v1042
      %1088 = vmatprep.subr.bf16.mxu0 0
      %1089 = vmatpush1.bf16.msra.mxu0 %v1043
      %1090 = vmatprep.subr.bf16.mxu0 0
      %1091 = vmatpush1.bf16.msra.mxu0 %v1044
      %1092 = vmatprep.subr.bf16.mxu0 0
      %1093 = vmatpush1.bf16.msra.mxu0 %v1045
      %1094 = vmatprep.mubr.bf16.mxu0 %v963
      %1095 = vmatmul.mubr.bf16.gmra.mrb[0].mxu0 %v962
      %v1096 = vpop.f32.mrb[0].mxu0
      %v1097 = vadd.f32 0.0, %v1096
      %v1098 = vpop.f32.mrb[0].mxu0
      %v1099 = vpop.f32.mrb[0].mxu0
      %v1100 = vadd.f32 0.0, %v1099
      %v1101 = vpop.f32.mrb[0].mxu0
      %1102 = vdwg.mxu0
      %v1103 = vld [vmem:[%s434] sm:$0xff]
      %v1104 = vld [vmem:[%s434 + $0x8] sm:$0xff]
      %v1105 = vmax.bf16 %v1103, 0
      %v1106 = vmax.bf16 %v1104, 0
      %v1109 = vunpack.c.l.b16 %v1105
      %v1110 = vunpack.c.h.b16 %v1105
      %v1111 = vunpack.c.l.b16 %v1106
      %v1112 = vunpack.c.h.b16 %v1106
      %v1113 = vpack.c.b16 %v1111, %v1109
      %v1114 = vpack.c.b16 %v1112, %v1110
      %1117 = vmatprep.subr.bf16.mxu0 0
      %1118 = vmatpush1.bf16.msra.mxu0 %v1030
      %1119 = vmatprep.subr.bf16.mxu0 0
      %1120 = vmatpush1.bf16.msra.mxu0 %v1031
      %1121 = vmatprep.subr.bf16.mxu0 0
      %1122 = vmatpush1.bf16.msra.mxu0 %v1032
      %1123 = vmatprep.subr.bf16.mxu0 0
      %1124 = vmatpush1.bf16.msra.mxu0 %v1033
      %1125 = vmatprep.subr.bf16.mxu0 0
      %1126 = vmatpush1.bf16.msra.mxu0 %v1034
      %1127 = vmatprep.subr.bf16.mxu0 0
      %1128 = vmatpush1.bf16.msra.mxu0 %v1035
      %1129 = vmatprep.subr.bf16.mxu0 0
      %1130 = vmatpush1.bf16.msra.mxu0 %v1036
      %1131 = vmatprep.subr.bf16.mxu0 0
      %1132 = vmatpush1.bf16.msra.mxu0 %v1037
      %1133 = vmatprep.subr.bf16.mxu0 0
      %1134 = vmatpush1.bf16.msra.mxu0 %v1038
      %1135 = vmatprep.subr.bf16.mxu0 0
      %1136 = vmatpush1.bf16.msra.mxu0 %v1039
      %1137 = vmatprep.subr.bf16.mxu0 0
      %1138 = vmatpush1.bf16.msra.mxu0 %v1040
      %1139 = vmatprep.subr.bf16.mxu0 0
      %1140 = vmatpush1.bf16.msra.mxu0 %v1041
      %1141 = vmatprep.subr.bf16.mxu0 0
      %1142 = vmatpush1.bf16.msra.mxu0 %v1042
      %1143 = vmatprep.subr.bf16.mxu0 0
      %1144 = vmatpush1.bf16.msra.mxu0 %v1043
      %1145 = vmatprep.subr.bf16.mxu0 0
      %1146 = vmatpush1.bf16.msra.mxu0 %v1044
      %1147 = vmatprep.subr.bf16.mxu0 0
      %1148 = vmatpush1.bf16.msra.mxu0 %v1045
      %1149 = vmatprep.mubr.bf16.mxu0 %v1114
      %1150 = vmatmul.mubr.bf16.gmra.mrb[0].mxu0 %v1113
      %v1151 = vpop.f32.mrb[0].mxu0
      %v1152 = vadd.f32 0.0, %v1151
      %v1153 = vpop.f32.mrb[0].mxu0
      %v1154 = vpop.f32.mrb[0].mxu0
      %v1155 = vadd.f32 0.0, %v1154
      %v1156 = vpop.f32.mrb[0].mxu0
      %1157 = vdwg.mxu0
      %v1158 = vmax.f32 %v804, 0.0
      %v1159 = vmax.f32 %v807, 0.0
      %v1160 = vpack.c.bf16 %v1159, %v1158
      %v1161 = vld [vmem:[%s6] sm:$0xff]
      %v1162 = vld [vmem:[%s6 + $0x8] sm:$0xff]
      %v1163 = vld [vmem:[%s6 + $0x10] sm:$0xff]
      %v1164 = vld [vmem:[%s6 + $0x18] sm:$0xff]
      %v1165 = vld [vmem:[%s6 + $0x20] sm:$0xff]
      %v1166 = vld [vmem:[%s6 + $0x28] sm:$0xff]
      %v1167 = vld [vmem:[%s6 + $0x30] sm:$0xff]
      %v1168 = vld [vmem:[%s6 + $0x38] sm:$0xff]
      %v1169 = vld [vmem:[%s6 + $0x40] sm:$0xff]
      %v1170 = vld [vmem:[%s6 + $0x48] sm:$0xff]
      %v1171 = vld [vmem:[%s6 + $0x50] sm:$0xff]
      %v1172 = vld [vmem:[%s6 + $0x58] sm:$0xff]
      %v1173 = vld [vmem:[%s6 + $0x60] sm:$0xff]
      %v1174 = vld [vmem:[%s6 + $0x68] sm:$0xff]
      %v1175 = vld [vmem:[%s6 + $0x70] sm:$0xff]
      %v1176 = vld [vmem:[%s6 + $0x78] sm:$0xff]
      %v1177 = vmax.f32 %v914, 0.0
      %v1178 = vmax.f32 %v917, 0.0
      %v1179 = vpack.c.bf16 %v1178, %v1177
      %v1180 = vld [vmem:[%s7] sm:$0xff]
      %v1181 = vld [vmem:[%s7 + $0x8] sm:$0xff]
      %v1182 = vld [vmem:[%s7 + $0x10] sm:$0xff]
      %v1183 = vld [vmem:[%s7 + $0x18] sm:$0xff]
      %v1184 = vld [vmem:[%s7 + $0x20] sm:$0xff]
      %v1185 = vld [vmem:[%s7 + $0x28] sm:$0xff]
      %v1186 = vld [vmem:[%s7 + $0x30] sm:$0xff]
      %v1187 = vld [vmem:[%s7 + $0x38] sm:$0xff]
      %v1188 = vld [vmem:[%s7 + $0x40] sm:$0xff]
      %v1189 = vld [vmem:[%s7 + $0x48] sm:$0xff]
      %v1190 = vld [vmem:[%s7 + $0x50] sm:$0xff]
      %v1191 = vld [vmem:[%s7 + $0x58] sm:$0xff]
      %v1192 = vld [vmem:[%s7 + $0x60] sm:$0xff]
      %v1193 = vld [vmem:[%s7 + $0x68] sm:$0xff]
      %v1194 = vld [vmem:[%s7 + $0x70] sm:$0xff]
      %v1195 = vld [vmem:[%s7 + $0x78] sm:$0xff]
      %v1212 = vunpack.c.l.b16 %v1180
      %v1213 = vunpack.c.h.b16 %v1180
      %v1214 = vunpack.c.l.b16 %v1181
      %v1215 = vunpack.c.h.b16 %v1181
      %v1216 = vunpack.c.l.b16 %v1182
      %v1217 = vunpack.c.h.b16 %v1182
      %v1218 = vunpack.c.l.b16 %v1183
      %v1219 = vunpack.c.h.b16 %v1183
      %v1220 = vunpack.c.l.b16 %v1184
      %v1221 = vunpack.c.h.b16 %v1184
      %v1222 = vunpack.c.l.b16 %v1185
      %v1223 = vunpack.c.h.b16 %v1185
      %v1224 = vunpack.c.l.b16 %v1186
      %v1225 = vunpack.c.h.b16 %v1186
      %v1226 = vunpack.c.l.b16 %v1187
      %v1227 = vunpack.c.h.b16 %v1187
      %v1228 = vunpack.c.l.b16 %v1188
      %v1229 = vunpack.c.h.b16 %v1188
      %v1230 = vunpack.c.l.b16 %v1189
      %v1231 = vunpack.c.h.b16 %v1189
      %v1232 = vunpack.c.l.b16 %v1190
      %v1233 = vunpack.c.h.b16 %v1190
      %v1234 = vunpack.c.l.b16 %v1191
      %v1235 = vunpack.c.h.b16 %v1191
      %v1236 = vunpack.c.l.b16 %v1192
      %v1237 = vunpack.c.h.b16 %v1192
      %v1238 = vunpack.c.l.b16 %v1193
      %v1239 = vunpack.c.h.b16 %v1193
      %v1240 = vunpack.c.l.b16 %v1194
      %v1241 = vunpack.c.h.b16 %v1194
      %v1242 = vunpack.c.l.b16 %v1195
      %v1243 = vunpack.c.h.b16 %v1195
      %v1244 = vpack.c.b16 %v1214, %v1212
      %v1245 = vpack.c.b16 %v1215, %v1213
      %v1246 = vpack.c.b16 %v1218, %v1216
      %v1247 = vpack.c.b16 %v1219, %v1217
      %v1248 = vpack.c.b16 %v1222, %v1220
      %v1249 = vpack.c.b16 %v1223, %v1221
      %v1250 = vpack.c.b16 %v1226, %v1224
      %v1251 = vpack.c.b16 %v1227, %v1225
      %v1252 = vpack.c.b16 %v1230, %v1228
      %v1253 = vpack.c.b16 %v1231, %v1229
      %v1254 = vpack.c.b16 %v1234, %v1232
      %v1255 = vpack.c.b16 %v1235, %v1233
      %v1256 = vpack.c.b16 %v1238, %v1236
      %v1257 = vpack.c.b16 %v1239, %v1237
      %v1258 = vpack.c.b16 %v1242, %v1240
      %v1259 = vpack.c.b16 %v1243, %v1241
      %1276 = vmatprep.subr.bf16.mxu0 %v1245
      %1277 = vmatpush1.bf16.msra.mxu0 %v1244
      %1278 = vmatprep.subr.bf16.mxu0 %v1247
      %1279 = vmatpush1.bf16.msra.mxu0 %v1246
      %1280 = vmatprep.subr.bf16.mxu0 %v1249
      %1281 = vmatpush1.bf16.msra.mxu0 %v1248
      %1282 = vmatprep.subr.bf16.mxu0 %v1251
      %1283 = vmatpush1.bf16.msra.mxu0 %v1250
      %1284 = vmatprep.subr.bf16.mxu0 %v1253
      %1285 = vmatpush1.bf16.msra.mxu0 %v1252
      %1286 = vmatprep.subr.bf16.mxu0 %v1255
      %1287 = vmatpush1.bf16.msra.mxu0 %v1254
      %1288 = vmatprep.subr.bf16.mxu0 %v1257
      %1289 = vmatpush1.bf16.msra.mxu0 %v1256
      %1290 = vmatprep.subr.bf16.mxu0 %v1259
      %1291 = vmatpush1.bf16.msra.mxu0 %v1258
      %1292 = vmatprep.subr.bf16.mxu0 0
      %1293 = vmatpush1.bf16.msra.mxu0 0
      %1294 = vmatprep.subr.bf16.mxu0 0
      %1295 = vmatpush1.bf16.msra.mxu0 0
      %1296 = vmatprep.subr.bf16.mxu0 0
      %1297 = vmatpush1.bf16.msra.mxu0 0
      %1298 = vmatprep.subr.bf16.mxu0 0
      %1299 = vmatpush1.bf16.msra.mxu0 0
      %1300 = vmatprep.subr.bf16.mxu0 0
      %1301 = vmatpush1.bf16.msra.mxu0 0
      %1302 = vmatprep.subr.bf16.mxu0 0
      %1303 = vmatpush1.bf16.msra.mxu0 0
      %1304 = vmatprep.subr.bf16.mxu0 0
      %1305 = vmatpush1.bf16.msra.mxu0 0
      %1306 = vmatprep.subr.bf16.mxu0 0
      %1307 = vmatpush1.bf16.msra.mxu0 0
      %1308 = vmatprep.mubr.bf16.mxu0 0
      %1309 = vmatmul.mubr.bf16.gmra.mrb[0].mxu0 %v1179
      %v1310 = vpop.f32.mrb[0].mxu0
      %v1311 = vadd.f32 0.0, %v1310
      %v1312 = vpop.f32.mrb[0].mxu0
      %v1313 = vadd.f32 0.0, %v1312
      %v1314 = vpop.f32.mrb[0].mxu0
      %v1315 = vadd.f32 0.0, %v1314
      %v1316 = vpop.f32.mrb[0].mxu0
      %v1317 = vadd.f32 0.0, %v1316
      %1318 = vdwg.mxu0
      %v1335 = vunpack.c.l.b16 %v1161
      %v1336 = vunpack.c.h.b16 %v1161
      %v1337 = vunpack.c.l.b16 %v1162
      %v1338 = vunpack.c.h.b16 %v1162
      %v1339 = vunpack.c.l.b16 %v1163
      %v1340 = vunpack.c.h.b16 %v1163
      %v1341 = vunpack.c.l.b16 %v1164
      %v1342 = vunpack.c.h.b16 %v1164
      %v1343 = vunpack.c.l.b16 %v1165
      %v1344 = vunpack.c.h.b16 %v1165
      %v1345 = vunpack.c.l.b16 %v1166
      %v1346 = vunpack.c.h.b16 %v1166
      %v1347 = vunpack.c.l.b16 %v1167
      %v1348 = vunpack.c.h.b16 %v1167
      %v1349 = vunpack.c.l.b16 %v1168
      %v1350 = vunpack.c.h.b16 %v1168
      %v1351 = vunpack.c.l.b16 %v1169
      %v1352 = vunpack.c.h.b16 %v1169
      %v1353 = vunpack.c.l.b16 %v1170
      %v1354 = vunpack.c.h.b16 %v1170
      %v1355 = vunpack.c.l.b16 %v1171
      %v1356 = vunpack.c.h.b16 %v1171
      %v1357 = vunpack.c.l.b16 %v1172
      %v1358 = vunpack.c.h.b16 %v1172
      %v1359 = vunpack.c.l.b16 %v1173
      %v1360 = vunpack.c.h.b16 %v1173
      %v1361 = vunpack.c.l.b16 %v1174
      %v1362 = vunpack.c.h.b16 %v1174
      %v1363 = vunpack.c.l.b16 %v1175
      %v1364 = vunpack.c.h.b16 %v1175
      %v1365 = vunpack.c.l.b16 %v1176
      %v1366 = vunpack.c.h.b16 %v1176
      %v1367 = vpack.c.b16 %v1337, %v1335
      %v1368 = vpack.c.b16 %v1338, %v1336
      %v1369 = vpack.c.b16 %v1341, %v1339
      %v1370 = vpack.c.b16 %v1342, %v1340
      %v1371 = vpack.c.b16 %v1345, %v1343
      %v1372 = vpack.c.b16 %v1346, %v1344
      %v1373 = vpack.c.b16 %v1349, %v1347
      %v1374 = vpack.c.b16 %v1350, %v1348
      %v1375 = vpack.c.b16 %v1353, %v1351
      %v1376 = vpack.c.b16 %v1354, %v1352
      %v1377 = vpack.c.b16 %v1357, %v1355
      %v1378 = vpack.c.b16 %v1358, %v1356
      %v1379 = vpack.c.b16 %v1361, %v1359
      %v1380 = vpack.c.b16 %v1362, %v1360
      %v1381 = vpack.c.b16 %v1365, %v1363
      %v1382 = vpack.c.b16 %v1366, %v1364
      %1399 = vmatprep.subr.bf16.mxu0 %v1368
      %1400 = vmatpush1.bf16.msra.mxu0 %v1367
      %1401 = vmatprep.subr.bf16.mxu0 %v1370
      %1402 = vmatpush1.bf16.msra.mxu0 %v1369
      %1403 = vmatprep.subr.bf16.mxu0 %v1372
      %1404 = vmatpush1.bf16.msra.mxu0 %v1371
      %1405 = vmatprep.subr.bf16.mxu0 %v1374
      %1406 = vmatpush1.bf16.msra.mxu0 %v1373
      %1407 = vmatprep.subr.bf16.mxu0 %v1376
      %1408 = vmatpush1.bf16.msra.mxu0 %v1375
      %1409 = vmatprep.subr.bf16.mxu0 %v1378
      %1410 = vmatpush1.bf16.msra.mxu0 %v1377
      %1411 = vmatprep.subr.bf16.mxu0 %v1380
      %1412 = vmatpush1.bf16.msra.mxu0 %v1379
      %1413 = vmatprep.subr.bf16.mxu0 %v1382
      %1414 = vmatpush1.bf16.msra.mxu0 %v1381
      %1415 = vmatprep.subr.bf16.mxu0 0
      %1416 = vmatpush1.bf16.msra.mxu0 0
      %1417 = vmatprep.subr.bf16.mxu0 0
      %1418 = vmatpush1.bf16.msra.mxu0 0
      %1419 = vmatprep.subr.bf16.mxu0 0
      %1420 = vmatpush1.bf16.msra.mxu0 0
      %1421 = vmatprep.subr.bf16.mxu0 0
      %1422 = vmatpush1.bf16.msra.mxu0 0
      %1423 = vmatprep.subr.bf16.mxu0 0
      %1424 = vmatpush1.bf16.msra.mxu0 0
      %1425 = vmatprep.subr.bf16.mxu0 0
      %1426 = vmatpush1.bf16.msra.mxu0 0
      %1427 = vmatprep.subr.bf16.mxu0 0
      %1428 = vmatpush1.bf16.msra.mxu0 0
      %1429 = vmatprep.subr.bf16.mxu0 0
      %1430 = vmatpush1.bf16.msra.mxu0 0
      %1431 = vmatprep.mubr.bf16.mxu0 0
      %1432 = vmatmul.mubr.bf16.gmra.mrb[0].mxu0 %v1160
      %v1433 = vpop.f32.mrb[0].mxu0
      %v1434 = vadd.f32 %v1311, %v1433
      %v1435 = vpop.f32.mrb[0].mxu0
      %v1436 = vadd.f32 %v1313, %v1435
      %v1437 = vpop.f32.mrb[0].mxu0
      %v1438 = vadd.f32 %v1315, %v1437
      %v1439 = vpop.f32.mrb[0].mxu0
      %v1440 = vadd.f32 %v1317, %v1439
      %1441 = vdwg.mxu0
      %v1442 = vmax.f32 %v1097, 0.0
      %v1443 = vmax.f32 %v1100, 0.0
      %v1444 = vpack.c.bf16 %v1443, %v1442
      %v1445 = vld [vmem:[%s8] sm:$0xff]
      %v1446 = vld [vmem:[%s8 + $0x8] sm:$0xff]
      %v1447 = vld [vmem:[%s8 + $0x10] sm:$0xff]
      %v1448 = vld [vmem:[%s8 + $0x18] sm:$0xff]
      %v1449 = vld [vmem:[%s8 + $0x20] sm:$0xff]
      %v1450 = vld [vmem:[%s8 + $0x28] sm:$0xff]
      %v1451 = vld [vmem:[%s8 + $0x30] sm:$0xff]
      %v1452 = vld [vmem:[%s8 + $0x38] sm:$0xff]
      %v1453 = vld [vmem:[%s8 + $0x40] sm:$0xff]
      %v1454 = vld [vmem:[%s8 + $0x48] sm:$0xff]
      %v1455 = vld [vmem:[%s8 + $0x50] sm:$0xff]
      %v1456 = vld [vmem:[%s8 + $0x58] sm:$0xff]
      %v1457 = vld [vmem:[%s8 + $0x60] sm:$0xff]
      %v1458 = vld [vmem:[%s8 + $0x68] sm:$0xff]
      %v1459 = vld [vmem:[%s8 + $0x70] sm:$0xff]
      %v1460 = vld [vmem:[%s8 + $0x78] sm:$0xff]
      %v1477 = vunpack.c.l.b16 %v1445
      %v1478 = vunpack.c.h.b16 %v1445
      %v1479 = vunpack.c.l.b16 %v1446
      %v1480 = vunpack.c.h.b16 %v1446
      %v1481 = vunpack.c.l.b16 %v1447
      %v1482 = vunpack.c.h.b16 %v1447
      %v1483 = vunpack.c.l.b16 %v1448
      %v1484 = vunpack.c.h.b16 %v1448
      %v1485 = vunpack.c.l.b16 %v1449
      %v1486 = vunpack.c.h.b16 %v1449
      %v1487 = vunpack.c.l.b16 %v1450
      %v1488 = vunpack.c.h.b16 %v1450
      %v1489 = vunpack.c.l.b16 %v1451
      %v1490 = vunpack.c.h.b16 %v1451
      %v1491 = vunpack.c.l.b16 %v1452
      %v1492 = vunpack.c.h.b16 %v1452
      %v1493 = vunpack.c.l.b16 %v1453
      %v1494 = vunpack.c.h.b16 %v1453
      %v1495 = vunpack.c.l.b16 %v1454
      %v1496 = vunpack.c.h.b16 %v1454
      %v1497 = vunpack.c.l.b16 %v1455
      %v1498 = vunpack.c.h.b16 %v1455
      %v1499 = vunpack.c.l.b16 %v1456
      %v1500 = vunpack.c.h.b16 %v1456
      %v1501 = vunpack.c.l.b16 %v1457
      %v1502 = vunpack.c.h.b16 %v1457
      %v1503 = vunpack.c.l.b16 %v1458
      %v1504 = vunpack.c.h.b16 %v1458
      %v1505 = vunpack.c.l.b16 %v1459
      %v1506 = vunpack.c.h.b16 %v1459
      %v1507 = vunpack.c.l.b16 %v1460
      %v1508 = vunpack.c.h.b16 %v1460
      %v1509 = vpack.c.b16 %v1479, %v1477
      %v1510 = vpack.c.b16 %v1480, %v1478
      %v1511 = vpack.c.b16 %v1483, %v1481
      %v1512 = vpack.c.b16 %v1484, %v1482
      %v1513 = vpack.c.b16 %v1487, %v1485
      %v1514 = vpack.c.b16 %v1488, %v1486
      %v1515 = vpack.c.b16 %v1491, %v1489
      %v1516 = vpack.c.b16 %v1492, %v1490
      %v1517 = vpack.c.b16 %v1495, %v1493
      %v1518 = vpack.c.b16 %v1496, %v1494
      %v1519 = vpack.c.b16 %v1499, %v1497
      %v1520 = vpack.c.b16 %v1500, %v1498
      %v1521 = vpack.c.b16 %v1503, %v1501
      %v1522 = vpack.c.b16 %v1504, %v1502
      %v1523 = vpack.c.b16 %v1507, %v1505
      %v1524 = vpack.c.b16 %v1508, %v1506
      %1541 = vmatprep.subr.bf16.mxu0 %v1510
      %1542 = vmatpush1.bf16.msra.mxu0 %v1509
      %1543 = vmatprep.subr.bf16.mxu0 %v1512
      %1544 = vmatpush1.bf16.msra.mxu0 %v1511
      %1545 = vmatprep.subr.bf16.mxu0 %v1514
      %1546 = vmatpush1.bf16.msra.mxu0 %v1513
      %1547 = vmatprep.subr.bf16.mxu0 %v1516
      %1548 = vmatpush1.bf16.msra.mxu0 %v1515
      %1549 = vmatprep.subr.bf16.mxu0 %v1518
      %1550 = vmatpush1.bf16.msra.mxu0 %v1517
      %1551 = vmatprep.subr.bf16.mxu0 %v1520
      %1552 = vmatpush1.bf16.msra.mxu0 %v1519
      %1553 = vmatprep.subr.bf16.mxu0 %v1522
      %1554 = vmatpush1.bf16.msra.mxu0 %v1521
      %1555 = vmatprep.subr.bf16.mxu0 %v1524
      %1556 = vmatpush1.bf16.msra.mxu0 %v1523
      %1557 = vmatprep.subr.bf16.mxu0 0
      %1558 = vmatpush1.bf16.msra.mxu0 0
      %1559 = vmatprep.subr.bf16.mxu0 0
      %1560 = vmatpush1.bf16.msra.mxu0 0
      %1561 = vmatprep.subr.bf16.mxu0 0
      %1562 = vmatpush1.bf16.msra.mxu0 0
      %1563 = vmatprep.subr.bf16.mxu0 0
      %1564 = vmatpush1.bf16.msra.mxu0 0
      %1565 = vmatprep.subr.bf16.mxu0 0
      %1566 = vmatpush1.bf16.msra.mxu0 0
      %1567 = vmatprep.subr.bf16.mxu0 0
      %1568 = vmatpush1.bf16.msra.mxu0 0
      %1569 = vmatprep.subr.bf16.mxu0 0
      %1570 = vmatpush1.bf16.msra.mxu0 0
      %1571 = vmatprep.subr.bf16.mxu0 0
      %1572 = vmatpush1.bf16.msra.mxu0 0
      %1573 = vmatprep.mubr.bf16.mxu0 0
      %1574 = vmatmul.mubr.bf16.gmra.mrb[0].mxu0 %v1444
      %v1575 = vpop.f32.mrb[0].mxu0
      %v1576 = vadd.f32 0.0, %v1575
      %v1577 = vpop.f32.mrb[0].mxu0
      %v1578 = vadd.f32 0.0, %v1577
      %v1579 = vpop.f32.mrb[0].mxu0
      %v1580 = vadd.f32 0.0, %v1579
      %v1581 = vpop.f32.mrb[0].mxu0
      %v1582 = vadd.f32 0.0, %v1581
      %1583 = vdwg.mxu0
      %v1584 = vadd.f32 %v1434, %v1576
      %v1585 = vadd.f32 %v1436, %v1578
      %v1586 = vadd.f32 %v1438, %v1580
      %v1587 = vadd.f32 %v1440, %v1582
      %v1588 = vmax.f32 %v1152, 0.0
      %v1589 = vmax.f32 %v1155, 0.0
      %v1590 = vpack.c.bf16 %v1589, %v1588
      %v1591 = vld [vmem:[%s9] sm:$0xff]
      %v1592 = vld [vmem:[%s9 + $0x8] sm:$0xff]
      %v1593 = vld [vmem:[%s9 + $0x10] sm:$0xff]
      %v1594 = vld [vmem:[%s9 + $0x18] sm:$0xff]
      %v1595 = vld [vmem:[%s9 + $0x20] sm:$0xff]
      %v1596 = vld [vmem:[%s9 + $0x28] sm:$0xff]
      %v1597 = vld [vmem:[%s9 + $0x30] sm:$0xff]
      %v1598 = vld [vmem:[%s9 + $0x38] sm:$0xff]
      %v1599 = vld [vmem:[%s9 + $0x40] sm:$0xff]
      %v1600 = vld [vmem:[%s9 + $0x48] sm:$0xff]
      %v1601 = vld [vmem:[%s9 + $0x50] sm:$0xff]
      %v1602 = vld [vmem:[%s9 + $0x58] sm:$0xff]
      %v1603 = vld [vmem:[%s9 + $0x60] sm:$0xff]
      %v1604 = vld [vmem:[%s9 + $0x68] sm:$0xff]
      %v1605 = vld [vmem:[%s9 + $0x70] sm:$0xff]
      %v1606 = vld [vmem:[%s9 + $0x78] sm:$0xff]
      %v1623 = vunpack.c.l.b16 %v1591
      %v1624 = vunpack.c.h.b16 %v1591
      %v1625 = vunpack.c.l.b16 %v1592
      %v1626 = vunpack.c.h.b16 %v1592
      %v1627 = vunpack.c.l.b16 %v1593
      %v1628 = vunpack.c.h.b16 %v1593
      %v1629 = vunpack.c.l.b16 %v1594
      %v1630 = vunpack.c.h.b16 %v1594
      %v1631 = vunpack.c.l.b16 %v1595
      %v1632 = vunpack.c.h.b16 %v1595
      %v1633 = vunpack.c.l.b16 %v1596
      %v1634 = vunpack.c.h.b16 %v1596
      %v1635 = vunpack.c.l.b16 %v1597
      %v1636 = vunpack.c.h.b16 %v1597
      %v1637 = vunpack.c.l.b16 %v1598
      %v1638 = vunpack.c.h.b16 %v1598
      %v1639 = vunpack.c.l.b16 %v1599
      %v1640 = vunpack.c.h.b16 %v1599
      %v1641 = vunpack.c.l.b16 %v1600
      %v1642 = vunpack.c.h.b16 %v1600
      %v1643 = vunpack.c.l.b16 %v1601
      %v1644 = vunpack.c.h.b16 %v1601
      %v1645 = vunpack.c.l.b16 %v1602
      %v1646 = vunpack.c.h.b16 %v1602
      %v1647 = vunpack.c.l.b16 %v1603
      %v1648 = vunpack.c.h.b16 %v1603
      %v1649 = vunpack.c.l.b16 %v1604
      %v1650 = vunpack.c.h.b16 %v1604
      %v1651 = vunpack.c.l.b16 %v1605
      %v1652 = vunpack.c.h.b16 %v1605
      %v1653 = vunpack.c.l.b16 %v1606
      %v1654 = vunpack.c.h.b16 %v1606
      %v1655 = vpack.c.b16 %v1625, %v1623
      %v1656 = vpack.c.b16 %v1626, %v1624
      %v1657 = vpack.c.b16 %v1629, %v1627
      %v1658 = vpack.c.b16 %v1630, %v1628
      %v1659 = vpack.c.b16 %v1633, %v1631
      %v1660 = vpack.c.b16 %v1634, %v1632
      %v1661 = vpack.c.b16 %v1637, %v1635
      %v1662 = vpack.c.b16 %v1638, %v1636
      %v1663 = vpack.c.b16 %v1641, %v1639
      %v1664 = vpack.c.b16 %v1642, %v1640
      %v1665 = vpack.c.b16 %v1645, %v1643
      %v1666 = vpack.c.b16 %v1646, %v1644
      %v1667 = vpack.c.b16 %v1649, %v1647
      %v1668 = vpack.c.b16 %v1650, %v1648
      %v1669 = vpack.c.b16 %v1653, %v1651
      %v1670 = vpack.c.b16 %v1654, %v1652
      %1687 = vmatprep.subr.bf16.mxu0 %v1656
      %1688 = vmatpush1.bf16.msra.mxu0 %v1655
      %1689 = vmatprep.subr.bf16.mxu0 %v1658
      %1690 = vmatpush1.bf16.msra.mxu0 %v1657
      %1691 = vmatprep.subr.bf16.mxu0 %v1660
      %1692 = vmatpush1.bf16.msra.mxu0 %v1659
      %1693 = vmatprep.subr.bf16.mxu0 %v1662
      %1694 = vmatpush1.bf16.msra.mxu0 %v1661
      %1695 = vmatprep.subr.bf16.mxu0 %v1664
      %1696 = vmatpush1.bf16.msra.mxu0 %v1663
      %1697 = vmatprep.subr.bf16.mxu0 %v1666
      %1698 = vmatpush1.bf16.msra.mxu0 %v1665
      %1699 = vmatprep.subr.bf16.mxu0 %v1668
      %1700 = vmatpush1.bf16.msra.mxu0 %v1667
      %1701 = vmatprep.subr.bf16.mxu0 %v1670
      %1702 = vmatpush1.bf16.msra.mxu0 %v1669
      %1703 = vmatprep.subr.bf16.mxu0 0
      %1704 = vmatpush1.bf16.msra.mxu0 0
      %1705 = vmatprep.subr.bf16.mxu0 0
      %1706 = vmatpush1.bf16.msra.mxu0 0
      %1707 = vmatprep.subr.bf16.mxu0 0
      %1708 = vmatpush1.bf16.msra.mxu0 0
      %1709 = vmatprep.subr.bf16.mxu0 0
      %1710 = vmatpush1.bf16.msra.mxu0 0
      %1711 = vmatprep.subr.bf16.mxu0 0
      %1712 = vmatpush1.bf16.msra.mxu0 0
      %1713 = vmatprep.subr.bf16.mxu0 0
      %1714 = vmatpush1.bf16.msra.mxu0 0
      %1715 = vmatprep.subr.bf16.mxu0 0
      %1716 = vmatpush1.bf16.msra.mxu0 0
      %1717 = vmatprep.subr.bf16.mxu0 0
      %1718 = vmatpush1.bf16.msra.mxu0 0
      %1719 = vmatprep.mubr.bf16.mxu0 0
      %1720 = vmatmul.mubr.bf16.gmra.mrb[0].mxu0 %v1590
      %v1721 = vpop.f32.mrb[0].mxu0
      %v1722 = vadd.f32 0.0, %v1721
      %v1723 = vpop.f32.mrb[0].mxu0
      %v1724 = vadd.f32 0.0, %v1723
      %v1725 = vpop.f32.mrb[0].mxu0
      %v1726 = vadd.f32 0.0, %v1725
      %v1727 = vpop.f32.mrb[0].mxu0
      %v1728 = vadd.f32 0.0, %v1727
      %1729 = vdwg.mxu0
      %v1730 = vadd.f32 %v1584, %v1722
      %v1731 = vadd.f32 %v1585, %v1724
      %v1732 = vadd.f32 %v1586, %v1726
      %v1733 = vadd.f32 %v1587, %v1728
      %v1734 = vpack.c.bf16 %v1732, %v1730
      %v1735 = vpack.c.bf16 %v1733, %v1731
      %v1738 = vunpack.c.l.b16 %v1734
      %v1739 = vunpack.c.l.b16 %v1735
      %v1740 = vunpack.c.h.b16 %v1734
      %v1741 = vunpack.c.h.b16 %v1735
      %v1742 = vpack.c.b16 %v1739, %v1738
      %v1743 = vpack.c.b16 %v1741, %v1740
      %1746 = vst [vmem:[%s441] sm:$0xff] %v1742
      %1747 = vst [vmem:[%s441 + $0x8] sm:$0xff] %v1743
      %s1748 = smul.u32 2, %s21
      %p1749 = scmp.lt.s32.totalorder %s1748, 3
      %s1750 = scalar_select %p1749, %s1748, 3
      %s1751 = smul.addr %s1750, 2
      %s1752 = smul.addr %s1751, 4
      %s1753 = scalar_lea.vmem %s10, %s1752
      // Predicated region
      $region61: #{model_forward.10} parent=59 // pred_check
        %p1754 = pneg %p269
      $region62: #{model_forward.10} parent=59 // pred_check_branch
        %1756 = sbr.rel (%p1754) target = $region64
      $region63: #{model_forward.10} parent=59 // pred_region
        %s1757 = smul.u32 2, %s21
      $region64: #{model_forward.10} parent=59 // pred_fallthru
        _
    $region60: #{model_forward.10} parent=5 // pred_fallthru
      _
    %p1758 = scmp.le.s32.totalorder 2, %s16
    // Predicated region
    $region65: #{model_forward.10} parent=5 // pred_check
      %p1759 = pneg %p1758
    $region66: #{model_forward.10} parent=5 // pred_check_branch
      %1761 = sbr.rel (%p1759) target = $region68
    $region67: #{model_forward.10} parent=5 // pred_region
      %s1762 = ssub.s32 %s16, 2
      // Predicated region
      $region69: #{model_forward.10} parent=67 // pred_check
        %p1763 = pneg %p275
      $region70: #{model_forward.10} parent=67 // pred_check_branch
        %1765 = sbr.rel (%p1763) target = $region72
      $region71: #{model_forward.10} parent=67 // pred_region
        %s1766 = smul.u32 2, %s22
        %p1767 = scmp.lt.s32.totalorder %s1766, 3
        %s1768 = scalar_select %p1767, %s1766, 3
        %s1769 = smul.addr %s1768, 2
        %s1770 = smul.addr %s1769, 4
        %s1771 = scalar_lea.vmem %s10, %s1770
      $region72: #{model_forward.10} parent=67 // pred_fallthru
        _
    $region68: #{model_forward.10} parent=5 // pred_fallthru
      _
  $region6: #{model_forward.10} parent=0 // loop_footer
    %s20 = sadd.s32 1, %s16
  $region7: #{model_forward.10} parent=0 // loop_footer_branch
    %15 = sbr.rel target = $region3
  $region8: #{model_forward.10} parent=0 // loop_exit
    _

// kernel: model_forward.9
$region0: #{model_forward.9}
  #allocation0 [shape = 'u32[]', space=smem, size = 0x4, offset = 0x4, fixed_abs, tag = 'smem constant byte address 0x4 - core index']
  #allocation1 [shape = 'u32[144,128]{1,0:T(1,128)}', space=vmem, size = 0x12000, scoped, tag = 'internal scratch']
  %s0 = inlined_call_operand.vmem [shape: bf16[2,64,256], index: 0, kind: input, shape index: {}]
  %s1 = inlined_call_operand.vmem [shape: bf16[1,256,128], index: 1, kind: input, shape index: {}]
  %s2 = inlined_call_operand.vmem [shape: f32[1,1,128], index: 2, kind: input, shape index: {}]
  %s3 = inlined_call_operand.vmem [shape: f32[1,2,128], index: 3, kind: output, shape index: {}]
  %s4 = sld [smem:[#allocation0]]
  $region22: #{model_forward.9} parent=0
    _
  %s6 = ssub.s32 1, %s4
  %s7 = scalar_select 0, %s6, %s4
  // Predicated region
  $region2: #{model_forward.9} parent=0 // pred_check
    _
  $region3: #{model_forward.9} parent=0 // pred_check_branch
    %9 = sbr.rel (0) target = $region5
  $region4: #{model_forward.9} parent=0 // pred_region
    _
  $region5: #{model_forward.9} parent=0 // pred_fallthru
    _
  // Predicated region
  $region6: #{model_forward.9} parent=0 // pred_check
    _
  $region7: #{model_forward.9} parent=0 // pred_check_branch
    %11 = sbr.rel (0) target = $region9
  $region8: #{model_forward.9} parent=0 // pred_region
    _
  $region9: #{model_forward.9} parent=0 // pred_fallthru
    _
  // Predicated region
  $region10: #{model_forward.9} parent=0 // pred_check
    _
  $region11: #{model_forward.9} parent=0 // pred_check_branch
    %13 = sbr.rel (0) target = $region13
  $region12: #{model_forward.9} parent=0 // pred_region
    _
  $region13: #{model_forward.9} parent=0 // pred_fallthru
    _
  %v15 = vld [vmem:[%s0] sm:$0xff]
  %v16 = vld [vmem:[%s0 + $0x8] sm:$0xff]
  %v17 = vld [vmem:[%s0 + $0x10] sm:$0xff]
  %v18 = vld [vmem:[%s0 + $0x18] sm:$0xff]
  %v19 = vld [vmem:[%s0 + $0x20] sm:$0xff]
  %v20 = vld [vmem:[%s0 + $0x28] sm:$0xff]
  %v21 = vld [vmem:[%s0 + $0x30] sm:$0xff]
  %v22 = vld [vmem:[%s0 + $0x38] sm:$0xff]
  %v23 = vld [vmem:[%s0 + $0x40] sm:$0xff]
  %v24 = vld [vmem:[%s0 + $0x48] sm:$0xff]
  %v25 = vld [vmem:[%s0 + $0x50] sm:$0xff]
  %v26 = vld [vmem:[%s0 + $0x58] sm:$0xff]
  %v27 = vld [vmem:[%s0 + $0x60] sm:$0xff]
  %v28 = vld [vmem:[%s0 + $0x68] sm:$0xff]
  %v29 = vld [vmem:[%s0 + $0x70] sm:$0xff]
  %v30 = vld [vmem:[%s0 + $0x78] sm:$0xff]
  %v31 = vunpack.c.l.bf16 %v15
  %v32 = vunpack.c.h.bf16 %v15
  %v33 = vunpack.c.l.bf16 %v16
  %v34 = vunpack.c.h.bf16 %v16
  %v35 = vunpack.c.l.bf16 %v17
  %v36 = vunpack.c.h.bf16 %v17
  %v37 = vunpack.c.l.bf16 %v18
  %v38 = vunpack.c.h.bf16 %v18
  %v39 = vunpack.c.l.bf16 %v19
  %v40 = vunpack.c.h.bf16 %v19
  %v41 = vunpack.c.l.bf16 %v20
  %v42 = vunpack.c.h.bf16 %v20
  %v43 = vunpack.c.l.bf16 %v21
  %v44 = vunpack.c.h.bf16 %v21
  %v45 = vunpack.c.l.bf16 %v22
  %v46 = vunpack.c.h.bf16 %v22
  %v47 = vunpack.c.l.bf16 %v23
  %v48 = vunpack.c.h.bf16 %v23
  %v49 = vunpack.c.l.bf16 %v24
  %v50 = vunpack.c.h.bf16 %v24
  %v51 = vunpack.c.l.bf16 %v25
  %v52 = vunpack.c.h.bf16 %v25
  %v53 = vunpack.c.l.bf16 %v26
  %v54 = vunpack.c.h.bf16 %v26
  %v55 = vunpack.c.l.bf16 %v27
  %v56 = vunpack.c.h.bf16 %v27
  %v57 = vunpack.c.l.bf16 %v28
  %v58 = vunpack.c.h.bf16 %v28
  %v59 = vunpack.c.l.bf16 %v29
  %v60 = vunpack.c.h.bf16 %v29
  %v61 = vunpack.c.l.bf16 %v30
  %v62 = vunpack.c.h.bf16 %v30
  %v63 = vmax.f32 %v31, 0.0
  %v64 = vmax.f32 %v32, 0.0
  %v65 = vmax.f32 %v33, 0.0
  %v66 = vmax.f32 %v34, 0.0
  %v67 = vmax.f32 %v35, 0.0
  %v68 = vmax.f32 %v36, 0.0
  %v69 = vmax.f32 %v37, 0.0
  %v70 = vmax.f32 %v38, 0.0
  %v71 = vmax.f32 %v39, 0.0
  %v72 = vmax.f32 %v40, 0.0
  %v73 = vmax.f32 %v41, 0.0
  %v74 = vmax.f32 %v42, 0.0
  %v75 = vmax.f32 %v43, 0.0
  %v76 = vmax.f32 %v44, 0.0
  %v77 = vmax.f32 %v45, 0.0
  %v78 = vmax.f32 %v46, 0.0
  %v79 = vmax.f32 %v47, 0.0
  %v80 = vmax.f32 %v48, 0.0
  %v81 = vmax.f32 %v49, 0.0
  %v82 = vmax.f32 %v50, 0.0
  %v83 = vmax.f32 %v51, 0.0
  %v84 = vmax.f32 %v52, 0.0
  %v85 = vmax.f32 %v53, 0.0
  %v86 = vmax.f32 %v54, 0.0
  %v87 = vmax.f32 %v55, 0.0
  %v88 = vmax.f32 %v56, 0.0
  %v89 = vmax.f32 %v57, 0.0
  %v90 = vmax.f32 %v58, 0.0
  %v91 = vmax.f32 %v59, 0.0
  %v92 = vmax.f32 %v60, 0.0
  %v93 = vmax.f32 %v61, 0.0
  %v94 = vmax.f32 %v62, 0.0
  %v95 = vadd.f32 %v63, %v65
  %v96 = vadd.f32 %v95, %v67
  %v97 = vadd.f32 %v96, %v69
  %v98 = vadd.f32 %v97, %v71
  %v99 = vadd.f32 %v98, %v73
  %v100 = vadd.f32 %v99, %v75
  %v101 = vadd.f32 %v100, %v77
  %v102 = vrot.slane %v101, 4
  %v103 = vadd.f32 %v101, %v102
  %v104 = vrot.slane %v103, 2
  %v105 = vadd.f32 %v103, %v104
  %v106 = vrot.slane %v105, 1
  %v107 = vadd.f32 %v105, %v106
  %v108 = vadd.f32 %v64, %v66
  %v109 = vadd.f32 %v108, %v68
  %v110 = vadd.f32 %v109, %v70
  %v111 = vadd.f32 %v110, %v72
  %v112 = vadd.f32 %v111, %v74
  %v113 = vadd.f32 %v112, %v76
  %v114 = vadd.f32 %v113, %v78
  %v115 = vrot.slane %v114, 4
  %v116 = vadd.f32 %v114, %v115
  %v117 = vrot.slane %v116, 2
  %v118 = vadd.f32 %v116, %v117
  %v119 = vrot.slane %v118, 1
  %v120 = vadd.f32 %v118, %v119
  %v121 = vadd.f32 %v79, %v81
  %v122 = vadd.f32 %v121, %v83
  %v123 = vadd.f32 %v122, %v85
  %v124 = vadd.f32 %v123, %v87
  %v125 = vadd.f32 %v124, %v89
  %v126 = vadd.f32 %v125, %v91
  %v127 = vadd.f32 %v126, %v93
  %v128 = vrot.slane %v127, 4
  %v129 = vadd.f32 %v127, %v128
  %v130 = vrot.slane %v129, 2
  %v131 = vadd.f32 %v129, %v130
  %v132 = vrot.slane %v131, 1
  %v133 = vadd.f32 %v131, %v132
  %v134 = vadd.f32 %v80, %v82
  %v135 = vadd.f32 %v134, %v84
  %v136 = vadd.f32 %v135, %v86
  %v137 = vadd.f32 %v136, %v88
  %v138 = vadd.f32 %v137, %v90
  %v139 = vadd.f32 %v138, %v92
  %v140 = vadd.f32 %v139, %v94
  %v141 = vrot.slane %v140, 4
  %v142 = vadd.f32 %v140, %v141
  %v143 = vrot.slane %v142, 2
  %v144 = vadd.f32 %v142, %v143
  %v145 = vrot.slane %v144, 1
  %v146 = vadd.f32 %v144, %v145
  %v147 = vmul.f32 %v107, 0.015625
  %v148 = vmul.f32 %v120, 0.015625
  %v149 = vmul.f32 %v133, 0.015625
  %v150 = vmul.f32 %v146, 0.015625
  %v151 = vpack.c.bf16 %v147, %v147
  %v152 = vpack.c.bf16 %v148, %v148
  %v153 = vpack.c.bf16 %v149, %v149
  %v154 = vpack.c.bf16 %v150, %v150
  %v155 = vld [vmem:[%s1] sm:$0xf]
  %v156 = vld [vmem:[%s1 + $0x4] sm:$0xf]
  %v157 = vld [vmem:[%s1 + $0x8] sm:$0xf]
  %v158 = vld [vmem:[%s1 + $0xc] sm:$0xf]
  %v159 = vld [vmem:[%s1 + $0x10] sm:$0xf]
  %v160 = vld [vmem:[%s1 + $0x14] sm:$0xf]
  %v161 = vld [vmem:[%s1 + $0x18] sm:$0xf]
  %v162 = vld [vmem:[%s1 + $0x1c] sm:$0xf]
  %v163 = vld [vmem:[%s1 + $0x20] sm:$0xf]
  %v164 = vld [vmem:[%s1 + $0x24] sm:$0xf]
  %v165 = vld [vmem:[%s1 + $0x28] sm:$0xf]
  %v166 = vld [vmem:[%s1 + $0x2c] sm:$0xf]
  %v167 = vld [vmem:[%s1 + $0x30] sm:$0xf]
  %v168 = vld [vmem:[%s1 + $0x34] sm:$0xf]
  %v169 = vld [vmem:[%s1 + $0x38] sm:$0xf]
  %v170 = vld [vmem:[%s1 + $0x3c] sm:$0xf]
  %v171 = vld [vmem:[%s1 + $0x40] sm:$0xf]
  %v172 = vld [vmem:[%s1 + $0x44] sm:$0xf]
  %v173 = vld [vmem:[%s1 + $0x48] sm:$0xf]
  %v174 = vld [vmem:[%s1 + $0x4c] sm:$0xf]
  %v175 = vld [vmem:[%s1 + $0x50] sm:$0xf]
  %v176 = vld [vmem:[%s1 + $0x54] sm:$0xf]
  %v177 = vld [vmem:[%s1 + $0x58] sm:$0xf]
  %v178 = vld [vmem:[%s1 + $0x5c] sm:$0xf]
  %v179 = vld [vmem:[%s1 + $0x60] sm:$0xf]
  %v180 = vld [vmem:[%s1 + $0x64] sm:$0xf]
  %v181 = vld [vmem:[%s1 + $0x68] sm:$0xf]
  %v182 = vld [vmem:[%s1 + $0x6c] sm:$0xf]
  %v183 = vld [vmem:[%s1 + $0x70] sm:$0xf]
  %v184 = vld [vmem:[%s1 + $0x74] sm:$0xf]
  %v185 = vld [vmem:[%s1 + $0x78] sm:$0xf]
  %v186 = vld [vmem:[%s1 + $0x7c] sm:$0xf]
  %v187 = vld [vmem:[%s2] sm:$0x1]
  %v189 = vlaneseq
  %v190 = vshrl.u32 %v189, 7
  %v191 = vsub.s32 0, %v190
  %v192 = vrot.slane %v187, %v191
  %v198 = vunpack.c.l.b16 %v151
  %v199 = vunpack.c.l.b16 %v152
  %v200 = vunpack.c.l.b16 %v153
  %v201 = vunpack.c.l.b16 %v154
  %vm202 = vcmask 1041409
  %v203 = vsel %vm202, %v200, %v198
  %v204 = vsel %vm202, %v201, %v199
  %v205 = vpack.c.b16 %v203, %v203
  %v206 = vpack.c.b16 %v204, %v204
  %v241 = vunpack.c.l.b16 %v155
  %v242 = vunpack.c.l.b16 %v156
  %v243 = vunpack.c.l.b16 %v157
  %v244 = vunpack.c.l.b16 %v158
  %v245 = vunpack.c.l.b16 %v159
  %v246 = vunpack.c.l.b16 %v160
  %v247 = vunpack.c.l.b16 %v161
  %v248 = vunpack.c.l.b16 %v162
  %v249 = vunpack.c.l.b16 %v163
  %v250 = vunpack.c.l.b16 %v164
  %v251 = vunpack.c.l.b16 %v165
  %v252 = vunpack.c.l.b16 %v166
  %v253 = vunpack.c.l.b16 %v167
  %v254 = vunpack.c.l.b16 %v168
  %v255 = vunpack.c.l.b16 %v169
  %v256 = vunpack.c.l.b16 %v170
  %v257 = vunpack.c.l.b16 %v171
  %v258 = vunpack.c.l.b16 %v172
  %v259 = vunpack.c.l.b16 %v173
  %v260 = vunpack.c.l.b16 %v174
  %v261 = vunpack.c.l.b16 %v175
  %v262 = vunpack.c.l.b16 %v176
  %v263 = vunpack.c.l.b16 %v177
  %v264 = vunpack.c.l.b16 %v178
  %v265 = vunpack.c.l.b16 %v179
  %v266 = vunpack.c.l.b16 %v180
  %v267 = vunpack.c.l.b16 %v181
  %v268 = vunpack.c.l.b16 %v182
  %v269 = vunpack.c.l.b16 %v183
  %v270 = vunpack.c.l.b16 %v184
  %v271 = vunpack.c.l.b16 %v185
  %v272 = vunpack.c.l.b16 %v186
  %v273 = vpack.c.b16 %v242, %v241
  %v274 = vpack.c.b16 %v244, %v243
  %v275 = vpack.c.b16 %v246, %v245
  %v276 = vpack.c.b16 %v248, %v247
  %v277 = vpack.c.b16 %v250, %v249
  %v278 = vpack.c.b16 %v252, %v251
  %v279 = vpack.c.b16 %v254, %v253
  %v280 = vpack.c.b16 %v256, %v255
  %v281 = vpack.c.b16 %v258, %v257
  %v282 = vpack.c.b16 %v260, %v259
  %v283 = vpack.c.b16 %v262, %v261
  %v284 = vpack.c.b16 %v264, %v263
  %v285 = vpack.c.b16 %v266, %v265
  %v286 = vpack.c.b16 %v268, %v267
  %v287 = vpack.c.b16 %v270, %v269
  %v288 = vpack.c.b16 %v272, %v271
  %305 = vmatprep.subr.bf16.mxu0 0
  %306 = vmatpush1.bf16.msra.mxu0 %v273
  %307 = vmatprep.subr.bf16.mxu0 0
  %308 = vmatpush1.bf16.msra.mxu0 %v274
  %309 = vmatprep.subr.bf16.mxu0 0
  %310 = vmatpush1.bf16.msra.mxu0 %v275
  %311 = vmatprep.subr.bf16.mxu0 0
  %312 = vmatpush1.bf16.msra.mxu0 %v276
  %313 = vmatprep.subr.bf16.mxu0 0
  %314 = vmatpush1.bf16.msra.mxu0 %v277
  %315 = vmatprep.subr.bf16.mxu0 0
  %316 = vmatpush1.bf16.msra.mxu0 %v278
  %317 = vmatprep.subr.bf16.mxu0 0
  %318 = vmatpush1.bf16.msra.mxu0 %v279
  %319 = vmatprep.subr.bf16.mxu0 0
  %320 = vmatpush1.bf16.msra.mxu0 %v280
  %321 = vmatprep.subr.bf16.mxu0 0
  %322 = vmatpush1.bf16.msra.mxu0 %v281
  %323 = vmatprep.subr.bf16.mxu0 0
  %324 = vmatpush1.bf16.msra.mxu0 %v282
  %325 = vmatprep.subr.bf16.mxu0 0
  %326 = vmatpush1.bf16.msra.mxu0 %v283
  %327 = vmatprep.subr.bf16.mxu0 0
  %328 = vmatpush1.bf16.msra.mxu0 %v284
  %329 = vmatprep.subr.bf16.mxu0 0
  %330 = vmatpush1.bf16.msra.mxu0 %v285
  %331 = vmatprep.subr.bf16.mxu0 0
  %332 = vmatpush1.bf16.msra.mxu0 %v286
  %333 = vmatprep.subr.bf16.mxu0 0
  %334 = vmatpush1.bf16.msra.mxu0 %v287
  %335 = vmatprep.subr.bf16.mxu0 0
  %336 = vmatpush1.bf16.msra.mxu0 %v288
  %337 = vmatprep.mubr.bf16.mxu0 %v206
  %338 = vmatmul.mubr.bf16.gmra.mrb[0].mxu0 %v205
  %v339 = vpop.f32.mrb[0].mxu0
  %v340 = vadd.f32 %v192, %v339
  %v341 = vpop.f32.mrb[0].mxu0
  %v342 = vpop.f32.mrb[0].mxu0
  %v343 = vpop.f32.mrb[0].mxu0
  %344 = vdwg.mxu0
  %345 = vst [vmem:[%s3] sm:$0x3] %v340
  // Predicated region
  $region14: #{model_forward.9} parent=0 // pred_check
    _
  $region15: #{model_forward.9} parent=0 // pred_check_branch
    %347 = sbr.rel (0) target = $region17
  $region16: #{model_forward.9} parent=0 // pred_region
    _
  $region17: #{model_forward.9} parent=0 // pred_fallthru
    _
  // Predicated region
  $region18: #{model_forward.9} parent=0 // pred_check
    _
  $region19: #{model_forward.9} parent=0 // pred_check_branch
    %349 = sbr.rel (0) target = $region21
  $region20: #{model_forward.9} parent=0 // pred_region
    _
  $region21: #{model_forward.9} parent=0 // pred_fallthru
    _

</llo_original>
